<compile_context>
chip_gen: v7x
topology: tpu7x:2x2x1
jax: 0.10.0
libtpu: 0.0.40
codegen_flags: <defaults>
</compile_context>

<pallas_src>
import functools
import numpy as np
import jax
import jax.numpy as jnp
from jax.experimental import pallas as pl
from jax.experimental.pallas import tpu as pltpu

_EPS = 1e-5
LANE = 128


def _detect_multi_tc():
    try:
        kind = jax.devices()[0].device_kind.lower()
        return ("v7" in kind) or ("7x" in kind)
    except Exception:
        return False


_MULTI_TC = _detect_multi_tc()


def _row_tiles(m):
    # v7x has two TensorCores: give it a 2-way "parallel" row grid.
    # v5e / v6e have one TC: a single tile avoids useless pipeline steps.
    if _MULTI_TC and m >= 256 and m % 16 == 0:
        return 2
    return 1


# ----------------------------------------------------------------------------
# Pallas kernels
# ----------------------------------------------------------------------------
def _mm_bias_stats_kernel(a_ref, w_ref, b_ref, o_ref, st_ref):
    """1x1 conv (matmul) + bias; also emits per-channel (sum, sum-of-squares)."""
    y = jnp.dot(a_ref[...].astype(jnp.bfloat16), w_ref[...],
                preferred_element_type=jnp.float32) + b_ref[...]
    o_ref[...] = y
    st_ref[0, 0:1, :] = jnp.sum(y, axis=0, keepdims=True)
    st_ref[0, 1:2, :] = jnp.sum(y * y, axis=0, keepdims=True)


def matmul_bias_stats(a, w, bias):
    """a: (M, K) f32/bf16, w: (K, C) bf16, bias: (1, C) f32 -> (y (M, C) f32, stats (2, C))."""
    m, k = a.shape
    kw, c = w.shape
    gm = _row_tiles(m)
    tm = m // gm
    y, st = pl.pallas_call(
        _mm_bias_stats_kernel,
        out_shape=(jax.ShapeDtypeStruct((m, c), jnp.float32),
                   jax.ShapeDtypeStruct((gm, 2, c), jnp.float32)),
        grid=(gm,),
        in_specs=[pl.BlockSpec((tm, k), lambda i: (i, 0)),
                  pl.BlockSpec((kw, c), lambda i: (0, 0)),
                  pl.BlockSpec((1, c), lambda i: (0, 0))],
        out_specs=(pl.BlockSpec((tm, c), lambda i: (i, 0)),
                   pl.BlockSpec((1, 2, c), lambda i: (i, 0, 0))),
        compiler_params=pltpu.CompilerParams(dimension_semantics=("parallel",)),
    )(a, w, bias)
    return y, st.sum(axis=0)


def _head_mm_kernel(x_ref, m_ref, b_ref, o_ref, st_ref):
    z = jnp.dot(x_ref[...], m_ref[0], preferred_element_type=jnp.float32) + b_ref[0]
    o_ref[...] = z
    st_ref[0, 0:1, :] = jnp.sum(z, axis=0, keepdims=True)
    st_ref[0, 1:2, :] = jnp.sum(z * z, axis=0, keepdims=True)


def head_matmul(x_heads, m_op, bias):
    """Fused BlockGC core: per-head matmul with the precomputed (V*ci, V*co) operator.
    x_heads: (H, R, K) bf16; m_op: (H, K, C) bf16 (K = V*ci, unpadded); bias: (H, 1, C) f32."""
    h, r, k = x_heads.shape
    c = m_op.shape[-1]
    z, st = pl.pallas_call(
        _head_mm_kernel,
        out_shape=(jax.ShapeDtypeStruct((h * r, c), jnp.float32),
                   jax.ShapeDtypeStruct((h, 2, c), jnp.float32)),
        grid=(h,),
        in_specs=[pl.BlockSpec((r, k), lambda g: (g, 0)),
                  pl.BlockSpec((1, k, c), lambda g: (g, 0, 0)),
                  pl.BlockSpec((1, 1, c), lambda g: (g, 0, 0))],
        out_specs=(pl.BlockSpec((r, c), lambda g: (g, 0)),
                   pl.BlockSpec((1, 2, c), lambda g: (g, 0, 0))),
        compiler_params=pltpu.CompilerParams(dimension_semantics=("parallel",)),
    )(x_heads.reshape(h * r, k), m_op, bias)
    return z.reshape(h, r, c), st


def _gcn_tcn1_kernel(z_ref, r_ref, sz_ref, sr_ref, sh_ref, w_ref, b_ref, o_ref, st_ref):
    """GCN epilogue (BN + residual + ReLU) fused as prologue of the branch-1x1 matmul."""
    g = jnp.maximum(z_ref[...] * sz_ref[...]
                    + r_ref[...].astype(jnp.float32) * sr_ref[...] + sh_ref[...], 0.0)
    y = jnp.dot(g.astype(jnp.bfloat16), w_ref[...],
                preferred_element_type=jnp.float32) + b_ref[...]
    o_ref[...] = y
    st_ref[0, 0:1, :] = jnp.sum(y, axis=0, keepdims=True)
    st_ref[0, 1:2, :] = jnp.sum(y * y, axis=0, keepdims=True)


def gcn_epilogue_tcn1x1(z, res, s_z, s_r, shift, w, bias):
    m, cin = z.shape
    c = w.shape[-1]
    gm = _row_tiles(m)
    tm = m // gm
    vec = lambda a: a.reshape(1, -1).astype(jnp.float32)
    y, st = pl.pallas_call(
        _gcn_tcn1_kernel,
        out_shape=(jax.ShapeDtypeStruct((m, c), jnp.float32),
                   jax.ShapeDtypeStruct((gm, 2, c), jnp.float32)),
        grid=(gm,),
        in_specs=[pl.BlockSpec((tm, cin), lambda i: (i, 0)),
                  pl.BlockSpec((tm, cin), lambda i: (i, 0)),
                  pl.BlockSpec((1, cin), lambda i: (0, 0)),
                  pl.BlockSpec((1, cin), lambda i: (0, 0)),
                  pl.BlockSpec((1, cin), lambda i: (0, 0)),
                  pl.BlockSpec((cin, c), lambda i: (0, 0)),
                  pl.BlockSpec((1, c), lambda i: (0, 0))],
        out_specs=(pl.BlockSpec((tm, c), lambda i: (i, 0)),
                   pl.BlockSpec((1, 2, c), lambda i: (i, 0, 0))),
        compiler_params=pltpu.CompilerParams(dimension_semantics=("parallel",)),
    )(z, res, vec(s_z), vec(s_r), vec(shift), w, bias)
    return y, st.sum(axis=0)


def _branch_kernel(y_ref, sa_ref, ba_ref, mk_ref, l2_ref, l3_ref, w_ref, b_ref,
                   o_ref, st_ref, *, T, V, t_out, stride, kt, dils):
    """Per-sample fused temporal stage: BN+ReLU prologue, both dilated (kt,1) temporal convs
    (stride folded in), (3,1) max-pool branch and strided 1x1 pass-through branch, assembled
    into the lane-dense out_c output plus per-channel (sum, sumsq) for the downstream BNs.
    Rows are in parity-split time order (even times first) so every tap is contiguous."""
    sa, ba, mk = sa_ref[...], ba_ref[...], mk_ref[...]

    def act(row_start, n_rows):
        a = y_ref[pl.ds(row_start, n_rows), :] * sa + ba
        return a + mk * (jnp.maximum(a, 0.0) - a)          # ReLU only where mk == 1

    def row_of_time(t_in):                                  # parity-split row offset
        if stride == 2:
            return (t_in // 2 + (t_in % 2) * t_out) * V
        return t_in * V

    # conv biases for branches 0/1 (zeros elsewhere) initialise the accumulator
    o_ref[...] = jnp.zeros(o_ref.shape, jnp.float32) + b_ref[...]

    # dilated (kt, 1) temporal convolutions, output stride folded in
    for b, dil in enumerate(dils):
        pad = (kt - 1) * dil // 2
        for j in range(kt):
            off = j * dil - pad
            i_lo = 0 if off >= 0 else (-off + stride - 1) // stride
            i_hi = min(t_out, (T - 1 - off) // stride + 1)
            if i_hi <= i_lo:
                continue
            n_rows = (i_hi - i_lo) * V
            xa = act(row_of_time(i_lo * stride + off), n_rows).astype(jnp.bfloat16)
            dst = pl.ds(i_lo * V, n_rows)
            o_ref[dst, :] = o_ref[dst, :] + jnp.dot(
                xa, w_ref[b * kt + j], preferred_element_type=jnp.float32)

    # branch 2: (3,1) max pool (inputs are post-ReLU so zero padding == -inf padding)
    # branch 3: strided 1x1 pass-through (raw; its BN is applied in the final kernel)
    l2m, l3m = l2_ref[...], l3_ref[...]
    center = act(row_of_time(0), t_out * V)
    o_ref[...] = o_ref[...] + center * (l2m + l3m)
    for d in (-1, 1):
        i_lo = 0 if d >= 0 else (-d + stride - 1) // stride
        i_hi = min(t_out, (T - 1 - d) // stride + 1)
        if i_hi <= i_lo:
            continue
        n_rows = (i_hi - i_lo) * V
        nb = act(row_of_time(i_lo * stride + d), n_rows)
        dst = pl.ds(i_lo * V, n_rows)
        cur = o_ref[dst, :]
        o_ref[dst, :] = jnp.maximum(cur, nb * l2m + cur * (1.0 - l2m))

    ov = o_ref[...]
    st_ref[0, 0:1, :] = jnp.sum(ov, axis=0, keepdims=True)
    st_ref[0, 1:2, :] = jnp.sum(ov * ov, axis=0, keepdims=True)


def tcn_branches(y_all, sa, ba, mask, lane2, lane3, w, bias, *,
                 n, t, v, t_out, stride, kt, dils):
    c = y_all.shape[-1]
    kern = functools.partial(_branch_kernel, T=t, V=v, t_out=t_out,
                             stride=stride, kt=kt, dils=dils)
    vec = lambda a: a.reshape(1, -1).astype(jnp.float32)
    pre, st = pl.pallas_call(
        kern,
        out_shape=(jax.ShapeDtypeStruct((n * t_out * v, c), jnp.float32),
                   jax.ShapeDtypeStruct((n, 2, c), jnp.float32)),
        grid=(n,),
        in_specs=[pl.BlockSpec((t * v, c), lambda i: (i, 0)),
                  pl.BlockSpec((1, c), lambda i: (0, 0)),
                  pl.BlockSpec((1, c), lambda i: (0, 0)),
                  pl.BlockSpec((1, c), lambda i: (0, 0)),
                  pl.BlockSpec((1, c), lambda i: (0, 0)),
                  pl.BlockSpec((1, c), lambda i: (0, 0)),
                  pl.BlockSpec((len(dils) * kt, c, c), lambda i: (0, 0, 0)),
                  pl.BlockSpec((1, c), lambda i: (0, 0))],
        out_specs=(pl.BlockSpec((t_out * v, c), lambda i: (i, 0)),
                   pl.BlockSpec((1, 2, c), lambda i: (i, 0, 0))),
        compiler_params=pltpu.CompilerParams(dimension_semantics=("parallel",)),
    )(y_all, vec(sa), vec(ba), vec(mask), lane2, lane3, w, bias)
    return pre, st.sum(axis=0)


def _final_kernel(y_ref, r_ref, sy_ref, sr_ref, sh_ref, o_ref):
    o_ref[...] = jnp.maximum(
        y_ref[...] * sy_ref[...]
        + r_ref[...].astype(jnp.float32) * sr_ref[...] + sh_ref[...], 0.0)


def final_add_relu(y, res, s_y, s_r, shift):
    """relu(y*s_y + res*s_r + shift): both folded BatchNorms + residual + relu."""
    m, c = y.shape
    gm = _row_tiles(m)
    tm = m // gm
    vec = lambda a: a.reshape(1, -1).astype(jnp.float32)
    return pl.pallas_call(
        _final_kernel,
        out_shape=jax.ShapeDtypeStruct((m, c), jnp.float32),
        grid=(gm,),
        in_specs=[pl.BlockSpec((tm, c), lambda i: (i, 0)),
                  pl.BlockSpec((tm, c), lambda i: (i, 0)),
                  pl.BlockSpec((1, c), lambda i: (0, 0)),
                  pl.BlockSpec((1, c), lambda i: (0, 0)),
                  pl.BlockSpec((1, c), lambda i: (0, 0))],
        out_specs=pl.BlockSpec((tm, c), lambda i: (i, 0)),
        compiler_params=pltpu.CompilerParams(dimension_semantics=("parallel",)),
    )(y, res, vec(s_y), vec(s_r), vec(shift))


# ----------------------------------------------------------------------------
# Graph (coco layout) -> hop distance matrix
# ----------------------------------------------------------------------------
def build_coco_hop():
    num_node = 17
    origin_edges = [(16, 14), (14, 12), (17, 15), (15, 13), (12, 13), (6, 12),
                    (7, 13), (6, 7), (8, 6), (10, 8), (9, 7), (11, 9), (2, 3),
                    (2, 1), (3, 1), (4, 2), (5, 3), (4, 6), (5, 7)]
    edges = [(i - 1, j - 1) for i, j in origin_edges]
    A = np.eye(num_node)
    for i, j in edges:
        A[i, j] = 1
        A[j, i] = 1
    Ms = [np.eye(num_node), A]
    for d in range(2, num_node):
        Ms.append(Ms[d - 1] @ A)
    Ms = np.stack(Ms) > 0
    hop = np.full((num_node, num_node), num_node, dtype=np.int32)
    for d in range(num_node - 1, -1, -1):
        hop[Ms[d]] = d
    assert np.all(hop != num_node), "graph must be connected"
    return hop


# ----------------------------------------------------------------------------
# BatchNorm (training-mode batch statistics, affine = identity at init)
# ----------------------------------------------------------------------------
def _bn_from_stats(st, count):
    mean = st[0] / count
    var = jnp.maximum(st[1] / count - mean * mean, 0.0)
    scale = jax.lax.rsqrt(var + _EPS)
    return scale, -mean * scale


# ----------------------------------------------------------------------------
# Parameters (raw, PyTorch-shaped) + one-time prep (fused / transposed / bf16)
# ----------------------------------------------------------------------------
def make_raw_params(key, in_c, out_c, V, hop_max, stride, kg=3, n_heads=8, kt=5):
    h = n_heads if in_c > n_heads else 1
    ci, co, bc = in_c // h, out_c // h, out_c // 4
    keys = iter(jax.random.split(key, 64))

    def w(shape, scale=0.1):
        return scale * jax.random.normal(next(keys), shape, jnp.float32)

    p = {
        'proj_w': w((in_c, 64)), 'proj_b': w((in_c,)),
        'emb': w((kg, h, hop_max + 1)),
        'A': jnp.tile(jnp.eye(V, dtype=jnp.float32)[None, None], (kg, h, 1, 1)),
        'block_w': w((kg, h, co, ci)), 'block_b': w((kg, h, co)),
        'w1': [w((bc, out_c)) for _ in range(4)],
        'b1': [w((bc,)) for _ in range(4)],
        'wt0': w((bc, bc, kt)), 'bt0': w((bc,)),
        'wt1': w((bc, bc, kt)), 'bt1': w((bc,)),
    }
    if in_c != out_c:
        p['gres_w'], p['gres_b'] = w((out_c, in_c)), w((out_c,))
    if not (in_c == out_c and stride == 1):
        p['lres_w'], p['lres_b'] = w((out_c, in_c)), w((out_c,))
    return p


def prepare_params(raw, hop, in_c, out_c, V, n_heads=8, kt=5, dils=(1, 2)):
    """Hoisted out of the forward path: weight transpose / bf16 cast, the fused BlockGC
    per-head operator (V-mix x grouped-1x1 x k-sum), the fused branch-1x1 weight, and the
    dilated temporal-conv taps embedded into lane-aligned (out_c, out_c) blocks."""
    h = n_heads if in_c > n_heads else 1
    ci, co, bc = in_c // h, out_c // h, out_c // 4

    def lin(wmat, bvec):
        return (wmat.T.astype(jnp.bfloat16), bvec.reshape(1, -1).astype(jnp.float32))

    prep = {
        'proj': lin(raw['proj_w'], raw['proj_b']),
        'gres': lin(raw['gres_w'], raw['gres_b']) if 'gres_w' in raw else None,
        'lres': lin(raw['lres_w'], raw['lres_b']) if 'lres_w' in raw else None,
    }

    # BlockGC fused operator:  M[h, (v,ci), (w,co)] = sum_k BnA[k,h,v,w] * W[k,h,co,ci]
    B = raw['emb'][:, :, hop]                                  # (k, h, V, V)
    A = raw['A']
    l2 = lambda m: jnp.sqrt(jnp.sum(m * m, axis=-2, keepdims=True)) + 1e-4
    BnA = B / l2(B) + A / l2(A)
    M = jnp.einsum('khvw,khoc->hvcwo', BnA, raw['block_w']).reshape(h, V * ci, V * co)
    prep['gcn_M'] = M.astype(jnp.bfloat16)                     # K = V*ci kept unpadded
    gcn_b = jnp.broadcast_to(raw['block_b'].sum(0)[:, None, :], (h, V, co))
    prep['gcn_bias'] = gcn_b.reshape(h, 1, V * co).astype(jnp.float32)

    # the four MultiScale_TCN branch 1x1 convs fused into one (out_c -> out_c) matmul
    prep['tcn_w1'] = lin(jnp.concatenate(raw['w1'], axis=0),
                         jnp.concatenate(raw['b1'], axis=0))

    # dilated temporal-conv taps embedded in (out_c, out_c) blocks: both branches accumulate
    # straight into the lane-dense output of the fused branch kernel
    taps = []
    for b in range(len(dils)):
        wt = raw[f'wt{b}']                                     # (bc, bc, kt)
        for j in range(kt):
            blk = jnp.zeros((out_c, out_c), jnp.float32)
            blk = blk.at[b * bc:(b + 1) * bc, b * bc:(b + 1) * bc].set(wt[:, :, j].T)
            taps.append(blk)
    prep['tconv_w'] = jnp.stack(taps).astype(jnp.bfloat16)     # (len(dils)*kt, out_c, out_c)
    tb = jnp.zeros((1, out_c), jnp.float32)
    tb = tb.at[0, :bc].set(raw['bt0']).at[0, bc:2 * bc].set(raw['bt1'])
    prep['tconv_b'] = tb

    prep['lane2'] = jnp.zeros((1, out_c), jnp.float32).at[0, 2 * bc:3 * bc].set(1.0)
    prep['lane3'] = jnp.zeros((1, out_c), jnp.float32).at[0, 3 * bc:].set(1.0)
    prep['relu_mask'] = jnp.concatenate(
        [jnp.ones((3 * bc,), jnp.float32), jnp.zeros((bc,), jnp.float32)])
    return prep


# ----------------------------------------------------------------------------
# GCN_MultiScale_TCN_Layer forward
# ----------------------------------------------------------------------------
def layer_forward(x, d_topo, p, *, out_c, stride, heads, kt=5, dils=(1, 2)):
    """x: (N, C_in, T, V) f32, d_topo: (N, 64) f32 -> (N, C_out, T_out, V) f32."""
    n, c_in, t, v = x.shape
    h = heads
    ci, co = c_in // h, out_c // h
    t_out = (t - 1) // stride + 1

    # --- D_TopoProjector: Linear -> BN1d -> ReLU, broadcast-added to x ---
    pw, pb = p['proj']
    e, e_st = matmul_bias_stats(d_topo, pw, pb)
    se, be = _bn_from_stats(e_st, n)
    e_act = jnp.maximum(e * se + be, 0.0)

    # channels-last, parity-split time order (even times first), topo add, single bf16 cast
    xcl = jnp.transpose(x, (0, 2, 3, 1))
    if stride > 1:
        perm = jnp.concatenate([jnp.arange(0, t, stride), jnp.arange(1, t, stride)])
        xcl = jnp.take(xcl, perm, axis=1)
    xcl = (xcl + e_act[:, None, None, :]).astype(jnp.bfloat16)        # (N, T, V, C_in)
    x_flat = xcl.reshape(n * t * v, c_in)

    # --- layer residual (strided 1x1 conv; its BN folded into the final kernel) ---
    if p['lres'] is None:
        res_layer = xcl[:, :t_out].reshape(n * t_out * v, c_in)
        s_l = jnp.ones((out_c,), jnp.float32)
        b_l = jnp.zeros((out_c,), jnp.float32)
    else:
        lw, lb = p['lres']
        res_layer, l_st = matmul_bias_stats(
            xcl[:, :t_out].reshape(n * t_out * v, c_in), lw, lb)
        s_l, b_l = _bn_from_stats(l_st, n * t_out * v)

    # --- BlockGC residual (1x1 conv; its BN folded into the next kernel) ---
    if p['gres'] is None:
        res_gcn = x_flat
        s_g = jnp.ones((out_c,), jnp.float32)
        b_g = jnp.zeros((out_c,), jnp.float32)
    else:
        gw, gb = p['gres']
        res_gcn, g_st = matmul_bias_stats(x_flat, gw, gb)
        s_g, b_g = _bn_from_stats(g_st, n * t * v)

    # --- BlockGC core: V-mix x grouped 1x1 x k-sum as one matmul per head ---
    x_heads = xcl.reshape(n, t, v, h, ci).transpose(3, 0, 1, 2, 4).reshape(h, n * t, v * ci)
    z_heads, z_st = head_matmul(x_heads, p['gcn_M'], p['gcn_bias'])
    z_row = z_heads.reshape(h, n, t, v, co).transpose(1, 2, 3, 0, 4).reshape(n * t * v, out_c)
    z_sum = z_st[:, 0, :].reshape(h, v, co).sum(axis=1).reshape(-1)
    z_sq = z_st[:, 1, :].reshape(h, v, co).sum(axis=1).reshape(-1)
    s_z, b_z = _bn_from_stats(jnp.stack([z_sum, z_sq]), n * t * v)

    # --- GCN epilogue (BN + residual + ReLU) fused into the branch-1x1 matmul ---
    tw, tb = p['tcn_w1']
    y_all, y_st = gcn_epilogue_tcn1x1(z_row, res_gcn, s_z, s_g, b_z + b_g, tw, tb)
    s_a, b_a = _bn_from_stats(y_st, n * t * v)
    mask = p['relu_mask']
    sa = s_a * mask + (1.0 - mask)       # branch 3 (strided 1x1) skips this BN + ReLU
    ba = b_a * mask

    # --- fused temporal stage: both dilated convs + max-pool + strided pass-through ---
    pre, pre_st = tcn_branches(y_all, sa, ba, mask, p['lane2'], p['lane3'],
                               p['tconv_w'], p['tconv_b'],
                               n=n, t=t, v=v, t_out=t_out, stride=stride, kt=kt, dils=dils)
    s_b, b_b = _bn_from_stats(pre_st, n * t_out * v)

    # --- final: relu(tcn + residual) with both folded BN affines in one kernel ---
    out = final_add_relu(pre, res_layer, s_b, s_l, b_b + b_l)
    return out.reshape(n, t_out, v, out_c).transpose(0, 3, 1, 2)


# ----------------------------------------------------------------------------
# Main
# ----------------------------------------------------------------------------
if __name__ == "__main__":
    hop_np = build_coco_hop()
    V = int(hop_np.shape[0])                 # 17 joints (coco layout)

    N, C_IN, C_OUT, T, STRIDE = 2, 64, 128, 16, 2
    HEADS = 8 if C_IN > 8 else 1

    key = jax.random.PRNGKey(0)
    k_x, k_d, k_p = jax.random.split(key, 3)
    x = jax.random.normal(k_x, (N, C_IN, T, V), jnp.float32)
    d_topo = jax.random.normal(k_d, (N, 64), jnp.float32)

    raw = make_raw_params(k_p, C_IN, C_OUT, V, int(hop_np.max()), STRIDE, n_heads=HEADS)
    params = prepare_params(raw, jnp.asarray(hop_np), C_IN, C_OUT, V, n_heads=HEADS)

    fwd = jax.jit(functools.partial(layer_forward, out_c=C_OUT, stride=STRIDE, heads=HEADS))
    out = jax.block_until_ready(fwd(x, d_topo, params))

    assert out.shape == (N, C_OUT, (T - 1) // STRIDE + 1, V), out.shape
    assert bool(jnp.all(jnp.isfinite(out)))
    print("KERNEL_OK")
</pallas_src>

<mosaic_0001>
module attributes {stable_mosaic.version = 11 : i64} {
  func.func @_mm_bias_stats_kernel(%arg0: i32, %arg1: memref<2x64xf32, #tpu.memory_space<vmem>>, %arg2: memref<64x64xbf16, #tpu.memory_space<vmem>>, %arg3: memref<1x64xf32, #tpu.memory_space<vmem>>, %arg4: memref<2x64xf32, #tpu.memory_space<vmem>>, %arg5: memref<1x2x64xf32, #tpu.memory_space<vmem>>) attributes {dimension_semantics = [#tpu.dimension_semantics<parallel>], iteration_bounds = array<i64: 1>, scalar_prefetch = 0 : i64, scratch_operands = 0 : i64, tpu.core_type = #tpu.core_type<tc>, window_params = [{transform_indices = @transform_0, window_bounds = array<i64: 2, 64>}, {pipeline_mode = #tpu.pipeline_mode<synchronous>, transform_indices = @transform_1, window_bounds = array<i64: 64, 64>}, {pipeline_mode = #tpu.pipeline_mode<synchronous>, transform_indices = @transform_2, window_bounds = array<i64: 1, 64>}, {transform_indices = @transform_3, window_bounds = array<i64: 2, 64>}, {transform_indices = @transform_4, window_bounds = array<i64: 1, 2, 64>}]} {
    %c0 = arith.constant 0 : index
    %c0_0 = arith.constant 0 : index
    %0 = vector.load %arg1[%c0, %c0_0] : memref<2x64xf32, #tpu.memory_space<vmem>>, vector<2x64xf32>
    %1 = arith.truncf %0 : vector<2x64xf32> to vector<2x64xbf16>
    %c0_1 = arith.constant 0 : index
    %c0_2 = arith.constant 0 : index
    %2 = vector.load %arg2[%c0_1, %c0_2] : memref<64x64xbf16, #tpu.memory_space<vmem>>, vector<64x64xbf16>
    %cst = arith.constant dense<0.000000e+00> : vector<2x64xf32>
    %3 = tpu.matmul %1, %2, %cst {dimension_numbers = #tpu.dot_dimension_numbers<[1], [0], [0], [1], [0, 0, 1, 1], [], []>} : vector<2x64xbf16>, vector<64x64xbf16>, vector<2x64xf32> -> vector<2x64xf32>
    %c0_3 = arith.constant 0 : index
    %c0_4 = arith.constant 0 : index
    %4 = vector.load %arg3[%c0_3, %c0_4] : memref<1x64xf32, #tpu.memory_space<vmem>>, vector<1x64xf32>
    %5 = vector.broadcast %4 : vector<1x64xf32> to vector<2x64xf32>
    %6 = arith.addf %3, %5 : vector<2x64xf32>
    %c0_5 = arith.constant 0 : index
    %c0_6 = arith.constant 0 : index
    %7 = vector.load %arg4[%c0_5, %c0_6] : memref<2x64xf32, #tpu.memory_space<vmem>>, vector<2x64xf32>
    tpu.vector_store %arg4[%c0_5, %c0_6], %6 {strides = array<i32>} : memref<2x64xf32, #tpu.memory_space<vmem>>, vector<2x64xf32>,
    %cst_7 = arith.constant dense<0.000000e+00> : vector<64xf32>
    %8 = vector.multi_reduction <add>, %6, %cst_7 [0] : vector<2x64xf32> to vector<64xf32>
    %9 = vector.shape_cast %8 : vector<64xf32> to vector<1x64xf32>
    %c0_8 = arith.constant 0 : index
    %c0_9 = arith.constant 0 : index
    %c0_10 = arith.constant 0 : index
    %10 = vector.load %arg5[%c0_8, %c0_9, %c0_10] : memref<1x2x64xf32, #tpu.memory_space<vmem>>, vector<1x1x64xf32>
    %11 = vector.shape_cast %10 : vector<1x1x64xf32> to vector<1x64xf32>
    %12 = vector.shape_cast %9 : vector<1x64xf32> to vector<1x1x64xf32>
    tpu.vector_store %arg5[%c0_8, %c0_9, %c0_10], %12 {strides = array<i32>} : memref<1x2x64xf32, #tpu.memory_space<vmem>>, vector<1x1x64xf32>,
    %13 = arith.mulf %6, %6 : vector<2x64xf32>
    %cst_11 = arith.constant dense<0.000000e+00> : vector<64xf32>
    %14 = vector.multi_reduction <add>, %13, %cst_11 [0] : vector<2x64xf32> to vector<64xf32>
    %15 = vector.shape_cast %14 : vector<64xf32> to vector<1x64xf32>
    %c0_12 = arith.constant 0 : index
    %c1 = arith.constant 1 : index
    %c0_13 = arith.constant 0 : index
    %16 = vector.load %arg5[%c0_12, %c1, %c0_13] : memref<1x2x64xf32, #tpu.memory_space<vmem>>, vector<1x1x64xf32>
    %17 = vector.shape_cast %16 : vector<1x1x64xf32> to vector<1x64xf32>
    %18 = vector.shape_cast %15 : vector<1x64xf32> to vector<1x1x64xf32>
    tpu.vector_store %arg5[%c0_12, %c1, %c0_13], %18 {strides = array<i32>} : memref<1x2x64xf32, #tpu.memory_space<vmem>>, vector<1x1x64xf32>,
    return
  }
  func.func @transform_0(%arg0: i32) -> (i32, i32) {
    %c0_i32 = arith.constant 0 : i32
    %c0_i32_0 = arith.constant 0 : i32
    return %arg0, %c0_i32 : i32, i32
  }
  func.func @transform_1(%arg0: i32) -> (i32, i32) {
    %c0_i32 = arith.constant 0 : i32
    %c0_i32_0 = arith.constant 0 : i32
    %c0_i32_1 = arith.constant 0 : i32
    return %c0_i32, %c0_i32_0 : i32, i32
  }
  func.func @transform_2(%arg0: i32) -> (i32, i32) {
    %c0_i32 = arith.constant 0 : i32
    %c0_i32_0 = arith.constant 0 : i32
    %c0_i32_1 = arith.constant 0 : i32
    return %c0_i32, %c0_i32_0 : i32, i32
  }
  func.func @transform_3(%arg0: i32) -> (i32, i32) {
    %c0_i32 = arith.constant 0 : i32
    %c0_i32_0 = arith.constant 0 : i32
    return %arg0, %c0_i32 : i32, i32
  }
  func.func @transform_4(%arg0: i32) -> (i32, i32, i32) {
    %c0_i32 = arith.constant 0 : i32
    %c0_i32_0 = arith.constant 0 : i32
    %c0_i32_1 = arith.constant 0 : i32
    return %arg0, %c0_i32, %c0_i32_0 : i32, i32, i32
  }
}

module attributes {stable_mosaic.version = 11 : i64} {
  func.func @_head_mm_kernel(%arg0: i32, %arg1: memref<32x136xbf16, #tpu.memory_space<vmem>>, %arg2: memref<1x136x272xbf16, #tpu.memory_space<vmem>>, %arg3: memref<1x1x272xf32, #tpu.memory_space<vmem>>, %arg4: memref<32x272xf32, #tpu.memory_space<vmem>>, %arg5: memref<1x2x272xf32, #tpu.memory_space<vmem>>) attributes {dimension_semantics = [#tpu.dimension_semantics<parallel>], iteration_bounds = array<i64: 8>, scalar_prefetch = 0 : i64, scratch_operands = 0 : i64, tpu.core_type = #tpu.core_type<tc>, window_params = [{transform_indices = @transform_0, window_bounds = array<i64: 32, 136>}, {transform_indices = @transform_1, window_bounds = array<i64: 1, 136, 272>}, {transform_indices = @transform_2, window_bounds = array<i64: 1, 1, 272>}, {transform_indices = @transform_3, window_bounds = array<i64: 32, 272>}, {transform_indices = @transform_4, window_bounds = array<i64: 1, 2, 272>}]} {
    %c0 = arith.constant 0 : index
    %c0_0 = arith.constant 0 : index
    %0 = vector.load %arg1[%c0, %c0_0] : memref<32x136xbf16, #tpu.memory_space<vmem>>, vector<32x136xbf16>
    %c0_1 = arith.constant 0 : index
    %c0_2 = arith.constant 0 : index
    %c0_3 = arith.constant 0 : index
    %1 = vector.load %arg2[%c0_1, %c0_2, %c0_3] : memref<1x136x272xbf16, #tpu.memory_space<vmem>>, vector<1x136x272xbf16>
    %2 = vector.shape_cast %1 : vector<1x136x272xbf16> to vector<136x272xbf16>
    %cst = arith.constant dense<0.000000e+00> : vector<32x272xf32>
    %3 = tpu.matmul %0, %2, %cst {dimension_numbers = #tpu.dot_dimension_numbers<[1], [0], [0], [1], [0, 0, 1, 1], [], []>} : vector<32x136xbf16>, vector<136x272xbf16>, vector<32x272xf32> -> vector<32x272xf32>
    %c0_4 = arith.constant 0 : index
    %c0_5 = arith.constant 0 : index
    %c0_6 = arith.constant 0 : index
    %4 = vector.load %arg3[%c0_4, %c0_5, %c0_6] : memref<1x1x272xf32, #tpu.memory_space<vmem>>, vector<1x1x272xf32>
    %5 = vector.shape_cast %4 : vector<1x1x272xf32> to vector<1x272xf32>
    %6 = vector.broadcast %5 : vector<1x272xf32> to vector<32x272xf32>
    %7 = arith.addf %3, %6 : vector<32x272xf32>
    %c0_7 = arith.constant 0 : index
    %c0_8 = arith.constant 0 : index
    %8 = vector.load %arg4[%c0_7, %c0_8] : memref<32x272xf32, #tpu.memory_space<vmem>>, vector<32x272xf32>
    tpu.vector_store %arg4[%c0_7, %c0_8], %7 {strides = array<i32>} : memref<32x272xf32, #tpu.memory_space<vmem>>, vector<32x272xf32>,
    %cst_9 = arith.constant dense<0.000000e+00> : vector<272xf32>
    %9 = vector.multi_reduction <add>, %7, %cst_9 [0] : vector<32x272xf32> to vector<272xf32>
    %10 = vector.shape_cast %9 : vector<272xf32> to vector<1x272xf32>
    %c0_10 = arith.constant 0 : index
    %c0_11 = arith.constant 0 : index
    %c0_12 = arith.constant 0 : index
    %11 = vector.load %arg5[%c0_10, %c0_11, %c0_12] : memref<1x2x272xf32, #tpu.memory_space<vmem>>, vector<1x1x272xf32>
    %12 = vector.shape_cast %11 : vector<1x1x272xf32> to vector<1x272xf32>
    %13 = vector.shape_cast %10 : vector<1x272xf32> to vector<1x1x272xf32>
    tpu.vector_store %arg5[%c0_10, %c0_11, %c0_12], %13 {strides = array<i32>} : memref<1x2x272xf32, #tpu.memory_space<vmem>>, vector<1x1x272xf32>,
    %14 = arith.mulf %7, %7 : vector<32x272xf32>
    %cst_13 = arith.constant dense<0.000000e+00> : vector<272xf32>
    %15 = vector.multi_reduction <add>, %14, %cst_13 [0] : vector<32x272xf32> to vector<272xf32>
    %16 = vector.shape_cast %15 : vector<272xf32> to vector<1x272xf32>
    %c0_14 = arith.constant 0 : index
    %c1 = arith.constant 1 : index
    %c0_15 = arith.constant 0 : index
    %17 = vector.load %arg5[%c0_14, %c1, %c0_15] : memref<1x2x272xf32, #tpu.memory_space<vmem>>, vector<1x1x272xf32>
    %18 = vector.shape_cast %17 : vector<1x1x272xf32> to vector<1x272xf32>
    %19 = vector.shape_cast %16 : vector<1x272xf32> to vector<1x1x272xf32>
    tpu.vector_store %arg5[%c0_14, %c1, %c0_15], %19 {strides = array<i32>} : memref<1x2x272xf32, #tpu.memory_space<vmem>>, vector<1x1x272xf32>,
    return
  }
  func.func @transform_0(%arg0: i32) -> (i32, i32) {
    %c0_i32 = arith.constant 0 : i32
    %c0_i32_0 = arith.constant 0 : i32
    return %arg0, %c0_i32 : i32, i32
  }
  func.func @transform_1(%arg0: i32) -> (i32, i32, i32) {
    %c0_i32 = arith.constant 0 : i32
    %c0_i32_0 = arith.constant 0 : i32
    %c0_i32_1 = arith.constant 0 : i32
    return %arg0, %c0_i32, %c0_i32_0 : i32, i32, i32
  }
  func.func @transform_2(%arg0: i32) -> (i32, i32, i32) {
    %c0_i32 = arith.constant 0 : i32
    %c0_i32_0 = arith.constant 0 : i32
    %c0_i32_1 = arith.constant 0 : i32
    return %arg0, %c0_i32, %c0_i32_0 : i32, i32, i32
  }
  func.func @transform_3(%arg0: i32) -> (i32, i32) {
    %c0_i32 = arith.constant 0 : i32
    %c0_i32_0 = arith.constant 0 : i32
    return %arg0, %c0_i32 : i32, i32
  }
  func.func @transform_4(%arg0: i32) -> (i32, i32, i32) {
    %c0_i32 = arith.constant 0 : i32
    %c0_i32_0 = arith.constant 0 : i32
    %c0_i32_1 = arith.constant 0 : i32
    return %arg0, %c0_i32, %c0_i32_0 : i32, i32, i32
  }
}

module attributes {stable_mosaic.version = 11 : i64} {
  func.func @_mm_bias_stats_kernel(%arg0: i32, %arg1: memref<544x64xbf16, #tpu.memory_space<vmem>>, %arg2: memref<64x128xbf16, #tpu.memory_space<vmem>>, %arg3: memref<1x128xf32, #tpu.memory_space<vmem>>, %arg4: memref<544x128xf32, #tpu.memory_space<vmem>>, %arg5: memref<1x2x128xf32, #tpu.memory_space<vmem>>) attributes {dimension_semantics = [#tpu.dimension_semantics<parallel>], iteration_bounds = array<i64: 1>, scalar_prefetch = 0 : i64, scratch_operands = 0 : i64, tpu.core_type = #tpu.core_type<tc>, window_params = [{transform_indices = @transform_0, window_bounds = array<i64: 544, 64>}, {pipeline_mode = #tpu.pipeline_mode<synchronous>, transform_indices = @transform_1, window_bounds = array<i64: 64, 128>}, {pipeline_mode = #tpu.pipeline_mode<synchronous>, transform_indices = @transform_2, window_bounds = array<i64: 1, 128>}, {transform_indices = @transform_3, window_bounds = array<i64: 544, 128>}, {transform_indices = @transform_4, window_bounds = array<i64: 1, 2, 128>}]} {
    %c0 = arith.constant 0 : index
    %c0_0 = arith.constant 0 : index
    %0 = vector.load %arg1[%c0, %c0_0] : memref<544x64xbf16, #tpu.memory_space<vmem>>, vector<544x64xbf16>
    %c0_1 = arith.constant 0 : index
    %c0_2 = arith.constant 0 : index
    %1 = vector.load %arg2[%c0_1, %c0_2] : memref<64x128xbf16, #tpu.memory_space<vmem>>, vector<64x128xbf16>
    %cst = arith.constant dense<0.000000e+00> : vector<544x128xf32>
    %2 = tpu.matmul %0, %1, %cst {dimension_numbers = #tpu.dot_dimension_numbers<[1], [0], [0], [1], [0, 0, 1, 1], [], []>} : vector<544x64xbf16>, vector<64x128xbf16>, vector<544x128xf32> -> vector<544x128xf32>
    %c0_3 = arith.constant 0 : index
    %c0_4 = arith.constant 0 : index
    %3 = vector.load %arg3[%c0_3, %c0_4] : memref<1x128xf32, #tpu.memory_space<vmem>>, vector<1x128xf32>
    %4 = vector.broadcast %3 : vector<1x128xf32> to vector<544x128xf32>
    %5 = arith.addf %2, %4 : vector<544x128xf32>
    %c0_5 = arith.constant 0 : index
    %c0_6 = arith.constant 0 : index
    %6 = vector.load %arg4[%c0_5, %c0_6] : memref<544x128xf32, #tpu.memory_space<vmem>>, vector<544x128xf32>
    tpu.vector_store %arg4[%c0_5, %c0_6], %5 {strides = array<i32>} : memref<544x128xf32, #tpu.memory_space<vmem>>, vector<544x128xf32>,
    %cst_7 = arith.constant dense<0.000000e+00> : vector<128xf32>
    %7 = vector.multi_reduction <add>, %5, %cst_7 [0] : vector<544x128xf32> to vector<128xf32>
    %8 = vector.shape_cast %7 : vector<128xf32> to vector<1x128xf32>
    %c0_8 = arith.constant 0 : index
    %c0_9 = arith.constant 0 : index
    %c0_10 = arith.constant 0 : index
    %9 = vector.load %arg5[%c0_8, %c0_9, %c0_10] : memref<1x2x128xf32, #tpu.memory_space<vmem>>, vector<1x1x128xf32>
    %10 = vector.shape_cast %9 : vector<1x1x128xf32> to vector<1x128xf32>
    %11 = vector.shape_cast %8 : vector<1x128xf32> to vector<1x1x128xf32>
    tpu.vector_store %arg5[%c0_8, %c0_9, %c0_10], %11 {strides = array<i32>} : memref<1x2x128xf32, #tpu.memory_space<vmem>>, vector<1x1x128xf32>,
    %12 = arith.mulf %5, %5 : vector<544x128xf32>
    %cst_11 = arith.constant dense<0.000000e+00> : vector<128xf32>
    %13 = vector.multi_reduction <add>, %12, %cst_11 [0] : vector<544x128xf32> to vector<128xf32>
    %14 = vector.shape_cast %13 : vector<128xf32> to vector<1x128xf32>
    %c0_12 = arith.constant 0 : index
    %c1 = arith.constant 1 : index
    %c0_13 = arith.constant 0 : index
    %15 = vector.load %arg5[%c0_12, %c1, %c0_13] : memref<1x2x128xf32, #tpu.memory_space<vmem>>, vector<1x1x128xf32>
    %16 = vector.shape_cast %15 : vector<1x1x128xf32> to vector<1x128xf32>
    %17 = vector.shape_cast %14 : vector<1x128xf32> to vector<1x1x128xf32>
    tpu.vector_store %arg5[%c0_12, %c1, %c0_13], %17 {strides = array<i32>} : memref<1x2x128xf32, #tpu.memory_space<vmem>>, vector<1x1x128xf32>,
    return
  }
  func.func @transform_0(%arg0: i32) -> (i32, i32) {
    %c0_i32 = arith.constant 0 : i32
    %c0_i32_0 = arith.constant 0 : i32
    return %arg0, %c0_i32 : i32, i32
  }
  func.func @transform_1(%arg0: i32) -> (i32, i32) {
    %c0_i32 = arith.constant 0 : i32
    %c0_i32_0 = arith.constant 0 : i32
    %c0_i32_1 = arith.constant 0 : i32
    return %c0_i32, %c0_i32_0 : i32, i32
  }
  func.func @transform_2(%arg0: i32) -> (i32, i32) {
    %c0_i32 = arith.constant 0 : i32
    %c0_i32_0 = arith.constant 0 : i32
    %c0_i32_1 = arith.constant 0 : i32
    return %c0_i32, %c0_i32_0 : i32, i32
  }
  func.func @transform_3(%arg0: i32) -> (i32, i32) {
    %c0_i32 = arith.constant 0 : i32
    %c0_i32_0 = arith.constant 0 : i32
    return %arg0, %c0_i32 : i32, i32
  }
  func.func @transform_4(%arg0: i32) -> (i32, i32, i32) {
    %c0_i32 = arith.constant 0 : i32
    %c0_i32_0 = arith.constant 0 : i32
    %c0_i32_1 = arith.constant 0 : i32
    return %arg0, %c0_i32, %c0_i32_0 : i32, i32, i32
  }
}

module attributes {stable_mosaic.version = 11 : i64} {
  func.func @_gcn_tcn1_kernel(%arg0: i32, %arg1: memref<544x128xf32, #tpu.memory_space<vmem>>, %arg2: memref<544x128xf32, #tpu.memory_space<vmem>>, %arg3: memref<1x128xf32, #tpu.memory_space<vmem>>, %arg4: memref<1x128xf32, #tpu.memory_space<vmem>>, %arg5: memref<1x128xf32, #tpu.memory_space<vmem>>, %arg6: memref<128x128xbf16, #tpu.memory_space<vmem>>, %arg7: memref<1x128xf32, #tpu.memory_space<vmem>>, %arg8: memref<544x128xf32, #tpu.memory_space<vmem>>, %arg9: memref<1x2x128xf32, #tpu.memory_space<vmem>>) attributes {dimension_semantics = [#tpu.dimension_semantics<parallel>], iteration_bounds = array<i64: 1>, scalar_prefetch = 0 : i64, scratch_operands = 0 : i64, tpu.core_type = #tpu.core_type<tc>, window_params = [{transform_indices = @transform_0, window_bounds = array<i64: 544, 128>}, {transform_indices = @transform_1, window_bounds = array<i64: 544, 128>}, {pipeline_mode = #tpu.pipeline_mode<synchronous>, transform_indices = @transform_2, window_bounds = array<i64: 1, 128>}, {pipeline_mode = #tpu.pipeline_mode<synchronous>, transform_indices = @transform_3, window_bounds = array<i64: 1, 128>}, {pipeline_mode = #tpu.pipeline_mode<synchronous>, transform_indices = @transform_4, window_bounds = array<i64: 1, 128>}, {pipeline_mode = #tpu.pipeline_mode<synchronous>, transform_indices = @transform_5, window_bounds = array<i64: 128, 128>}, {pipeline_mode = #tpu.pipeline_mode<synchronous>, transform_indices = @transform_6, window_bounds = array<i64: 1, 128>}, {transform_indices = @transform_7, window_bounds = array<i64: 544, 128>}, {transform_indices = @transform_8, window_bounds = array<i64: 1, 2, 128>}]} {
    %c0 = arith.constant 0 : index
    %c0_0 = arith.constant 0 : index
    %0 = vector.load %arg1[%c0, %c0_0] : memref<544x128xf32, #tpu.memory_space<vmem>>, vector<544x128xf32>
    %c0_1 = arith.constant 0 : index
    %c0_2 = arith.constant 0 : index
    %1 = vector.load %arg3[%c0_1, %c0_2] : memref<1x128xf32, #tpu.memory_space<vmem>>, vector<1x128xf32>
    %2 = vector.broadcast %1 : vector<1x128xf32> to vector<544x128xf32>
    %3 = arith.mulf %0, %2 : vector<544x128xf32>
    %c0_3 = arith.constant 0 : index
    %c0_4 = arith.constant 0 : index
    %4 = vector.load %arg2[%c0_3, %c0_4] : memref<544x128xf32, #tpu.memory_space<vmem>>, vector<544x128xf32>
    %c0_5 = arith.constant 0 : index
    %c0_6 = arith.constant 0 : index
    %5 = vector.load %arg4[%c0_5, %c0_6] : memref<1x128xf32, #tpu.memory_space<vmem>>, vector<1x128xf32>
    %6 = vector.broadcast %5 : vector<1x128xf32> to vector<544x128xf32>
    %7 = arith.mulf %4, %6 : vector<544x128xf32>
    %8 = arith.addf %3, %7 : vector<544x128xf32>
    %c0_7 = arith.constant 0 : index
    %c0_8 = arith.constant 0 : index
    %9 = vector.load %arg5[%c0_7, %c0_8] : memref<1x128xf32, #tpu.memory_space<vmem>>, vector<1x128xf32>
    %10 = vector.broadcast %9 : vector<1x128xf32> to vector<544x128xf32>
    %11 = arith.addf %8, %10 : vector<544x128xf32>
    %cst = arith.constant 0.000000e+00 : f32
    %12 = vector.broadcast %cst : f32 to vector<544x128xf32>
    %13 = arith.maximumf %11, %12 : vector<544x128xf32>
    %14 = arith.truncf %13 : vector<544x128xf32> to vector<544x128xbf16>
    %c0_9 = arith.constant 0 : index
    %c0_10 = arith.constant 0 : index
    %15 = vector.load %arg6[%c0_9, %c0_10] : memref<128x128xbf16, #tpu.memory_space<vmem>>, vector<128x128xbf16>
    %cst_11 = arith.constant dense<0.000000e+00> : vector<544x128xf32>
    %16 = tpu.matmul %14, %15, %cst_11 {dimension_numbers = #tpu.dot_dimension_numbers<[1], [0], [0], [1], [0, 0, 1, 1], [], []>} : vector<544x128xbf16>, vector<128x128xbf16>, vector<544x128xf32> -> vector<544x128xf32>
    %c0_12 = arith.constant 0 : index
    %c0_13 = arith.constant 0 : index
    %17 = vector.load %arg7[%c0_12, %c0_13] : memref<1x128xf32, #tpu.memory_space<vmem>>, vector<1x128xf32>
    %18 = vector.broadcast %17 : vector<1x128xf32> to vector<544x128xf32>
    %19 = arith.addf %16, %18 : vector<544x128xf32>
    %c0_14 = arith.constant 0 : index
    %c0_15 = arith.constant 0 : index
    %20 = vector.load %arg8[%c0_14, %c0_15] : memref<544x128xf32, #tpu.memory_space<vmem>>, vector<544x128xf32>
    tpu.vector_store %arg8[%c0_14, %c0_15], %19 {strides = array<i32>} : memref<544x128xf32, #tpu.memory_space<vmem>>, vector<544x128xf32>,
    %cst_16 = arith.constant dense<0.000000e+00> : vector<128xf32>
    %21 = vector.multi_reduction <add>, %19, %cst_16 [0] : vector<544x128xf32> to vector<128xf32>
    %22 = vector.shape_cast %21 : vector<128xf32> to vector<1x128xf32>
    %c0_17 = arith.constant 0 : index
    %c0_18 = arith.constant 0 : index
    %c0_19 = arith.constant 0 : index
    %23 = vector.load %arg9[%c0_17, %c0_18, %c0_19] : memref<1x2x128xf32, #tpu.memory_space<vmem>>, vector<1x1x128xf32>
    %24 = vector.shape_cast %23 : vector<1x1x128xf32> to vector<1x128xf32>
    %25 = vector.shape_cast %22 : vector<1x128xf32> to vector<1x1x128xf32>
    tpu.vector_store %arg9[%c0_17, %c0_18, %c0_19], %25 {strides = array<i32>} : memref<1x2x128xf32, #tpu.memory_space<vmem>>, vector<1x1x128xf32>,
    %26 = arith.mulf %19, %19 : vector<544x128xf32>
    %cst_20 = arith.constant dense<0.000000e+00> : vector<128xf32>
    %27 = vector.multi_reduction <add>, %26, %cst_20 [0] : vector<544x128xf32> to vector<128xf32>
    %28 = vector.shape_cast %27 : vector<128xf32> to vector<1x128xf32>
    %c0_21 = arith.constant 0 : index
    %c1 = arith.constant 1 : index
    %c0_22 = arith.constant 0 : index
    %29 = vector.load %arg9[%c0_21, %c1, %c0_22] : memref<1x2x128xf32, #tpu.memory_space<vmem>>, vector<1x1x128xf32>
    %30 = vector.shape_cast %29 : vector<1x1x128xf32> to vector<1x128xf32>
    %31 = vector.shape_cast %28 : vector<1x128xf32> to vector<1x1x128xf32>
    tpu.vector_store %arg9[%c0_21, %c1, %c0_22], %31 {strides = array<i32>} : memref<1x2x128xf32, #tpu.memory_space<vmem>>, vector<1x1x128xf32>,
    return
  }
  func.func @transform_0(%arg0: i32) -> (i32, i32) {
    %c0_i32 = arith.constant 0 : i32
    %c0_i32_0 = arith.constant 0 : i32
    return %arg0, %c0_i32 : i32, i32
  }
  func.func @transform_1(%arg0: i32) -> (i32, i32) {
    %c0_i32 = arith.constant 0 : i32
    %c0_i32_0 = arith.constant 0 : i32
    return %arg0, %c0_i32 : i32, i32
  }
  func.func @transform_2(%arg0: i32) -> (i32, i32) {
    %c0_i32 = arith.constant 0 : i32
    %c0_i32_0 = arith.constant 0 : i32
    %c0_i32_1 = arith.constant 0 : i32
    return %c0_i32, %c0_i32_0 : i32, i32
  }
  func.func @transform_3(%arg0: i32) -> (i32, i32) {
    %c0_i32 = arith.constant 0 : i32
    %c0_i32_0 = arith.constant 0 : i32
    %c0_i32_1 = arith.constant 0 : i32
    return %c0_i32, %c0_i32_0 : i32, i32
  }
  func.func @transform_4(%arg0: i32) -> (i32, i32) {
    %c0_i32 = arith.constant 0 : i32
    %c0_i32_0 = arith.constant 0 : i32
    %c0_i32_1 = arith.constant 0 : i32
    return %c0_i32, %c0_i32_0 : i32, i32
  }
  func.func @transform_5(%arg0: i32) -> (i32, i32) {
    %c0_i32 = arith.constant 0 : i32
    %c0_i32_0 = arith.constant 0 : i32
    %c0_i32_1 = arith.constant 0 : i32
    return %c0_i32, %c0_i32_0 : i32, i32
  }
  func.func @transform_6(%arg0: i32) -> (i32, i32) {
    %c0_i32 = arith.constant 0 : i32
    %c0_i32_0 = arith.constant 0 : i32
    %c0_i32_1 = arith.constant 0 : i32
    return %c0_i32, %c0_i32_0 : i32, i32
  }
  func.func @transform_7(%arg0: i32) -> (i32, i32) {
    %c0_i32 = arith.constant 0 : i32
    %c0_i32_0 = arith.constant 0 : i32
    return %arg0, %c0_i32 : i32, i32
  }
  func.func @transform_8(%arg0: i32) -> (i32, i32, i32) {
    %c0_i32 = arith.constant 0 : i32
    %c0_i32_0 = arith.constant 0 : i32
    %c0_i32_1 = arith.constant 0 : i32
    return %arg0, %c0_i32, %c0_i32_0 : i32, i32, i32
  }
}

module attributes {stable_mosaic.version = 11 : i64} {
  func.func @_branch_kernel(%arg0: i32, %arg1: memref<272x128xf32, #tpu.memory_space<vmem>>, %arg2: memref<1x128xf32, #tpu.memory_space<vmem>>, %arg3: memref<1x128xf32, #tpu.memory_space<vmem>>, %arg4: memref<1x128xf32, #tpu.memory_space<vmem>>, %arg5: memref<1x128xf32, #tpu.memory_space<vmem>>, %arg6: memref<1x128xf32, #tpu.memory_space<vmem>>, %arg7: memref<10x128x128xbf16, #tpu.memory_space<vmem>>, %arg8: memref<1x128xf32, #tpu.memory_space<vmem>>, %arg9: memref<136x128xf32, #tpu.memory_space<vmem>>, %arg10: memref<1x2x128xf32, #tpu.memory_space<vmem>>) attributes {dimension_semantics = [#tpu.dimension_semantics<parallel>], iteration_bounds = array<i64: 2>, scalar_prefetch = 0 : i64, scratch_operands = 0 : i64, tpu.core_type = #tpu.core_type<tc>, window_params = [{transform_indices = @transform_0, window_bounds = array<i64: 272, 128>}, {pipeline_mode = #tpu.pipeline_mode<synchronous>, transform_indices = @transform_1, window_bounds = array<i64: 1, 128>}, {pipeline_mode = #tpu.pipeline_mode<synchronous>, transform_indices = @transform_2, window_bounds = array<i64: 1, 128>}, {pipeline_mode = #tpu.pipeline_mode<synchronous>, transform_indices = @transform_3, window_bounds = array<i64: 1, 128>}, {pipeline_mode = #tpu.pipeline_mode<synchronous>, transform_indices = @transform_4, window_bounds = array<i64: 1, 128>}, {pipeline_mode = #tpu.pipeline_mode<synchronous>, transform_indices = @transform_5, window_bounds = array<i64: 1, 128>}, {pipeline_mode = #tpu.pipeline_mode<synchronous>, transform_indices = @transform_6, window_bounds = array<i64: 10, 128, 128>}, {pipeline_mode = #tpu.pipeline_mode<synchronous>, transform_indices = @transform_7, window_bounds = array<i64: 1, 128>}, {transform_indices = @transform_8, window_bounds = array<i64: 136, 128>}, {transform_indices = @transform_9, window_bounds = array<i64: 1, 2, 128>}]} {
    %c0 = arith.constant 0 : index
    %c0_0 = arith.constant 0 : index
    %0 = vector.load %arg2[%c0, %c0_0] : memref<1x128xf32, #tpu.memory_space<vmem>>, vector<1x128xf32>
    %c0_1 = arith.constant 0 : index
    %c0_2 = arith.constant 0 : index
    %1 = vector.load %arg3[%c0_1, %c0_2] : memref<1x128xf32, #tpu.memory_space<vmem>>, vector<1x128xf32>
    %c0_3 = arith.constant 0 : index
    %c0_4 = arith.constant 0 : index
    %2 = vector.load %arg4[%c0_3, %c0_4] : memref<1x128xf32, #tpu.memory_space<vmem>>, vector<1x128xf32>
    %cst = arith.constant 0.000000e+00 : f32
    %3 = vector.broadcast %cst : f32 to vector<136x128xf32>
    %c0_5 = arith.constant 0 : index
    %c0_6 = arith.constant 0 : index
    %4 = vector.load %arg8[%c0_5, %c0_6] : memref<1x128xf32, #tpu.memory_space<vmem>>, vector<1x128xf32>
    %5 = vector.broadcast %4 : vector<1x128xf32> to vector<136x128xf32>
    %6 = arith.addf %3, %5 : vector<136x128xf32>
    %c0_7 = arith.constant 0 : index
    %c0_8 = arith.constant 0 : index
    %7 = vector.load %arg9[%c0_7, %c0_8] : memref<136x128xf32, #tpu.memory_space<vmem>>, vector<136x128xf32>
    tpu.vector_store %arg9[%c0_7, %c0_8], %6 {strides = array<i32>} : memref<136x128xf32, #tpu.memory_space<vmem>>, vector<136x128xf32>,
    %c0_9 = arith.constant 0 : index
    %c0_10 = arith.constant 0 : index
    %8 = vector.load %arg1[%c0_9, %c0_10] : memref<272x128xf32, #tpu.memory_space<vmem>>, vector<119x128xf32>
    %9 = vector.broadcast %0 : vector<1x128xf32> to vector<119x128xf32>
    %10 = arith.mulf %8, %9 : vector<119x128xf32>
    %11 = vector.broadcast %1 : vector<1x128xf32> to vector<119x128xf32>
    %12 = arith.addf %10, %11 : vector<119x128xf32>
    %cst_11 = arith.constant 0.000000e+00 : f32
    %13 = vector.broadcast %cst_11 : f32 to vector<119x128xf32>
    %14 = arith.maximumf %12, %13 : vector<119x128xf32>
    %15 = arith.subf %14, %12 : vector<119x128xf32>
    %16 = vector.broadcast %2 : vector<1x128xf32> to vector<119x128xf32>
    %17 = arith.mulf %16, %15 : vector<119x128xf32>
    %18 = arith.addf %12, %17 : vector<119x128xf32>
    %19 = arith.truncf %18 : vector<119x128xf32> to vector<119x128xbf16>
    %c17 = arith.constant 17 : index
    %c0_12 = arith.constant 0 : index
    %20 = vector.load %arg9[%c17, %c0_12] : memref<136x128xf32, #tpu.memory_space<vmem>>, vector<119x128xf32>
    %c0_13 = arith.constant 0 : index
    %c0_14 = arith.constant 0 : index
    %c0_15 = arith.constant 0 : index
    %21 = vector.load %arg7[%c0_13, %c0_14, %c0_15] : memref<10x128x128xbf16, #tpu.memory_space<vmem>>, vector<1x128x128xbf16>
    %22 = vector.shape_cast %21 : vector<1x128x128xbf16> to vector<128x128xbf16>
    %cst_16 = arith.constant dense<0.000000e+00> : vector<119x128xf32>
    %23 = tpu.matmul %19, %22, %cst_16 {dimension_numbers = #tpu.dot_dimension_numbers<[1], [0], [0], [1], [0, 0, 1, 1], [], []>} : vector<119x128xbf16>, vector<128x128xbf16>, vector<119x128xf32> -> vector<119x128xf32>
    %24 = arith.addf %20, %23 : vector<119x128xf32>
    %c17_17 = arith.constant 17 : index
    %c0_18 = arith.constant 0 : index
    %25 = vector.load %arg9[%c17_17, %c0_18] : memref<136x128xf32, #tpu.memory_space<vmem>>, vector<119x128xf32>
    tpu.vector_store %arg9[%c17_17, %c0_18], %24 {strides = array<i32>} : memref<136x128xf32, #tpu.memory_space<vmem>>, vector<119x128xf32>,
    %c136 = arith.constant 136 : index
    %c0_19 = arith.constant 0 : index
    %26 = vector.load %arg1[%c136, %c0_19] : memref<272x128xf32, #tpu.memory_space<vmem>>, vector<119x128xf32>
    %27 = vector.broadcast %0 : vector<1x128xf32> to vector<119x128xf32>
    %28 = arith.mulf %26, %27 : vector<119x128xf32>
    %29 = vector.broadcast %1 : vector<1x128xf32> to vector<119x128xf32>
    %30 = arith.addf %28, %29 : vector<119x128xf32>
    %cst_20 = arith.constant 0.000000e+00 : f32
    %31 = vector.broadcast %cst_20 : f32 to vector<119x128xf32>
    %32 = arith.maximumf %30, %31 : vector<119x128xf32>
    %33 = arith.subf %32, %30 : vector<119x128xf32>
    %34 = vector.broadcast %2 : vector<1x128xf32> to vector<119x128xf32>
    %35 = arith.mulf %34, %33 : vector<119x128xf32>
    %36 = arith.addf %30, %35 : vector<119x128xf32>
    %37 = arith.truncf %36 : vector<119x128xf32> to vector<119x128xbf16>
    %c17_21 = arith.constant 17 : index
    %c0_22 = arith.constant 0 : index
    %38 = vector.load %arg9[%c17_21, %c0_22] : memref<136x128xf32, #tpu.memory_space<vmem>>, vector<119x128xf32>
    %c1 = arith.constant 1 : index
    %c0_23 = arith.constant 0 : index
    %c0_24 = arith.constant 0 : index
    %39 = vector.load %arg7[%c1, %c0_23, %c0_24] : memref<10x128x128xbf16, #tpu.memory_space<vmem>>, vector<1x128x128xbf16>
    %40 = vector.shape_cast %39 : vector<1x128x128xbf16> to vector<128x128xbf16>
    %cst_25 = arith.constant dense<0.000000e+00> : vector<119x128xf32>
    %41 = tpu.matmul %37, %40, %cst_25 {dimension_numbers = #tpu.dot_dimension_numbers<[1], [0], [0], [1], [0, 0, 1, 1], [], []>} : vector<119x128xbf16>, vector<128x128xbf16>, vector<119x128xf32> -> vector<119x128xf32>
    %42 = arith.addf %38, %41 : vector<119x128xf32>
    %c17_26 = arith.constant 17 : index
    %c0_27 = arith.constant 0 : index
    %43 = vector.load %arg9[%c17_26, %c0_27] : memref<136x128xf32, #tpu.memory_space<vmem>>, vector<119x128xf32>
    tpu.vector_store %arg9[%c17_26, %c0_27], %42 {strides = array<i32>} : memref<136x128xf32, #tpu.memory_space<vmem>>, vector<119x128xf32>,
    %c0_28 = arith.constant 0 : index
    %c0_29 = arith.constant 0 : index
    %44 = vector.load %arg1[%c0_28, %c0_29] : memref<272x128xf32, #tpu.memory_space<vmem>>, vector<136x128xf32>
    %45 = vector.broadcast %0 : vector<1x128xf32> to vector<136x128xf32>
    %46 = arith.mulf %44, %45 : vector<136x128xf32>
    %47 = vector.broadcast %1 : vector<1x128xf32> to vector<136x128xf32>
    %48 = arith.addf %46, %47 : vector<136x128xf32>
    %cst_30 = arith.constant 0.000000e+00 : f32
    %49 = vector.broadcast %cst_30 : f32 to vector<136x128xf32>
    %50 = arith.maximumf %48, %49 : vector<136x128xf32>
    %51 = arith.subf %50, %48 : vector<136x128xf32>
    %52 = vector.broadcast %2 : vector<1x128xf32> to vector<136x128xf32>
    %53 = arith.mulf %52, %51 : vector<136x128xf32>
    %54 = arith.addf %48, %53 : vector<136x128xf32>
    %55 = arith.truncf %54 : vector<136x128xf32> to vector<136x128xbf16>
    %c0_31 = arith.constant 0 : index
    %c0_32 = arith.constant 0 : index
    %56 = vector.load %arg9[%c0_31, %c0_32] : memref<136x128xf32, #tpu.memory_space<vmem>>, vector<136x128xf32>
    %c2 = arith.constant 2 : index
    %c0_33 = arith.constant 0 : index
    %c0_34 = arith.constant 0 : index
    %57 = vector.load %arg7[%c2, %c0_33, %c0_34] : memref<10x128x128xbf16, #tpu.memory_space<vmem>>, vector<1x128x128xbf16>
    %58 = vector.shape_cast %57 : vector<1x128x128xbf16> to vector<128x128xbf16>
    %cst_35 = arith.constant dense<0.000000e+00> : vector<136x128xf32>
    %59 = tpu.matmul %55, %58, %cst_35 {dimension_numbers = #tpu.dot_dimension_numbers<[1], [0], [0], [1], [0, 0, 1, 1], [], []>} : vector<136x128xbf16>, vector<128x128xbf16>, vector<136x128xf32> -> vector<136x128xf32>
    %60 = arith.addf %56, %59 : vector<136x128xf32>
    %c0_36 = arith.constant 0 : index
    %c0_37 = arith.constant 0 : index
    %61 = vector.load %arg9[%c0_36, %c0_37] : memref<136x128xf32, #tpu.memory_space<vmem>>, vector<136x128xf32>
    tpu.vector_store %arg9[%c0_36, %c0_37], %60 {strides = array<i32>} : memref<136x128xf32, #tpu.memory_space<vmem>>, vector<136x128xf32>,
    %c136_38 = arith.constant 136 : index
    %c0_39 = arith.constant 0 : index
    %62 = vector.load %arg1[%c136_38, %c0_39] : memref<272x128xf32, #tpu.memory_space<vmem>>, vector<136x128xf32>
    %63 = vector.broadcast %0 : vector<1x128xf32> to vector<136x128xf32>
    %64 = arith.mulf %62, %63 : vector<136x128xf32>
    %65 = vector.broadcast %1 : vector<1x128xf32> to vector<136x128xf32>
    %66 = arith.addf %64, %65 : vector<136x128xf32>
    %cst_40 = arith.constant 0.000000e+00 : f32
    %67 = vector.broadcast %cst_40 : f32 to vector<136x128xf32>
    %68 = arith.maximumf %66, %67 : vector<136x128xf32>
    %69 = arith.subf %68, %66 : vector<136x128xf32>
    %70 = vector.broadcast %2 : vector<1x128xf32> to vector<136x128xf32>
    %71 = arith.mulf %70, %69 : vector<136x128xf32>
    %72 = arith.addf %66, %71 : vector<136x128xf32>
    %73 = arith.truncf %72 : vector<136x128xf32> to vector<136x128xbf16>
    %c0_41 = arith.constant 0 : index
    %c0_42 = arith.constant 0 : index
    %74 = vector.load %arg9[%c0_41, %c0_42] : memref<136x128xf32, #tpu.memory_space<vmem>>, vector<136x128xf32>
    %c3 = arith.constant 3 : index
    %c0_43 = arith.constant 0 : index
    %c0_44 = arith.constant 0 : index
    %75 = vector.load %arg7[%c3, %c0_43, %c0_44] : memref<10x128x128xbf16, #tpu.memory_space<vmem>>, vector<1x128x128xbf16>
    %76 = vector.shape_cast %75 : vector<1x128x128xbf16> to vector<128x128xbf16>
    %cst_45 = arith.constant dense<0.000000e+00> : vector<136x128xf32>
    %77 = tpu.matmul %73, %76, %cst_45 {dimension_numbers = #tpu.dot_dimension_numbers<[1], [0], [0], [1], [0, 0, 1, 1], [], []>} : vector<136x128xbf16>, vector<128x128xbf16>, vector<136x128xf32> -> vector<136x128xf32>
    %78 = arith.addf %74, %77 : vector<136x128xf32>
    %c0_46 = arith.constant 0 : index
    %c0_47 = arith.constant 0 : index
    %79 = vector.load %arg9[%c0_46, %c0_47] : memref<136x128xf32, #tpu.memory_space<vmem>>, vector<136x128xf32>
    tpu.vector_store %arg9[%c0_46, %c0_47], %78 {strides = array<i32>} : memref<136x128xf32, #tpu.memory_space<vmem>>, vector<136x128xf32>,
    %c17_48 = arith.constant 17 : index
    %c0_49 = arith.constant 0 : index
    %80 = vector.load %arg1[%c17_48, %c0_49] : memref<272x128xf32, #tpu.memory_space<vmem>>, vector<119x128xf32>
    %81 = vector.broadcast %0 : vector<1x128xf32> to vector<119x128xf32>
    %82 = arith.mulf %80, %81 : vector<119x128xf32>
    %83 = vector.broadcast %1 : vector<1x128xf32> to vector<119x128xf32>
    %84 = arith.addf %82, %83 : vector<119x128xf32>
    %cst_50 = arith.constant 0.000000e+00 : f32
    %85 = vector.broadcast %cst_50 : f32 to vector<119x128xf32>
    %86 = arith.maximumf %84, %85 : vector<119x128xf32>
    %87 = arith.subf %86, %84 : vector<119x128xf32>
    %88 = vector.broadcast %2 : vector<1x128xf32> to vector<119x128xf32>
    %89 = arith.mulf %88, %87 : vector<119x128xf32>
    %90 = arith.addf %84, %89 : vector<119x128xf32>
    %91 = arith.truncf %90 : vector<119x128xf32> to vector<119x128xbf16>
    %c0_51 = arith.constant 0 : index
    %c0_52 = arith.constant 0 : index
    %92 = vector.load %arg9[%c0_51, %c0_52] : memref<136x128xf32, #tpu.memory_space<vmem>>, vector<119x128xf32>
    %c4 = arith.constant 4 : index
    %c0_53 = arith.constant 0 : index
    %c0_54 = arith.constant 0 : index
    %93 = vector.load %arg7[%c4, %c0_53, %c0_54] : memref<10x128x128xbf16, #tpu.memory_space<vmem>>, vector<1x128x128xbf16>
    %94 = vector.shape_cast %93 : vector<1x128x128xbf16> to vector<128x128xbf16>
    %cst_55 = arith.constant dense<0.000000e+00> : vector<119x128xf32>
    %95 = tpu.matmul %91, %94, %cst_55 {dimension_numbers = #tpu.dot_dimension_numbers<[1], [0], [0], [1], [0, 0, 1, 1], [], []>} : vector<119x128xbf16>, vector<128x128xbf16>, vector<119x128xf32> -> vector<119x128xf32>
    %96 = arith.addf %92, %95 : vector<119x128xf32>
    %c0_56 = arith.constant 0 : index
    %c0_57 = arith.constant 0 : index
    %97 = vector.load %arg9[%c0_56, %c0_57] : memref<136x128xf32, #tpu.memory_space<vmem>>, vector<119x128xf32>
    tpu.vector_store %arg9[%c0_56, %c0_57], %96 {strides = array<i32>} : memref<136x128xf32, #tpu.memory_space<vmem>>, vector<119x128xf32>,
    %c0_58 = arith.constant 0 : index
    %c0_59 = arith.constant 0 : index
    %98 = vector.load %arg1[%c0_58, %c0_59] : memref<272x128xf32, #tpu.memory_space<vmem>>, vector<102x128xf32>
    %99 = vector.broadcast %0 : vector<1x128xf32> to vector<102x128xf32>
    %100 = arith.mulf %98, %99 : vector<102x128xf32>
    %101 = vector.broadcast %1 : vector<1x128xf32> to vector<102x128xf32>
    %102 = arith.addf %100, %101 : vector<102x128xf32>
    %cst_60 = arith.constant 0.000000e+00 : f32
    %103 = vector.broadcast %cst_60 : f32 to vector<102x128xf32>
    %104 = arith.maximumf %102, %103 : vector<102x128xf32>
    %105 = arith.subf %104, %102 : vector<102x128xf32>
    %106 = vector.broadcast %2 : vector<1x128xf32> to vector<102x128xf32>
    %107 = arith.mulf %106, %105 : vector<102x128xf32>
    %108 = arith.addf %102, %107 : vector<102x128xf32>
    %109 = arith.truncf %108 : vector<102x128xf32> to vector<102x128xbf16>
    %c34 = arith.constant 34 : index
    %c0_61 = arith.constant 0 : index
    %110 = vector.load %arg9[%c34, %c0_61] : memref<136x128xf32, #tpu.memory_space<vmem>>, vector<102x128xf32>
    %c5 = arith.constant 5 : index
    %c0_62 = arith.constant 0 : index
    %c0_63 = arith.constant 0 : index
    %111 = vector.load %arg7[%c5, %c0_62, %c0_63] : memref<10x128x128xbf16, #tpu.memory_space<vmem>>, vector<1x128x128xbf16>
    %112 = vector.shape_cast %111 : vector<1x128x128xbf16> to vector<128x128xbf16>
    %cst_64 = arith.constant dense<0.000000e+00> : vector<102x128xf32>
    %113 = tpu.matmul %109, %112, %cst_64 {dimension_numbers = #tpu.dot_dimension_numbers<[1], [0], [0], [1], [0, 0, 1, 1], [], []>} : vector<102x128xbf16>, vector<128x128xbf16>, vector<102x128xf32> -> vector<102x128xf32>
    %114 = arith.addf %110, %113 : vector<102x128xf32>
    %c34_65 = arith.constant 34 : index
    %c0_66 = arith.constant 0 : index
    %115 = vector.load %arg9[%c34_65, %c0_66] : memref<136x128xf32, #tpu.memory_space<vmem>>, vector<102x128xf32>
    tpu.vector_store %arg9[%c34_65, %c0_66], %114 {strides = array<i32>} : memref<136x128xf32, #tpu.memory_space<vmem>>, vector<102x128xf32>,
    %c0_67 = arith.constant 0 : index
    %c0_68 = arith.constant 0 : index
    %116 = vector.load %arg1[%c0_67, %c0_68] : memref<272x128xf32, #tpu.memory_space<vmem>>, vector<119x128xf32>
    %117 = vector.broadcast %0 : vector<1x128xf32> to vector<119x128xf32>
    %118 = arith.mulf %116, %117 : vector<119x128xf32>
    %119 = vector.broadcast %1 : vector<1x128xf32> to vector<119x128xf32>
    %120 = arith.addf %118, %119 : vector<119x128xf32>
    %cst_69 = arith.constant 0.000000e+00 : f32
    %121 = vector.broadcast %cst_69 : f32 to vector<119x128xf32>
    %122 = arith.maximumf %120, %121 : vector<119x128xf32>
    %123 = arith.subf %122, %120 : vector<119x128xf32>
    %124 = vector.broadcast %2 : vector<1x128xf32> to vector<119x128xf32>
    %125 = arith.mulf %124, %123 : vector<119x128xf32>
    %126 = arith.addf %120, %125 : vector<119x128xf32>
    %127 = arith.truncf %126 : vector<119x128xf32> to vector<119x128xbf16>
    %c17_70 = arith.constant 17 : index
    %c0_71 = arith.constant 0 : index
    %128 = vector.load %arg9[%c17_70, %c0_71] : memref<136x128xf32, #tpu.memory_space<vmem>>, vector<119x128xf32>
    %c6 = arith.constant 6 : index
    %c0_72 = arith.constant 0 : index
    %c0_73 = arith.constant 0 : index
    %129 = vector.load %arg7[%c6, %c0_72, %c0_73] : memref<10x128x128xbf16, #tpu.memory_space<vmem>>, vector<1x128x128xbf16>
    %130 = vector.shape_cast %129 : vector<1x128x128xbf16> to vector<128x128xbf16>
    %cst_74 = arith.constant dense<0.000000e+00> : vector<119x128xf32>
    %131 = tpu.matmul %127, %130, %cst_74 {dimension_numbers = #tpu.dot_dimension_numbers<[1], [0], [0], [1], [0, 0, 1, 1], [], []>} : vector<119x128xbf16>, vector<128x128xbf16>, vector<119x128xf32> -> vector<119x128xf32>
    %132 = arith.addf %128, %131 : vector<119x128xf32>
    %c17_75 = arith.constant 17 : index
    %c0_76 = arith.constant 0 : index
    %133 = vector.load %arg9[%c17_75, %c0_76] : memref<136x128xf32, #tpu.memory_space<vmem>>, vector<119x128xf32>
    tpu.vector_store %arg9[%c17_75, %c0_76], %132 {strides = array<i32>} : memref<136x128xf32, #tpu.memory_space<vmem>>, vector<119x128xf32>,
    %c0_77 = arith.constant 0 : index
    %c0_78 = arith.constant 0 : index
    %134 = vector.load %arg1[%c0_77, %c0_78] : memref<272x128xf32, #tpu.memory_space<vmem>>, vector<136x128xf32>
    %135 = vector.broadcast %0 : vector<1x128xf32> to vector<136x128xf32>
    %136 = arith.mulf %134, %135 : vector<136x128xf32>
    %137 = vector.broadcast %1 : vector<1x128xf32> to vector<136x128xf32>
    %138 = arith.addf %136, %137 : vector<136x128xf32>
    %cst_79 = arith.constant 0.000000e+00 : f32
    %139 = vector.broadcast %cst_79 : f32 to vector<136x128xf32>
    %140 = arith.maximumf %138, %139 : vector<136x128xf32>
    %141 = arith.subf %140, %138 : vector<136x128xf32>
    %142 = vector.broadcast %2 : vector<1x128xf32> to vector<136x128xf32>
    %143 = arith.mulf %142, %141 : vector<136x128xf32>
    %144 = arith.addf %138, %143 : vector<136x128xf32>
    %145 = arith.truncf %144 : vector<136x128xf32> to vector<136x128xbf16>
    %c0_80 = arith.constant 0 : index
    %c0_81 = arith.constant 0 : index
    %146 = vector.load %arg9[%c0_80, %c0_81] : memref<136x128xf32, #tpu.memory_space<vmem>>, vector<136x128xf32>
    %c7 = arith.constant 7 : index
    %c0_82 = arith.constant 0 : index
    %c0_83 = arith.constant 0 : index
    %147 = vector.load %arg7[%c7, %c0_82, %c0_83] : memref<10x128x128xbf16, #tpu.memory_space<vmem>>, vector<1x128x128xbf16>
    %148 = vector.shape_cast %147 : vector<1x128x128xbf16> to vector<128x128xbf16>
    %cst_84 = arith.constant dense<0.000000e+00> : vector<136x128xf32>
    %149 = tpu.matmul %145, %148, %cst_84 {dimension_numbers = #tpu.dot_dimension_numbers<[1], [0], [0], [1], [0, 0, 1, 1], [], []>} : vector<136x128xbf16>, vector<128x128xbf16>, vector<136x128xf32> -> vector<136x128xf32>
    %150 = arith.addf %146, %149 : vector<136x128xf32>
    %c0_85 = arith.constant 0 : index
    %c0_86 = arith.constant 0 : index
    %151 = vector.load %arg9[%c0_85, %c0_86] : memref<136x128xf32, #tpu.memory_space<vmem>>, vector<136x128xf32>
    tpu.vector_store %arg9[%c0_85, %c0_86], %150 {strides = array<i32>} : memref<136x128xf32, #tpu.memory_space<vmem>>, vector<136x128xf32>,
    %c17_87 = arith.constant 17 : index
    %c0_88 = arith.constant 0 : index
    %152 = vector.load %arg1[%c17_87, %c0_88] : memref<272x128xf32, #tpu.memory_space<vmem>>, vector<119x128xf32>
    %153 = vector.broadcast %0 : vector<1x128xf32> to vector<119x128xf32>
    %154 = arith.mulf %152, %153 : vector<119x128xf32>
    %155 = vector.broadcast %1 : vector<1x128xf32> to vector<119x128xf32>
    %156 = arith.addf %154, %155 : vector<119x128xf32>
    %cst_89 = arith.constant 0.000000e+00 : f32
    %157 = vector.broadcast %cst_89 : f32 to vector<119x128xf32>
    %158 = arith.maximumf %156, %157 : vector<119x128xf32>
    %159 = arith.subf %158, %156 : vector<119x128xf32>
    %160 = vector.broadcast %2 : vector<1x128xf32> to vector<119x128xf32>
    %161 = arith.mulf %160, %159 : vector<119x128xf32>
    %162 = arith.addf %156, %161 : vector<119x128xf32>
    %163 = arith.truncf %162 : vector<119x128xf32> to vector<119x128xbf16>
    %c0_90 = arith.constant 0 : index
    %c0_91 = arith.constant 0 : index
    %164 = vector.load %arg9[%c0_90, %c0_91] : memref<136x128xf32, #tpu.memory_space<vmem>>, vector<119x128xf32>
    %c8 = arith.constant 8 : index
    %c0_92 = arith.constant 0 : index
    %c0_93 = arith.constant 0 : index
    %165 = vector.load %arg7[%c8, %c0_92, %c0_93] : memref<10x128x128xbf16, #tpu.memory_space<vmem>>, vector<1x128x128xbf16>
    %166 = vector.shape_cast %165 : vector<1x128x128xbf16> to vector<128x128xbf16>
    %cst_94 = arith.constant dense<0.000000e+00> : vector<119x128xf32>
    %167 = tpu.matmul %163, %166, %cst_94 {dimension_numbers = #tpu.dot_dimension_numbers<[1], [0], [0], [1], [0, 0, 1, 1], [], []>} : vector<119x128xbf16>, vector<128x128xbf16>, vector<119x128xf32> -> vector<119x128xf32>
    %168 = arith.addf %164, %167 : vector<119x128xf32>
    %c0_95 = arith.constant 0 : index
    %c0_96 = arith.constant 0 : index
    %169 = vector.load %arg9[%c0_95, %c0_96] : memref<136x128xf32, #tpu.memory_space<vmem>>, vector<119x128xf32>
    tpu.vector_store %arg9[%c0_95, %c0_96], %168 {strides = array<i32>} : memref<136x128xf32, #tpu.memory_space<vmem>>, vector<119x128xf32>,
    %c34_97 = arith.constant 34 : index
    %c0_98 = arith.constant 0 : index
    %170 = vector.load %arg1[%c34_97, %c0_98] : memref<272x128xf32, #tpu.memory_space<vmem>>, vector<102x128xf32>
    %171 = vector.broadcast %0 : vector<1x128xf32> to vector<102x128xf32>
    %172 = arith.mulf %170, %171 : vector<102x128xf32>
    %173 = vector.broadcast %1 : vector<1x128xf32> to vector<102x128xf32>
    %174 = arith.addf %172, %173 : vector<102x128xf32>
    %cst_99 = arith.constant 0.000000e+00 : f32
    %175 = vector.broadcast %cst_99 : f32 to vector<102x128xf32>
    %176 = arith.maximumf %174, %175 : vector<102x128xf32>
    %177 = arith.subf %176, %174 : vector<102x128xf32>
    %178 = vector.broadcast %2 : vector<1x128xf32> to vector<102x128xf32>
    %179 = arith.mulf %178, %177 : vector<102x128xf32>
    %180 = arith.addf %174, %179 : vector<102x128xf32>
    %181 = arith.truncf %180 : vector<102x128xf32> to vector<102x128xbf16>
    %c0_100 = arith.constant 0 : index
    %c0_101 = arith.constant 0 : index
    %182 = vector.load %arg9[%c0_100, %c0_101] : memref<136x128xf32, #tpu.memory_space<vmem>>, vector<102x128xf32>
    %c9 = arith.constant 9 : index
    %c0_102 = arith.constant 0 : index
    %c0_103 = arith.constant 0 : index
    %183 = vector.load %arg7[%c9, %c0_102, %c0_103] : memref<10x128x128xbf16, #tpu.memory_space<vmem>>, vector<1x128x128xbf16>
    %184 = vector.shape_cast %183 : vector<1x128x128xbf16> to vector<128x128xbf16>
    %cst_104 = arith.constant dense<0.000000e+00> : vector<102x128xf32>
    %185 = tpu.matmul %181, %184, %cst_104 {dimension_numbers = #tpu.dot_dimension_numbers<[1], [0], [0], [1], [0, 0, 1, 1], [], []>} : vector<102x128xbf16>, vector<128x128xbf16>, vector<102x128xf32> -> vector<102x128xf32>
    %186 = arith.addf %182, %185 : vector<102x128xf32>
    %c0_105 = arith.constant 0 : index
    %c0_106 = arith.constant 0 : index
    %187 = vector.load %arg9[%c0_105, %c0_106] : memref<136x128xf32, #tpu.memory_space<vmem>>, vector<102x128xf32>
    tpu.vector_store %arg9[%c0_105, %c0_106], %186 {strides = array<i32>} : memref<136x128xf32, #tpu.memory_space<vmem>>, vector<102x128xf32>,
    %c0_107 = arith.constant 0 : index
    %c0_108 = arith.constant 0 : index
    %188 = vector.load %arg5[%c0_107, %c0_108] : memref<1x128xf32, #tpu.memory_space<vmem>>, vector<1x128xf32>
    %c0_109 = arith.constant 0 : index
    %c0_110 = arith.constant 0 : index
    %189 = vector.load %arg6[%c0_109, %c0_110] : memref<1x128xf32, #tpu.memory_space<vmem>>, vector<1x128xf32>
    %c0_111 = arith.constant 0 : index
    %c0_112 = arith.constant 0 : index
    %190 = vector.load %arg1[%c0_111, %c0_112] : memref<272x128xf32, #tpu.memory_space<vmem>>, vector<136x128xf32>
    %191 = vector.broadcast %0 : vector<1x128xf32> to vector<136x128xf32>
    %192 = arith.mulf %190, %191 : vector<136x128xf32>
    %193 = vector.broadcast %1 : vector<1x128xf32> to vector<136x128xf32>
    %194 = arith.addf %192, %193 : vector<136x128xf32>
    %cst_113 = arith.constant 0.000000e+00 : f32
    %195 = vector.broadcast %cst_113 : f32 to vector<136x128xf32>
    %196 = arith.maximumf %194, %195 : vector<136x128xf32>
    %197 = arith.subf %196, %194 : vector<136x128xf32>
    %198 = vector.broadcast %2 : vector<1x128xf32> to vector<136x128xf32>
    %199 = arith.mulf %198, %197 : vector<136x128xf32>
    %200 = arith.addf %194, %199 : vector<136x128xf32>
    %c0_114 = arith.constant 0 : index
    %c0_115 = arith.constant 0 : index
    %201 = vector.load %arg9[%c0_114, %c0_115] : memref<136x128xf32, #tpu.memory_space<vmem>>, vector<136x128xf32>
    %202 = arith.addf %188, %189 : vector<1x128xf32>
    %203 = vector.broadcast %202 : vector<1x128xf32> to vector<136x128xf32>
    %204 = arith.mulf %200, %203 : vector<136x128xf32>
    %205 = arith.addf %201, %204 : vector<136x128xf32>
    %c0_116 = arith.constant 0 : index
    %c0_117 = arith.constant 0 : index
    %206 = vector.load %arg9[%c0_116, %c0_117] : memref<136x128xf32, #tpu.memory_space<vmem>>, vector<136x128xf32>
    tpu.vector_store %arg9[%c0_116, %c0_117], %205 {strides = array<i32>} : memref<136x128xf32, #tpu.memory_space<vmem>>, vector<136x128xf32>,
    %c136_118 = arith.constant 136 : index
    %c0_119 = arith.constant 0 : index
    %207 = vector.load %arg1[%c136_118, %c0_119] : memref<272x128xf32, #tpu.memory_space<vmem>>, vector<119x128xf32>
    %208 = vector.broadcast %0 : vector<1x128xf32> to vector<119x128xf32>
    %209 = arith.mulf %207, %208 : vector<119x128xf32>
    %210 = vector.broadcast %1 : vector<1x128xf32> to vector<119x128xf32>
    %211 = arith.addf %209, %210 : vector<119x128xf32>
    %cst_120 = arith.constant 0.000000e+00 : f32
    %212 = vector.broadcast %cst_120 : f32 to vector<119x128xf32>
    %213 = arith.maximumf %211, %212 : vector<119x128xf32>
    %214 = arith.subf %213, %211 : vector<119x128xf32>
    %215 = vector.broadcast %2 : vector<1x128xf32> to vector<119x128xf32>
    %216 = arith.mulf %215, %214 : vector<119x128xf32>
    %217 = arith.addf %211, %216 : vector<119x128xf32>
    %c17_121 = arith.constant 17 : index
    %c0_122 = arith.constant 0 : index
    %218 = vector.load %arg9[%c17_121, %c0_122] : memref<136x128xf32, #tpu.memory_space<vmem>>, vector<119x128xf32>
    %219 = vector.broadcast %188 : vector<1x128xf32> to vector<119x128xf32>
    %220 = arith.mulf %217, %219 : vector<119x128xf32>
    %cst_123 = arith.constant 1.000000e+00 : f32
    %221 = vector.broadcast %cst_123 : f32 to vector<1x128xf32>
    %222 = arith.subf %221, %188 : vector<1x128xf32>
    %223 = vector.broadcast %222 : vector<1x128xf32> to vector<119x128xf32>
    %224 = arith.mulf %218, %223 : vector<119x128xf32>
    %225 = arith.addf %220, %224 : vector<119x128xf32>
    %226 = arith.maximumf %218, %225 : vector<119x128xf32>
    %c17_124 = arith.constant 17 : index
    %c0_125 = arith.constant 0 : index
    %227 = vector.load %arg9[%c17_124, %c0_125] : memref<136x128xf32, #tpu.memory_space<vmem>>, vector<119x128xf32>
    tpu.vector_store %arg9[%c17_124, %c0_125], %226 {strides = array<i32>} : memref<136x128xf32, #tpu.memory_space<vmem>>, vector<119x128xf32>,
    %c136_126 = arith.constant 136 : index
    %c0_127 = arith.constant 0 : index
    %228 = vector.load %arg1[%c136_126, %c0_127] : memref<272x128xf32, #tpu.memory_space<vmem>>, vector<136x128xf32>
    %229 = vector.broadcast %0 : vector<1x128xf32> to vector<136x128xf32>
    %230 = arith.mulf %228, %229 : vector<136x128xf32>
    %231 = vector.broadcast %1 : vector<1x128xf32> to vector<136x128xf32>
    %232 = arith.addf %230, %231 : vector<136x128xf32>
    %cst_128 = arith.constant 0.000000e+00 : f32
    %233 = vector.broadcast %cst_128 : f32 to vector<136x128xf32>
    %234 = arith.maximumf %232, %233 : vector<136x128xf32>
    %235 = arith.subf %234, %232 : vector<136x128xf32>
    %236 = vector.broadcast %2 : vector<1x128xf32> to vector<136x128xf32>
    %237 = arith.mulf %236, %235 : vector<136x128xf32>
    %238 = arith.addf %232, %237 : vector<136x128xf32>
    %c0_129 = arith.constant 0 : index
    %c0_130 = arith.constant 0 : index
    %239 = vector.load %arg9[%c0_129, %c0_130] : memref<136x128xf32, #tpu.memory_space<vmem>>, vector<136x128xf32>
    %240 = vector.broadcast %188 : vector<1x128xf32> to vector<136x128xf32>
    %241 = arith.mulf %238, %240 : vector<136x128xf32>
    %cst_131 = arith.constant 1.000000e+00 : f32
    %242 = vector.broadcast %cst_131 : f32 to vector<1x128xf32>
    %243 = arith.subf %242, %188 : vector<1x128xf32>
    %244 = vector.broadcast %243 : vector<1x128xf32> to vector<136x128xf32>
    %245 = arith.mulf %239, %244 : vector<136x128xf32>
    %246 = arith.addf %241, %245 : vector<136x128xf32>
    %247 = arith.maximumf %239, %246 : vector<136x128xf32>
    %c0_132 = arith.constant 0 : index
    %c0_133 = arith.constant 0 : index
    %248 = vector.load %arg9[%c0_132, %c0_133] : memref<136x128xf32, #tpu.memory_space<vmem>>, vector<136x128xf32>
    tpu.vector_store %arg9[%c0_132, %c0_133], %247 {strides = array<i32>} : memref<136x128xf32, #tpu.memory_space<vmem>>, vector<136x128xf32>,
    %c0_134 = arith.constant 0 : index
    %c0_135 = arith.constant 0 : index
    %249 = vector.load %arg9[%c0_134, %c0_135] : memref<136x128xf32, #tpu.memory_space<vmem>>, vector<136x128xf32>
    %cst_136 = arith.constant dense<0.000000e+00> : vector<128xf32>
    %250 = vector.multi_reduction <add>, %249, %cst_136 [0] : vector<136x128xf32> to vector<128xf32>
    %251 = vector.shape_cast %250 : vector<128xf32> to vector<1x128xf32>
    %c0_137 = arith.constant 0 : index
    %c0_138 = arith.constant 0 : index
    %c0_139 = arith.constant 0 : index
    %252 = vector.load %arg10[%c0_137, %c0_138, %c0_139] : memref<1x2x128xf32, #tpu.memory_space<vmem>>, vector<1x1x128xf32>
    %253 = vector.shape_cast %252 : vector<1x1x128xf32> to vector<1x128xf32>
    %254 = vector.shape_cast %251 : vector<1x128xf32> to vector<1x1x128xf32>
    tpu.vector_store %arg10[%c0_137, %c0_138, %c0_139], %254 {strides = array<i32>} : memref<1x2x128xf32, #tpu.memory_space<vmem>>, vector<1x1x128xf32>,
    %255 = arith.mulf %249, %249 : vector<136x128xf32>
    %cst_140 = arith.constant dense<0.000000e+00> : vector<128xf32>
    %256 = vector.multi_reduction <add>, %255, %cst_140 [0] : vector<136x128xf32> to vector<128xf32>
    %257 = vector.shape_cast %256 : vector<128xf32> to vector<1x128xf32>
    %c0_141 = arith.constant 0 : index
    %c1_142 = arith.constant 1 : index
    %c0_143 = arith.constant 0 : index
    %258 = vector.load %arg10[%c0_141, %c1_142, %c0_143] : memref<1x2x128xf32, #tpu.memory_space<vmem>>, vector<1x1x128xf32>
    %259 = vector.shape_cast %258 : vector<1x1x128xf32> to vector<1x128xf32>
    %260 = vector.shape_cast %257 : vector<1x128xf32> to vector<1x1x128xf32>
    tpu.vector_store %arg10[%c0_141, %c1_142, %c0_143], %260 {strides = array<i32>} : memref<1x2x128xf32, #tpu.memory_space<vmem>>, vector<1x1x128xf32>,
    return
  }
  func.func @transform_0(%arg0: i32) -> (i32, i32) {
    %c0_i32 = arith.constant 0 : i32
    %c0_i32_0 = arith.constant 0 : i32
    return %arg0, %c0_i32 : i32, i32
  }
  func.func @transform_1(%arg0: i32) -> (i32, i32) {
    %c0_i32 = arith.constant 0 : i32
    %c0_i32_0 = arith.constant 0 : i32
    %c0_i32_1 = arith.constant 0 : i32
    return %c0_i32, %c0_i32_0 : i32, i32
  }
  func.func @transform_2(%arg0: i32) -> (i32, i32) {
    %c0_i32 = arith.constant 0 : i32
    %c0_i32_0 = arith.constant 0 : i32
    %c0_i32_1 = arith.constant 0 : i32
    return %c0_i32, %c0_i32_0 : i32, i32
  }
  func.func @transform_3(%arg0: i32) -> (i32, i32) {
    %c0_i32 = arith.constant 0 : i32
    %c0_i32_0 = arith.constant 0 : i32
    %c0_i32_1 = arith.constant 0 : i32
    return %c0_i32, %c0_i32_0 : i32, i32
  }
  func.func @transform_4(%arg0: i32) -> (i32, i32) {
    %c0_i32 = arith.constant 0 : i32
    %c0_i32_0 = arith.constant 0 : i32
    %c0_i32_1 = arith.constant 0 : i32
    return %c0_i32, %c0_i32_0 : i32, i32
  }
  func.func @transform_5(%arg0: i32) -> (i32, i32) {
    %c0_i32 = arith.constant 0 : i32
    %c0_i32_0 = arith.constant 0 : i32
    %c0_i32_1 = arith.constant 0 : i32
    return %c0_i32, %c0_i32_0 : i32, i32
  }
  func.func @transform_6(%arg0: i32) -> (i32, i32, i32) {
    %c0_i32 = arith.constant 0 : i32
    %c0_i32_0 = arith.constant 0 : i32
    %c0_i32_1 = arith.constant 0 : i32
    %c0_i32_2 = arith.constant 0 : i32
    return %c0_i32, %c0_i32_0, %c0_i32_1 : i32, i32, i32
  }
  func.func @transform_7(%arg0: i32) -> (i32, i32) {
    %c0_i32 = arith.constant 0 : i32
    %c0_i32_0 = arith.constant 0 : i32
    %c0_i32_1 = arith.constant 0 : i32
    return %c0_i32, %c0_i32_0 : i32, i32
  }
  func.func @transform_8(%arg0: i32) -> (i32, i32) {
    %c0_i32 = arith.constant 0 : i32
    %c0_i32_0 = arith.constant 0 : i32
    return %arg0, %c0_i32 : i32, i32
  }
  func.func @transform_9(%arg0: i32) -> (i32, i32, i32) {
    %c0_i32 = arith.constant 0 : i32
    %c0_i32_0 = arith.constant 0 : i32
    %c0_i32_1 = arith.constant 0 : i32
    return %arg0, %c0_i32, %c0_i32_0 : i32, i32, i32
  }
}

module attributes {stable_mosaic.version = 11 : i64} {
  func.func @_mm_bias_stats_kernel(%arg0: i32, %arg1: memref<272x64xbf16, #tpu.memory_space<vmem>>, %arg2: memref<64x128xbf16, #tpu.memory_space<vmem>>, %arg3: memref<1x128xf32, #tpu.memory_space<vmem>>, %arg4: memref<272x128xf32, #tpu.memory_space<vmem>>, %arg5: memref<1x2x128xf32, #tpu.memory_space<vmem>>) attributes {dimension_semantics = [#tpu.dimension_semantics<parallel>], iteration_bounds = array<i64: 1>, scalar_prefetch = 0 : i64, scratch_operands = 0 : i64, tpu.core_type = #tpu.core_type<tc>, window_params = [{transform_indices = @transform_0, window_bounds = array<i64: 272, 64>}, {pipeline_mode = #tpu.pipeline_mode<synchronous>, transform_indices = @transform_1, window_bounds = array<i64: 64, 128>}, {pipeline_mode = #tpu.pipeline_mode<synchronous>, transform_indices = @transform_2, window_bounds = array<i64: 1, 128>}, {transform_indices = @transform_3, window_bounds = array<i64: 272, 128>}, {transform_indices = @transform_4, window_bounds = array<i64: 1, 2, 128>}]} {
    %c0 = arith.constant 0 : index
    %c0_0 = arith.constant 0 : index
    %0 = vector.load %arg1[%c0, %c0_0] : memref<272x64xbf16, #tpu.memory_space<vmem>>, vector<272x64xbf16>
    %c0_1 = arith.constant 0 : index
    %c0_2 = arith.constant 0 : index
    %1 = vector.load %arg2[%c0_1, %c0_2] : memref<64x128xbf16, #tpu.memory_space<vmem>>, vector<64x128xbf16>
    %cst = arith.constant dense<0.000000e+00> : vector<272x128xf32>
    %2 = tpu.matmul %0, %1, %cst {dimension_numbers = #tpu.dot_dimension_numbers<[1], [0], [0], [1], [0, 0, 1, 1], [], []>} : vector<272x64xbf16>, vector<64x128xbf16>, vector<272x128xf32> -> vector<272x128xf32>
    %c0_3 = arith.constant 0 : index
    %c0_4 = arith.constant 0 : index
    %3 = vector.load %arg3[%c0_3, %c0_4] : memref<1x128xf32, #tpu.memory_space<vmem>>, vector<1x128xf32>
    %4 = vector.broadcast %3 : vector<1x128xf32> to vector<272x128xf32>
    %5 = arith.addf %2, %4 : vector<272x128xf32>
    %c0_5 = arith.constant 0 : index
    %c0_6 = arith.constant 0 : index
    %6 = vector.load %arg4[%c0_5, %c0_6] : memref<272x128xf32, #tpu.memory_space<vmem>>, vector<272x128xf32>
    tpu.vector_store %arg4[%c0_5, %c0_6], %5 {strides = array<i32>} : memref<272x128xf32, #tpu.memory_space<vmem>>, vector<272x128xf32>,
    %cst_7 = arith.constant dense<0.000000e+00> : vector<128xf32>
    %7 = vector.multi_reduction <add>, %5, %cst_7 [0] : vector<272x128xf32> to vector<128xf32>
    %8 = vector.shape_cast %7 : vector<128xf32> to vector<1x128xf32>
    %c0_8 = arith.constant 0 : index
    %c0_9 = arith.constant 0 : index
    %c0_10 = arith.constant 0 : index
    %9 = vector.load %arg5[%c0_8, %c0_9, %c0_10] : memref<1x2x128xf32, #tpu.memory_space<vmem>>, vector<1x1x128xf32>
    %10 = vector.shape_cast %9 : vector<1x1x128xf32> to vector<1x128xf32>
    %11 = vector.shape_cast %8 : vector<1x128xf32> to vector<1x1x128xf32>
    tpu.vector_store %arg5[%c0_8, %c0_9, %c0_10], %11 {strides = array<i32>} : memref<1x2x128xf32, #tpu.memory_space<vmem>>, vector<1x1x128xf32>,
    %12 = arith.mulf %5, %5 : vector<272x128xf32>
    %cst_11 = arith.constant dense<0.000000e+00> : vector<128xf32>
    %13 = vector.multi_reduction <add>, %12, %cst_11 [0] : vector<272x128xf32> to vector<128xf32>
    %14 = vector.shape_cast %13 : vector<128xf32> to vector<1x128xf32>
    %c0_12 = arith.constant 0 : index
    %c1 = arith.constant 1 : index
    %c0_13 = arith.constant 0 : index
    %15 = vector.load %arg5[%c0_12, %c1, %c0_13] : memref<1x2x128xf32, #tpu.memory_space<vmem>>, vector<1x1x128xf32>
    %16 = vector.shape_cast %15 : vector<1x1x128xf32> to vector<1x128xf32>
    %17 = vector.shape_cast %14 : vector<1x128xf32> to vector<1x1x128xf32>
    tpu.vector_store %arg5[%c0_12, %c1, %c0_13], %17 {strides = array<i32>} : memref<1x2x128xf32, #tpu.memory_space<vmem>>, vector<1x1x128xf32>,
    return
  }
  func.func @transform_0(%arg0: i32) -> (i32, i32) {
    %c0_i32 = arith.constant 0 : i32
    %c0_i32_0 = arith.constant 0 : i32
    return %arg0, %c0_i32 : i32, i32
  }
  func.func @transform_1(%arg0: i32) -> (i32, i32) {
    %c0_i32 = arith.constant 0 : i32
    %c0_i32_0 = arith.constant 0 : i32
    %c0_i32_1 = arith.constant 0 : i32
    return %c0_i32, %c0_i32_0 : i32, i32
  }
  func.func @transform_2(%arg0: i32) -> (i32, i32) {
    %c0_i32 = arith.constant 0 : i32
    %c0_i32_0 = arith.constant 0 : i32
    %c0_i32_1 = arith.constant 0 : i32
    return %c0_i32, %c0_i32_0 : i32, i32
  }
  func.func @transform_3(%arg0: i32) -> (i32, i32) {
    %c0_i32 = arith.constant 0 : i32
    %c0_i32_0 = arith.constant 0 : i32
    return %arg0, %c0_i32 : i32, i32
  }
  func.func @transform_4(%arg0: i32) -> (i32, i32, i32) {
    %c0_i32 = arith.constant 0 : i32
    %c0_i32_0 = arith.constant 0 : i32
    %c0_i32_1 = arith.constant 0 : i32
    return %arg0, %c0_i32, %c0_i32_0 : i32, i32, i32
  }
}

module attributes {stable_mosaic.version = 11 : i64} {
  func.func @_final_kernel(%arg0: i32, %arg1: memref<272x128xf32, #tpu.memory_space<vmem>>, %arg2: memref<272x128xf32, #tpu.memory_space<vmem>>, %arg3: memref<1x128xf32, #tpu.memory_space<vmem>>, %arg4: memref<1x128xf32, #tpu.memory_space<vmem>>, %arg5: memref<1x128xf32, #tpu.memory_space<vmem>>, %arg6: memref<272x128xf32, #tpu.memory_space<vmem>>) attributes {dimension_semantics = [#tpu.dimension_semantics<parallel>], iteration_bounds = array<i64: 1>, scalar_prefetch = 0 : i64, scratch_operands = 0 : i64, tpu.core_type = #tpu.core_type<tc>, window_params = [{transform_indices = @transform_0, window_bounds = array<i64: 272, 128>}, {transform_indices = @transform_1, window_bounds = array<i64: 272, 128>}, {pipeline_mode = #tpu.pipeline_mode<synchronous>, transform_indices = @transform_2, window_bounds = array<i64: 1, 128>}, {pipeline_mode = #tpu.pipeline_mode<synchronous>, transform_indices = @transform_3, window_bounds = array<i64: 1, 128>}, {pipeline_mode = #tpu.pipeline_mode<synchronous>, transform_indices = @transform_4, window_bounds = array<i64: 1, 128>}, {transform_indices = @transform_5, window_bounds = array<i64: 272, 128>}]} {
    %c0 = arith.constant 0 : index
    %c0_0 = arith.constant 0 : index
    %0 = vector.load %arg1[%c0, %c0_0] : memref<272x128xf32, #tpu.memory_space<vmem>>, vector<272x128xf32>
    %c0_1 = arith.constant 0 : index
    %c0_2 = arith.constant 0 : index
    %1 = vector.load %arg3[%c0_1, %c0_2] : memref<1x128xf32, #tpu.memory_space<vmem>>, vector<1x128xf32>
    %2 = vector.broadcast %1 : vector<1x128xf32> to vector<272x128xf32>
    %3 = arith.mulf %0, %2 : vector<272x128xf32>
    %c0_3 = arith.constant 0 : index
    %c0_4 = arith.constant 0 : index
    %4 = vector.load %arg2[%c0_3, %c0_4] : memref<272x128xf32, #tpu.memory_space<vmem>>, vector<272x128xf32>
    %c0_5 = arith.constant 0 : index
    %c0_6 = arith.constant 0 : index
    %5 = vector.load %arg4[%c0_5, %c0_6] : memref<1x128xf32, #tpu.memory_space<vmem>>, vector<1x128xf32>
    %6 = vector.broadcast %5 : vector<1x128xf32> to vector<272x128xf32>
    %7 = arith.mulf %4, %6 : vector<272x128xf32>
    %8 = arith.addf %3, %7 : vector<272x128xf32>
    %c0_7 = arith.constant 0 : index
    %c0_8 = arith.constant 0 : index
    %9 = vector.load %arg5[%c0_7, %c0_8] : memref<1x128xf32, #tpu.memory_space<vmem>>, vector<1x128xf32>
    %10 = vector.broadcast %9 : vector<1x128xf32> to vector<272x128xf32>
    %11 = arith.addf %8, %10 : vector<272x128xf32>
    %cst = arith.constant 0.000000e+00 : f32
    %12 = vector.broadcast %cst : f32 to vector<272x128xf32>
    %13 = arith.maximumf %11, %12 : vector<272x128xf32>
    %c0_9 = arith.constant 0 : index
    %c0_10 = arith.constant 0 : index
    %14 = vector.load %arg6[%c0_9, %c0_10] : memref<272x128xf32, #tpu.memory_space<vmem>>, vector<272x128xf32>
    tpu.vector_store %arg6[%c0_9, %c0_10], %13 {strides = array<i32>} : memref<272x128xf32, #tpu.memory_space<vmem>>, vector<272x128xf32>,
    return
  }
  func.func @transform_0(%arg0: i32) -> (i32, i32) {
    %c0_i32 = arith.constant 0 : i32
    %c0_i32_0 = arith.constant 0 : i32
    return %arg0, %c0_i32 : i32, i32
  }
  func.func @transform_1(%arg0: i32) -> (i32, i32) {
    %c0_i32 = arith.constant 0 : i32
    %c0_i32_0 = arith.constant 0 : i32
    return %arg0, %c0_i32 : i32, i32
  }
  func.func @transform_2(%arg0: i32) -> (i32, i32) {
    %c0_i32 = arith.constant 0 : i32
    %c0_i32_0 = arith.constant 0 : i32
    %c0_i32_1 = arith.constant 0 : i32
    return %c0_i32, %c0_i32_0 : i32, i32
  }
  func.func @transform_3(%arg0: i32) -> (i32, i32) {
    %c0_i32 = arith.constant 0 : i32
    %c0_i32_0 = arith.constant 0 : i32
    %c0_i32_1 = arith.constant 0 : i32
    return %c0_i32, %c0_i32_0 : i32, i32
  }
  func.func @transform_4(%arg0: i32) -> (i32, i32) {
    %c0_i32 = arith.constant 0 : i32
    %c0_i32_0 = arith.constant 0 : i32
    %c0_i32_1 = arith.constant 0 : i32
    return %c0_i32, %c0_i32_0 : i32, i32
  }
  func.func @transform_5(%arg0: i32) -> (i32, i32) {
    %c0_i32 = arith.constant 0 : i32
    %c0_i32_0 = arith.constant 0 : i32
    return %arg0, %c0_i32 : i32, i32
  }
}

</mosaic_0001>

<llo_original>
// kernel: layer_forward.7
$region0: #{layer_forward.7}
  #allocation0 [shape = 'u32[]', space=smem, size = 0x4, offset = 0x4, fixed_abs, tag = 'smem constant byte address 0x4 - core index']
  #allocation1 [shape = 'u32[144,128]{1,0:T(1,128)}', space=vmem, size = 0x12000, scoped, tag = 'internal scratch']
  %s0 = inlined_call_operand.vmem [shape: f32[2,64], index: 0, kind: input, shape index: {}]
  %s1 = inlined_call_operand.vmem [shape: bf16[64,64], index: 1, kind: input, shape index: {}]
  %s2 = inlined_call_operand.vmem [shape: f32[1,64], index: 2, kind: input, shape index: {}]
  %s3 = inlined_call_operand.vmem [shape: f32[2,64], index: 3, kind: output, shape index: {0}]
  %s4 = inlined_call_operand.vmem [shape: f32[1,2,64], index: 4, kind: output, shape index: {1}]
  %5 = xla_tuple %s3, %s4
  %s6 = sld [smem:[#allocation0]]
  $region30: #{layer_forward.7} parent=0
    _
  %s8 = ssub.s32 1, %s6
  %s9 = scalar_select 0, %s8, %s6
  // Predicated region
  $region2: #{layer_forward.7} parent=0 // pred_check
    _
  $region3: #{layer_forward.7} parent=0 // pred_check_branch
    %11 = sbr.rel (0) target = $region5
  $region4: #{layer_forward.7} parent=0 // pred_region
    _
  $region5: #{layer_forward.7} parent=0 // pred_fallthru
    _
  // Predicated region
  $region6: #{layer_forward.7} parent=0 // pred_check
    _
  $region7: #{layer_forward.7} parent=0 // pred_check_branch
    %13 = sbr.rel (0) target = $region9
  $region8: #{layer_forward.7} parent=0 // pred_region
    _
  $region9: #{layer_forward.7} parent=0 // pred_fallthru
    _
  // Predicated region
  $region10: #{layer_forward.7} parent=0 // pred_check
    _
  $region11: #{layer_forward.7} parent=0 // pred_check_branch
    %15 = sbr.rel (0) target = $region13
  $region12: #{layer_forward.7} parent=0 // pred_region
    _
  $region13: #{layer_forward.7} parent=0 // pred_fallthru
    _
  %v17 = vld [vmem:[%s0] sm:$0x3]
  %v18 = vpack.c.bf16 %v17, %v17
  %v19 = vld [vmem:[%s1] sm:$0xf]
  %v20 = vld [vmem:[%s1 + $0x4] sm:$0xf]
  %v21 = vld [vmem:[%s1 + $0x8] sm:$0xf]
  %v22 = vld [vmem:[%s1 + $0xc] sm:$0xf]
  %v23 = vld [vmem:[%s1 + $0x10] sm:$0xf]
  %v24 = vld [vmem:[%s1 + $0x14] sm:$0xf]
  %v25 = vld [vmem:[%s1 + $0x18] sm:$0xf]
  %v26 = vld [vmem:[%s1 + $0x1c] sm:$0xf]
  %v27 = vld [vmem:[%s2] sm:$0x1]
  %v29 = vlaneseq
  %v30 = vshrl.u32 %v29, 7
  %v31 = vsub.s32 0, %v30
  %v32 = vrot.slane %v27, %v31
  %v42 = vunpack.c.l.b16 %v19
  %v43 = vunpack.c.l.b16 %v20
  %v44 = vunpack.c.l.b16 %v21
  %v45 = vunpack.c.l.b16 %v22
  %v46 = vunpack.c.l.b16 %v23
  %v47 = vunpack.c.l.b16 %v24
  %v48 = vunpack.c.l.b16 %v25
  %v49 = vunpack.c.l.b16 %v26
  %v50 = vpack.c.b16 %v43, %v42
  %v51 = vpack.c.b16 %v45, %v44
  %v52 = vpack.c.b16 %v47, %v46
  %v53 = vpack.c.b16 %v49, %v48
  %vm58 = vcmask 523264
  %v60 = vsel %vm58, %v18, 0
  %62 = vmatprep.subr.bf16.mxu0 0
  %63 = vmatpush1.bf16.msra.mxu0 %v50
  %64 = vmatprep.subr.bf16.mxu0 0
  %65 = vmatpush1.bf16.msra.mxu0 %v51
  %66 = vmatprep.subr.bf16.mxu0 0
  %67 = vmatpush1.bf16.msra.mxu0 %v52
  %68 = vmatprep.subr.bf16.mxu0 0
  %69 = vmatpush1.bf16.msra.mxu0 %v53
  %70 = vmatprep.subr.bf16.mxu0 0
  %71 = vmatpush1.bf16.msra.mxu0 0
  %72 = vmatprep.subr.bf16.mxu0 0
  %73 = vmatpush1.bf16.msra.mxu0 0
  %74 = vmatprep.subr.bf16.mxu0 0
  %75 = vmatpush1.bf16.msra.mxu0 0
  %76 = vmatprep.subr.bf16.mxu0 0
  %77 = vmatpush1.bf16.msra.mxu0 0
  %78 = vmatprep.subr.bf16.mxu0 0
  %79 = vmatpush1.bf16.msra.mxu0 0
  %80 = vmatprep.subr.bf16.mxu0 0
  %81 = vmatpush1.bf16.msra.mxu0 0
  %82 = vmatprep.subr.bf16.mxu0 0
  %83 = vmatpush1.bf16.msra.mxu0 0
  %84 = vmatprep.subr.bf16.mxu0 0
  %85 = vmatpush1.bf16.msra.mxu0 0
  %86 = vmatprep.subr.bf16.mxu0 0
  %87 = vmatpush1.bf16.msra.mxu0 0
  %88 = vmatprep.subr.bf16.mxu0 0
  %89 = vmatpush1.bf16.msra.mxu0 0
  %90 = vmatprep.subr.bf16.mxu0 0
  %91 = vmatpush1.bf16.msra.mxu0 0
  %92 = vmatprep.subr.bf16.mxu0 0
  %93 = vmatpush1.bf16.msra.mxu0 0
  %94 = vmatprep.mubr.bf16.mxu0 0
  %95 = vmatmul.mubr.bf16.gmra.mrb[0].mxu0 %v60
  %v96 = vpop.f32.mrb[0].mxu0
  %v97 = vadd.f32 %v32, %v96
  %v98 = vpop.f32.mrb[0].mxu0
  %v99 = vpop.f32.mrb[0].mxu0
  %v100 = vpop.f32.mrb[0].mxu0
  %101 = vdwg.mxu0
  %vm102 = vcmask 517120
  %103 = vst.msk [vmem:[%s3] sm:$0x3] %vm102, %v97
  %v104 = vsel %vm102, %v97, 0.0
  %v105 = vrot.slane %v104, 4
  %v106 = vadd.f32 %v104, %v105
  %v107 = vrot.slane %v106, 2
  %v108 = vadd.f32 %v106, %v107
  %v109 = vrot.slane %v108, 1
  %v110 = vadd.f32 %v108, %v109
  %vm111 = vcmask 516096
  %112 = vst.msk [vmem:[%s4] sm:$0x1] %vm111, %v110
  %v113 = vmul.f32 %v97, %v97
  %v114 = vsel %vm102, %v113, 0.0
  %v115 = vrot.slane %v114, 4
  %v116 = vadd.f32 %v114, %v115
  %v117 = vrot.slane %v116, 2
  %v118 = vadd.f32 %v116, %v117
  %v119 = vrot.slane %v118, 1
  %v120 = vadd.f32 %v118, %v119
  %121 = vst.msk [vmem:[%s4 + $0x1] sm:$0x1] %vm111, %v120
  // Predicated region
  $region14: #{layer_forward.7} parent=0 // pred_check
    _
  $region15: #{layer_forward.7} parent=0 // pred_check_branch
    %123 = sbr.rel (0) target = $region17
  $region16: #{layer_forward.7} parent=0 // pred_region
    _
  $region17: #{layer_forward.7} parent=0 // pred_fallthru
    _
  // Predicated region
  $region18: #{layer_forward.7} parent=0 // pred_check
    _
  $region19: #{layer_forward.7} parent=0 // pred_check_branch
    %125 = sbr.rel (0) target = $region21
  $region20: #{layer_forward.7} parent=0 // pred_region
    _
  $region21: #{layer_forward.7} parent=0 // pred_fallthru
    _
  // Predicated region
  $region22: #{layer_forward.7} parent=0 // pred_check
    _
  $region23: #{layer_forward.7} parent=0 // pred_check_branch
    %127 = sbr.rel (0) target = $region25
  $region24: #{layer_forward.7} parent=0 // pred_region
    _
  $region25: #{layer_forward.7} parent=0 // pred_fallthru
    _
  // Predicated region
  $region26: #{layer_forward.7} parent=0 // pred_check
    _
  $region27: #{layer_forward.7} parent=0 // pred_check_branch
    %129 = sbr.rel (0) target = $region29
  $region28: #{layer_forward.7} parent=0 // pred_region
    _
  $region29: #{layer_forward.7} parent=0 // pred_fallthru
    _

// kernel: layer_forward.10
$region0: #{layer_forward.10}
  #allocation0 [shape = 'u32[]', space=smem, size = 0x4, offset = 0x4, fixed_abs, tag = 'smem constant byte address 0x4 - core index']
  #allocation1 [shape = 'u32[144,128]{1,0:T(1,128)}', space=vmem, size = 0x12000, scoped, tag = 'internal scratch']
  %s0 = inlined_call_operand.vmem [shape: bf16[256,136], index: 0, kind: input, shape index: {}]
  %s1 = inlined_call_operand.vmem [shape: bf16[8,136,272], index: 1, kind: input, shape index: {}]
  %s2 = inlined_call_operand.vmem [shape: f32[8,1,272], index: 2, kind: input, shape index: {}]
  %s3 = inlined_call_operand.vmem [shape: f32[256,272], index: 3, kind: output, shape index: {0}]
  %s4 = inlined_call_operand.vmem [shape: f32[8,2,272], index: 4, kind: output, shape index: {1}]
  %5 = xla_tuple %s3, %s4
  %s6 = sld [smem:[#allocation0]]
  $region53: #{layer_forward.10} parent=0
    _
  %s8 = ssub.s32 1, %s6
  %s9 = scalar_select 0, %s8, %s6
  loop: start=0, step=1, limit=10
  $region2: #{layer_forward.10} parent=0 // loop_pre_header
    _
  $region3: #{layer_forward.10} parent=0 // loop_header
    %s11 = sphi 0, %s15
    %p12 = scmp.ge.s32.totalorder %s11, 10
    %s21 = sphi 0, %s23
    %s24 = sphi 0, %s21
    %s25 = sphi 0, %s24
    %s41 = sphi 0, %s25
    %s47 = sphi 0, %s49
    %s50 = sphi 0, %s47
    %s51 = sphi 0, %s50
    %s67 = sphi 0, %s51
    %s73 = sphi 0, %s75
    %s76 = sphi 0, %s73
    %s77 = sphi 0, %s76
    %s93 = sphi 0, %s77
    %s99 = sphi 0, %s101
    %s102 = sphi 0, %s99
    %s103 = sphi 0, %s102
    %s119 = sphi 0, %s103
    %s125 = sphi 0, %s127
    %s128 = sphi 0, %s125
    %s129 = sphi 0, %s128
    %s145 = sphi 0, %s129
  $region4: #{layer_forward.10} parent=0 // loop_header_branch
    %14 = sbr.rel (%p12) target = $region8
  $region5: #{layer_forward.10} parent=0 // loop_body
    %s16 = ssub.s32 %s11, 1
    %s17 = ssub.s32 %s11, 2
    %s18 = sadd.s32 %s11, 1
    %s19 = ssub.s32 %s11, %s18
    %p20 = scmp.eq.s32.totalorder %s19, 0
    %s22 = sadd.s32 %s21, 1
    %s23 = scalar_select %p20, %s21, %s22
    %p26 = pneg %p20
    %p27 = scmp.eq.s32.totalorder %s11, 7
    %p28 = por %p26, %p27
    %p29 = scmp.ne.s32.totalorder %s21, %s24
    %p30 = scmp.eq.s32.totalorder %s11, 0
    %p31 = por %p29, %p30
    %p32 = scmp.ne.s32.totalorder %s21, %s24
    %p33 = scmp.eq.s32.totalorder %s16, 7
    %p34 = por %p32, %p33
    %p35 = scmp.ne.s32.totalorder %s24, %s25
    %p36 = scmp.eq.s32.totalorder %s16, 0
    %p37 = por %p35, %p36
    %p38 = scmp.ne.s32.totalorder %s24, %s25
    %p39 = scmp.eq.s32.totalorder %s17, 7
    %p40 = por %p38, %p39
    %p42 = scmp.ne.s32.totalorder %s25, %s41
    %p43 = scmp.eq.s32.totalorder %s17, 0
    %p44 = por %p42, %p43
    %s45 = ssub.s32 %s11, %s18
    %p46 = scmp.eq.s32.totalorder %s45, 0
    %s48 = sadd.s32 %s47, 1
    %s49 = scalar_select %p46, %s47, %s48
    %p52 = pneg %p46
    %p53 = scmp.eq.s32.totalorder %s11, 7
    %p54 = por %p52, %p53
    %p55 = scmp.ne.s32.totalorder %s47, %s50
    %p56 = scmp.eq.s32.totalorder %s11, 0
    %p57 = por %p55, %p56
    %p58 = scmp.ne.s32.totalorder %s47, %s50
    %p59 = scmp.eq.s32.totalorder %s16, 7
    %p60 = por %p58, %p59
    %p61 = scmp.ne.s32.totalorder %s50, %s51
    %p62 = scmp.eq.s32.totalorder %s16, 0
    %p63 = por %p61, %p62
    %p64 = scmp.ne.s32.totalorder %s50, %s51
    %p65 = scmp.eq.s32.totalorder %s17, 7
    %p66 = por %p64, %p65
    %p68 = scmp.ne.s32.totalorder %s51, %s67
    %p69 = scmp.eq.s32.totalorder %s17, 0
    %p70 = por %p68, %p69
    %s71 = ssub.s32 %s11, %s18
    %p72 = scmp.eq.s32.totalorder %s71, 0
    %s74 = sadd.s32 %s73, 1
    %s75 = scalar_select %p72, %s73, %s74
    %p78 = pneg %p72
    %p79 = scmp.eq.s32.totalorder %s11, 7
    %p80 = por %p78, %p79
    %p81 = scmp.ne.s32.totalorder %s73, %s76
    %p82 = scmp.eq.s32.totalorder %s11, 0
    %p83 = por %p81, %p82
    %p84 = scmp.ne.s32.totalorder %s73, %s76
    %p85 = scmp.eq.s32.totalorder %s16, 7
    %p86 = por %p84, %p85
    %p87 = scmp.ne.s32.totalorder %s76, %s77
    %p88 = scmp.eq.s32.totalorder %s16, 0
    %p89 = por %p87, %p88
    %p90 = scmp.ne.s32.totalorder %s76, %s77
    %p91 = scmp.eq.s32.totalorder %s17, 7
    %p92 = por %p90, %p91
    %p94 = scmp.ne.s32.totalorder %s77, %s93
    %p95 = scmp.eq.s32.totalorder %s17, 0
    %p96 = por %p94, %p95
    %s97 = ssub.s32 %s11, %s18
    %p98 = scmp.eq.s32.totalorder %s97, 0
    %s100 = sadd.s32 %s99, 1
    %s101 = scalar_select %p98, %s99, %s100
    %p104 = pneg %p98
    %p105 = scmp.eq.s32.totalorder %s11, 7
    %p106 = por %p104, %p105
    %p107 = scmp.ne.s32.totalorder %s99, %s102
    %p108 = scmp.eq.s32.totalorder %s11, 0
    %p109 = por %p107, %p108
    %p110 = scmp.ne.s32.totalorder %s99, %s102
    %p111 = scmp.eq.s32.totalorder %s16, 7
    %p112 = por %p110, %p111
    %p113 = scmp.ne.s32.totalorder %s102, %s103
    %p114 = scmp.eq.s32.totalorder %s16, 0
    %p115 = por %p113, %p114
    %p116 = scmp.ne.s32.totalorder %s102, %s103
    %p117 = scmp.eq.s32.totalorder %s17, 7
    %p118 = por %p116, %p117
    %p120 = scmp.ne.s32.totalorder %s103, %s119
    %p121 = scmp.eq.s32.totalorder %s17, 0
    %p122 = por %p120, %p121
    %s123 = ssub.s32 %s11, %s18
    %p124 = scmp.eq.s32.totalorder %s123, 0
    %s126 = sadd.s32 %s125, 1
    %s127 = scalar_select %p124, %s125, %s126
    %p130 = pneg %p124
    %p131 = scmp.eq.s32.totalorder %s11, 7
    %p132 = por %p130, %p131
    %p133 = scmp.ne.s32.totalorder %s125, %s128
    %p134 = scmp.eq.s32.totalorder %s11, 0
    %p135 = por %p133, %p134
    %p136 = scmp.ne.s32.totalorder %s125, %s128
    %p137 = scmp.eq.s32.totalorder %s16, 7
    %p138 = por %p136, %p137
    %p139 = scmp.ne.s32.totalorder %s128, %s129
    %p140 = scmp.eq.s32.totalorder %s16, 0
    %p141 = por %p139, %p140
    %p142 = scmp.ne.s32.totalorder %s128, %s129
    %p143 = scmp.eq.s32.totalorder %s17, 7
    %p144 = por %p142, %p143
    %p146 = scmp.ne.s32.totalorder %s129, %s145
    %p147 = scmp.eq.s32.totalorder %s17, 0
    %p148 = por %p146, %p147
    %p149 = scmp.le.s32.totalorder 1, %s11
    %p150 = scmp.lt.s32.totalorder %s11, 9
    %p151 = pnand %p149, %p150
    %p152 = pneg %p151
    // Predicated region
    $region9: #{layer_forward.10} parent=5 // pred_check
      _
    $region10: #{layer_forward.10} parent=5 // pred_check_branch
      %154 = sbr.rel (%p151) target = $region12
    $region11: #{layer_forward.10} parent=5 // pred_region
      %s155 = ssub.s32 %s11, 1
    $region12: #{layer_forward.10} parent=5 // pred_fallthru
      _
    %p156 = scmp.lt.s32.totalorder %s11, 8
    // Predicated region
    $region13: #{layer_forward.10} parent=5 // pred_check
      %p157 = pneg %p156
    $region14: #{layer_forward.10} parent=5 // pred_check_branch
      %159 = sbr.rel (%p157) target = $region16
    $region15: #{layer_forward.10} parent=5 // pred_region
      // Predicated region
      $region17: #{layer_forward.10} parent=15 // pred_check
        %p160 = pneg %p31
      $region18: #{layer_forward.10} parent=15 // pred_check_branch
        %162 = sbr.rel (%p160) target = $region20
      $region19: #{layer_forward.10} parent=15 // pred_region
        %s163 = smul.u32 4, %s11
        %p164 = scmp.lt.s32.totalorder %s163, 31
        %s165 = scalar_select %p164, %s163, 31
        %s166 = smul.addr %s165, 2
        %s167 = smul.addr %s166, 4
        %s168 = scalar_lea.vmem %s0, %s167
        %s169 = smul.u32 4, %s11
      $region20: #{layer_forward.10} parent=15 // pred_fallthru
        _
      // Predicated region
      $region21: #{layer_forward.10} parent=15 // pred_check
        %p170 = pneg %p57
      $region22: #{layer_forward.10} parent=15 // pred_check_branch
        %172 = sbr.rel (%p170) target = $region24
      $region23: #{layer_forward.10} parent=15 // pred_region
        %p173 = scmp.lt.s32.totalorder %s11, 7
        %s174 = scalar_select %p173, %s11, 7
        %s175 = smul.addr %s174, 51
        %s176 = smul.addr %s175, 4
        %s177 = scalar_lea.vmem %s1, %s176
      $region24: #{layer_forward.10} parent=15 // pred_fallthru
        _
      // Predicated region
      $region25: #{layer_forward.10} parent=15 // pred_check
        %p178 = pneg %p83
      $region26: #{layer_forward.10} parent=15 // pred_check_branch
        %180 = sbr.rel (%p178) target = $region28
      $region27: #{layer_forward.10} parent=15 // pred_region
        %p181 = scmp.lt.s32.totalorder %s11, 7
        %s182 = scalar_select %p181, %s11, 7
        %s183 = smul.addr %s182, 3
        %s184 = scalar_lea.vmem %s2, %s183
      $region28: #{layer_forward.10} parent=15 // pred_fallthru
        _
    $region16: #{layer_forward.10} parent=5 // pred_fallthru
      _
    %p185 = scmp.le.s32.totalorder 1, %s11
    %p186 = scmp.lt.s32.totalorder %s11, 9
    %p187 = pnand %p185, %p186
    %p188 = pneg %p187
    // Predicated region
    $region29: #{layer_forward.10} parent=5 // pred_check
      _
    $region30: #{layer_forward.10} parent=5 // pred_check_branch
      %190 = sbr.rel (%p187) target = $region32
    $region31: #{layer_forward.10} parent=5 // pred_region
      %s191 = ssub.s32 %s11, 1
      %s192 = smul.u32 4, %s16
      %p193 = scmp.lt.s32.totalorder %s192, 31
      %s194 = scalar_select %p193, %s192, 31
      %s195 = smul.addr %s194, 2
      %s196 = smul.addr %s195, 4
      %s197 = scalar_lea.vmem %s0, %s196
      %p198 = pneg %p37
      %p199 = pneg %p34
      %p200 = scmp.lt.s32.totalorder %s16, 7
      %s201 = scalar_select %p200, %s16, 7
      %s202 = smul.addr %s201, 51
      %s203 = smul.addr %s202, 4
      %s204 = scalar_lea.vmem %s1, %s203
      %p205 = pneg %p63
      %p206 = pneg %p60
      %p207 = scmp.lt.s32.totalorder %s16, 7
      %s208 = scalar_select %p207, %s16, 7
      %s209 = smul.addr %s208, 3
      %s210 = scalar_lea.vmem %s2, %s209
      %p211 = pneg %p89
      %p212 = pneg %p86
      %p213 = pneg %p115
      %p214 = pneg %p112
      %s215 = smul.u32 4, %s16
      %p216 = scmp.lt.s32.totalorder %s215, 31
      %s217 = scalar_select %p216, %s215, 31
      %s218 = smul.addr %s217, 3
      %s219 = smul.addr %s218, 8
      %s220 = scalar_lea.vmem %s3, %s219
      %p221 = pneg %p141
      %p222 = pneg %p138
      %p223 = scmp.lt.s32.totalorder %s16, 7
      %s224 = scalar_select %p223, %s16, 7
      %s225 = smul.addr %s224, 3
      %s226 = smul.addr %s225, 2
      %s227 = scalar_lea.vmem %s4, %s226
      %s228 = smul.u32 4, %s16
      %p229 = scmp.lt.s32.totalorder %s228, 31
      %s230 = scalar_select %p229, %s228, 31
      %s231 = smul.addr %s230, 2
      %s232 = smul.addr %s231, 4
      %s233 = scalar_lea.vmem %s0, %s232
      %s234 = smul.u32 4, %s16
      %p235 = scmp.lt.s32.totalorder %s16, 7
      %s236 = scalar_select %p235, %s16, 7
      %s237 = smul.addr %s236, 51
      %s238 = smul.addr %s237, 4
      %s239 = scalar_lea.vmem %s1, %s238
      %p240 = scmp.lt.s32.totalorder %s16, 7
      %s241 = scalar_select %p240, %s16, 7
      %s242 = smul.addr %s241, 3
      %s243 = scalar_lea.vmem %s2, %s242
      %s244 = smul.u32 4, %s16
      %p245 = scmp.lt.s32.totalorder %s244, 31
      %s246 = scalar_select %p245, %s244, 31
      %s247 = smul.addr %s246, 3
      %s248 = smul.addr %s247, 8
      %s249 = scalar_lea.vmem %s3, %s248
      %s250 = smul.u32 4, %s16
      %p251 = scmp.lt.s32.totalorder %s16, 7
      %s252 = scalar_select %p251, %s16, 7
      %s253 = smul.addr %s252, 3
      %s254 = smul.addr %s253, 2
      %s255 = scalar_lea.vmem %s4, %s254
      %v257 = vld [vmem:[%s233] sm:$0xff]
      %v258 = vld [vmem:[%s233 + $0x8] sm:$0xff]
      %v259 = vld [vmem:[%s233 + $0x10] sm:$0xff]
      %v260 = vld [vmem:[%s233 + $0x18] sm:$0xff]
      %v261 = vld [vmem:[%s239] sm:$0xff]
      %v262 = vld [vmem:[%s239 + $0x8] sm:$0xf]
      %v263 = vld [vmem:[%s239 + $0xc] sm:$0xff]
      %v264 = vld [vmem:[%s239 + $0x14] sm:$0xf]
      %v265 = vld [vmem:[%s239 + $0x18] sm:$0xff]
      %v266 = vld [vmem:[%s239 + $0x20] sm:$0xf]
      %v267 = vld [vmem:[%s239 + $0x24] sm:$0xff]
      %v268 = vld [vmem:[%s239 + $0x2c] sm:$0xf]
      %v269 = vld [vmem:[%s239 + $0x30] sm:$0xff]
      %v270 = vld [vmem:[%s239 + $0x38] sm:$0xf]
      %v271 = vld [vmem:[%s239 + $0x3c] sm:$0xff]
      %v272 = vld [vmem:[%s239 + $0x44] sm:$0xf]
      %v273 = vld [vmem:[%s239 + $0x48] sm:$0xff]
      %v274 = vld [vmem:[%s239 + $0x50] sm:$0xf]
      %v275 = vld [vmem:[%s239 + $0x54] sm:$0xff]
      %v276 = vld [vmem:[%s239 + $0x5c] sm:$0xf]
      %v277 = vld [vmem:[%s239 + $0x60] sm:$0xff]
      %v278 = vld [vmem:[%s239 + $0x68] sm:$0xf]
      %v279 = vld [vmem:[%s239 + $0x6c] sm:$0xff]
      %v280 = vld [vmem:[%s239 + $0x74] sm:$0xf]
      %v281 = vld [vmem:[%s239 + $0x78] sm:$0xff]
      %v282 = vld [vmem:[%s239 + $0x80] sm:$0xf]
      %v283 = vld [vmem:[%s239 + $0x84] sm:$0xff]
      %v284 = vld [vmem:[%s239 + $0x8c] sm:$0xf]
      %v285 = vld [vmem:[%s239 + $0x90] sm:$0xff]
      %v286 = vld [vmem:[%s239 + $0x98] sm:$0xf]
      %v287 = vld [vmem:[%s239 + $0x9c] sm:$0xff]
      %v288 = vld [vmem:[%s239 + $0xa4] sm:$0xf]
      %v289 = vld [vmem:[%s239 + $0xa8] sm:$0xff]
      %v290 = vld [vmem:[%s239 + $0xb0] sm:$0xf]
      %v291 = vld [vmem:[%s239 + $0xb4] sm:$0xff]
      %v292 = vld [vmem:[%s239 + $0xbc] sm:$0xf]
      %v293 = vld [vmem:[%s239 + $0xc0] sm:$0xff]
      %v294 = vld [vmem:[%s239 + $0xc8] sm:$0xf]
      %v295 = vld [vmem:[%s243] sm:$0x7]
      %v297 = vlaneseq
      %v298 = vshrl.u32 %v297, 7
      %v299 = vsub.s32 0, %v298
      %v300 = vrot.slane %v295, %v299
      %v301 = vlaneseq
      %v302 = vshrl.u32 %v301, 7
      %v303 = vsub.s32 1, %v302
      %v304 = vrot.slane %v295, %v303
      %v305 = vlaneseq
      %v306 = vshrl.u32 %v305, 7
      %v307 = vsub.s32 2, %v306
      %v308 = vrot.slane %v295, %v307
      %v316 = vunpack.c.l.b16 %v257
      %v317 = vunpack.c.h.b16 %v257
      %v318 = vunpack.c.l.b16 %v258
      %v319 = vunpack.c.h.b16 %v258
      %v320 = vunpack.c.l.b16 %v259
      %v321 = vunpack.c.h.b16 %v259
      %v322 = vunpack.c.l.b16 %v260
      %v323 = vunpack.c.h.b16 %v260
      %v324 = vpack.c.b16 %v318, %v316
      %v325 = vpack.c.b16 %v319, %v317
      %v326 = vpack.c.b16 %v322, %v320
      %v327 = vpack.c.b16 %v323, %v321
      %v364 = vunpack.c.l.b16 %v261
      %v365 = vunpack.c.h.b16 %v261
      %v366 = vunpack.c.l.b16 %v262
      %v367 = vunpack.c.l.b16 %v263
      %v368 = vunpack.c.h.b16 %v263
      %v369 = vunpack.c.l.b16 %v264
      %v370 = vunpack.c.l.b16 %v265
      %v371 = vunpack.c.h.b16 %v265
      %v372 = vunpack.c.l.b16 %v266
      %v373 = vunpack.c.l.b16 %v267
      %v374 = vunpack.c.h.b16 %v267
      %v375 = vunpack.c.l.b16 %v268
      %v376 = vunpack.c.l.b16 %v269
      %v377 = vunpack.c.h.b16 %v269
      %v378 = vunpack.c.l.b16 %v270
      %v379 = vunpack.c.l.b16 %v271
      %v380 = vunpack.c.h.b16 %v271
      %v381 = vunpack.c.l.b16 %v272
      %v382 = vunpack.c.l.b16 %v273
      %v383 = vunpack.c.h.b16 %v273
      %v384 = vunpack.c.l.b16 %v274
      %v385 = vunpack.c.l.b16 %v275
      %v386 = vunpack.c.h.b16 %v275
      %v387 = vunpack.c.l.b16 %v276
      %v388 = vunpack.c.l.b16 %v277
      %v389 = vunpack.c.h.b16 %v277
      %v390 = vunpack.c.l.b16 %v278
      %v391 = vunpack.c.l.b16 %v279
      %v392 = vunpack.c.h.b16 %v279
      %v393 = vunpack.c.l.b16 %v280
      %v394 = vunpack.c.l.b16 %v281
      %v395 = vunpack.c.h.b16 %v281
      %v396 = vunpack.c.l.b16 %v282
      %v397 = vunpack.c.l.b16 %v283
      %v398 = vunpack.c.h.b16 %v283
      %v399 = vunpack.c.l.b16 %v284
      %v400 = vunpack.c.l.b16 %v285
      %v401 = vunpack.c.h.b16 %v285
      %v402 = vunpack.c.l.b16 %v286
      %v403 = vunpack.c.l.b16 %v287
      %v404 = vunpack.c.h.b16 %v287
      %v405 = vunpack.c.l.b16 %v288
      %v406 = vunpack.c.l.b16 %v289
      %v407 = vunpack.c.h.b16 %v289
      %v408 = vunpack.c.l.b16 %v290
      %v409 = vunpack.c.l.b16 %v291
      %v410 = vunpack.c.h.b16 %v291
      %v411 = vunpack.c.l.b16 %v292
      %v412 = vunpack.c.l.b16 %v293
      %v413 = vunpack.c.h.b16 %v293
      %v414 = vunpack.c.l.b16 %v294
      %v415 = vpack.c.b16 %v367, %v364
      %v416 = vpack.c.b16 %v368, %v365
      %v417 = vpack.c.b16 %v369, %v366
      %v418 = vpack.c.b16 %v373, %v370
      %v419 = vpack.c.b16 %v374, %v371
      %v420 = vpack.c.b16 %v375, %v372
      %v421 = vpack.c.b16 %v379, %v376
      %v422 = vpack.c.b16 %v380, %v377
      %v423 = vpack.c.b16 %v381, %v378
      %v424 = vpack.c.b16 %v385, %v382
      %v425 = vpack.c.b16 %v386, %v383
      %v426 = vpack.c.b16 %v387, %v384
      %v427 = vpack.c.b16 %v391, %v388
      %v428 = vpack.c.b16 %v392, %v389
      %v429 = vpack.c.b16 %v393, %v390
      %v430 = vpack.c.b16 %v397, %v394
      %v431 = vpack.c.b16 %v398, %v395
      %v432 = vpack.c.b16 %v399, %v396
      %v433 = vpack.c.b16 %v403, %v400
      %v434 = vpack.c.b16 %v404, %v401
      %v435 = vpack.c.b16 %v405, %v402
      %v436 = vpack.c.b16 %v409, %v406
      %v437 = vpack.c.b16 %v410, %v407
      %v438 = vpack.c.b16 %v411, %v408
      %v439 = vpack.c.b16 %v412, %v412
      %v440 = vpack.c.b16 %v413, %v413
      %v441 = vpack.c.b16 %v414, %v414
      %vm466 = vcmask 64512
      %v468 = vsel %vm466, %v325, 0
      %v471 = vsel %vm466, %v327, 0
      %vm473 = vcmask 1043456
      %v475 = vsel %vm473, %v439, 0
      %v478 = vsel %vm473, %v440, 0
      %v481 = vsel %vm473, %v441, 0
      %483 = vmatprep.subr.bf16.mxu0 %v416
      %484 = vmatpush1.bf16.msra.mxu0 %v415
      %485 = vmatprep.subr.bf16.mxu0 %v419
      %486 = vmatpush1.bf16.msra.mxu0 %v418
      %487 = vmatprep.subr.bf16.mxu0 %v422
      %488 = vmatpush1.bf16.msra.mxu0 %v421
      %489 = vmatprep.subr.bf16.mxu0 %v425
      %490 = vmatpush1.bf16.msra.mxu0 %v424
      %491 = vmatprep.subr.bf16.mxu0 %v428
      %492 = vmatpush1.bf16.msra.mxu0 %v427
      %493 = vmatprep.subr.bf16.mxu0 %v431
      %494 = vmatpush1.bf16.msra.mxu0 %v430
      %495 = vmatprep.subr.bf16.mxu0 %v434
      %496 = vmatpush1.bf16.msra.mxu0 %v433
      %497 = vmatprep.subr.bf16.mxu0 %v437
      %498 = vmatpush1.bf16.msra.mxu0 %v436
      %499 = vmatprep.subr.bf16.mxu0 %v478
      %500 = vmatpush1.bf16.msra.mxu0 %v475
      %501 = vmatprep.subr.bf16.mxu0 0
      %502 = vmatpush1.bf16.msra.mxu0 0
      %503 = vmatprep.subr.bf16.mxu0 0
      %504 = vmatpush1.bf16.msra.mxu0 0
      %505 = vmatprep.subr.bf16.mxu0 0
      %506 = vmatpush1.bf16.msra.mxu0 0
      %507 = vmatprep.subr.bf16.mxu0 0
      %508 = vmatpush1.bf16.msra.mxu0 0
      %509 = vmatprep.subr.bf16.mxu0 0
      %510 = vmatpush1.bf16.msra.mxu0 0
      %511 = vmatprep.subr.bf16.mxu0 0
      %512 = vmatpush1.bf16.msra.mxu0 0
      %513 = vmatprep.subr.bf16.mxu0 0
      %514 = vmatpush1.bf16.msra.mxu0 0
      %515 = vmatprep.mubr.bf16.mxu0 %v468
      %516 = vmatmul.mubr.bf16.gmra.mrb[0].mxu0 %v324
      %v517 = vpop.f32.mrb[0].mxu0
      %v518 = vadd.f32 %v300, %v517
      %v519 = vpop.f32.mrb[0].mxu0
      %v520 = vadd.f32 %v304, %v519
      %v521 = vpop.f32.mrb[0].mxu0
      %v522 = vadd.f32 %v300, %v521
      %v523 = vpop.f32.mrb[0].mxu0
      %v524 = vadd.f32 %v304, %v523
      %525 = vmatprep.mubr.bf16.mxu0 %v471
      %526 = vmatmul.mubr.bf16.gmra.mrb[0].mxu0 %v326
      %v527 = vpop.f32.mrb[0].mxu0
      %v528 = vadd.f32 %v300, %v527
      %v529 = vpop.f32.mrb[0].mxu0
      %v530 = vadd.f32 %v304, %v529
      %v531 = vpop.f32.mrb[0].mxu0
      %v532 = vadd.f32 %v300, %v531
      %v533 = vpop.f32.mrb[0].mxu0
      %v534 = vadd.f32 %v304, %v533
      %535 = vdwg.mxu0
      %536 = vmatprep.subr.bf16.mxu0 0
      %537 = vmatpush1.bf16.msra.mxu0 %v417
      %538 = vmatprep.subr.bf16.mxu0 0
      %539 = vmatpush1.bf16.msra.mxu0 %v420
      %540 = vmatprep.subr.bf16.mxu0 0
      %541 = vmatpush1.bf16.msra.mxu0 %v423
      %542 = vmatprep.subr.bf16.mxu0 0
      %543 = vmatpush1.bf16.msra.mxu0 %v426
      %544 = vmatprep.subr.bf16.mxu0 0
      %545 = vmatpush1.bf16.msra.mxu0 %v429
      %546 = vmatprep.subr.bf16.mxu0 0
      %547 = vmatpush1.bf16.msra.mxu0 %v432
      %548 = vmatprep.subr.bf16.mxu0 0
      %549 = vmatpush1.bf16.msra.mxu0 %v435
      %550 = vmatprep.subr.bf16.mxu0 0
      %551 = vmatpush1.bf16.msra.mxu0 %v438
      %552 = vmatprep.subr.bf16.mxu0 0
      %553 = vmatpush1.bf16.msra.mxu0 %v481
      %554 = vmatprep.subr.bf16.mxu0 0
      %555 = vmatpush1.bf16.msra.mxu0 0
      %556 = vmatprep.subr.bf16.mxu0 0
      %557 = vmatpush1.bf16.msra.mxu0 0
      %558 = vmatprep.subr.bf16.mxu0 0
      %559 = vmatpush1.bf16.msra.mxu0 0
      %560 = vmatprep.subr.bf16.mxu0 0
      %561 = vmatpush1.bf16.msra.mxu0 0
      %562 = vmatprep.subr.bf16.mxu0 0
      %563 = vmatpush1.bf16.msra.mxu0 0
      %564 = vmatprep.subr.bf16.mxu0 0
      %565 = vmatpush1.bf16.msra.mxu0 0
      %566 = vmatprep.subr.bf16.mxu0 0
      %567 = vmatpush1.bf16.msra.mxu0 0
      %568 = vmatprep.mubr.bf16.mxu0 %v468
      %569 = vmatmul.mubr.bf16.gmra.mrb[0].mxu0 %v324
      %v570 = vpop.f32.mrb[0].mxu0
      %v571 = vadd.f32 %v308, %v570
      %v572 = vpop.f32.mrb[0].mxu0
      %v573 = vpop.f32.mrb[0].mxu0
      %v574 = vadd.f32 %v308, %v573
      %v575 = vpop.f32.mrb[0].mxu0
      %576 = vmatprep.mubr.bf16.mxu0 %v471
      %577 = vmatmul.mubr.bf16.gmra.mrb[0].mxu0 %v326
      %v578 = vpop.f32.mrb[0].mxu0
      %v579 = vadd.f32 %v308, %v578
      %v580 = vpop.f32.mrb[0].mxu0
      %v581 = vpop.f32.mrb[0].mxu0
      %v582 = vadd.f32 %v308, %v581
      %v583 = vpop.f32.mrb[0].mxu0
      %584 = vdwg.mxu0
      %585 = vst [vmem:[%s249] sm:$0xff] %v518
      %586 = vst [vmem:[%s249 + $0x8] sm:$0xff] %v520
      %vm587 = vcmask 130048
      %588 = vst.msk [vmem:[%s249 + $0x10] sm:$0xff] %vm587, %v571
      %589 = vst [vmem:[%s249 + $0x18] sm:$0xff] %v522
      %590 = vst [vmem:[%s249 + $0x20] sm:$0xff] %v524
      %591 = vst.msk [vmem:[%s249 + $0x28] sm:$0xff] %vm587, %v574
      %592 = vst [vmem:[%s249 + $0x30] sm:$0xff] %v528
      %593 = vst [vmem:[%s249 + $0x38] sm:$0xff] %v530
      %594 = vst.msk [vmem:[%s249 + $0x40] sm:$0xff] %vm587, %v579
      %595 = vst [vmem:[%s249 + $0x48] sm:$0xff] %v532
      %596 = vst [vmem:[%s249 + $0x50] sm:$0xff] %v534
      %597 = vst.msk [vmem:[%s249 + $0x58] sm:$0xff] %vm587, %v582
      %v598 = vadd.f32 %v518, %v522
      %v599 = vadd.f32 %v598, %v528
      %v600 = vadd.f32 %v599, %v532
      %v601 = vrot.slane %v600, 4
      %v602 = vadd.f32 %v600, %v601
      %v603 = vrot.slane %v602, 2
      %v604 = vadd.f32 %v602, %v603
      %v605 = vrot.slane %v604, 1
      %v606 = vadd.f32 %v604, %v605
      %v607 = vadd.f32 %v520, %v524
      %v608 = vadd.f32 %v607, %v530
      %v609 = vadd.f32 %v608, %v534
      %v610 = vrot.slane %v609, 4
      %v611 = vadd.f32 %v609, %v610
      %v612 = vrot.slane %v611, 2
      %v613 = vadd.f32 %v611, %v612
      %v614 = vrot.slane %v613, 1
      %v615 = vadd.f32 %v613, %v614
      %v616 = vsel %vm587, %v571, 0.0
      %v617 = vsel %vm587, %v574, 0.0
      %v618 = vadd.f32 %v616, %v617
      %v619 = vsel %vm587, %v579, 0.0
      %v620 = vadd.f32 %v618, %v619
      %v621 = vsel %vm587, %v582, 0.0
      %v622 = vadd.f32 %v620, %v621
      %v623 = vrot.slane %v622, 4
      %v624 = vadd.f32 %v622, %v623
      %v625 = vrot.slane %v624, 2
      %v626 = vadd.f32 %v624, %v625
      %v627 = vrot.slane %v626, 1
      %v628 = vadd.f32 %v626, %v627
      %v632 = vcombine.low %v606, %v615
      %v634 = vunpack.c.l.s4 1966171168
      %v635 = vunpack.c.0.s8 %v634
      %v636 = vlaneseq
      %v637 = vshrl.u32 %v636, 7
      %v638 = vsub.s32 %v635, %v637
      %v639 = vrot.slane %v632, %v638
      %v641 = vunpack.c.l.s4 1966171168
      %v642 = vunpack.c.0.s8 %v641
      %v643 = vlaneseq
      %v644 = vshrl.u32 %v643, 7
      %v645 = vsub.s32 %v642, %v644
      %v646 = vrot.slane %v628, %v645
      %v647 = vcombine.low %v639, %v646
      %v649 = vunpack.c.l.s4 1966171168
      %v650 = vunpack.c.0.s8 %v649
      %v651 = vlaneseq
      %v652 = vshrl.u32 %v651, 7
      %v653 = vsub.s32 %v650, %v652
      %v654 = vrot.slane %v647, %v653
      %v656 = vlaneseq
      %vm657 = vcmp.ge.s32.totalorder %v656, 0
      %vm658 = vcmp.lt.s32.totalorder %v656, 272
      %vm659 = vmand %vm657, %vm658
      %660 = vst.msk [vmem:[%s255] ss:$2 sm:$0x7] %vm659, %v654
      %v661 = vmul.f32 %v518, %v518
      %v662 = vmul.f32 %v520, %v520
      %v663 = vmul.f32 %v571, %v571
      %v664 = vmul.f32 %v522, %v522
      %v665 = vmul.f32 %v524, %v524
      %v666 = vmul.f32 %v574, %v574
      %v667 = vmul.f32 %v528, %v528
      %v668 = vmul.f32 %v530, %v530
      %v669 = vmul.f32 %v579, %v579
      %v670 = vmul.f32 %v532, %v532
      %v671 = vmul.f32 %v534, %v534
      %v672 = vmul.f32 %v582, %v582
      %v673 = vadd.f32 %v661, %v664
      %v674 = vadd.f32 %v673, %v667
      %v675 = vadd.f32 %v674, %v670
      %v676 = vrot.slane %v675, 4
      %v677 = vadd.f32 %v675, %v676
      %v678 = vrot.slane %v677, 2
      %v679 = vadd.f32 %v677, %v678
      %v680 = vrot.slane %v679, 1
      %v681 = vadd.f32 %v679, %v680
      %v682 = vadd.f32 %v662, %v665
      %v683 = vadd.f32 %v682, %v668
      %v684 = vadd.f32 %v683, %v671
      %v685 = vrot.slane %v684, 4
      %v686 = vadd.f32 %v684, %v685
      %v687 = vrot.slane %v686, 2
      %v688 = vadd.f32 %v686, %v687
      %v689 = vrot.slane %v688, 1
      %v690 = vadd.f32 %v688, %v689
      %v691 = vsel %vm587, %v663, 0.0
      %v692 = vsel %vm587, %v666, 0.0
      %v693 = vadd.f32 %v691, %v692
      %v694 = vsel %vm587, %v669, 0.0
      %v695 = vadd.f32 %v693, %v694
      %v696 = vsel %vm587, %v672, 0.0
      %v697 = vadd.f32 %v695, %v696
      %v698 = vrot.slane %v697, 4
      %v699 = vadd.f32 %v697, %v698
      %v700 = vrot.slane %v699, 2
      %v701 = vadd.f32 %v699, %v700
      %v702 = vrot.slane %v701, 1
      %v703 = vadd.f32 %v701, %v702
      %v707 = vcombine.low %v681, %v690
      %v709 = vunpack.c.l.s4 1966171168
      %v710 = vunpack.c.0.s8 %v709
      %v711 = vlaneseq
      %v712 = vshrl.u32 %v711, 7
      %v713 = vsub.s32 %v710, %v712
      %v714 = vrot.slane %v707, %v713
      %v716 = vunpack.c.l.s4 1966171168
      %v717 = vunpack.c.0.s8 %v716
      %v718 = vlaneseq
      %v719 = vshrl.u32 %v718, 7
      %v720 = vsub.s32 %v717, %v719
      %v721 = vrot.slane %v703, %v720
      %v722 = vcombine.low %v714, %v721
      %v724 = vunpack.c.l.s4 1966171168
      %v725 = vunpack.c.0.s8 %v724
      %v726 = vlaneseq
      %v727 = vshrl.u32 %v726, 7
      %v728 = vsub.s32 %v725, %v727
      %v729 = vrot.slane %v722, %v728
      %s731 = scalar_lea.vmem %s255, 1
      %732 = vst.msk [vmem:[%s731] ss:$2 sm:$0x7] %vm659, %v729
      %s733 = smul.u32 4, %s16
      %p734 = scmp.lt.s32.totalorder %s733, 31
      %s735 = scalar_select %p734, %s733, 31
      %s736 = smul.addr %s735, 3
      %s737 = smul.addr %s736, 8
      %s738 = scalar_lea.vmem %s3, %s737
      %p739 = scmp.lt.s32.totalorder %s16, 7
      %s740 = scalar_select %p739, %s16, 7
      %s741 = smul.addr %s740, 3
      %s742 = smul.addr %s741, 2
      %s743 = scalar_lea.vmem %s4, %s742
      // Predicated region
      $region33: #{layer_forward.10} parent=31 // pred_check
        %p744 = pneg %p112
      $region34: #{layer_forward.10} parent=31 // pred_check_branch
        %746 = sbr.rel (%p744) target = $region36
      $region35: #{layer_forward.10} parent=31 // pred_region
        %s747 = smul.u32 4, %s16
      $region36: #{layer_forward.10} parent=31 // pred_fallthru
        _
      // Predicated region
      $region37: #{layer_forward.10} parent=31 // pred_check
        %p748 = pneg %p138
      $region38: #{layer_forward.10} parent=31 // pred_check_branch
        %750 = sbr.rel (%p748) target = $region40
      $region39: #{layer_forward.10} parent=31 // pred_region
        _
      $region40: #{layer_forward.10} parent=31 // pred_fallthru
        _
    $region32: #{layer_forward.10} parent=5 // pred_fallthru
      _
    %p751 = scmp.le.s32.totalorder 2, %s11
    // Predicated region
    $region41: #{layer_forward.10} parent=5 // pred_check
      %p752 = pneg %p751
    $region42: #{layer_forward.10} parent=5 // pred_check_branch
      %754 = sbr.rel (%p752) target = $region44
    $region43: #{layer_forward.10} parent=5 // pred_region
      %s755 = ssub.s32 %s11, 2
      // Predicated region
      $region45: #{layer_forward.10} parent=43 // pred_check
        %p756 = pneg %p118
      $region46: #{layer_forward.10} parent=43 // pred_check_branch
        %758 = sbr.rel (%p756) target = $region48
      $region47: #{layer_forward.10} parent=43 // pred_region
        %s759 = smul.u32 4, %s17
        %p760 = scmp.lt.s32.totalorder %s759, 31
        %s761 = scalar_select %p760, %s759, 31
        %s762 = smul.addr %s761, 3
        %s763 = smul.addr %s762, 8
        %s764 = scalar_lea.vmem %s3, %s763
      $region48: #{layer_forward.10} parent=43 // pred_fallthru
        _
      // Predicated region
      $region49: #{layer_forward.10} parent=43 // pred_check
        %p765 = pneg %p144
      $region50: #{layer_forward.10} parent=43 // pred_check_branch
        %767 = sbr.rel (%p765) target = $region52
      $region51: #{layer_forward.10} parent=43 // pred_region
        %p768 = scmp.lt.s32.totalorder %s17, 7
        %s769 = scalar_select %p768, %s17, 7
        %s770 = smul.addr %s769, 3
        %s771 = smul.addr %s770, 2
        %s772 = scalar_lea.vmem %s4, %s771
      $region52: #{layer_forward.10} parent=43 // pred_fallthru
        _
    $region44: #{layer_forward.10} parent=5 // pred_fallthru
      _
  $region6: #{layer_forward.10} parent=0 // loop_footer
    %s15 = sadd.s32 1, %s11
  $region7: #{layer_forward.10} parent=0 // loop_footer_branch
    %10 = sbr.rel target = $region3
  $region8: #{layer_forward.10} parent=0 // loop_exit
    _

// kernel: layer_forward.9
$region0: #{layer_forward.9}
  #allocation0 [shape = 'u32[]', space=smem, size = 0x4, offset = 0x4, fixed_abs, tag = 'smem constant byte address 0x4 - core index']
  #allocation1 [shape = 'u32[144,128]{1,0:T(1,128)}', space=vmem, size = 0x12000, scoped, tag = 'internal scratch']
  %s0 = inlined_call_operand.vmem [shape: bf16[544,64], index: 0, kind: input, shape index: {}]
  %s1 = inlined_call_operand.vmem [shape: bf16[64,128], index: 1, kind: input, shape index: {}]
  %s2 = inlined_call_operand.vmem [shape: f32[1,128], index: 2, kind: input, shape index: {}]
  %s3 = inlined_call_operand.vmem [shape: f32[544,128], index: 3, kind: output, shape index: {0}]
  %s4 = inlined_call_operand.vmem [shape: f32[1,2,128], index: 4, kind: output, shape index: {1}]
  %5 = xla_tuple %s3, %s4
  %s6 = sld [smem:[#allocation0]]
  $region30: #{layer_forward.9} parent=0
    _
  %s8 = ssub.s32 1, %s6
  %s9 = scalar_select 0, %s8, %s6
  // Predicated region
  $region2: #{layer_forward.9} parent=0 // pred_check
    _
  $region3: #{layer_forward.9} parent=0 // pred_check_branch
    %11 = sbr.rel (0) target = $region5
  $region4: #{layer_forward.9} parent=0 // pred_region
    _
  $region5: #{layer_forward.9} parent=0 // pred_fallthru
    _
  // Predicated region
  $region6: #{layer_forward.9} parent=0 // pred_check
    _
  $region7: #{layer_forward.9} parent=0 // pred_check_branch
    %13 = sbr.rel (0) target = $region9
  $region8: #{layer_forward.9} parent=0 // pred_region
    _
  $region9: #{layer_forward.9} parent=0 // pred_fallthru
    _
  // Predicated region
  $region10: #{layer_forward.9} parent=0 // pred_check
    _
  $region11: #{layer_forward.9} parent=0 // pred_check_branch
    %15 = sbr.rel (0) target = $region13
  $region12: #{layer_forward.9} parent=0 // pred_region
    _
  $region13: #{layer_forward.9} parent=0 // pred_fallthru
    _
  %v17 = vld [vmem:[%s0] sm:$0xf]
  %v18 = vld [vmem:[%s0 + $0x4] sm:$0xf]
  %v19 = vld [vmem:[%s0 + $0x8] sm:$0xf]
  %v20 = vld [vmem:[%s0 + $0xc] sm:$0xf]
  %v21 = vld [vmem:[%s0 + $0x10] sm:$0xf]
  %v22 = vld [vmem:[%s0 + $0x14] sm:$0xf]
  %v23 = vld [vmem:[%s0 + $0x18] sm:$0xf]
  %v24 = vld [vmem:[%s0 + $0x1c] sm:$0xf]
  %v25 = vld [vmem:[%s0 + $0x20] sm:$0xf]
  %v26 = vld [vmem:[%s0 + $0x24] sm:$0xf]
  %v27 = vld [vmem:[%s0 + $0x28] sm:$0xf]
  %v28 = vld [vmem:[%s0 + $0x2c] sm:$0xf]
  %v29 = vld [vmem:[%s0 + $0x30] sm:$0xf]
  %v30 = vld [vmem:[%s0 + $0x34] sm:$0xf]
  %v31 = vld [vmem:[%s0 + $0x38] sm:$0xf]
  %v32 = vld [vmem:[%s0 + $0x3c] sm:$0xf]
  %v33 = vld [vmem:[%s0 + $0x40] sm:$0xf]
  %v34 = vld [vmem:[%s0 + $0x44] sm:$0xf]
  %v35 = vld [vmem:[%s0 + $0x48] sm:$0xf]
  %v36 = vld [vmem:[%s0 + $0x4c] sm:$0xf]
  %v37 = vld [vmem:[%s0 + $0x50] sm:$0xf]
  %v38 = vld [vmem:[%s0 + $0x54] sm:$0xf]
  %v39 = vld [vmem:[%s0 + $0x58] sm:$0xf]
  %v40 = vld [vmem:[%s0 + $0x5c] sm:$0xf]
  %v41 = vld [vmem:[%s0 + $0x60] sm:$0xf]
  %v42 = vld [vmem:[%s0 + $0x64] sm:$0xf]
  %v43 = vld [vmem:[%s0 + $0x68] sm:$0xf]
  %v44 = vld [vmem:[%s0 + $0x6c] sm:$0xf]
  %v45 = vld [vmem:[%s0 + $0x70] sm:$0xf]
  %v46 = vld [vmem:[%s0 + $0x74] sm:$0xf]
  %v47 = vld [vmem:[%s0 + $0x78] sm:$0xf]
  %v48 = vld [vmem:[%s0 + $0x7c] sm:$0xf]
  %v49 = vld [vmem:[%s0 + $0x80] sm:$0xf]
  %v50 = vld [vmem:[%s0 + $0x84] sm:$0xf]
  %v51 = vld [vmem:[%s0 + $0x88] sm:$0xf]
  %v52 = vld [vmem:[%s0 + $0x8c] sm:$0xf]
  %v53 = vld [vmem:[%s0 + $0x90] sm:$0xf]
  %v54 = vld [vmem:[%s0 + $0x94] sm:$0xf]
  %v55 = vld [vmem:[%s0 + $0x98] sm:$0xf]
  %v56 = vld [vmem:[%s0 + $0x9c] sm:$0xf]
  %v57 = vld [vmem:[%s0 + $0xa0] sm:$0xf]
  %v58 = vld [vmem:[%s0 + $0xa4] sm:$0xf]
  %v59 = vld [vmem:[%s0 + $0xa8] sm:$0xf]
  %v60 = vld [vmem:[%s0 + $0xac] sm:$0xf]
  %v61 = vld [vmem:[%s0 + $0xb0] sm:$0xf]
  %v62 = vld [vmem:[%s0 + $0xb4] sm:$0xf]
  %v63 = vld [vmem:[%s0 + $0xb8] sm:$0xf]
  %v64 = vld [vmem:[%s0 + $0xbc] sm:$0xf]
  %v65 = vld [vmem:[%s0 + $0xc0] sm:$0xf]
  %v66 = vld [vmem:[%s0 + $0xc4] sm:$0xf]
  %v67 = vld [vmem:[%s0 + $0xc8] sm:$0xf]
  %v68 = vld [vmem:[%s0 + $0xcc] sm:$0xf]
  %v69 = vld [vmem:[%s0 + $0xd0] sm:$0xf]
  %v70 = vld [vmem:[%s0 + $0xd4] sm:$0xf]
  %v71 = vld [vmem:[%s0 + $0xd8] sm:$0xf]
  %v72 = vld [vmem:[%s0 + $0xdc] sm:$0xf]
  %v73 = vld [vmem:[%s0 + $0xe0] sm:$0xf]
  %v74 = vld [vmem:[%s0 + $0xe4] sm:$0xf]
  %v75 = vld [vmem:[%s0 + $0xe8] sm:$0xf]
  %v76 = vld [vmem:[%s0 + $0xec] sm:$0xf]
  %v77 = vld [vmem:[%s0 + $0xf0] sm:$0xf]
  %v78 = vld [vmem:[%s0 + $0xf4] sm:$0xf]
  %v79 = vld [vmem:[%s0 + $0xf8] sm:$0xf]
  %v80 = vld [vmem:[%s0 + $0xfc] sm:$0xf]
  %v81 = vld [vmem:[%s0 + $0x100] sm:$0xf]
  %v82 = vld [vmem:[%s0 + $0x104] sm:$0xf]
  %v83 = vld [vmem:[%s0 + $0x108] sm:$0xf]
  %v84 = vld [vmem:[%s0 + $0x10c] sm:$0xf]
  %v85 = vld [vmem:[%s1] sm:$0xf]
  %v86 = vld [vmem:[%s1 + $0x4] sm:$0xf]
  %v87 = vld [vmem:[%s1 + $0x8] sm:$0xf]
  %v88 = vld [vmem:[%s1 + $0xc] sm:$0xf]
  %v89 = vld [vmem:[%s1 + $0x10] sm:$0xf]
  %v90 = vld [vmem:[%s1 + $0x14] sm:$0xf]
  %v91 = vld [vmem:[%s1 + $0x18] sm:$0xf]
  %v92 = vld [vmem:[%s1 + $0x1c] sm:$0xf]
  %v93 = vld [vmem:[%s2] sm:$0x1]
  %v95 = vlaneseq
  %v96 = vshrl.u32 %v95, 7
  %v97 = vsub.s32 0, %v96
  %v98 = vrot.slane %v93, %v97
  %v168 = vunpack.c.l.b16 %v17
  %v169 = vunpack.c.l.b16 %v18
  %v170 = vunpack.c.l.b16 %v19
  %v171 = vunpack.c.l.b16 %v20
  %v172 = vunpack.c.l.b16 %v21
  %v173 = vunpack.c.l.b16 %v22
  %v174 = vunpack.c.l.b16 %v23
  %v175 = vunpack.c.l.b16 %v24
  %v176 = vunpack.c.l.b16 %v25
  %v177 = vunpack.c.l.b16 %v26
  %v178 = vunpack.c.l.b16 %v27
  %v179 = vunpack.c.l.b16 %v28
  %v180 = vunpack.c.l.b16 %v29
  %v181 = vunpack.c.l.b16 %v30
  %v182 = vunpack.c.l.b16 %v31
  %v183 = vunpack.c.l.b16 %v32
  %v184 = vunpack.c.l.b16 %v33
  %v185 = vunpack.c.l.b16 %v34
  %v186 = vunpack.c.l.b16 %v35
  %v187 = vunpack.c.l.b16 %v36
  %v188 = vunpack.c.l.b16 %v37
  %v189 = vunpack.c.l.b16 %v38
  %v190 = vunpack.c.l.b16 %v39
  %v191 = vunpack.c.l.b16 %v40
  %v192 = vunpack.c.l.b16 %v41
  %v193 = vunpack.c.l.b16 %v42
  %v194 = vunpack.c.l.b16 %v43
  %v195 = vunpack.c.l.b16 %v44
  %v196 = vunpack.c.l.b16 %v45
  %v197 = vunpack.c.l.b16 %v46
  %v198 = vunpack.c.l.b16 %v47
  %v199 = vunpack.c.l.b16 %v48
  %v200 = vunpack.c.l.b16 %v49
  %v201 = vunpack.c.l.b16 %v50
  %v202 = vunpack.c.l.b16 %v51
  %v203 = vunpack.c.l.b16 %v52
  %v204 = vunpack.c.l.b16 %v53
  %v205 = vunpack.c.l.b16 %v54
  %v206 = vunpack.c.l.b16 %v55
  %v207 = vunpack.c.l.b16 %v56
  %v208 = vunpack.c.l.b16 %v57
  %v209 = vunpack.c.l.b16 %v58
  %v210 = vunpack.c.l.b16 %v59
  %v211 = vunpack.c.l.b16 %v60
  %v212 = vunpack.c.l.b16 %v61
  %v213 = vunpack.c.l.b16 %v62
  %v214 = vunpack.c.l.b16 %v63
  %v215 = vunpack.c.l.b16 %v64
  %v216 = vunpack.c.l.b16 %v65
  %v217 = vunpack.c.l.b16 %v66
  %v218 = vunpack.c.l.b16 %v67
  %v219 = vunpack.c.l.b16 %v68
  %v220 = vunpack.c.l.b16 %v69
  %v221 = vunpack.c.l.b16 %v70
  %v222 = vunpack.c.l.b16 %v71
  %v223 = vunpack.c.l.b16 %v72
  %v224 = vunpack.c.l.b16 %v73
  %v225 = vunpack.c.l.b16 %v74
  %v226 = vunpack.c.l.b16 %v75
  %v227 = vunpack.c.l.b16 %v76
  %v228 = vunpack.c.l.b16 %v77
  %v229 = vunpack.c.l.b16 %v78
  %v230 = vunpack.c.l.b16 %v79
  %v231 = vunpack.c.l.b16 %v80
  %v232 = vunpack.c.l.b16 %v81
  %v233 = vunpack.c.l.b16 %v82
  %v234 = vunpack.c.l.b16 %v83
  %v235 = vunpack.c.l.b16 %v84
  %v236 = vpack.c.b16 %v169, %v168
  %v237 = vpack.c.b16 %v171, %v170
  %v238 = vpack.c.b16 %v173, %v172
  %v239 = vpack.c.b16 %v175, %v174
  %v240 = vpack.c.b16 %v177, %v176
  %v241 = vpack.c.b16 %v179, %v178
  %v242 = vpack.c.b16 %v181, %v180
  %v243 = vpack.c.b16 %v183, %v182
  %v244 = vpack.c.b16 %v185, %v184
  %v245 = vpack.c.b16 %v187, %v186
  %v246 = vpack.c.b16 %v189, %v188
  %v247 = vpack.c.b16 %v191, %v190
  %v248 = vpack.c.b16 %v193, %v192
  %v249 = vpack.c.b16 %v195, %v194
  %v250 = vpack.c.b16 %v197, %v196
  %v251 = vpack.c.b16 %v199, %v198
  %v252 = vpack.c.b16 %v201, %v200
  %v253 = vpack.c.b16 %v203, %v202
  %v254 = vpack.c.b16 %v205, %v204
  %v255 = vpack.c.b16 %v207, %v206
  %v256 = vpack.c.b16 %v209, %v208
  %v257 = vpack.c.b16 %v211, %v210
  %v258 = vpack.c.b16 %v213, %v212
  %v259 = vpack.c.b16 %v215, %v214
  %v260 = vpack.c.b16 %v217, %v216
  %v261 = vpack.c.b16 %v219, %v218
  %v262 = vpack.c.b16 %v221, %v220
  %v263 = vpack.c.b16 %v223, %v222
  %v264 = vpack.c.b16 %v225, %v224
  %v265 = vpack.c.b16 %v227, %v226
  %v266 = vpack.c.b16 %v229, %v228
  %v267 = vpack.c.b16 %v231, %v230
  %v268 = vpack.c.b16 %v233, %v232
  %v269 = vpack.c.b16 %v235, %v234
  %v278 = vunpack.c.l.b16 %v85
  %v279 = vunpack.c.l.b16 %v86
  %v280 = vunpack.c.l.b16 %v87
  %v281 = vunpack.c.l.b16 %v88
  %v282 = vunpack.c.l.b16 %v89
  %v283 = vunpack.c.l.b16 %v90
  %v284 = vunpack.c.l.b16 %v91
  %v285 = vunpack.c.l.b16 %v92
  %v286 = vpack.c.b16 %v279, %v278
  %v287 = vpack.c.b16 %v281, %v280
  %v288 = vpack.c.b16 %v283, %v282
  %v289 = vpack.c.b16 %v285, %v284
  %vm294 = vcmask 523264
  %v296 = vsel %vm294, %v236, 0
  %v299 = vsel %vm294, %v237, 0
  %v302 = vsel %vm294, %v238, 0
  %v305 = vsel %vm294, %v239, 0
  %v308 = vsel %vm294, %v240, 0
  %v311 = vsel %vm294, %v241, 0
  %v314 = vsel %vm294, %v242, 0
  %v317 = vsel %vm294, %v243, 0
  %v320 = vsel %vm294, %v244, 0
  %v323 = vsel %vm294, %v245, 0
  %v326 = vsel %vm294, %v246, 0
  %v329 = vsel %vm294, %v247, 0
  %v332 = vsel %vm294, %v248, 0
  %v335 = vsel %vm294, %v249, 0
  %v338 = vsel %vm294, %v250, 0
  %v341 = vsel %vm294, %v251, 0
  %v344 = vsel %vm294, %v252, 0
  %v347 = vsel %vm294, %v253, 0
  %v350 = vsel %vm294, %v254, 0
  %v353 = vsel %vm294, %v255, 0
  %v356 = vsel %vm294, %v256, 0
  %v359 = vsel %vm294, %v257, 0
  %v362 = vsel %vm294, %v258, 0
  %v365 = vsel %vm294, %v259, 0
  %v368 = vsel %vm294, %v260, 0
  %v371 = vsel %vm294, %v261, 0
  %v374 = vsel %vm294, %v262, 0
  %v377 = vsel %vm294, %v263, 0
  %v380 = vsel %vm294, %v264, 0
  %v383 = vsel %vm294, %v265, 0
  %v386 = vsel %vm294, %v266, 0
  %v389 = vsel %vm294, %v267, 0
  %v392 = vsel %vm294, %v268, 0
  %v395 = vsel %vm294, %v269, 0
  %397 = vmatprep.subr.bf16.mxu0 0
  %398 = vmatpush1.bf16.msra.mxu0 %v286
  %399 = vmatprep.subr.bf16.mxu0 0
  %400 = vmatpush1.bf16.msra.mxu0 %v287
  %401 = vmatprep.subr.bf16.mxu0 0
  %402 = vmatpush1.bf16.msra.mxu0 %v288
  %403 = vmatprep.subr.bf16.mxu0 0
  %404 = vmatpush1.bf16.msra.mxu0 %v289
  %405 = vmatprep.subr.bf16.mxu0 0
  %406 = vmatpush1.bf16.msra.mxu0 0
  %407 = vmatprep.subr.bf16.mxu0 0
  %408 = vmatpush1.bf16.msra.mxu0 0
  %409 = vmatprep.subr.bf16.mxu0 0
  %410 = vmatpush1.bf16.msra.mxu0 0
  %411 = vmatprep.subr.bf16.mxu0 0
  %412 = vmatpush1.bf16.msra.mxu0 0
  %413 = vmatprep.subr.bf16.mxu0 0
  %414 = vmatpush1.bf16.msra.mxu0 0
  %415 = vmatprep.subr.bf16.mxu0 0
  %416 = vmatpush1.bf16.msra.mxu0 0
  %417 = vmatprep.subr.bf16.mxu0 0
  %418 = vmatpush1.bf16.msra.mxu0 0
  %419 = vmatprep.subr.bf16.mxu0 0
  %420 = vmatpush1.bf16.msra.mxu0 0
  %421 = vmatprep.subr.bf16.mxu0 0
  %422 = vmatpush1.bf16.msra.mxu0 0
  %423 = vmatprep.subr.bf16.mxu0 0
  %424 = vmatpush1.bf16.msra.mxu0 0
  %425 = vmatprep.subr.bf16.mxu0 0
  %426 = vmatpush1.bf16.msra.mxu0 0
  %427 = vmatprep.subr.bf16.mxu0 0
  %428 = vmatpush1.bf16.msra.mxu0 0
  %429 = vmatprep.mubr.bf16.mxu0 0
  %430 = vmatmul.mubr.bf16.gmra.mrb[0].mxu0 %v296
  %v431 = vpop.f32.mrb[0].mxu0
  %v432 = vadd.f32 %v98, %v431
  %v433 = vpop.f32.mrb[0].mxu0
  %v434 = vpop.f32.mrb[0].mxu0
  %v435 = vadd.f32 %v98, %v434
  %v436 = vpop.f32.mrb[0].mxu0
  %437 = vmatprep.mubr.bf16.mxu0 0
  %438 = vmatmul.mubr.bf16.gmra.mrb[0].mxu0 %v299
  %v439 = vpop.f32.mrb[0].mxu0
  %v440 = vadd.f32 %v98, %v439
  %v441 = vpop.f32.mrb[0].mxu0
  %v442 = vpop.f32.mrb[0].mxu0
  %v443 = vadd.f32 %v98, %v442
  %v444 = vpop.f32.mrb[0].mxu0
  %445 = vmatprep.mubr.bf16.mxu0 0
  %446 = vmatmul.mubr.bf16.gmra.mrb[0].mxu0 %v302
  %v447 = vpop.f32.mrb[0].mxu0
  %v448 = vadd.f32 %v98, %v447
  %v449 = vpop.f32.mrb[0].mxu0
  %v450 = vpop.f32.mrb[0].mxu0
  %v451 = vadd.f32 %v98, %v450
  %v452 = vpop.f32.mrb[0].mxu0
  %453 = vmatprep.mubr.bf16.mxu0 0
  %454 = vmatmul.mubr.bf16.gmra.mrb[0].mxu0 %v305
  %v455 = vpop.f32.mrb[0].mxu0
  %v456 = vadd.f32 %v98, %v455
  %v457 = vpop.f32.mrb[0].mxu0
  %v458 = vpop.f32.mrb[0].mxu0
  %v459 = vadd.f32 %v98, %v458
  %v460 = vpop.f32.mrb[0].mxu0
  %461 = vmatprep.mubr.bf16.mxu0 0
  %462 = vmatmul.mubr.bf16.gmra.mrb[0].mxu0 %v308
  %v463 = vpop.f32.mrb[0].mxu0
  %v464 = vadd.f32 %v98, %v463
  %v465 = vpop.f32.mrb[0].mxu0
  %v466 = vpop.f32.mrb[0].mxu0
  %v467 = vadd.f32 %v98, %v466
  %v468 = vpop.f32.mrb[0].mxu0
  %469 = vmatprep.mubr.bf16.mxu0 0
  %470 = vmatmul.mubr.bf16.gmra.mrb[0].mxu0 %v311
  %v471 = vpop.f32.mrb[0].mxu0
  %v472 = vadd.f32 %v98, %v471
  %v473 = vpop.f32.mrb[0].mxu0
  %v474 = vpop.f32.mrb[0].mxu0
  %v475 = vadd.f32 %v98, %v474
  %v476 = vpop.f32.mrb[0].mxu0
  %477 = vmatprep.mubr.bf16.mxu0 0
  %478 = vmatmul.mubr.bf16.gmra.mrb[0].mxu0 %v314
  %v479 = vpop.f32.mrb[0].mxu0
  %v480 = vadd.f32 %v98, %v479
  %v481 = vpop.f32.mrb[0].mxu0
  %v482 = vpop.f32.mrb[0].mxu0
  %v483 = vadd.f32 %v98, %v482
  %v484 = vpop.f32.mrb[0].mxu0
  %485 = vmatprep.mubr.bf16.mxu0 0
  %486 = vmatmul.mubr.bf16.gmra.mrb[0].mxu0 %v317
  %v487 = vpop.f32.mrb[0].mxu0
  %v488 = vadd.f32 %v98, %v487
  %v489 = vpop.f32.mrb[0].mxu0
  %v490 = vpop.f32.mrb[0].mxu0
  %v491 = vadd.f32 %v98, %v490
  %v492 = vpop.f32.mrb[0].mxu0
  %493 = vmatprep.mubr.bf16.mxu0 0
  %494 = vmatmul.mubr.bf16.gmra.mrb[0].mxu0 %v320
  %v495 = vpop.f32.mrb[0].mxu0
  %v496 = vadd.f32 %v98, %v495
  %v497 = vpop.f32.mrb[0].mxu0
  %v498 = vpop.f32.mrb[0].mxu0
  %v499 = vadd.f32 %v98, %v498
  %v500 = vpop.f32.mrb[0].mxu0
  %501 = vmatprep.mubr.bf16.mxu0 0
  %502 = vmatmul.mubr.bf16.gmra.mrb[0].mxu0 %v323
  %v503 = vpop.f32.mrb[0].mxu0
  %v504 = vadd.f32 %v98, %v503
  %v505 = vpop.f32.mrb[0].mxu0
  %v506 = vpop.f32.mrb[0].mxu0
  %v507 = vadd.f32 %v98, %v506
  %v508 = vpop.f32.mrb[0].mxu0
  %509 = vmatprep.mubr.bf16.mxu0 0
  %510 = vmatmul.mubr.bf16.gmra.mrb[0].mxu0 %v326
  %v511 = vpop.f32.mrb[0].mxu0
  %v512 = vadd.f32 %v98, %v511
  %v513 = vpop.f32.mrb[0].mxu0
  %v514 = vpop.f32.mrb[0].mxu0
  %v515 = vadd.f32 %v98, %v514
  %v516 = vpop.f32.mrb[0].mxu0
  %517 = vmatprep.mubr.bf16.mxu0 0
  %518 = vmatmul.mubr.bf16.gmra.mrb[0].mxu0 %v329
  %v519 = vpop.f32.mrb[0].mxu0
  %v520 = vadd.f32 %v98, %v519
  %v521 = vpop.f32.mrb[0].mxu0
  %v522 = vpop.f32.mrb[0].mxu0
  %v523 = vadd.f32 %v98, %v522
  %v524 = vpop.f32.mrb[0].mxu0
  %525 = vmatprep.mubr.bf16.mxu0 0
  %526 = vmatmul.mubr.bf16.gmra.mrb[0].mxu0 %v332
  %v527 = vpop.f32.mrb[0].mxu0
  %v528 = vadd.f32 %v98, %v527
  %v529 = vpop.f32.mrb[0].mxu0
  %v530 = vpop.f32.mrb[0].mxu0
  %v531 = vadd.f32 %v98, %v530
  %v532 = vpop.f32.mrb[0].mxu0
  %533 = vmatprep.mubr.bf16.mxu0 0
  %534 = vmatmul.mubr.bf16.gmra.mrb[0].mxu0 %v335
  %v535 = vpop.f32.mrb[0].mxu0
  %v536 = vadd.f32 %v98, %v535
  %v537 = vpop.f32.mrb[0].mxu0
  %v538 = vpop.f32.mrb[0].mxu0
  %v539 = vadd.f32 %v98, %v538
  %v540 = vpop.f32.mrb[0].mxu0
  %541 = vmatprep.mubr.bf16.mxu0 0
  %542 = vmatmul.mubr.bf16.gmra.mrb[0].mxu0 %v338
  %v543 = vpop.f32.mrb[0].mxu0
  %v544 = vadd.f32 %v98, %v543
  %v545 = vpop.f32.mrb[0].mxu0
  %v546 = vpop.f32.mrb[0].mxu0
  %v547 = vadd.f32 %v98, %v546
  %v548 = vpop.f32.mrb[0].mxu0
  %549 = vmatprep.mubr.bf16.mxu0 0
  %550 = vmatmul.mubr.bf16.gmra.mrb[0].mxu0 %v341
  %v551 = vpop.f32.mrb[0].mxu0
  %v552 = vadd.f32 %v98, %v551
  %v553 = vpop.f32.mrb[0].mxu0
  %v554 = vpop.f32.mrb[0].mxu0
  %v555 = vadd.f32 %v98, %v554
  %v556 = vpop.f32.mrb[0].mxu0
  %557 = vmatprep.mubr.bf16.mxu0 0
  %558 = vmatmul.mubr.bf16.gmra.mrb[0].mxu0 %v344
  %v559 = vpop.f32.mrb[0].mxu0
  %v560 = vadd.f32 %v98, %v559
  %v561 = vpop.f32.mrb[0].mxu0
  %v562 = vpop.f32.mrb[0].mxu0
  %v563 = vadd.f32 %v98, %v562
  %v564 = vpop.f32.mrb[0].mxu0
  %565 = vmatprep.mubr.bf16.mxu0 0
  %566 = vmatmul.mubr.bf16.gmra.mrb[0].mxu0 %v347
  %v567 = vpop.f32.mrb[0].mxu0
  %v568 = vadd.f32 %v98, %v567
  %v569 = vpop.f32.mrb[0].mxu0
  %v570 = vpop.f32.mrb[0].mxu0
  %v571 = vadd.f32 %v98, %v570
  %v572 = vpop.f32.mrb[0].mxu0
  %573 = vmatprep.mubr.bf16.mxu0 0
  %574 = vmatmul.mubr.bf16.gmra.mrb[0].mxu0 %v350
  %v575 = vpop.f32.mrb[0].mxu0
  %v576 = vadd.f32 %v98, %v575
  %v577 = vpop.f32.mrb[0].mxu0
  %v578 = vpop.f32.mrb[0].mxu0
  %v579 = vadd.f32 %v98, %v578
  %v580 = vpop.f32.mrb[0].mxu0
  %581 = vmatprep.mubr.bf16.mxu0 0
  %582 = vmatmul.mubr.bf16.gmra.mrb[0].mxu0 %v353
  %v583 = vpop.f32.mrb[0].mxu0
  %v584 = vadd.f32 %v98, %v583
  %v585 = vpop.f32.mrb[0].mxu0
  %v586 = vpop.f32.mrb[0].mxu0
  %v587 = vadd.f32 %v98, %v586
  %v588 = vpop.f32.mrb[0].mxu0
  %589 = vmatprep.mubr.bf16.mxu0 0
  %590 = vmatmul.mubr.bf16.gmra.mrb[0].mxu0 %v356
  %v591 = vpop.f32.mrb[0].mxu0
  %v592 = vadd.f32 %v98, %v591
  %v593 = vpop.f32.mrb[0].mxu0
  %v594 = vpop.f32.mrb[0].mxu0
  %v595 = vadd.f32 %v98, %v594
  %v596 = vpop.f32.mrb[0].mxu0
  %597 = vmatprep.mubr.bf16.mxu0 0
  %598 = vmatmul.mubr.bf16.gmra.mrb[0].mxu0 %v359
  %v599 = vpop.f32.mrb[0].mxu0
  %v600 = vadd.f32 %v98, %v599
  %v601 = vpop.f32.mrb[0].mxu0
  %v602 = vpop.f32.mrb[0].mxu0
  %v603 = vadd.f32 %v98, %v602
  %v604 = vpop.f32.mrb[0].mxu0
  %605 = vmatprep.mubr.bf16.mxu0 0
  %606 = vmatmul.mubr.bf16.gmra.mrb[0].mxu0 %v362
  %v607 = vpop.f32.mrb[0].mxu0
  %v608 = vadd.f32 %v98, %v607
  %v609 = vpop.f32.mrb[0].mxu0
  %v610 = vpop.f32.mrb[0].mxu0
  %v611 = vadd.f32 %v98, %v610
  %v612 = vpop.f32.mrb[0].mxu0
  %613 = vmatprep.mubr.bf16.mxu0 0
  %614 = vmatmul.mubr.bf16.gmra.mrb[0].mxu0 %v365
  %v615 = vpop.f32.mrb[0].mxu0
  %v616 = vadd.f32 %v98, %v615
  %v617 = vpop.f32.mrb[0].mxu0
  %v618 = vpop.f32.mrb[0].mxu0
  %v619 = vadd.f32 %v98, %v618
  %v620 = vpop.f32.mrb[0].mxu0
  %621 = vmatprep.mubr.bf16.mxu0 0
  %622 = vmatmul.mubr.bf16.gmra.mrb[0].mxu0 %v368
  %v623 = vpop.f32.mrb[0].mxu0
  %v624 = vadd.f32 %v98, %v623
  %v625 = vpop.f32.mrb[0].mxu0
  %v626 = vpop.f32.mrb[0].mxu0
  %v627 = vadd.f32 %v98, %v626
  %v628 = vpop.f32.mrb[0].mxu0
  %629 = vmatprep.mubr.bf16.mxu0 0
  %630 = vmatmul.mubr.bf16.gmra.mrb[0].mxu0 %v371
  %v631 = vpop.f32.mrb[0].mxu0
  %v632 = vadd.f32 %v98, %v631
  %v633 = vpop.f32.mrb[0].mxu0
  %v634 = vpop.f32.mrb[0].mxu0
  %v635 = vadd.f32 %v98, %v634
  %v636 = vpop.f32.mrb[0].mxu0
  %637 = vmatprep.mubr.bf16.mxu0 0
  %638 = vmatmul.mubr.bf16.gmra.mrb[0].mxu0 %v374
  %v639 = vpop.f32.mrb[0].mxu0
  %v640 = vadd.f32 %v98, %v639
  %v641 = vpop.f32.mrb[0].mxu0
  %v642 = vpop.f32.mrb[0].mxu0
  %v643 = vadd.f32 %v98, %v642
  %v644 = vpop.f32.mrb[0].mxu0
  %645 = vmatprep.mubr.bf16.mxu0 0
  %646 = vmatmul.mubr.bf16.gmra.mrb[0].mxu0 %v377
  %v647 = vpop.f32.mrb[0].mxu0
  %v648 = vadd.f32 %v98, %v647
  %v649 = vpop.f32.mrb[0].mxu0
  %v650 = vpop.f32.mrb[0].mxu0
  %v651 = vadd.f32 %v98, %v650
  %v652 = vpop.f32.mrb[0].mxu0
  %653 = vmatprep.mubr.bf16.mxu0 0
  %654 = vmatmul.mubr.bf16.gmra.mrb[0].mxu0 %v380
  %v655 = vpop.f32.mrb[0].mxu0
  %v656 = vadd.f32 %v98, %v655
  %v657 = vpop.f32.mrb[0].mxu0
  %v658 = vpop.f32.mrb[0].mxu0
  %v659 = vadd.f32 %v98, %v658
  %v660 = vpop.f32.mrb[0].mxu0
  %661 = vmatprep.mubr.bf16.mxu0 0
  %662 = vmatmul.mubr.bf16.gmra.mrb[0].mxu0 %v383
  %v663 = vpop.f32.mrb[0].mxu0
  %v664 = vadd.f32 %v98, %v663
  %v665 = vpop.f32.mrb[0].mxu0
  %v666 = vpop.f32.mrb[0].mxu0
  %v667 = vadd.f32 %v98, %v666
  %v668 = vpop.f32.mrb[0].mxu0
  %669 = vmatprep.mubr.bf16.mxu0 0
  %670 = vmatmul.mubr.bf16.gmra.mrb[0].mxu0 %v386
  %v671 = vpop.f32.mrb[0].mxu0
  %v672 = vadd.f32 %v98, %v671
  %v673 = vpop.f32.mrb[0].mxu0
  %v674 = vpop.f32.mrb[0].mxu0
  %v675 = vadd.f32 %v98, %v674
  %v676 = vpop.f32.mrb[0].mxu0
  %677 = vmatprep.mubr.bf16.mxu0 0
  %678 = vmatmul.mubr.bf16.gmra.mrb[0].mxu0 %v389
  %v679 = vpop.f32.mrb[0].mxu0
  %v680 = vadd.f32 %v98, %v679
  %v681 = vpop.f32.mrb[0].mxu0
  %v682 = vpop.f32.mrb[0].mxu0
  %v683 = vadd.f32 %v98, %v682
  %v684 = vpop.f32.mrb[0].mxu0
  %685 = vmatprep.mubr.bf16.mxu0 0
  %686 = vmatmul.mubr.bf16.gmra.mrb[0].mxu0 %v392
  %v687 = vpop.f32.mrb[0].mxu0
  %v688 = vadd.f32 %v98, %v687
  %v689 = vpop.f32.mrb[0].mxu0
  %v690 = vpop.f32.mrb[0].mxu0
  %v691 = vadd.f32 %v98, %v690
  %v692 = vpop.f32.mrb[0].mxu0
  %693 = vmatprep.mubr.bf16.mxu0 0
  %694 = vmatmul.mubr.bf16.gmra.mrb[0].mxu0 %v395
  %v695 = vpop.f32.mrb[0].mxu0
  %v696 = vadd.f32 %v98, %v695
  %v697 = vpop.f32.mrb[0].mxu0
  %v698 = vpop.f32.mrb[0].mxu0
  %v699 = vadd.f32 %v98, %v698
  %v700 = vpop.f32.mrb[0].mxu0
  %701 = vdwg.mxu0
  %702 = vst [vmem:[%s3] sm:$0xff] %v432
  %703 = vst [vmem:[%s3 + $0x8] sm:$0xff] %v435
  %704 = vst [vmem:[%s3 + $0x10] sm:$0xff] %v440
  %705 = vst [vmem:[%s3 + $0x18] sm:$0xff] %v443
  %706 = vst [vmem:[%s3 + $0x20] sm:$0xff] %v448
  %707 = vst [vmem:[%s3 + $0x28] sm:$0xff] %v451
  %708 = vst [vmem:[%s3 + $0x30] sm:$0xff] %v456
  %709 = vst [vmem:[%s3 + $0x38] sm:$0xff] %v459
  %710 = vst [vmem:[%s3 + $0x40] sm:$0xff] %v464
  %711 = vst [vmem:[%s3 + $0x48] sm:$0xff] %v467
  %712 = vst [vmem:[%s3 + $0x50] sm:$0xff] %v472
  %713 = vst [vmem:[%s3 + $0x58] sm:$0xff] %v475
  %714 = vst [vmem:[%s3 + $0x60] sm:$0xff] %v480
  %715 = vst [vmem:[%s3 + $0x68] sm:$0xff] %v483
  %716 = vst [vmem:[%s3 + $0x70] sm:$0xff] %v488
  %717 = vst [vmem:[%s3 + $0x78] sm:$0xff] %v491
  %718 = vst [vmem:[%s3 + $0x80] sm:$0xff] %v496
  %719 = vst [vmem:[%s3 + $0x88] sm:$0xff] %v499
  %720 = vst [vmem:[%s3 + $0x90] sm:$0xff] %v504
  %721 = vst [vmem:[%s3 + $0x98] sm:$0xff] %v507
  %722 = vst [vmem:[%s3 + $0xa0] sm:$0xff] %v512
  %723 = vst [vmem:[%s3 + $0xa8] sm:$0xff] %v515
  %724 = vst [vmem:[%s3 + $0xb0] sm:$0xff] %v520
  %725 = vst [vmem:[%s3 + $0xb8] sm:$0xff] %v523
  %726 = vst [vmem:[%s3 + $0xc0] sm:$0xff] %v528
  %727 = vst [vmem:[%s3 + $0xc8] sm:$0xff] %v531
  %728 = vst [vmem:[%s3 + $0xd0] sm:$0xff] %v536
  %729 = vst [vmem:[%s3 + $0xd8] sm:$0xff] %v539
  %730 = vst [vmem:[%s3 + $0xe0] sm:$0xff] %v544
  %731 = vst [vmem:[%s3 + $0xe8] sm:$0xff] %v547
  %732 = vst [vmem:[%s3 + $0xf0] sm:$0xff] %v552
  %733 = vst [vmem:[%s3 + $0xf8] sm:$0xff] %v555
  %734 = vst [vmem:[%s3 + $0x100] sm:$0xff] %v560
  %735 = vst [vmem:[%s3 + $0x108] sm:$0xff] %v563
  %736 = vst [vmem:[%s3 + $0x110] sm:$0xff] %v568
  %737 = vst [vmem:[%s3 + $0x118] sm:$0xff] %v571
  %738 = vst [vmem:[%s3 + $0x120] sm:$0xff] %v576
  %739 = vst [vmem:[%s3 + $0x128] sm:$0xff] %v579
  %740 = vst [vmem:[%s3 + $0x130] sm:$0xff] %v584
  %741 = vst [vmem:[%s3 + $0x138] sm:$0xff] %v587
  %742 = vst [vmem:[%s3 + $0x140] sm:$0xff] %v592
  %743 = vst [vmem:[%s3 + $0x148] sm:$0xff] %v595
  %744 = vst [vmem:[%s3 + $0x150] sm:$0xff] %v600
  %745 = vst [vmem:[%s3 + $0x158] sm:$0xff] %v603
  %746 = vst [vmem:[%s3 + $0x160] sm:$0xff] %v608
  %747 = vst [vmem:[%s3 + $0x168] sm:$0xff] %v611
  %748 = vst [vmem:[%s3 + $0x170] sm:$0xff] %v616
  %749 = vst [vmem:[%s3 + $0x178] sm:$0xff] %v619
  %750 = vst [vmem:[%s3 + $0x180] sm:$0xff] %v624
  %751 = vst [vmem:[%s3 + $0x188] sm:$0xff] %v627
  %752 = vst [vmem:[%s3 + $0x190] sm:$0xff] %v632
  %753 = vst [vmem:[%s3 + $0x198] sm:$0xff] %v635
  %754 = vst [vmem:[%s3 + $0x1a0] sm:$0xff] %v640
  %755 = vst [vmem:[%s3 + $0x1a8] sm:$0xff] %v643
  %756 = vst [vmem:[%s3 + $0x1b0] sm:$0xff] %v648
  %757 = vst [vmem:[%s3 + $0x1b8] sm:$0xff] %v651
  %758 = vst [vmem:[%s3 + $0x1c0] sm:$0xff] %v656
  %759 = vst [vmem:[%s3 + $0x1c8] sm:$0xff] %v659
  %760 = vst [vmem:[%s3 + $0x1d0] sm:$0xff] %v664
  %761 = vst [vmem:[%s3 + $0x1d8] sm:$0xff] %v667
  %762 = vst [vmem:[%s3 + $0x1e0] sm:$0xff] %v672
  %763 = vst [vmem:[%s3 + $0x1e8] sm:$0xff] %v675
  %764 = vst [vmem:[%s3 + $0x1f0] sm:$0xff] %v680
  %765 = vst [vmem:[%s3 + $0x1f8] sm:$0xff] %v683
  %766 = vst [vmem:[%s3 + $0x200] sm:$0xff] %v688
  %767 = vst [vmem:[%s3 + $0x208] sm:$0xff] %v691
  %768 = vst [vmem:[%s3 + $0x210] sm:$0xff] %v696
  %769 = vst [vmem:[%s3 + $0x218] sm:$0xff] %v699
  %v770 = vadd.f32 %v432, %v435
  %v771 = vadd.f32 %v770, %v440
  %v772 = vadd.f32 %v771, %v443
  %v773 = vadd.f32 %v772, %v448
  %v774 = vadd.f32 %v773, %v451
  %v775 = vadd.f32 %v774, %v456
  %v776 = vadd.f32 %v775, %v459
  %v777 = vadd.f32 %v776, %v464
  %v778 = vadd.f32 %v777, %v467
  %v779 = vadd.f32 %v778, %v472
  %v780 = vadd.f32 %v779, %v475
  %v781 = vadd.f32 %v780, %v480
  %v782 = vadd.f32 %v781, %v483
  %v783 = vadd.f32 %v782, %v488
  %v784 = vadd.f32 %v783, %v491
  %v785 = vadd.f32 %v784, %v496
  %v786 = vadd.f32 %v785, %v499
  %v787 = vadd.f32 %v786, %v504
  %v788 = vadd.f32 %v787, %v507
  %v789 = vadd.f32 %v788, %v512
  %v790 = vadd.f32 %v789, %v515
  %v791 = vadd.f32 %v790, %v520
  %v792 = vadd.f32 %v791, %v523
  %v793 = vadd.f32 %v792, %v528
  %v794 = vadd.f32 %v793, %v531
  %v795 = vadd.f32 %v794, %v536
  %v796 = vadd.f32 %v795, %v539
  %v797 = vadd.f32 %v796, %v544
  %v798 = vadd.f32 %v797, %v547
  %v799 = vadd.f32 %v798, %v552
  %v800 = vadd.f32 %v799, %v555
  %v801 = vadd.f32 %v800, %v560
  %v802 = vadd.f32 %v801, %v563
  %v803 = vadd.f32 %v802, %v568
  %v804 = vadd.f32 %v803, %v571
  %v805 = vadd.f32 %v804, %v576
  %v806 = vadd.f32 %v805, %v579
  %v807 = vadd.f32 %v806, %v584
  %v808 = vadd.f32 %v807, %v587
  %v809 = vadd.f32 %v808, %v592
  %v810 = vadd.f32 %v809, %v595
  %v811 = vadd.f32 %v810, %v600
  %v812 = vadd.f32 %v811, %v603
  %v813 = vadd.f32 %v812, %v608
  %v814 = vadd.f32 %v813, %v611
  %v815 = vadd.f32 %v814, %v616
  %v816 = vadd.f32 %v815, %v619
  %v817 = vadd.f32 %v816, %v624
  %v818 = vadd.f32 %v817, %v627
  %v819 = vadd.f32 %v818, %v632
  %v820 = vadd.f32 %v819, %v635
  %v821 = vadd.f32 %v820, %v640
  %v822 = vadd.f32 %v821, %v643
  %v823 = vadd.f32 %v822, %v648
  %v824 = vadd.f32 %v823, %v651
  %v825 = vadd.f32 %v824, %v656
  %v826 = vadd.f32 %v825, %v659
  %v827 = vadd.f32 %v826, %v664
  %v828 = vadd.f32 %v827, %v667
  %v829 = vadd.f32 %v828, %v672
  %v830 = vadd.f32 %v829, %v675
  %v831 = vadd.f32 %v830, %v680
  %v832 = vadd.f32 %v831, %v683
  %v833 = vadd.f32 %v832, %v688
  %v834 = vadd.f32 %v833, %v691
  %v835 = vadd.f32 %v834, %v696
  %v836 = vadd.f32 %v835, %v699
  %v837 = vrot.slane %v836, 4
  %v838 = vadd.f32 %v836, %v837
  %v839 = vrot.slane %v838, 2
  %v840 = vadd.f32 %v838, %v839
  %v841 = vrot.slane %v840, 1
  %v842 = vadd.f32 %v840, %v841
  %843 = vst [vmem:[%s4] sm:$0x1] %v842
  %v844 = vmul.f32 %v432, %v432
  %v845 = vmul.f32 %v435, %v435
  %v846 = vmul.f32 %v440, %v440
  %v847 = vmul.f32 %v443, %v443
  %v848 = vmul.f32 %v448, %v448
  %v849 = vmul.f32 %v451, %v451
  %v850 = vmul.f32 %v456, %v456
  %v851 = vmul.f32 %v459, %v459
  %v852 = vmul.f32 %v464, %v464
  %v853 = vmul.f32 %v467, %v467
  %v854 = vmul.f32 %v472, %v472
  %v855 = vmul.f32 %v475, %v475
  %v856 = vmul.f32 %v480, %v480
  %v857 = vmul.f32 %v483, %v483
  %v858 = vmul.f32 %v488, %v488
  %v859 = vmul.f32 %v491, %v491
  %v860 = vmul.f32 %v496, %v496
  %v861 = vmul.f32 %v499, %v499
  %v862 = vmul.f32 %v504, %v504
  %v863 = vmul.f32 %v507, %v507
  %v864 = vmul.f32 %v512, %v512
  %v865 = vmul.f32 %v515, %v515
  %v866 = vmul.f32 %v520, %v520
  %v867 = vmul.f32 %v523, %v523
  %v868 = vmul.f32 %v528, %v528
  %v869 = vmul.f32 %v531, %v531
  %v870 = vmul.f32 %v536, %v536
  %v871 = vmul.f32 %v539, %v539
  %v872 = vmul.f32 %v544, %v544
  %v873 = vmul.f32 %v547, %v547
  %v874 = vmul.f32 %v552, %v552
  %v875 = vmul.f32 %v555, %v555
  %v876 = vmul.f32 %v560, %v560
  %v877 = vmul.f32 %v563, %v563
  %v878 = vmul.f32 %v568, %v568
  %v879 = vmul.f32 %v571, %v571
  %v880 = vmul.f32 %v576, %v576
  %v881 = vmul.f32 %v579, %v579
  %v882 = vmul.f32 %v584, %v584
  %v883 = vmul.f32 %v587, %v587
  %v884 = vmul.f32 %v592, %v592
  %v885 = vmul.f32 %v595, %v595
  %v886 = vmul.f32 %v600, %v600
  %v887 = vmul.f32 %v603, %v603
  %v888 = vmul.f32 %v608, %v608
  %v889 = vmul.f32 %v611, %v611
  %v890 = vmul.f32 %v616, %v616
  %v891 = vmul.f32 %v619, %v619
  %v892 = vmul.f32 %v624, %v624
  %v893 = vmul.f32 %v627, %v627
  %v894 = vmul.f32 %v632, %v632
  %v895 = vmul.f32 %v635, %v635
  %v896 = vmul.f32 %v640, %v640
  %v897 = vmul.f32 %v643, %v643
  %v898 = vmul.f32 %v648, %v648
  %v899 = vmul.f32 %v651, %v651
  %v900 = vmul.f32 %v656, %v656
  %v901 = vmul.f32 %v659, %v659
  %v902 = vmul.f32 %v664, %v664
  %v903 = vmul.f32 %v667, %v667
  %v904 = vmul.f32 %v672, %v672
  %v905 = vmul.f32 %v675, %v675
  %v906 = vmul.f32 %v680, %v680
  %v907 = vmul.f32 %v683, %v683
  %v908 = vmul.f32 %v688, %v688
  %v909 = vmul.f32 %v691, %v691
  %v910 = vmul.f32 %v696, %v696
  %v911 = vmul.f32 %v699, %v699
  %v912 = vadd.f32 %v844, %v845
  %v913 = vadd.f32 %v912, %v846
  %v914 = vadd.f32 %v913, %v847
  %v915 = vadd.f32 %v914, %v848
  %v916 = vadd.f32 %v915, %v849
  %v917 = vadd.f32 %v916, %v850
  %v918 = vadd.f32 %v917, %v851
  %v919 = vadd.f32 %v918, %v852
  %v920 = vadd.f32 %v919, %v853
  %v921 = vadd.f32 %v920, %v854
  %v922 = vadd.f32 %v921, %v855
  %v923 = vadd.f32 %v922, %v856
  %v924 = vadd.f32 %v923, %v857
  %v925 = vadd.f32 %v924, %v858
  %v926 = vadd.f32 %v925, %v859
  %v927 = vadd.f32 %v926, %v860
  %v928 = vadd.f32 %v927, %v861
  %v929 = vadd.f32 %v928, %v862
  %v930 = vadd.f32 %v929, %v863
  %v931 = vadd.f32 %v930, %v864
  %v932 = vadd.f32 %v931, %v865
  %v933 = vadd.f32 %v932, %v866
  %v934 = vadd.f32 %v933, %v867
  %v935 = vadd.f32 %v934, %v868
  %v936 = vadd.f32 %v935, %v869
  %v937 = vadd.f32 %v936, %v870
  %v938 = vadd.f32 %v937, %v871
  %v939 = vadd.f32 %v938, %v872
  %v940 = vadd.f32 %v939, %v873
  %v941 = vadd.f32 %v940, %v874
  %v942 = vadd.f32 %v941, %v875
  %v943 = vadd.f32 %v942, %v876
  %v944 = vadd.f32 %v943, %v877
  %v945 = vadd.f32 %v944, %v878
  %v946 = vadd.f32 %v945, %v879
  %v947 = vadd.f32 %v946, %v880
  %v948 = vadd.f32 %v947, %v881
  %v949 = vadd.f32 %v948, %v882
  %v950 = vadd.f32 %v949, %v883
  %v951 = vadd.f32 %v950, %v884
  %v952 = vadd.f32 %v951, %v885
  %v953 = vadd.f32 %v952, %v886
  %v954 = vadd.f32 %v953, %v887
  %v955 = vadd.f32 %v954, %v888
  %v956 = vadd.f32 %v955, %v889
  %v957 = vadd.f32 %v956, %v890
  %v958 = vadd.f32 %v957, %v891
  %v959 = vadd.f32 %v958, %v892
  %v960 = vadd.f32 %v959, %v893
  %v961 = vadd.f32 %v960, %v894
  %v962 = vadd.f32 %v961, %v895
  %v963 = vadd.f32 %v962, %v896
  %v964 = vadd.f32 %v963, %v897
  %v965 = vadd.f32 %v964, %v898
  %v966 = vadd.f32 %v965, %v899
  %v967 = vadd.f32 %v966, %v900
  %v968 = vadd.f32 %v967, %v901
  %v969 = vadd.f32 %v968, %v902
  %v970 = vadd.f32 %v969, %v903
  %v971 = vadd.f32 %v970, %v904
  %v972 = vadd.f32 %v971, %v905
  %v973 = vadd.f32 %v972, %v906
  %v974 = vadd.f32 %v973, %v907
  %v975 = vadd.f32 %v974, %v908
  %v976 = vadd.f32 %v975, %v909
  %v977 = vadd.f32 %v976, %v910
  %v978 = vadd.f32 %v977, %v911
  %v979 = vrot.slane %v978, 4
  %v980 = vadd.f32 %v978, %v979
  %v981 = vrot.slane %v980, 2
  %v982 = vadd.f32 %v980, %v981
  %v983 = vrot.slane %v982, 1
  %v984 = vadd.f32 %v982, %v983
  %985 = vst [vmem:[%s4 + $0x1] sm:$0x1] %v984
  // Predicated region
  $region14: #{layer_forward.9} parent=0 // pred_check
    _
  $region15: #{layer_forward.9} parent=0 // pred_check_branch
    %987 = sbr.rel (0) target = $region17
  $region16: #{layer_forward.9} parent=0 // pred_region
    _
  $region17: #{layer_forward.9} parent=0 // pred_fallthru
    _
  // Predicated region
  $region18: #{layer_forward.9} parent=0 // pred_check
    _
  $region19: #{layer_forward.9} parent=0 // pred_check_branch
    %989 = sbr.rel (0) target = $region21
  $region20: #{layer_forward.9} parent=0 // pred_region
    _
  $region21: #{layer_forward.9} parent=0 // pred_fallthru
    _
  // Predicated region
  $region22: #{layer_forward.9} parent=0 // pred_check
    _
  $region23: #{layer_forward.9} parent=0 // pred_check_branch
    %991 = sbr.rel (0) target = $region25
  $region24: #{layer_forward.9} parent=0 // pred_region
    _
  $region25: #{layer_forward.9} parent=0 // pred_fallthru
    _
  // Predicated region
  $region26: #{layer_forward.9} parent=0 // pred_check
    _
  $region27: #{layer_forward.9} parent=0 // pred_check_branch
    %993 = sbr.rel (0) target = $region29
  $region28: #{layer_forward.9} parent=0 // pred_region
    _
  $region29: #{layer_forward.9} parent=0 // pred_fallthru
    _

// kernel: squeeze.18
$region0: #{squeeze.18}
  %s0 = inlined_call_operand.vmem [shape: f32[8,272], index: 0, kind: input, shape index: {}]
  %s1 = inlined_call_operand.vmem [shape: f32[8,17,16], index: 1, kind: output, shape index: {}]
  %v2 = vld [vmem:[%s0] sm:$0xff]
  %vm3 = vcmask 130048
  %4 = vst.msk [vmem:[%s1] ss:$24 sm:$0xf] %vm3, %v2
  %5 = vst.msk [vmem:[%s1] ss:$24 sm:$0xf0] %vm3, %v2
  %s6 = scalar_lea.vmem %s0, 8
  %v7 = vld [vmem:[%s6] sm:$0xff]
  %vm8 = vcmask 130048
  %s9 = scalar_lea.vmem %s1, 8
  %10 = vst.msk [vmem:[%s9] ss:$24 sm:$0xf] %vm8, %v7
  %s11 = scalar_lea.vmem %s1, 8
  %12 = vst.msk [vmem:[%s11] ss:$24 sm:$0xf0] %vm8, %v7
  %s13 = scalar_lea.vmem %s0, 16
  %v14 = vld [vmem:[%s13] sm:$0xff]
  %vm15 = vcmask 130048
  %s16 = scalar_lea.vmem %s1, 16
  %17 = vst.msk [vmem:[%s16] ss:$24 sm:$0xf] %vm15, %v14
  %s18 = scalar_lea.vmem %s1, 16
  %19 = vst.msk [vmem:[%s18] ss:$24 sm:$0xf0] %vm15, %v14
  %v20 = vld.sshfl [vmem:[%s0] sm:$0xff pattern:$0x56741230]
  %21 = vrot.lane.b32.xlu0 %v20, 112
  %v22 = vpop.permute.xlu0 %21
  %vm23 = vcmask 130048
  %s24 = scalar_lea.vmem %s1, 1
  %25 = vst.msk [vmem:[%s24] ss:$72 sm:$0x3] %vm23, %v22
  %s26 = scalar_lea.vmem %s1, 97
  %27 = vst.msk [vmem:[%s26] ss:$-24 sm:$0xc] %vm23, %v22
  %s28 = scalar_lea.vmem %s1, 4294967105
  %29 = vst.msk [vmem:[%s28] ss:$72 sm:$0x30] %vm23, %v22
  %s30 = scalar_lea.vmem %s1, 289
  %31 = vst.msk [vmem:[%s30] ss:$-24 sm:$0xc0] %vm23, %v22
  %s32 = scalar_lea.vmem %s0, 8
  %v33 = vld.sshfl [vmem:[%s32] sm:$0xff pattern:$0x67452301]
  %34 = vrot.lane.b32.xlu0 %v33, 112
  %v35 = vpop.permute.xlu0 %34
  %vm36 = vcmask 130048
  %s37 = scalar_lea.vmem %s1, 33
  %38 = vst.msk [vmem:[%s37] ss:$-24 sm:$0x3] %vm36, %v35
  %s39 = scalar_lea.vmem %s1, 129
  %40 = vst.msk [vmem:[%s39] ss:$-24 sm:$0xc] %vm36, %v35
  %s41 = scalar_lea.vmem %s1, 225
  %42 = vst.msk [vmem:[%s41] ss:$-24 sm:$0x30] %vm36, %v35
  %s43 = scalar_lea.vmem %s1, 321
  %44 = vst.msk [vmem:[%s43] ss:$-24 sm:$0xc0] %vm36, %v35
  %v45 = vld.sshfl [vmem:[%s0] sm:$0xff pattern:$0x56741230]
  %46 = vrot.lane.b32.xlu0 %v45, 96
  %v47 = vpop.permute.xlu0 %46
  %vm48 = vcmask 130048
  %s49 = scalar_lea.vmem %s1, 2
  %50 = vst.msk [vmem:[%s49] ss:$72 sm:$0x3] %vm48, %v47
  %s51 = scalar_lea.vmem %s1, 98
  %52 = vst.msk [vmem:[%s51] ss:$-24 sm:$0xc] %vm48, %v47
  %s53 = scalar_lea.vmem %s1, 4294967106
  %54 = vst.msk [vmem:[%s53] ss:$72 sm:$0x30] %vm48, %v47
  %s55 = scalar_lea.vmem %s1, 290
  %56 = vst.msk [vmem:[%s55] ss:$-24 sm:$0xc0] %vm48, %v47
  %s57 = scalar_lea.vmem %s0, 8
  %v58 = vld.sshfl [vmem:[%s57] sm:$0xff pattern:$0x67452301]
  %59 = vrot.lane.b32.xlu0 %v58, 96
  %v60 = vpop.permute.xlu0 %59
  %vm61 = vcmask 130048
  %s62 = scalar_lea.vmem %s1, 34
  %63 = vst.msk [vmem:[%s62] ss:$-24 sm:$0x3] %vm61, %v60
  %s64 = scalar_lea.vmem %s1, 130
  %65 = vst.msk [vmem:[%s64] ss:$-24 sm:$0xc] %vm61, %v60
  %s66 = scalar_lea.vmem %s1, 226
  %67 = vst.msk [vmem:[%s66] ss:$-24 sm:$0x30] %vm61, %v60
  %s68 = scalar_lea.vmem %s1, 322
  %69 = vst.msk [vmem:[%s68] ss:$-24 sm:$0xc0] %vm61, %v60
  %v70 = vld.sshfl [vmem:[%s0] sm:$0xff pattern:$0x56741230]
  %71 = vrot.lane.b32.xlu0 %v70, 80
  %v72 = vpop.permute.xlu0 %71
  %vm73 = vcmask 130048
  %s74 = scalar_lea.vmem %s1, 3
  %75 = vst.msk [vmem:[%s74] ss:$72 sm:$0x3] %vm73, %v72
  %s76 = scalar_lea.vmem %s1, 99
  %77 = vst.msk [vmem:[%s76] ss:$-24 sm:$0xc] %vm73, %v72
  %s78 = scalar_lea.vmem %s1, 4294967107
  %79 = vst.msk [vmem:[%s78] ss:$72 sm:$0x30] %vm73, %v72
  %s80 = scalar_lea.vmem %s1, 291
  %81 = vst.msk [vmem:[%s80] ss:$-24 sm:$0xc0] %vm73, %v72
  %s82 = scalar_lea.vmem %s0, 8
  %v83 = vld.sshfl [vmem:[%s82] sm:$0xff pattern:$0x67452301]
  %84 = vrot.lane.b32.xlu0 %v83, 80
  %v85 = vpop.permute.xlu0 %84
  %vm86 = vcmask 130048
  %s87 = scalar_lea.vmem %s1, 35
  %88 = vst.msk [vmem:[%s87] ss:$-24 sm:$0x3] %vm86, %v85
  %s89 = scalar_lea.vmem %s1, 131
  %90 = vst.msk [vmem:[%s89] ss:$-24 sm:$0xc] %vm86, %v85
  %s91 = scalar_lea.vmem %s1, 227
  %92 = vst.msk [vmem:[%s91] ss:$-24 sm:$0x30] %vm86, %v85
  %s93 = scalar_lea.vmem %s1, 323
  %94 = vst.msk [vmem:[%s93] ss:$-24 sm:$0xc0] %vm86, %v85
  %v95 = vld.sshfl [vmem:[%s0] sm:$0xff pattern:$0x56741230]
  %96 = vrot.lane.b32.xlu0 %v95, 64
  %v97 = vpop.permute.xlu0 %96
  %vm98 = vcmask 130048
  %s99 = scalar_lea.vmem %s1, 4
  %100 = vst.msk [vmem:[%s99] ss:$72 sm:$0x3] %vm98, %v97
  %s101 = scalar_lea.vmem %s1, 100
  %102 = vst.msk [vmem:[%s101] ss:$-24 sm:$0xc] %vm98, %v97
  %s103 = scalar_lea.vmem %s1, 4294967108
  %104 = vst.msk [vmem:[%s103] ss:$72 sm:$0x30] %vm98, %v97
  %s105 = scalar_lea.vmem %s1, 292
  %106 = vst.msk [vmem:[%s105] ss:$-24 sm:$0xc0] %vm98, %v97
  %s107 = scalar_lea.vmem %s0, 8
  %v108 = vld.sshfl [vmem:[%s107] sm:$0xff pattern:$0x67452301]
  %109 = vrot.lane.b32.xlu0 %v108, 64
  %v110 = vpop.permute.xlu0 %109
  %vm111 = vcmask 130048
  %s112 = scalar_lea.vmem %s1, 36
  %113 = vst.msk [vmem:[%s112] ss:$-24 sm:$0x3] %vm111, %v110
  %s114 = scalar_lea.vmem %s1, 132
  %115 = vst.msk [vmem:[%s114] ss:$-24 sm:$0xc] %vm111, %v110
  %s116 = scalar_lea.vmem %s1, 228
  %117 = vst.msk [vmem:[%s116] ss:$-24 sm:$0x30] %vm111, %v110
  %s118 = scalar_lea.vmem %s1, 324
  %119 = vst.msk [vmem:[%s118] ss:$-24 sm:$0xc0] %vm111, %v110
  %v120 = vld.sshfl [vmem:[%s0] sm:$0xff pattern:$0x56741230]
  %121 = vrot.lane.b32.xlu0 %v120, 48
  %v122 = vpop.permute.xlu0 %121
  %vm123 = vcmask 130048
  %s124 = scalar_lea.vmem %s1, 5
  %125 = vst.msk [vmem:[%s124] ss:$72 sm:$0x3] %vm123, %v122
  %s126 = scalar_lea.vmem %s1, 101
  %127 = vst.msk [vmem:[%s126] ss:$-24 sm:$0xc] %vm123, %v122
  %s128 = scalar_lea.vmem %s1, 4294967109
  %129 = vst.msk [vmem:[%s128] ss:$72 sm:$0x30] %vm123, %v122
  %s130 = scalar_lea.vmem %s1, 293
  %131 = vst.msk [vmem:[%s130] ss:$-24 sm:$0xc0] %vm123, %v122
  %s132 = scalar_lea.vmem %s0, 8
  %v133 = vld.sshfl [vmem:[%s132] sm:$0xff pattern:$0x67452301]
  %134 = vrot.lane.b32.xlu0 %v133, 48
  %v135 = vpop.permute.xlu0 %134
  %vm136 = vcmask 130048
  %s137 = scalar_lea.vmem %s1, 37
  %138 = vst.msk [vmem:[%s137] ss:$-24 sm:$0x3] %vm136, %v135
  %s139 = scalar_lea.vmem %s1, 133
  %140 = vst.msk [vmem:[%s139] ss:$-24 sm:$0xc] %vm136, %v135
  %s141 = scalar_lea.vmem %s1, 229
  %142 = vst.msk [vmem:[%s141] ss:$-24 sm:$0x30] %vm136, %v135
  %s143 = scalar_lea.vmem %s1, 325
  %144 = vst.msk [vmem:[%s143] ss:$-24 sm:$0xc0] %vm136, %v135
  %v145 = vld.sshfl [vmem:[%s0] sm:$0xff pattern:$0x56741230]
  %146 = vrot.lane.b32.xlu0 %v145, 32
  %v147 = vpop.permute.xlu0 %146
  %vm148 = vcmask 130048
  %s149 = scalar_lea.vmem %s1, 6
  %150 = vst.msk [vmem:[%s149] ss:$72 sm:$0x3] %vm148, %v147
  %s151 = scalar_lea.vmem %s1, 102
  %152 = vst.msk [vmem:[%s151] ss:$-24 sm:$0xc] %vm148, %v147
  %s153 = scalar_lea.vmem %s1, 4294967110
  %154 = vst.msk [vmem:[%s153] ss:$72 sm:$0x30] %vm148, %v147
  %s155 = scalar_lea.vmem %s1, 294
  %156 = vst.msk [vmem:[%s155] ss:$-24 sm:$0xc0] %vm148, %v147
  %s157 = scalar_lea.vmem %s0, 8
  %v158 = vld.sshfl [vmem:[%s157] sm:$0xff pattern:$0x67452301]
  %159 = vrot.lane.b32.xlu0 %v158, 32
  %v160 = vpop.permute.xlu0 %159
  %vm161 = vcmask 130048
  %s162 = scalar_lea.vmem %s1, 38
  %163 = vst.msk [vmem:[%s162] ss:$-24 sm:$0x3] %vm161, %v160
  %s164 = scalar_lea.vmem %s1, 134
  %165 = vst.msk [vmem:[%s164] ss:$-24 sm:$0xc] %vm161, %v160
  %s166 = scalar_lea.vmem %s1, 230
  %167 = vst.msk [vmem:[%s166] ss:$-24 sm:$0x30] %vm161, %v160
  %s168 = scalar_lea.vmem %s1, 326
  %169 = vst.msk [vmem:[%s168] ss:$-24 sm:$0xc0] %vm161, %v160
  %v170 = vld.sshfl [vmem:[%s0] sm:$0xff pattern:$0x56741230]
  %171 = vrot.lane.b32.xlu0 %v170, 16
  %v172 = vpop.permute.xlu0 %171
  %vm173 = vcmask 130048
  %s174 = scalar_lea.vmem %s1, 7
  %175 = vst.msk [vmem:[%s174] ss:$72 sm:$0x3] %vm173, %v172
  %s176 = scalar_lea.vmem %s1, 103
  %177 = vst.msk [vmem:[%s176] ss:$-24 sm:$0xc] %vm173, %v172
  %s178 = scalar_lea.vmem %s1, 4294967111
  %179 = vst.msk [vmem:[%s178] ss:$72 sm:$0x30] %vm173, %v172
  %s180 = scalar_lea.vmem %s1, 295
  %181 = vst.msk [vmem:[%s180] ss:$-24 sm:$0xc0] %vm173, %v172
  %s182 = scalar_lea.vmem %s0, 8
  %v183 = vld.sshfl [vmem:[%s182] sm:$0xff pattern:$0x67452301]
  %184 = vrot.lane.b32.xlu0 %v183, 16
  %v185 = vpop.permute.xlu0 %184
  %vm186 = vcmask 130048
  %s187 = scalar_lea.vmem %s1, 39
  %188 = vst.msk [vmem:[%s187] ss:$-24 sm:$0x3] %vm186, %v185
  %s189 = scalar_lea.vmem %s1, 135
  %190 = vst.msk [vmem:[%s189] ss:$-24 sm:$0xc] %vm186, %v185
  %s191 = scalar_lea.vmem %s1, 231
  %192 = vst.msk [vmem:[%s191] ss:$-24 sm:$0x30] %vm186, %v185
  %s193 = scalar_lea.vmem %s1, 327
  %194 = vst.msk [vmem:[%s193] ss:$-24 sm:$0xc0] %vm186, %v185

// kernel: layer_forward.11
$region0: #{layer_forward.11}
  #allocation0 [shape = 'u32[]', space=smem, size = 0x4, offset = 0x4, fixed_abs, tag = 'smem constant byte address 0x4 - core index']
  #allocation1 [shape = 'u32[144,128]{1,0:T(1,128)}', space=vmem, size = 0x12000, scoped, tag = 'internal scratch']
  %s0 = inlined_call_operand.vmem [shape: f32[544,128], index: 0, kind: input, shape index: {}]
  %s1 = inlined_call_operand.vmem [shape: f32[544,128], index: 1, kind: input, shape index: {}]
  %s2 = inlined_call_operand.vmem [shape: f32[1,128], index: 2, kind: input, shape index: {}]
  %s3 = inlined_call_operand.vmem [shape: f32[1,128], index: 3, kind: input, shape index: {}]
  %s4 = inlined_call_operand.vmem [shape: f32[1,128], index: 4, kind: input, shape index: {}]
  %s5 = inlined_call_operand.vmem [shape: bf16[128,128], index: 5, kind: input, shape index: {}]
  %s6 = inlined_call_operand.vmem [shape: f32[1,128], index: 6, kind: input, shape index: {}]
  %s7 = inlined_call_operand.vmem [shape: f32[544,128], index: 7, kind: output, shape index: {0}]
  %s8 = inlined_call_operand.vmem [shape: f32[1,2,128], index: 8, kind: output, shape index: {1}]
  %9 = xla_tuple %s7, %s8
  %s10 = sld [smem:[#allocation0]]
  $region46: #{layer_forward.11} parent=0
    _
  %s12 = ssub.s32 1, %s10
  %s13 = scalar_select 0, %s12, %s10
  // Predicated region
  $region2: #{layer_forward.11} parent=0 // pred_check
    _
  $region3: #{layer_forward.11} parent=0 // pred_check_branch
    %15 = sbr.rel (0) target = $region5
  $region4: #{layer_forward.11} parent=0 // pred_region
    _
  $region5: #{layer_forward.11} parent=0 // pred_fallthru
    _
  // Predicated region
  $region6: #{layer_forward.11} parent=0 // pred_check
    _
  $region7: #{layer_forward.11} parent=0 // pred_check_branch
    %17 = sbr.rel (0) target = $region9
  $region8: #{layer_forward.11} parent=0 // pred_region
    _
  $region9: #{layer_forward.11} parent=0 // pred_fallthru
    _
  // Predicated region
  $region10: #{layer_forward.11} parent=0 // pred_check
    _
  $region11: #{layer_forward.11} parent=0 // pred_check_branch
    %19 = sbr.rel (0) target = $region13
  $region12: #{layer_forward.11} parent=0 // pred_region
    _
  $region13: #{layer_forward.11} parent=0 // pred_fallthru
    _
  // Predicated region
  $region14: #{layer_forward.11} parent=0 // pred_check
    _
  $region15: #{layer_forward.11} parent=0 // pred_check_branch
    %21 = sbr.rel (0) target = $region17
  $region16: #{layer_forward.11} parent=0 // pred_region
    _
  $region17: #{layer_forward.11} parent=0 // pred_fallthru
    _
  // Predicated region
  $region18: #{layer_forward.11} parent=0 // pred_check
    _
  $region19: #{layer_forward.11} parent=0 // pred_check_branch
    %23 = sbr.rel (0) target = $region21
  $region20: #{layer_forward.11} parent=0 // pred_region
    _
  $region21: #{layer_forward.11} parent=0 // pred_fallthru
    _
  // Predicated region
  $region22: #{layer_forward.11} parent=0 // pred_check
    _
  $region23: #{layer_forward.11} parent=0 // pred_check_branch
    %25 = sbr.rel (0) target = $region25
  $region24: #{layer_forward.11} parent=0 // pred_region
    _
  $region25: #{layer_forward.11} parent=0 // pred_fallthru
    _
  // Predicated region
  $region26: #{layer_forward.11} parent=0 // pred_check
    _
  $region27: #{layer_forward.11} parent=0 // pred_check_branch
    %27 = sbr.rel (0) target = $region29
  $region28: #{layer_forward.11} parent=0 // pred_region
    _
  $region29: #{layer_forward.11} parent=0 // pred_fallthru
    _
  %v29 = vld [vmem:[%s0] sm:$0xff]
  %v30 = vld [vmem:[%s0 + $0x8] sm:$0xff]
  %v31 = vld [vmem:[%s0 + $0x10] sm:$0xff]
  %v32 = vld [vmem:[%s0 + $0x18] sm:$0xff]
  %v33 = vld [vmem:[%s0 + $0x20] sm:$0xff]
  %v34 = vld [vmem:[%s0 + $0x28] sm:$0xff]
  %v35 = vld [vmem:[%s0 + $0x30] sm:$0xff]
  %v36 = vld [vmem:[%s0 + $0x38] sm:$0xff]
  %v37 = vld [vmem:[%s0 + $0x40] sm:$0xff]
  %v38 = vld [vmem:[%s0 + $0x48] sm:$0xff]
  %v39 = vld [vmem:[%s0 + $0x50] sm:$0xff]
  %v40 = vld [vmem:[%s0 + $0x58] sm:$0xff]
  %v41 = vld [vmem:[%s0 + $0x60] sm:$0xff]
  %v42 = vld [vmem:[%s0 + $0x68] sm:$0xff]
  %v43 = vld [vmem:[%s0 + $0x70] sm:$0xff]
  %v44 = vld [vmem:[%s0 + $0x78] sm:$0xff]
  %v45 = vld [vmem:[%s0 + $0x80] sm:$0xff]
  %v46 = vld [vmem:[%s0 + $0x88] sm:$0xff]
  %v47 = vld [vmem:[%s0 + $0x90] sm:$0xff]
  %v48 = vld [vmem:[%s0 + $0x98] sm:$0xff]
  %v49 = vld [vmem:[%s0 + $0xa0] sm:$0xff]
  %v50 = vld [vmem:[%s0 + $0xa8] sm:$0xff]
  %v51 = vld [vmem:[%s0 + $0xb0] sm:$0xff]
  %v52 = vld [vmem:[%s0 + $0xb8] sm:$0xff]
  %v53 = vld [vmem:[%s0 + $0xc0] sm:$0xff]
  %v54 = vld [vmem:[%s0 + $0xc8] sm:$0xff]
  %v55 = vld [vmem:[%s0 + $0xd0] sm:$0xff]
  %v56 = vld [vmem:[%s0 + $0xd8] sm:$0xff]
  %v57 = vld [vmem:[%s0 + $0xe0] sm:$0xff]
  %v58 = vld [vmem:[%s0 + $0xe8] sm:$0xff]
  %v59 = vld [vmem:[%s0 + $0xf0] sm:$0xff]
  %v60 = vld [vmem:[%s0 + $0xf8] sm:$0xff]
  %v61 = vld [vmem:[%s0 + $0x100] sm:$0xff]
  %v62 = vld [vmem:[%s0 + $0x108] sm:$0xff]
  %v63 = vld [vmem:[%s0 + $0x110] sm:$0xff]
  %v64 = vld [vmem:[%s0 + $0x118] sm:$0xff]
  %v65 = vld [vmem:[%s0 + $0x120] sm:$0xff]
  %v66 = vld [vmem:[%s0 + $0x128] sm:$0xff]
  %v67 = vld [vmem:[%s0 + $0x130] sm:$0xff]
  %v68 = vld [vmem:[%s0 + $0x138] sm:$0xff]
  %v69 = vld [vmem:[%s0 + $0x140] sm:$0xff]
  %v70 = vld [vmem:[%s0 + $0x148] sm:$0xff]
  %v71 = vld [vmem:[%s0 + $0x150] sm:$0xff]
  %v72 = vld [vmem:[%s0 + $0x158] sm:$0xff]
  %v73 = vld [vmem:[%s0 + $0x160] sm:$0xff]
  %v74 = vld [vmem:[%s0 + $0x168] sm:$0xff]
  %v75 = vld [vmem:[%s0 + $0x170] sm:$0xff]
  %v76 = vld [vmem:[%s0 + $0x178] sm:$0xff]
  %v77 = vld [vmem:[%s0 + $0x180] sm:$0xff]
  %v78 = vld [vmem:[%s0 + $0x188] sm:$0xff]
  %v79 = vld [vmem:[%s0 + $0x190] sm:$0xff]
  %v80 = vld [vmem:[%s0 + $0x198] sm:$0xff]
  %v81 = vld [vmem:[%s0 + $0x1a0] sm:$0xff]
  %v82 = vld [vmem:[%s0 + $0x1a8] sm:$0xff]
  %v83 = vld [vmem:[%s0 + $0x1b0] sm:$0xff]
  %v84 = vld [vmem:[%s0 + $0x1b8] sm:$0xff]
  %v85 = vld [vmem:[%s0 + $0x1c0] sm:$0xff]
  %v86 = vld [vmem:[%s0 + $0x1c8] sm:$0xff]
  %v87 = vld [vmem:[%s0 + $0x1d0] sm:$0xff]
  %v88 = vld [vmem:[%s0 + $0x1d8] sm:$0xff]
  %v89 = vld [vmem:[%s0 + $0x1e0] sm:$0xff]
  %v90 = vld [vmem:[%s0 + $0x1e8] sm:$0xff]
  %v91 = vld [vmem:[%s0 + $0x1f0] sm:$0xff]
  %v92 = vld [vmem:[%s0 + $0x1f8] sm:$0xff]
  %v93 = vld [vmem:[%s0 + $0x200] sm:$0xff]
  %v94 = vld [vmem:[%s0 + $0x208] sm:$0xff]
  %v95 = vld [vmem:[%s0 + $0x210] sm:$0xff]
  %v96 = vld [vmem:[%s0 + $0x218] sm:$0xff]
  %v97 = vld [vmem:[%s2] sm:$0x1]
  %v99 = vlaneseq
  %v100 = vshrl.u32 %v99, 7
  %v101 = vsub.s32 0, %v100
  %v102 = vrot.slane %v97, %v101
  %v104 = vmul.f32 %v29, %v102
  %v105 = vmul.f32 %v30, %v102
  %v106 = vmul.f32 %v31, %v102
  %v107 = vmul.f32 %v32, %v102
  %v108 = vmul.f32 %v33, %v102
  %v109 = vmul.f32 %v34, %v102
  %v110 = vmul.f32 %v35, %v102
  %v111 = vmul.f32 %v36, %v102
  %v112 = vmul.f32 %v37, %v102
  %v113 = vmul.f32 %v38, %v102
  %v114 = vmul.f32 %v39, %v102
  %v115 = vmul.f32 %v40, %v102
  %v116 = vmul.f32 %v41, %v102
  %v117 = vmul.f32 %v42, %v102
  %v118 = vmul.f32 %v43, %v102
  %v119 = vmul.f32 %v44, %v102
  %v120 = vmul.f32 %v45, %v102
  %v121 = vmul.f32 %v46, %v102
  %v122 = vmul.f32 %v47, %v102
  %v123 = vmul.f32 %v48, %v102
  %v124 = vmul.f32 %v49, %v102
  %v125 = vmul.f32 %v50, %v102
  %v126 = vmul.f32 %v51, %v102
  %v127 = vmul.f32 %v52, %v102
  %v128 = vmul.f32 %v53, %v102
  %v129 = vmul.f32 %v54, %v102
  %v130 = vmul.f32 %v55, %v102
  %v131 = vmul.f32 %v56, %v102
  %v132 = vmul.f32 %v57, %v102
  %v133 = vmul.f32 %v58, %v102
  %v134 = vmul.f32 %v59, %v102
  %v135 = vmul.f32 %v60, %v102
  %v136 = vmul.f32 %v61, %v102
  %v137 = vmul.f32 %v62, %v102
  %v138 = vmul.f32 %v63, %v102
  %v139 = vmul.f32 %v64, %v102
  %v140 = vmul.f32 %v65, %v102
  %v141 = vmul.f32 %v66, %v102
  %v142 = vmul.f32 %v67, %v102
  %v143 = vmul.f32 %v68, %v102
  %v144 = vmul.f32 %v69, %v102
  %v145 = vmul.f32 %v70, %v102
  %v146 = vmul.f32 %v71, %v102
  %v147 = vmul.f32 %v72, %v102
  %v148 = vmul.f32 %v73, %v102
  %v149 = vmul.f32 %v74, %v102
  %v150 = vmul.f32 %v75, %v102
  %v151 = vmul.f32 %v76, %v102
  %v152 = vmul.f32 %v77, %v102
  %v153 = vmul.f32 %v78, %v102
  %v154 = vmul.f32 %v79, %v102
  %v155 = vmul.f32 %v80, %v102
  %v156 = vmul.f32 %v81, %v102
  %v157 = vmul.f32 %v82, %v102
  %v158 = vmul.f32 %v83, %v102
  %v159 = vmul.f32 %v84, %v102
  %v160 = vmul.f32 %v85, %v102
  %v161 = vmul.f32 %v86, %v102
  %v162 = vmul.f32 %v87, %v102
  %v163 = vmul.f32 %v88, %v102
  %v164 = vmul.f32 %v89, %v102
  %v165 = vmul.f32 %v90, %v102
  %v166 = vmul.f32 %v91, %v102
  %v167 = vmul.f32 %v92, %v102
  %v168 = vmul.f32 %v93, %v102
  %v169 = vmul.f32 %v94, %v102
  %v170 = vmul.f32 %v95, %v102
  %v171 = vmul.f32 %v96, %v102
  %v172 = vld [vmem:[%s1] sm:$0xff]
  %v173 = vld [vmem:[%s1 + $0x8] sm:$0xff]
  %v174 = vld [vmem:[%s1 + $0x10] sm:$0xff]
  %v175 = vld [vmem:[%s1 + $0x18] sm:$0xff]
  %v176 = vld [vmem:[%s1 + $0x20] sm:$0xff]
  %v177 = vld [vmem:[%s1 + $0x28] sm:$0xff]
  %v178 = vld [vmem:[%s1 + $0x30] sm:$0xff]
  %v179 = vld [vmem:[%s1 + $0x38] sm:$0xff]
  %v180 = vld [vmem:[%s1 + $0x40] sm:$0xff]
  %v181 = vld [vmem:[%s1 + $0x48] sm:$0xff]
  %v182 = vld [vmem:[%s1 + $0x50] sm:$0xff]
  %v183 = vld [vmem:[%s1 + $0x58] sm:$0xff]
  %v184 = vld [vmem:[%s1 + $0x60] sm:$0xff]
  %v185 = vld [vmem:[%s1 + $0x68] sm:$0xff]
  %v186 = vld [vmem:[%s1 + $0x70] sm:$0xff]
  %v187 = vld [vmem:[%s1 + $0x78] sm:$0xff]
  %v188 = vld [vmem:[%s1 + $0x80] sm:$0xff]
  %v189 = vld [vmem:[%s1 + $0x88] sm:$0xff]
  %v190 = vld [vmem:[%s1 + $0x90] sm:$0xff]
  %v191 = vld [vmem:[%s1 + $0x98] sm:$0xff]
  %v192 = vld [vmem:[%s1 + $0xa0] sm:$0xff]
  %v193 = vld [vmem:[%s1 + $0xa8] sm:$0xff]
  %v194 = vld [vmem:[%s1 + $0xb0] sm:$0xff]
  %v195 = vld [vmem:[%s1 + $0xb8] sm:$0xff]
  %v196 = vld [vmem:[%s1 + $0xc0] sm:$0xff]
  %v197 = vld [vmem:[%s1 + $0xc8] sm:$0xff]
  %v198 = vld [vmem:[%s1 + $0xd0] sm:$0xff]
  %v199 = vld [vmem:[%s1 + $0xd8] sm:$0xff]
  %v200 = vld [vmem:[%s1 + $0xe0] sm:$0xff]
  %v201 = vld [vmem:[%s1 + $0xe8] sm:$0xff]
  %v202 = vld [vmem:[%s1 + $0xf0] sm:$0xff]
  %v203 = vld [vmem:[%s1 + $0xf8] sm:$0xff]
  %v204 = vld [vmem:[%s1 + $0x100] sm:$0xff]
  %v205 = vld [vmem:[%s1 + $0x108] sm:$0xff]
  %v206 = vld [vmem:[%s1 + $0x110] sm:$0xff]
  %v207 = vld [vmem:[%s1 + $0x118] sm:$0xff]
  %v208 = vld [vmem:[%s1 + $0x120] sm:$0xff]
  %v209 = vld [vmem:[%s1 + $0x128] sm:$0xff]
  %v210 = vld [vmem:[%s1 + $0x130] sm:$0xff]
  %v211 = vld [vmem:[%s1 + $0x138] sm:$0xff]
  %v212 = vld [vmem:[%s1 + $0x140] sm:$0xff]
  %v213 = vld [vmem:[%s1 + $0x148] sm:$0xff]
  %v214 = vld [vmem:[%s1 + $0x150] sm:$0xff]
  %v215 = vld [vmem:[%s1 + $0x158] sm:$0xff]
  %v216 = vld [vmem:[%s1 + $0x160] sm:$0xff]
  %v217 = vld [vmem:[%s1 + $0x168] sm:$0xff]
  %v218 = vld [vmem:[%s1 + $0x170] sm:$0xff]
  %v219 = vld [vmem:[%s1 + $0x178] sm:$0xff]
  %v220 = vld [vmem:[%s1 + $0x180] sm:$0xff]
  %v221 = vld [vmem:[%s1 + $0x188] sm:$0xff]
  %v222 = vld [vmem:[%s1 + $0x190] sm:$0xff]
  %v223 = vld [vmem:[%s1 + $0x198] sm:$0xff]
  %v224 = vld [vmem:[%s1 + $0x1a0] sm:$0xff]
  %v225 = vld [vmem:[%s1 + $0x1a8] sm:$0xff]
  %v226 = vld [vmem:[%s1 + $0x1b0] sm:$0xff]
  %v227 = vld [vmem:[%s1 + $0x1b8] sm:$0xff]
  %v228 = vld [vmem:[%s1 + $0x1c0] sm:$0xff]
  %v229 = vld [vmem:[%s1 + $0x1c8] sm:$0xff]
  %v230 = vld [vmem:[%s1 + $0x1d0] sm:$0xff]
  %v231 = vld [vmem:[%s1 + $0x1d8] sm:$0xff]
  %v232 = vld [vmem:[%s1 + $0x1e0] sm:$0xff]
  %v233 = vld [vmem:[%s1 + $0x1e8] sm:$0xff]
  %v234 = vld [vmem:[%s1 + $0x1f0] sm:$0xff]
  %v235 = vld [vmem:[%s1 + $0x1f8] sm:$0xff]
  %v236 = vld [vmem:[%s1 + $0x200] sm:$0xff]
  %v237 = vld [vmem:[%s1 + $0x208] sm:$0xff]
  %v238 = vld [vmem:[%s1 + $0x210] sm:$0xff]
  %v239 = vld [vmem:[%s1 + $0x218] sm:$0xff]
  %v240 = vld [vmem:[%s3] sm:$0x1]
  %v242 = vlaneseq
  %v243 = vshrl.u32 %v242, 7
  %v244 = vsub.s32 0, %v243
  %v245 = vrot.slane %v240, %v244
  %v247 = vmul.f32 %v172, %v245
  %v248 = vmul.f32 %v173, %v245
  %v249 = vmul.f32 %v174, %v245
  %v250 = vmul.f32 %v175, %v245
  %v251 = vmul.f32 %v176, %v245
  %v252 = vmul.f32 %v177, %v245
  %v253 = vmul.f32 %v178, %v245
  %v254 = vmul.f32 %v179, %v245
  %v255 = vmul.f32 %v180, %v245
  %v256 = vmul.f32 %v181, %v245
  %v257 = vmul.f32 %v182, %v245
  %v258 = vmul.f32 %v183, %v245
  %v259 = vmul.f32 %v184, %v245
  %v260 = vmul.f32 %v185, %v245
  %v261 = vmul.f32 %v186, %v245
  %v262 = vmul.f32 %v187, %v245
  %v263 = vmul.f32 %v188, %v245
  %v264 = vmul.f32 %v189, %v245
  %v265 = vmul.f32 %v190, %v245
  %v266 = vmul.f32 %v191, %v245
  %v267 = vmul.f32 %v192, %v245
  %v268 = vmul.f32 %v193, %v245
  %v269 = vmul.f32 %v194, %v245
  %v270 = vmul.f32 %v195, %v245
  %v271 = vmul.f32 %v196, %v245
  %v272 = vmul.f32 %v197, %v245
  %v273 = vmul.f32 %v198, %v245
  %v274 = vmul.f32 %v199, %v245
  %v275 = vmul.f32 %v200, %v245
  %v276 = vmul.f32 %v201, %v245
  %v277 = vmul.f32 %v202, %v245
  %v278 = vmul.f32 %v203, %v245
  %v279 = vmul.f32 %v204, %v245
  %v280 = vmul.f32 %v205, %v245
  %v281 = vmul.f32 %v206, %v245
  %v282 = vmul.f32 %v207, %v245
  %v283 = vmul.f32 %v208, %v245
  %v284 = vmul.f32 %v209, %v245
  %v285 = vmul.f32 %v210, %v245
  %v286 = vmul.f32 %v211, %v245
  %v287 = vmul.f32 %v212, %v245
  %v288 = vmul.f32 %v213, %v245
  %v289 = vmul.f32 %v214, %v245
  %v290 = vmul.f32 %v215, %v245
  %v291 = vmul.f32 %v216, %v245
  %v292 = vmul.f32 %v217, %v245
  %v293 = vmul.f32 %v218, %v245
  %v294 = vmul.f32 %v219, %v245
  %v295 = vmul.f32 %v220, %v245
  %v296 = vmul.f32 %v221, %v245
  %v297 = vmul.f32 %v222, %v245
  %v298 = vmul.f32 %v223, %v245
  %v299 = vmul.f32 %v224, %v245
  %v300 = vmul.f32 %v225, %v245
  %v301 = vmul.f32 %v226, %v245
  %v302 = vmul.f32 %v227, %v245
  %v303 = vmul.f32 %v228, %v245
  %v304 = vmul.f32 %v229, %v245
  %v305 = vmul.f32 %v230, %v245
  %v306 = vmul.f32 %v231, %v245
  %v307 = vmul.f32 %v232, %v245
  %v308 = vmul.f32 %v233, %v245
  %v309 = vmul.f32 %v234, %v245
  %v310 = vmul.f32 %v235, %v245
  %v311 = vmul.f32 %v236, %v245
  %v312 = vmul.f32 %v237, %v245
  %v313 = vmul.f32 %v238, %v245
  %v314 = vmul.f32 %v239, %v245
  %v315 = vadd.f32 %v104, %v247
  %v316 = vadd.f32 %v105, %v248
  %v317 = vadd.f32 %v106, %v249
  %v318 = vadd.f32 %v107, %v250
  %v319 = vadd.f32 %v108, %v251
  %v320 = vadd.f32 %v109, %v252
  %v321 = vadd.f32 %v110, %v253
  %v322 = vadd.f32 %v111, %v254
  %v323 = vadd.f32 %v112, %v255
  %v324 = vadd.f32 %v113, %v256
  %v325 = vadd.f32 %v114, %v257
  %v326 = vadd.f32 %v115, %v258
  %v327 = vadd.f32 %v116, %v259
  %v328 = vadd.f32 %v117, %v260
  %v329 = vadd.f32 %v118, %v261
  %v330 = vadd.f32 %v119, %v262
  %v331 = vadd.f32 %v120, %v263
  %v332 = vadd.f32 %v121, %v264
  %v333 = vadd.f32 %v122, %v265
  %v334 = vadd.f32 %v123, %v266
  %v335 = vadd.f32 %v124, %v267
  %v336 = vadd.f32 %v125, %v268
  %v337 = vadd.f32 %v126, %v269
  %v338 = vadd.f32 %v127, %v270
  %v339 = vadd.f32 %v128, %v271
  %v340 = vadd.f32 %v129, %v272
  %v341 = vadd.f32 %v130, %v273
  %v342 = vadd.f32 %v131, %v274
  %v343 = vadd.f32 %v132, %v275
  %v344 = vadd.f32 %v133, %v276
  %v345 = vadd.f32 %v134, %v277
  %v346 = vadd.f32 %v135, %v278
  %v347 = vadd.f32 %v136, %v279
  %v348 = vadd.f32 %v137, %v280
  %v349 = vadd.f32 %v138, %v281
  %v350 = vadd.f32 %v139, %v282
  %v351 = vadd.f32 %v140, %v283
  %v352 = vadd.f32 %v141, %v284
  %v353 = vadd.f32 %v142, %v285
  %v354 = vadd.f32 %v143, %v286
  %v355 = vadd.f32 %v144, %v287
  %v356 = vadd.f32 %v145, %v288
  %v357 = vadd.f32 %v146, %v289
  %v358 = vadd.f32 %v147, %v290
  %v359 = vadd.f32 %v148, %v291
  %v360 = vadd.f32 %v149, %v292
  %v361 = vadd.f32 %v150, %v293
  %v362 = vadd.f32 %v151, %v294
  %v363 = vadd.f32 %v152, %v295
  %v364 = vadd.f32 %v153, %v296
  %v365 = vadd.f32 %v154, %v297
  %v366 = vadd.f32 %v155, %v298
  %v367 = vadd.f32 %v156, %v299
  %v368 = vadd.f32 %v157, %v300
  %v369 = vadd.f32 %v158, %v301
  %v370 = vadd.f32 %v159, %v302
  %v371 = vadd.f32 %v160, %v303
  %v372 = vadd.f32 %v161, %v304
  %v373 = vadd.f32 %v162, %v305
  %v374 = vadd.f32 %v163, %v306
  %v375 = vadd.f32 %v164, %v307
  %v376 = vadd.f32 %v165, %v308
  %v377 = vadd.f32 %v166, %v309
  %v378 = vadd.f32 %v167, %v310
  %v379 = vadd.f32 %v168, %v311
  %v380 = vadd.f32 %v169, %v312
  %v381 = vadd.f32 %v170, %v313
  %v382 = vadd.f32 %v171, %v314
  %v383 = vld [vmem:[%s4] sm:$0x1]
  %v385 = vlaneseq
  %v386 = vshrl.u32 %v385, 7
  %v387 = vsub.s32 0, %v386
  %v388 = vrot.slane %v383, %v387
  %v390 = vadd.f32 %v315, %v388
  %v391 = vadd.f32 %v316, %v388
  %v392 = vadd.f32 %v317, %v388
  %v393 = vadd.f32 %v318, %v388
  %v394 = vadd.f32 %v319, %v388
  %v395 = vadd.f32 %v320, %v388
  %v396 = vadd.f32 %v321, %v388
  %v397 = vadd.f32 %v322, %v388
  %v398 = vadd.f32 %v323, %v388
  %v399 = vadd.f32 %v324, %v388
  %v400 = vadd.f32 %v325, %v388
  %v401 = vadd.f32 %v326, %v388
  %v402 = vadd.f32 %v327, %v388
  %v403 = vadd.f32 %v328, %v388
  %v404 = vadd.f32 %v329, %v388
  %v405 = vadd.f32 %v330, %v388
  %v406 = vadd.f32 %v331, %v388
  %v407 = vadd.f32 %v332, %v388
  %v408 = vadd.f32 %v333, %v388
  %v409 = vadd.f32 %v334, %v388
  %v410 = vadd.f32 %v335, %v388
  %v411 = vadd.f32 %v336, %v388
  %v412 = vadd.f32 %v337, %v388
  %v413 = vadd.f32 %v338, %v388
  %v414 = vadd.f32 %v339, %v388
  %v415 = vadd.f32 %v340, %v388
  %v416 = vadd.f32 %v341, %v388
  %v417 = vadd.f32 %v342, %v388
  %v418 = vadd.f32 %v343, %v388
  %v419 = vadd.f32 %v344, %v388
  %v420 = vadd.f32 %v345, %v388
  %v421 = vadd.f32 %v346, %v388
  %v422 = vadd.f32 %v347, %v388
  %v423 = vadd.f32 %v348, %v388
  %v424 = vadd.f32 %v349, %v388
  %v425 = vadd.f32 %v350, %v388
  %v426 = vadd.f32 %v351, %v388
  %v427 = vadd.f32 %v352, %v388
  %v428 = vadd.f32 %v353, %v388
  %v429 = vadd.f32 %v354, %v388
  %v430 = vadd.f32 %v355, %v388
  %v431 = vadd.f32 %v356, %v388
  %v432 = vadd.f32 %v357, %v388
  %v433 = vadd.f32 %v358, %v388
  %v434 = vadd.f32 %v359, %v388
  %v435 = vadd.f32 %v360, %v388
  %v436 = vadd.f32 %v361, %v388
  %v437 = vadd.f32 %v362, %v388
  %v438 = vadd.f32 %v363, %v388
  %v439 = vadd.f32 %v364, %v388
  %v440 = vadd.f32 %v365, %v388
  %v441 = vadd.f32 %v366, %v388
  %v442 = vadd.f32 %v367, %v388
  %v443 = vadd.f32 %v368, %v388
  %v444 = vadd.f32 %v369, %v388
  %v445 = vadd.f32 %v370, %v388
  %v446 = vadd.f32 %v371, %v388
  %v447 = vadd.f32 %v372, %v388
  %v448 = vadd.f32 %v373, %v388
  %v449 = vadd.f32 %v374, %v388
  %v450 = vadd.f32 %v375, %v388
  %v451 = vadd.f32 %v376, %v388
  %v452 = vadd.f32 %v377, %v388
  %v453 = vadd.f32 %v378, %v388
  %v454 = vadd.f32 %v379, %v388
  %v455 = vadd.f32 %v380, %v388
  %v456 = vadd.f32 %v381, %v388
  %v457 = vadd.f32 %v382, %v388
  %v458 = vmax.f32 %v390, 0.0
  %v459 = vmax.f32 %v391, 0.0
  %v460 = vmax.f32 %v392, 0.0
  %v461 = vmax.f32 %v393, 0.0
  %v462 = vmax.f32 %v394, 0.0
  %v463 = vmax.f32 %v395, 0.0
  %v464 = vmax.f32 %v396, 0.0
  %v465 = vmax.f32 %v397, 0.0
  %v466 = vmax.f32 %v398, 0.0
  %v467 = vmax.f32 %v399, 0.0
  %v468 = vmax.f32 %v400, 0.0
  %v469 = vmax.f32 %v401, 0.0
  %v470 = vmax.f32 %v402, 0.0
  %v471 = vmax.f32 %v403, 0.0
  %v472 = vmax.f32 %v404, 0.0
  %v473 = vmax.f32 %v405, 0.0
  %v474 = vmax.f32 %v406, 0.0
  %v475 = vmax.f32 %v407, 0.0
  %v476 = vmax.f32 %v408, 0.0
  %v477 = vmax.f32 %v409, 0.0
  %v478 = vmax.f32 %v410, 0.0
  %v479 = vmax.f32 %v411, 0.0
  %v480 = vmax.f32 %v412, 0.0
  %v481 = vmax.f32 %v413, 0.0
  %v482 = vmax.f32 %v414, 0.0
  %v483 = vmax.f32 %v415, 0.0
  %v484 = vmax.f32 %v416, 0.0
  %v485 = vmax.f32 %v417, 0.0
  %v486 = vmax.f32 %v418, 0.0
  %v487 = vmax.f32 %v419, 0.0
  %v488 = vmax.f32 %v420, 0.0
  %v489 = vmax.f32 %v421, 0.0
  %v490 = vmax.f32 %v422, 0.0
  %v491 = vmax.f32 %v423, 0.0
  %v492 = vmax.f32 %v424, 0.0
  %v493 = vmax.f32 %v425, 0.0
  %v494 = vmax.f32 %v426, 0.0
  %v495 = vmax.f32 %v427, 0.0
  %v496 = vmax.f32 %v428, 0.0
  %v497 = vmax.f32 %v429, 0.0
  %v498 = vmax.f32 %v430, 0.0
  %v499 = vmax.f32 %v431, 0.0
  %v500 = vmax.f32 %v432, 0.0
  %v501 = vmax.f32 %v433, 0.0
  %v502 = vmax.f32 %v434, 0.0
  %v503 = vmax.f32 %v435, 0.0
  %v504 = vmax.f32 %v436, 0.0
  %v505 = vmax.f32 %v437, 0.0
  %v506 = vmax.f32 %v438, 0.0
  %v507 = vmax.f32 %v439, 0.0
  %v508 = vmax.f32 %v440, 0.0
  %v509 = vmax.f32 %v441, 0.0
  %v510 = vmax.f32 %v442, 0.0
  %v511 = vmax.f32 %v443, 0.0
  %v512 = vmax.f32 %v444, 0.0
  %v513 = vmax.f32 %v445, 0.0
  %v514 = vmax.f32 %v446, 0.0
  %v515 = vmax.f32 %v447, 0.0
  %v516 = vmax.f32 %v448, 0.0
  %v517 = vmax.f32 %v449, 0.0
  %v518 = vmax.f32 %v450, 0.0
  %v519 = vmax.f32 %v451, 0.0
  %v520 = vmax.f32 %v452, 0.0
  %v521 = vmax.f32 %v453, 0.0
  %v522 = vmax.f32 %v454, 0.0
  %v523 = vmax.f32 %v455, 0.0
  %v524 = vmax.f32 %v456, 0.0
  %v525 = vmax.f32 %v457, 0.0
  %v526 = vpack.c.bf16 %v459, %v458
  %v527 = vpack.c.bf16 %v461, %v460
  %v528 = vpack.c.bf16 %v463, %v462
  %v529 = vpack.c.bf16 %v465, %v464
  %v530 = vpack.c.bf16 %v467, %v466
  %v531 = vpack.c.bf16 %v469, %v468
  %v532 = vpack.c.bf16 %v471, %v470
  %v533 = vpack.c.bf16 %v473, %v472
  %v534 = vpack.c.bf16 %v475, %v474
  %v535 = vpack.c.bf16 %v477, %v476
  %v536 = vpack.c.bf16 %v479, %v478
  %v537 = vpack.c.bf16 %v481, %v480
  %v538 = vpack.c.bf16 %v483, %v482
  %v539 = vpack.c.bf16 %v485, %v484
  %v540 = vpack.c.bf16 %v487, %v486
  %v541 = vpack.c.bf16 %v489, %v488
  %v542 = vpack.c.bf16 %v491, %v490
  %v543 = vpack.c.bf16 %v493, %v492
  %v544 = vpack.c.bf16 %v495, %v494
  %v545 = vpack.c.bf16 %v497, %v496
  %v546 = vpack.c.bf16 %v499, %v498
  %v547 = vpack.c.bf16 %v501, %v500
  %v548 = vpack.c.bf16 %v503, %v502
  %v549 = vpack.c.bf16 %v505, %v504
  %v550 = vpack.c.bf16 %v507, %v506
  %v551 = vpack.c.bf16 %v509, %v508
  %v552 = vpack.c.bf16 %v511, %v510
  %v553 = vpack.c.bf16 %v513, %v512
  %v554 = vpack.c.bf16 %v515, %v514
  %v555 = vpack.c.bf16 %v517, %v516
  %v556 = vpack.c.bf16 %v519, %v518
  %v557 = vpack.c.bf16 %v521, %v520
  %v558 = vpack.c.bf16 %v523, %v522
  %v559 = vpack.c.bf16 %v525, %v524
  %v560 = vld [vmem:[%s5] sm:$0xf]
  %v561 = vld [vmem:[%s5 + $0x4] sm:$0xf]
  %v562 = vld [vmem:[%s5 + $0x8] sm:$0xf]
  %v563 = vld [vmem:[%s5 + $0xc] sm:$0xf]
  %v564 = vld [vmem:[%s5 + $0x10] sm:$0xf]
  %v565 = vld [vmem:[%s5 + $0x14] sm:$0xf]
  %v566 = vld [vmem:[%s5 + $0x18] sm:$0xf]
  %v567 = vld [vmem:[%s5 + $0x1c] sm:$0xf]
  %v568 = vld [vmem:[%s5 + $0x20] sm:$0xf]
  %v569 = vld [vmem:[%s5 + $0x24] sm:$0xf]
  %v570 = vld [vmem:[%s5 + $0x28] sm:$0xf]
  %v571 = vld [vmem:[%s5 + $0x2c] sm:$0xf]
  %v572 = vld [vmem:[%s5 + $0x30] sm:$0xf]
  %v573 = vld [vmem:[%s5 + $0x34] sm:$0xf]
  %v574 = vld [vmem:[%s5 + $0x38] sm:$0xf]
  %v575 = vld [vmem:[%s5 + $0x3c] sm:$0xf]
  %v576 = vld [vmem:[%s6] sm:$0x1]
  %v578 = vlaneseq
  %v579 = vshrl.u32 %v578, 7
  %v580 = vsub.s32 0, %v579
  %v581 = vrot.slane %v576, %v580
  %v599 = vunpack.c.l.b16 %v560
  %v600 = vunpack.c.l.b16 %v561
  %v601 = vunpack.c.l.b16 %v562
  %v602 = vunpack.c.l.b16 %v563
  %v603 = vunpack.c.l.b16 %v564
  %v604 = vunpack.c.l.b16 %v565
  %v605 = vunpack.c.l.b16 %v566
  %v606 = vunpack.c.l.b16 %v567
  %v607 = vunpack.c.l.b16 %v568
  %v608 = vunpack.c.l.b16 %v569
  %v609 = vunpack.c.l.b16 %v570
  %v610 = vunpack.c.l.b16 %v571
  %v611 = vunpack.c.l.b16 %v572
  %v612 = vunpack.c.l.b16 %v573
  %v613 = vunpack.c.l.b16 %v574
  %v614 = vunpack.c.l.b16 %v575
  %v615 = vpack.c.b16 %v600, %v599
  %v616 = vpack.c.b16 %v602, %v601
  %v617 = vpack.c.b16 %v604, %v603
  %v618 = vpack.c.b16 %v606, %v605
  %v619 = vpack.c.b16 %v608, %v607
  %v620 = vpack.c.b16 %v610, %v609
  %v621 = vpack.c.b16 %v612, %v611
  %v622 = vpack.c.b16 %v614, %v613
  %631 = vmatprep.subr.bf16.mxu0 0
  %632 = vmatpush1.bf16.msra.mxu0 %v615
  %633 = vmatprep.subr.bf16.mxu0 0
  %634 = vmatpush1.bf16.msra.mxu0 %v616
  %635 = vmatprep.subr.bf16.mxu0 0
  %636 = vmatpush1.bf16.msra.mxu0 %v617
  %637 = vmatprep.subr.bf16.mxu0 0
  %638 = vmatpush1.bf16.msra.mxu0 %v618
  %639 = vmatprep.subr.bf16.mxu0 0
  %640 = vmatpush1.bf16.msra.mxu0 %v619
  %641 = vmatprep.subr.bf16.mxu0 0
  %642 = vmatpush1.bf16.msra.mxu0 %v620
  %643 = vmatprep.subr.bf16.mxu0 0
  %644 = vmatpush1.bf16.msra.mxu0 %v621
  %645 = vmatprep.subr.bf16.mxu0 0
  %646 = vmatpush1.bf16.msra.mxu0 %v622
  %647 = vmatprep.subr.bf16.mxu0 0
  %648 = vmatpush1.bf16.msra.mxu0 0
  %649 = vmatprep.subr.bf16.mxu0 0
  %650 = vmatpush1.bf16.msra.mxu0 0
  %651 = vmatprep.subr.bf16.mxu0 0
  %652 = vmatpush1.bf16.msra.mxu0 0
  %653 = vmatprep.subr.bf16.mxu0 0
  %654 = vmatpush1.bf16.msra.mxu0 0
  %655 = vmatprep.subr.bf16.mxu0 0
  %656 = vmatpush1.bf16.msra.mxu0 0
  %657 = vmatprep.subr.bf16.mxu0 0
  %658 = vmatpush1.bf16.msra.mxu0 0
  %659 = vmatprep.subr.bf16.mxu0 0
  %660 = vmatpush1.bf16.msra.mxu0 0
  %661 = vmatprep.subr.bf16.mxu0 0
  %662 = vmatpush1.bf16.msra.mxu0 0
  %663 = vmatprep.mubr.bf16.mxu0 0
  %664 = vmatmul.mubr.bf16.gmra.mrb[0].mxu0 %v526
  %v665 = vpop.f32.mrb[0].mxu0
  %v666 = vadd.f32 %v581, %v665
  %v667 = vpop.f32.mrb[0].mxu0
  %v668 = vpop.f32.mrb[0].mxu0
  %v669 = vadd.f32 %v581, %v668
  %v670 = vpop.f32.mrb[0].mxu0
  %671 = vmatprep.mubr.bf16.mxu0 0
  %672 = vmatmul.mubr.bf16.gmra.mrb[0].mxu0 %v527
  %v673 = vpop.f32.mrb[0].mxu0
  %v674 = vadd.f32 %v581, %v673
  %v675 = vpop.f32.mrb[0].mxu0
  %v676 = vpop.f32.mrb[0].mxu0
  %v677 = vadd.f32 %v581, %v676
  %v678 = vpop.f32.mrb[0].mxu0
  %679 = vmatprep.mubr.bf16.mxu0 0
  %680 = vmatmul.mubr.bf16.gmra.mrb[0].mxu0 %v528
  %v681 = vpop.f32.mrb[0].mxu0
  %v682 = vadd.f32 %v581, %v681
  %v683 = vpop.f32.mrb[0].mxu0
  %v684 = vpop.f32.mrb[0].mxu0
  %v685 = vadd.f32 %v581, %v684
  %v686 = vpop.f32.mrb[0].mxu0
  %687 = vmatprep.mubr.bf16.mxu0 0
  %688 = vmatmul.mubr.bf16.gmra.mrb[0].mxu0 %v529
  %v689 = vpop.f32.mrb[0].mxu0
  %v690 = vadd.f32 %v581, %v689
  %v691 = vpop.f32.mrb[0].mxu0
  %v692 = vpop.f32.mrb[0].mxu0
  %v693 = vadd.f32 %v581, %v692
  %v694 = vpop.f32.mrb[0].mxu0
  %695 = vmatprep.mubr.bf16.mxu0 0
  %696 = vmatmul.mubr.bf16.gmra.mrb[0].mxu0 %v530
  %v697 = vpop.f32.mrb[0].mxu0
  %v698 = vadd.f32 %v581, %v697
  %v699 = vpop.f32.mrb[0].mxu0
  %v700 = vpop.f32.mrb[0].mxu0
  %v701 = vadd.f32 %v581, %v700
  %v702 = vpop.f32.mrb[0].mxu0
  %703 = vmatprep.mubr.bf16.mxu0 0
  %704 = vmatmul.mubr.bf16.gmra.mrb[0].mxu0 %v531
  %v705 = vpop.f32.mrb[0].mxu0
  %v706 = vadd.f32 %v581, %v705
  %v707 = vpop.f32.mrb[0].mxu0
  %v708 = vpop.f32.mrb[0].mxu0
  %v709 = vadd.f32 %v581, %v708
  %v710 = vpop.f32.mrb[0].mxu0
  %711 = vmatprep.mubr.bf16.mxu0 0
  %712 = vmatmul.mubr.bf16.gmra.mrb[0].mxu0 %v532
  %v713 = vpop.f32.mrb[0].mxu0
  %v714 = vadd.f32 %v581, %v713
  %v715 = vpop.f32.mrb[0].mxu0
  %v716 = vpop.f32.mrb[0].mxu0
  %v717 = vadd.f32 %v581, %v716
  %v718 = vpop.f32.mrb[0].mxu0
  %719 = vmatprep.mubr.bf16.mxu0 0
  %720 = vmatmul.mubr.bf16.gmra.mrb[0].mxu0 %v533
  %v721 = vpop.f32.mrb[0].mxu0
  %v722 = vadd.f32 %v581, %v721
  %v723 = vpop.f32.mrb[0].mxu0
  %v724 = vpop.f32.mrb[0].mxu0
  %v725 = vadd.f32 %v581, %v724
  %v726 = vpop.f32.mrb[0].mxu0
  %727 = vmatprep.mubr.bf16.mxu0 0
  %728 = vmatmul.mubr.bf16.gmra.mrb[0].mxu0 %v534
  %v729 = vpop.f32.mrb[0].mxu0
  %v730 = vadd.f32 %v581, %v729
  %v731 = vpop.f32.mrb[0].mxu0
  %v732 = vpop.f32.mrb[0].mxu0
  %v733 = vadd.f32 %v581, %v732
  %v734 = vpop.f32.mrb[0].mxu0
  %735 = vmatprep.mubr.bf16.mxu0 0
  %736 = vmatmul.mubr.bf16.gmra.mrb[0].mxu0 %v535
  %v737 = vpop.f32.mrb[0].mxu0
  %v738 = vadd.f32 %v581, %v737
  %v739 = vpop.f32.mrb[0].mxu0
  %v740 = vpop.f32.mrb[0].mxu0
  %v741 = vadd.f32 %v581, %v740
  %v742 = vpop.f32.mrb[0].mxu0
  %743 = vmatprep.mubr.bf16.mxu0 0
  %744 = vmatmul.mubr.bf16.gmra.mrb[0].mxu0 %v536
  %v745 = vpop.f32.mrb[0].mxu0
  %v746 = vadd.f32 %v581, %v745
  %v747 = vpop.f32.mrb[0].mxu0
  %v748 = vpop.f32.mrb[0].mxu0
  %v749 = vadd.f32 %v581, %v748
  %v750 = vpop.f32.mrb[0].mxu0
  %751 = vmatprep.mubr.bf16.mxu0 0
  %752 = vmatmul.mubr.bf16.gmra.mrb[0].mxu0 %v537
  %v753 = vpop.f32.mrb[0].mxu0
  %v754 = vadd.f32 %v581, %v753
  %v755 = vpop.f32.mrb[0].mxu0
  %v756 = vpop.f32.mrb[0].mxu0
  %v757 = vadd.f32 %v581, %v756
  %v758 = vpop.f32.mrb[0].mxu0
  %759 = vmatprep.mubr.bf16.mxu0 0
  %760 = vmatmul.mubr.bf16.gmra.mrb[0].mxu0 %v538
  %v761 = vpop.f32.mrb[0].mxu0
  %v762 = vadd.f32 %v581, %v761
  %v763 = vpop.f32.mrb[0].mxu0
  %v764 = vpop.f32.mrb[0].mxu0
  %v765 = vadd.f32 %v581, %v764
  %v766 = vpop.f32.mrb[0].mxu0
  %767 = vmatprep.mubr.bf16.mxu0 0
  %768 = vmatmul.mubr.bf16.gmra.mrb[0].mxu0 %v539
  %v769 = vpop.f32.mrb[0].mxu0
  %v770 = vadd.f32 %v581, %v769
  %v771 = vpop.f32.mrb[0].mxu0
  %v772 = vpop.f32.mrb[0].mxu0
  %v773 = vadd.f32 %v581, %v772
  %v774 = vpop.f32.mrb[0].mxu0
  %775 = vmatprep.mubr.bf16.mxu0 0
  %776 = vmatmul.mubr.bf16.gmra.mrb[0].mxu0 %v540
  %v777 = vpop.f32.mrb[0].mxu0
  %v778 = vadd.f32 %v581, %v777
  %v779 = vpop.f32.mrb[0].mxu0
  %v780 = vpop.f32.mrb[0].mxu0
  %v781 = vadd.f32 %v581, %v780
  %v782 = vpop.f32.mrb[0].mxu0
  %783 = vmatprep.mubr.bf16.mxu0 0
  %784 = vmatmul.mubr.bf16.gmra.mrb[0].mxu0 %v541
  %v785 = vpop.f32.mrb[0].mxu0
  %v786 = vadd.f32 %v581, %v785
  %v787 = vpop.f32.mrb[0].mxu0
  %v788 = vpop.f32.mrb[0].mxu0
  %v789 = vadd.f32 %v581, %v788
  %v790 = vpop.f32.mrb[0].mxu0
  %791 = vmatprep.mubr.bf16.mxu0 0
  %792 = vmatmul.mubr.bf16.gmra.mrb[0].mxu0 %v542
  %v793 = vpop.f32.mrb[0].mxu0
  %v794 = vadd.f32 %v581, %v793
  %v795 = vpop.f32.mrb[0].mxu0
  %v796 = vpop.f32.mrb[0].mxu0
  %v797 = vadd.f32 %v581, %v796
  %v798 = vpop.f32.mrb[0].mxu0
  %799 = vmatprep.mubr.bf16.mxu0 0
  %800 = vmatmul.mubr.bf16.gmra.mrb[0].mxu0 %v543
  %v801 = vpop.f32.mrb[0].mxu0
  %v802 = vadd.f32 %v581, %v801
  %v803 = vpop.f32.mrb[0].mxu0
  %v804 = vpop.f32.mrb[0].mxu0
  %v805 = vadd.f32 %v581, %v804
  %v806 = vpop.f32.mrb[0].mxu0
  %807 = vmatprep.mubr.bf16.mxu0 0
  %808 = vmatmul.mubr.bf16.gmra.mrb[0].mxu0 %v544
  %v809 = vpop.f32.mrb[0].mxu0
  %v810 = vadd.f32 %v581, %v809
  %v811 = vpop.f32.mrb[0].mxu0
  %v812 = vpop.f32.mrb[0].mxu0
  %v813 = vadd.f32 %v581, %v812
  %v814 = vpop.f32.mrb[0].mxu0
  %815 = vmatprep.mubr.bf16.mxu0 0
  %816 = vmatmul.mubr.bf16.gmra.mrb[0].mxu0 %v545
  %v817 = vpop.f32.mrb[0].mxu0
  %v818 = vadd.f32 %v581, %v817
  %v819 = vpop.f32.mrb[0].mxu0
  %v820 = vpop.f32.mrb[0].mxu0
  %v821 = vadd.f32 %v581, %v820
  %v822 = vpop.f32.mrb[0].mxu0
  %823 = vmatprep.mubr.bf16.mxu0 0
  %824 = vmatmul.mubr.bf16.gmra.mrb[0].mxu0 %v546
  %v825 = vpop.f32.mrb[0].mxu0
  %v826 = vadd.f32 %v581, %v825
  %v827 = vpop.f32.mrb[0].mxu0
  %v828 = vpop.f32.mrb[0].mxu0
  %v829 = vadd.f32 %v581, %v828
  %v830 = vpop.f32.mrb[0].mxu0
  %831 = vmatprep.mubr.bf16.mxu0 0
  %832 = vmatmul.mubr.bf16.gmra.mrb[0].mxu0 %v547
  %v833 = vpop.f32.mrb[0].mxu0
  %v834 = vadd.f32 %v581, %v833
  %v835 = vpop.f32.mrb[0].mxu0
  %v836 = vpop.f32.mrb[0].mxu0
  %v837 = vadd.f32 %v581, %v836
  %v838 = vpop.f32.mrb[0].mxu0
  %839 = vmatprep.mubr.bf16.mxu0 0
  %840 = vmatmul.mubr.bf16.gmra.mrb[0].mxu0 %v548
  %v841 = vpop.f32.mrb[0].mxu0
  %v842 = vadd.f32 %v581, %v841
  %v843 = vpop.f32.mrb[0].mxu0
  %v844 = vpop.f32.mrb[0].mxu0
  %v845 = vadd.f32 %v581, %v844
  %v846 = vpop.f32.mrb[0].mxu0
  %847 = vmatprep.mubr.bf16.mxu0 0
  %848 = vmatmul.mubr.bf16.gmra.mrb[0].mxu0 %v549
  %v849 = vpop.f32.mrb[0].mxu0
  %v850 = vadd.f32 %v581, %v849
  %v851 = vpop.f32.mrb[0].mxu0
  %v852 = vpop.f32.mrb[0].mxu0
  %v853 = vadd.f32 %v581, %v852
  %v854 = vpop.f32.mrb[0].mxu0
  %855 = vmatprep.mubr.bf16.mxu0 0
  %856 = vmatmul.mubr.bf16.gmra.mrb[0].mxu0 %v550
  %v857 = vpop.f32.mrb[0].mxu0
  %v858 = vadd.f32 %v581, %v857
  %v859 = vpop.f32.mrb[0].mxu0
  %v860 = vpop.f32.mrb[0].mxu0
  %v861 = vadd.f32 %v581, %v860
  %v862 = vpop.f32.mrb[0].mxu0
  %863 = vmatprep.mubr.bf16.mxu0 0
  %864 = vmatmul.mubr.bf16.gmra.mrb[0].mxu0 %v551
  %v865 = vpop.f32.mrb[0].mxu0
  %v866 = vadd.f32 %v581, %v865
  %v867 = vpop.f32.mrb[0].mxu0
  %v868 = vpop.f32.mrb[0].mxu0
  %v869 = vadd.f32 %v581, %v868
  %v870 = vpop.f32.mrb[0].mxu0
  %871 = vmatprep.mubr.bf16.mxu0 0
  %872 = vmatmul.mubr.bf16.gmra.mrb[0].mxu0 %v552
  %v873 = vpop.f32.mrb[0].mxu0
  %v874 = vadd.f32 %v581, %v873
  %v875 = vpop.f32.mrb[0].mxu0
  %v876 = vpop.f32.mrb[0].mxu0
  %v877 = vadd.f32 %v581, %v876
  %v878 = vpop.f32.mrb[0].mxu0
  %879 = vmatprep.mubr.bf16.mxu0 0
  %880 = vmatmul.mubr.bf16.gmra.mrb[0].mxu0 %v553
  %v881 = vpop.f32.mrb[0].mxu0
  %v882 = vadd.f32 %v581, %v881
  %v883 = vpop.f32.mrb[0].mxu0
  %v884 = vpop.f32.mrb[0].mxu0
  %v885 = vadd.f32 %v581, %v884
  %v886 = vpop.f32.mrb[0].mxu0
  %887 = vmatprep.mubr.bf16.mxu0 0
  %888 = vmatmul.mubr.bf16.gmra.mrb[0].mxu0 %v554
  %v889 = vpop.f32.mrb[0].mxu0
  %v890 = vadd.f32 %v581, %v889
  %v891 = vpop.f32.mrb[0].mxu0
  %v892 = vpop.f32.mrb[0].mxu0
  %v893 = vadd.f32 %v581, %v892
  %v894 = vpop.f32.mrb[0].mxu0
  %895 = vmatprep.mubr.bf16.mxu0 0
  %896 = vmatmul.mubr.bf16.gmra.mrb[0].mxu0 %v555
  %v897 = vpop.f32.mrb[0].mxu0
  %v898 = vadd.f32 %v581, %v897
  %v899 = vpop.f32.mrb[0].mxu0
  %v900 = vpop.f32.mrb[0].mxu0
  %v901 = vadd.f32 %v581, %v900
  %v902 = vpop.f32.mrb[0].mxu0
  %903 = vmatprep.mubr.bf16.mxu0 0
  %904 = vmatmul.mubr.bf16.gmra.mrb[0].mxu0 %v556
  %v905 = vpop.f32.mrb[0].mxu0
  %v906 = vadd.f32 %v581, %v905
  %v907 = vpop.f32.mrb[0].mxu0
  %v908 = vpop.f32.mrb[0].mxu0
  %v909 = vadd.f32 %v581, %v908
  %v910 = vpop.f32.mrb[0].mxu0
  %911 = vmatprep.mubr.bf16.mxu0 0
  %912 = vmatmul.mubr.bf16.gmra.mrb[0].mxu0 %v557
  %v913 = vpop.f32.mrb[0].mxu0
  %v914 = vadd.f32 %v581, %v913
  %v915 = vpop.f32.mrb[0].mxu0
  %v916 = vpop.f32.mrb[0].mxu0
  %v917 = vadd.f32 %v581, %v916
  %v918 = vpop.f32.mrb[0].mxu0
  %919 = vmatprep.mubr.bf16.mxu0 0
  %920 = vmatmul.mubr.bf16.gmra.mrb[0].mxu0 %v558
  %v921 = vpop.f32.mrb[0].mxu0
  %v922 = vadd.f32 %v581, %v921
  %v923 = vpop.f32.mrb[0].mxu0
  %v924 = vpop.f32.mrb[0].mxu0
  %v925 = vadd.f32 %v581, %v924
  %v926 = vpop.f32.mrb[0].mxu0
  %927 = vmatprep.mubr.bf16.mxu0 0
  %928 = vmatmul.mubr.bf16.gmra.mrb[0].mxu0 %v559
  %v929 = vpop.f32.mrb[0].mxu0
  %v930 = vadd.f32 %v581, %v929
  %v931 = vpop.f32.mrb[0].mxu0
  %v932 = vpop.f32.mrb[0].mxu0
  %v933 = vadd.f32 %v581, %v932
  %v934 = vpop.f32.mrb[0].mxu0
  %935 = vdwg.mxu0
  %936 = vst [vmem:[%s7] sm:$0xff] %v666
  %937 = vst [vmem:[%s7 + $0x8] sm:$0xff] %v669
  %938 = vst [vmem:[%s7 + $0x10] sm:$0xff] %v674
  %939 = vst [vmem:[%s7 + $0x18] sm:$0xff] %v677
  %940 = vst [vmem:[%s7 + $0x20] sm:$0xff] %v682
  %941 = vst [vmem:[%s7 + $0x28] sm:$0xff] %v685
  %942 = vst [vmem:[%s7 + $0x30] sm:$0xff] %v690
  %943 = vst [vmem:[%s7 + $0x38] sm:$0xff] %v693
  %944 = vst [vmem:[%s7 + $0x40] sm:$0xff] %v698
  %945 = vst [vmem:[%s7 + $0x48] sm:$0xff] %v701
  %946 = vst [vmem:[%s7 + $0x50] sm:$0xff] %v706
  %947 = vst [vmem:[%s7 + $0x58] sm:$0xff] %v709
  %948 = vst [vmem:[%s7 + $0x60] sm:$0xff] %v714
  %949 = vst [vmem:[%s7 + $0x68] sm:$0xff] %v717
  %950 = vst [vmem:[%s7 + $0x70] sm:$0xff] %v722
  %951 = vst [vmem:[%s7 + $0x78] sm:$0xff] %v725
  %952 = vst [vmem:[%s7 + $0x80] sm:$0xff] %v730
  %953 = vst [vmem:[%s7 + $0x88] sm:$0xff] %v733
  %954 = vst [vmem:[%s7 + $0x90] sm:$0xff] %v738
  %955 = vst [vmem:[%s7 + $0x98] sm:$0xff] %v741
  %956 = vst [vmem:[%s7 + $0xa0] sm:$0xff] %v746
  %957 = vst [vmem:[%s7 + $0xa8] sm:$0xff] %v749
  %958 = vst [vmem:[%s7 + $0xb0] sm:$0xff] %v754
  %959 = vst [vmem:[%s7 + $0xb8] sm:$0xff] %v757
  %960 = vst [vmem:[%s7 + $0xc0] sm:$0xff] %v762
  %961 = vst [vmem:[%s7 + $0xc8] sm:$0xff] %v765
  %962 = vst [vmem:[%s7 + $0xd0] sm:$0xff] %v770
  %963 = vst [vmem:[%s7 + $0xd8] sm:$0xff] %v773
  %964 = vst [vmem:[%s7 + $0xe0] sm:$0xff] %v778
  %965 = vst [vmem:[%s7 + $0xe8] sm:$0xff] %v781
  %966 = vst [vmem:[%s7 + $0xf0] sm:$0xff] %v786
  %967 = vst [vmem:[%s7 + $0xf8] sm:$0xff] %v789
  %968 = vst [vmem:[%s7 + $0x100] sm:$0xff] %v794
  %969 = vst [vmem:[%s7 + $0x108] sm:$0xff] %v797
  %970 = vst [vmem:[%s7 + $0x110] sm:$0xff] %v802
  %971 = vst [vmem:[%s7 + $0x118] sm:$0xff] %v805
  %972 = vst [vmem:[%s7 + $0x120] sm:$0xff] %v810
  %973 = vst [vmem:[%s7 + $0x128] sm:$0xff] %v813
  %974 = vst [vmem:[%s7 + $0x130] sm:$0xff] %v818
  %975 = vst [vmem:[%s7 + $0x138] sm:$0xff] %v821
  %976 = vst [vmem:[%s7 + $0x140] sm:$0xff] %v826
  %977 = vst [vmem:[%s7 + $0x148] sm:$0xff] %v829
  %978 = vst [vmem:[%s7 + $0x150] sm:$0xff] %v834
  %979 = vst [vmem:[%s7 + $0x158] sm:$0xff] %v837
  %980 = vst [vmem:[%s7 + $0x160] sm:$0xff] %v842
  %981 = vst [vmem:[%s7 + $0x168] sm:$0xff] %v845
  %982 = vst [vmem:[%s7 + $0x170] sm:$0xff] %v850
  %983 = vst [vmem:[%s7 + $0x178] sm:$0xff] %v853
  %984 = vst [vmem:[%s7 + $0x180] sm:$0xff] %v858
  %985 = vst [vmem:[%s7 + $0x188] sm:$0xff] %v861
  %986 = vst [vmem:[%s7 + $0x190] sm:$0xff] %v866
  %987 = vst [vmem:[%s7 + $0x198] sm:$0xff] %v869
  %988 = vst [vmem:[%s7 + $0x1a0] sm:$0xff] %v874
  %989 = vst [vmem:[%s7 + $0x1a8] sm:$0xff] %v877
  %990 = vst [vmem:[%s7 + $0x1b0] sm:$0xff] %v882
  %991 = vst [vmem:[%s7 + $0x1b8] sm:$0xff] %v885
  %992 = vst [vmem:[%s7 + $0x1c0] sm:$0xff] %v890
  %993 = vst [vmem:[%s7 + $0x1c8] sm:$0xff] %v893
  %994 = vst [vmem:[%s7 + $0x1d0] sm:$0xff] %v898
  %995 = vst [vmem:[%s7 + $0x1d8] sm:$0xff] %v901
  %996 = vst [vmem:[%s7 + $0x1e0] sm:$0xff] %v906
  %997 = vst [vmem:[%s7 + $0x1e8] sm:$0xff] %v909
  %998 = vst [vmem:[%s7 + $0x1f0] sm:$0xff] %v914
  %999 = vst [vmem:[%s7 + $0x1f8] sm:$0xff] %v917
  %1000 = vst [vmem:[%s7 + $0x200] sm:$0xff] %v922
  %1001 = vst [vmem:[%s7 + $0x208] sm:$0xff] %v925
  %1002 = vst [vmem:[%s7 + $0x210] sm:$0xff] %v930
  %1003 = vst [vmem:[%s7 + $0x218] sm:$0xff] %v933
  %v1004 = vadd.f32 %v666, %v669
  %v1005 = vadd.f32 %v1004, %v674
  %v1006 = vadd.f32 %v1005, %v677
  %v1007 = vadd.f32 %v1006, %v682
  %v1008 = vadd.f32 %v1007, %v685
  %v1009 = vadd.f32 %v1008, %v690
  %v1010 = vadd.f32 %v1009, %v693
  %v1011 = vadd.f32 %v1010, %v698
  %v1012 = vadd.f32 %v1011, %v701
  %v1013 = vadd.f32 %v1012, %v706
  %v1014 = vadd.f32 %v1013, %v709
  %v1015 = vadd.f32 %v1014, %v714
  %v1016 = vadd.f32 %v1015, %v717
  %v1017 = vadd.f32 %v1016, %v722
  %v1018 = vadd.f32 %v1017, %v725
  %v1019 = vadd.f32 %v1018, %v730
  %v1020 = vadd.f32 %v1019, %v733
  %v1021 = vadd.f32 %v1020, %v738
  %v1022 = vadd.f32 %v1021, %v741
  %v1023 = vadd.f32 %v1022, %v746
  %v1024 = vadd.f32 %v1023, %v749
  %v1025 = vadd.f32 %v1024, %v754
  %v1026 = vadd.f32 %v1025, %v757
  %v1027 = vadd.f32 %v1026, %v762
  %v1028 = vadd.f32 %v1027, %v765
  %v1029 = vadd.f32 %v1028, %v770
  %v1030 = vadd.f32 %v1029, %v773
  %v1031 = vadd.f32 %v1030, %v778
  %v1032 = vadd.f32 %v1031, %v781
  %v1033 = vadd.f32 %v1032, %v786
  %v1034 = vadd.f32 %v1033, %v789
  %v1035 = vadd.f32 %v1034, %v794
  %v1036 = vadd.f32 %v1035, %v797
  %v1037 = vadd.f32 %v1036, %v802
  %v1038 = vadd.f32 %v1037, %v805
  %v1039 = vadd.f32 %v1038, %v810
  %v1040 = vadd.f32 %v1039, %v813
  %v1041 = vadd.f32 %v1040, %v818
  %v1042 = vadd.f32 %v1041, %v821
  %v1043 = vadd.f32 %v1042, %v826
  %v1044 = vadd.f32 %v1043, %v829
  %v1045 = vadd.f32 %v1044, %v834
  %v1046 = vadd.f32 %v1045, %v837
  %v1047 = vadd.f32 %v1046, %v842
  %v1048 = vadd.f32 %v1047, %v845
  %v1049 = vadd.f32 %v1048, %v850
  %v1050 = vadd.f32 %v1049, %v853
  %v1051 = vadd.f32 %v1050, %v858
  %v1052 = vadd.f32 %v1051, %v861
  %v1053 = vadd.f32 %v1052, %v866
  %v1054 = vadd.f32 %v1053, %v869
  %v1055 = vadd.f32 %v1054, %v874
  %v1056 = vadd.f32 %v1055, %v877
  %v1057 = vadd.f32 %v1056, %v882
  %v1058 = vadd.f32 %v1057, %v885
  %v1059 = vadd.f32 %v1058, %v890
  %v1060 = vadd.f32 %v1059, %v893
  %v1061 = vadd.f32 %v1060, %v898
  %v1062 = vadd.f32 %v1061, %v901
  %v1063 = vadd.f32 %v1062, %v906
  %v1064 = vadd.f32 %v1063, %v909
  %v1065 = vadd.f32 %v1064, %v914
  %v1066 = vadd.f32 %v1065, %v917
  %v1067 = vadd.f32 %v1066, %v922
  %v1068 = vadd.f32 %v1067, %v925
  %v1069 = vadd.f32 %v1068, %v930
  %v1070 = vadd.f32 %v1069, %v933
  %v1071 = vrot.slane %v1070, 4
  %v1072 = vadd.f32 %v1070, %v1071
  %v1073 = vrot.slane %v1072, 2
  %v1074 = vadd.f32 %v1072, %v1073
  %v1075 = vrot.slane %v1074, 1
  %v1076 = vadd.f32 %v1074, %v1075
  %1077 = vst [vmem:[%s8] sm:$0x1] %v1076
  %v1078 = vmul.f32 %v666, %v666
  %v1079 = vmul.f32 %v669, %v669
  %v1080 = vmul.f32 %v674, %v674
  %v1081 = vmul.f32 %v677, %v677
  %v1082 = vmul.f32 %v682, %v682
  %v1083 = vmul.f32 %v685, %v685
  %v1084 = vmul.f32 %v690, %v690
  %v1085 = vmul.f32 %v693, %v693
  %v1086 = vmul.f32 %v698, %v698
  %v1087 = vmul.f32 %v701, %v701
  %v1088 = vmul.f32 %v706, %v706
  %v1089 = vmul.f32 %v709, %v709
  %v1090 = vmul.f32 %v714, %v714
  %v1091 = vmul.f32 %v717, %v717
  %v1092 = vmul.f32 %v722, %v722
  %v1093 = vmul.f32 %v725, %v725
  %v1094 = vmul.f32 %v730, %v730
  %v1095 = vmul.f32 %v733, %v733
  %v1096 = vmul.f32 %v738, %v738
  %v1097 = vmul.f32 %v741, %v741
  %v1098 = vmul.f32 %v746, %v746
  %v1099 = vmul.f32 %v749, %v749
  %v1100 = vmul.f32 %v754, %v754
  %v1101 = vmul.f32 %v757, %v757
  %v1102 = vmul.f32 %v762, %v762
  %v1103 = vmul.f32 %v765, %v765
  %v1104 = vmul.f32 %v770, %v770
  %v1105 = vmul.f32 %v773, %v773
  %v1106 = vmul.f32 %v778, %v778
  %v1107 = vmul.f32 %v781, %v781
  %v1108 = vmul.f32 %v786, %v786
  %v1109 = vmul.f32 %v789, %v789
  %v1110 = vmul.f32 %v794, %v794
  %v1111 = vmul.f32 %v797, %v797
  %v1112 = vmul.f32 %v802, %v802
  %v1113 = vmul.f32 %v805, %v805
  %v1114 = vmul.f32 %v810, %v810
  %v1115 = vmul.f32 %v813, %v813
  %v1116 = vmul.f32 %v818, %v818
  %v1117 = vmul.f32 %v821, %v821
  %v1118 = vmul.f32 %v826, %v826
  %v1119 = vmul.f32 %v829, %v829
  %v1120 = vmul.f32 %v834, %v834
  %v1121 = vmul.f32 %v837, %v837
  %v1122 = vmul.f32 %v842, %v842
  %v1123 = vmul.f32 %v845, %v845
  %v1124 = vmul.f32 %v850, %v850
  %v1125 = vmul.f32 %v853, %v853
  %v1126 = vmul.f32 %v858, %v858
  %v1127 = vmul.f32 %v861, %v861
  %v1128 = vmul.f32 %v866, %v866
  %v1129 = vmul.f32 %v869, %v869
  %v1130 = vmul.f32 %v874, %v874
  %v1131 = vmul.f32 %v877, %v877
  %v1132 = vmul.f32 %v882, %v882
  %v1133 = vmul.f32 %v885, %v885
  %v1134 = vmul.f32 %v890, %v890
  %v1135 = vmul.f32 %v893, %v893
  %v1136 = vmul.f32 %v898, %v898
  %v1137 = vmul.f32 %v901, %v901
  %v1138 = vmul.f32 %v906, %v906
  %v1139 = vmul.f32 %v909, %v909
  %v1140 = vmul.f32 %v914, %v914
  %v1141 = vmul.f32 %v917, %v917
  %v1142 = vmul.f32 %v922, %v922
  %v1143 = vmul.f32 %v925, %v925
  %v1144 = vmul.f32 %v930, %v930
  %v1145 = vmul.f32 %v933, %v933
  %v1146 = vadd.f32 %v1078, %v1079
  %v1147 = vadd.f32 %v1146, %v1080
  %v1148 = vadd.f32 %v1147, %v1081
  %v1149 = vadd.f32 %v1148, %v1082
  %v1150 = vadd.f32 %v1149, %v1083
  %v1151 = vadd.f32 %v1150, %v1084
  %v1152 = vadd.f32 %v1151, %v1085
  %v1153 = vadd.f32 %v1152, %v1086
  %v1154 = vadd.f32 %v1153, %v1087
  %v1155 = vadd.f32 %v1154, %v1088
  %v1156 = vadd.f32 %v1155, %v1089
  %v1157 = vadd.f32 %v1156, %v1090
  %v1158 = vadd.f32 %v1157, %v1091
  %v1159 = vadd.f32 %v1158, %v1092
  %v1160 = vadd.f32 %v1159, %v1093
  %v1161 = vadd.f32 %v1160, %v1094
  %v1162 = vadd.f32 %v1161, %v1095
  %v1163 = vadd.f32 %v1162, %v1096
  %v1164 = vadd.f32 %v1163, %v1097
  %v1165 = vadd.f32 %v1164, %v1098
  %v1166 = vadd.f32 %v1165, %v1099
  %v1167 = vadd.f32 %v1166, %v1100
  %v1168 = vadd.f32 %v1167, %v1101
  %v1169 = vadd.f32 %v1168, %v1102
  %v1170 = vadd.f32 %v1169, %v1103
  %v1171 = vadd.f32 %v1170, %v1104
  %v1172 = vadd.f32 %v1171, %v1105
  %v1173 = vadd.f32 %v1172, %v1106
  %v1174 = vadd.f32 %v1173, %v1107
  %v1175 = vadd.f32 %v1174, %v1108
  %v1176 = vadd.f32 %v1175, %v1109
  %v1177 = vadd.f32 %v1176, %v1110
  %v1178 = vadd.f32 %v1177, %v1111
  %v1179 = vadd.f32 %v1178, %v1112
  %v1180 = vadd.f32 %v1179, %v1113
  %v1181 = vadd.f32 %v1180, %v1114
  %v1182 = vadd.f32 %v1181, %v1115
  %v1183 = vadd.f32 %v1182, %v1116
  %v1184 = vadd.f32 %v1183, %v1117
  %v1185 = vadd.f32 %v1184, %v1118
  %v1186 = vadd.f32 %v1185, %v1119
  %v1187 = vadd.f32 %v1186, %v1120
  %v1188 = vadd.f32 %v1187, %v1121
  %v1189 = vadd.f32 %v1188, %v1122
  %v1190 = vadd.f32 %v1189, %v1123
  %v1191 = vadd.f32 %v1190, %v1124
  %v1192 = vadd.f32 %v1191, %v1125
  %v1193 = vadd.f32 %v1192, %v1126
  %v1194 = vadd.f32 %v1193, %v1127
  %v1195 = vadd.f32 %v1194, %v1128
  %v1196 = vadd.f32 %v1195, %v1129
  %v1197 = vadd.f32 %v1196, %v1130
  %v1198 = vadd.f32 %v1197, %v1131
  %v1199 = vadd.f32 %v1198, %v1132
  %v1200 = vadd.f32 %v1199, %v1133
  %v1201 = vadd.f32 %v1200, %v1134
  %v1202 = vadd.f32 %v1201, %v1135
  %v1203 = vadd.f32 %v1202, %v1136
  %v1204 = vadd.f32 %v1203, %v1137
  %v1205 = vadd.f32 %v1204, %v1138
  %v1206 = vadd.f32 %v1205, %v1139
  %v1207 = vadd.f32 %v1206, %v1140
  %v1208 = vadd.f32 %v1207, %v1141
  %v1209 = vadd.f32 %v1208, %v1142
  %v1210 = vadd.f32 %v1209, %v1143
  %v1211 = vadd.f32 %v1210, %v1144
  %v1212 = vadd.f32 %v1211, %v1145
  %v1213 = vrot.slane %v1212, 4
  %v1214 = vadd.f32 %v1212, %v1213
  %v1215 = vrot.slane %v1214, 2
  %v1216 = vadd.f32 %v1214, %v1215
  %v1217 = vrot.slane %v1216, 1
  %v1218 = vadd.f32 %v1216, %v1217
  %1219 = vst [vmem:[%s8 + $0x1] sm:$0x1] %v1218
  // Predicated region
  $region30: #{layer_forward.11} parent=0 // pred_check
    _
  $region31: #{layer_forward.11} parent=0 // pred_check_branch
    %1221 = sbr.rel (0) target = $region33
  $region32: #{layer_forward.11} parent=0 // pred_region
    _
  $region33: #{layer_forward.11} parent=0 // pred_fallthru
    _
  // Predicated region
  $region34: #{layer_forward.11} parent=0 // pred_check
    _
  $region35: #{layer_forward.11} parent=0 // pred_check_branch
    %1223 = sbr.rel (0) target = $region37
  $region36: #{layer_forward.11} parent=0 // pred_region
    _
  $region37: #{layer_forward.11} parent=0 // pred_fallthru
    _
  // Predicated region
  $region38: #{layer_forward.11} parent=0 // pred_check
    _
  $region39: #{layer_forward.11} parent=0 // pred_check_branch
    %1225 = sbr.rel (0) target = $region41
  $region40: #{layer_forward.11} parent=0 // pred_region
    _
  $region41: #{layer_forward.11} parent=0 // pred_fallthru
    _
  // Predicated region
  $region42: #{layer_forward.11} parent=0 // pred_check
    _
  $region43: #{layer_forward.11} parent=0 // pred_check_branch
    %1227 = sbr.rel (0) target = $region45
  $region44: #{layer_forward.11} parent=0 // pred_region
    _
  $region45: #{layer_forward.11} parent=0 // pred_fallthru
    _

// kernel: layer_forward.12
$region0: #{layer_forward.12}
  #allocation0 [shape = 'u32[]', space=smem, size = 0x4, offset = 0x4, fixed_abs, tag = 'smem constant byte address 0x4 - core index']
  #allocation1 [shape = 'u32[144,128]{1,0:T(1,128)}', space=vmem, size = 0x12000, scoped, tag = 'internal scratch']
  %s0 = inlined_call_operand.vmem [shape: f32[544,128], index: 0, kind: input, shape index: {}]
  %s1 = inlined_call_operand.vmem [shape: f32[1,128], index: 1, kind: input, shape index: {}]
  %s2 = inlined_call_operand.vmem [shape: f32[1,128], index: 2, kind: input, shape index: {}]
  %s3 = inlined_call_operand.vmem [shape: f32[1,128], index: 3, kind: input, shape index: {}]
  %s4 = inlined_call_operand.vmem [shape: f32[1,128], index: 4, kind: input, shape index: {}]
  %s5 = inlined_call_operand.vmem [shape: f32[1,128], index: 5, kind: input, shape index: {}]
  %s6 = inlined_call_operand.vmem [shape: bf16[10,128,128], index: 6, kind: input, shape index: {}]
  %s7 = inlined_call_operand.vmem [shape: f32[1,128], index: 7, kind: input, shape index: {}]
  %s8 = inlined_call_operand.vmem [shape: f32[272,128], index: 8, kind: output, shape index: {0}]
  %s9 = inlined_call_operand.vmem [shape: f32[2,2,128], index: 9, kind: output, shape index: {1}]
  %10 = xla_tuple %s8, %s9
  %s11 = sld [smem:[#allocation0]]
  $region73: #{layer_forward.12} parent=0
    _
  %s13 = ssub.s32 1, %s11
  %s14 = scalar_select 0, %s13, %s11
  loop: start=0, step=1, limit=4
  $region2: #{layer_forward.12} parent=0 // loop_pre_header
    _
  $region3: #{layer_forward.12} parent=0 // loop_header
    %s16 = sphi 0, %s20
    %p17 = scmp.ge.s32.totalorder %s16, 4
    %s26 = sphi 0, %s28
    %s29 = sphi 0, %s26
    %s30 = sphi 0, %s29
    %s46 = sphi 0, %s30
    %s50 = sphi 0, %s50
    %s52 = sphi 0, %s50
    %s53 = sphi 0, %s52
    %s67 = sphi 0, %s53
    %s71 = sphi 0, %s71
    %s73 = sphi 0, %s71
    %s74 = sphi 0, %s73
    %s88 = sphi 0, %s74
    %s92 = sphi 0, %s92
    %s94 = sphi 0, %s92
    %s95 = sphi 0, %s94
    %s109 = sphi 0, %s95
    %s113 = sphi 0, %s113
    %s115 = sphi 0, %s113
    %s116 = sphi 0, %s115
    %s130 = sphi 0, %s116
    %s134 = sphi 0, %s134
    %s136 = sphi 0, %s134
    %s137 = sphi 0, %s136
    %s151 = sphi 0, %s137
    %s155 = sphi 0, %s155
    %s157 = sphi 0, %s155
    %s158 = sphi 0, %s157
    %s172 = sphi 0, %s158
    %s176 = sphi 0, %s176
    %s178 = sphi 0, %s176
    %s179 = sphi 0, %s178
    %s193 = sphi 0, %s179
    %s199 = sphi 0, %s201
    %s202 = sphi 0, %s199
    %s203 = sphi 0, %s202
    %s219 = sphi 0, %s203
    %s225 = sphi 0, %s227
    %s228 = sphi 0, %s225
    %s229 = sphi 0, %s228
    %s245 = sphi 0, %s229
  $region4: #{layer_forward.12} parent=0 // loop_header_branch
    %19 = sbr.rel (%p17) target = $region8
  $region5: #{layer_forward.12} parent=0 // loop_body
    %s21 = ssub.s32 %s16, 1
    %s22 = ssub.s32 %s16, 2
    %s23 = sadd.s32 %s16, 1
    %s24 = ssub.s32 %s16, %s23
    %p25 = scmp.eq.s32.totalorder %s24, 0
    %s27 = sadd.s32 %s26, 1
    %s28 = scalar_select %p25, %s26, %s27
    %p31 = pneg %p25
    %p32 = scmp.eq.s32.totalorder %s16, 1
    %p33 = por %p31, %p32
    %p34 = scmp.ne.s32.totalorder %s26, %s29
    %p35 = scmp.eq.s32.totalorder %s16, 0
    %p36 = por %p34, %p35
    %p37 = scmp.ne.s32.totalorder %s26, %s29
    %p38 = scmp.eq.s32.totalorder %s21, 1
    %p39 = por %p37, %p38
    %p40 = scmp.ne.s32.totalorder %s29, %s30
    %p41 = scmp.eq.s32.totalorder %s21, 0
    %p42 = por %p40, %p41
    %p43 = scmp.ne.s32.totalorder %s29, %s30
    %p44 = scmp.eq.s32.totalorder %s22, 1
    %p45 = por %p43, %p44
    %p47 = scmp.ne.s32.totalorder %s30, %s46
    %p48 = scmp.eq.s32.totalorder %s22, 0
    %p49 = por %p47, %p48
    %s51 = sadd.s32 %s50, 1
    %p54 = scmp.eq.s32.totalorder %s16, 1
    %p55 = scmp.ne.s32.totalorder %s50, %s52
    %p56 = scmp.eq.s32.totalorder %s16, 0
    %p57 = por %p55, %p56
    %p58 = scmp.ne.s32.totalorder %s50, %s52
    %p59 = scmp.eq.s32.totalorder %s21, 1
    %p60 = por %p58, %p59
    %p61 = scmp.ne.s32.totalorder %s52, %s53
    %p62 = scmp.eq.s32.totalorder %s21, 0
    %p63 = por %p61, %p62
    %p64 = scmp.ne.s32.totalorder %s52, %s53
    %p65 = scmp.eq.s32.totalorder %s22, 1
    %p66 = por %p64, %p65
    %p68 = scmp.ne.s32.totalorder %s53, %s67
    %p69 = scmp.eq.s32.totalorder %s22, 0
    %p70 = por %p68, %p69
    %s72 = sadd.s32 %s71, 1
    %p75 = scmp.eq.s32.totalorder %s16, 1
    %p76 = scmp.ne.s32.totalorder %s71, %s73
    %p77 = scmp.eq.s32.totalorder %s16, 0
    %p78 = por %p76, %p77
    %p79 = scmp.ne.s32.totalorder %s71, %s73
    %p80 = scmp.eq.s32.totalorder %s21, 1
    %p81 = por %p79, %p80
    %p82 = scmp.ne.s32.totalorder %s73, %s74
    %p83 = scmp.eq.s32.totalorder %s21, 0
    %p84 = por %p82, %p83
    %p85 = scmp.ne.s32.totalorder %s73, %s74
    %p86 = scmp.eq.s32.totalorder %s22, 1
    %p87 = por %p85, %p86
    %p89 = scmp.ne.s32.totalorder %s74, %s88
    %p90 = scmp.eq.s32.totalorder %s22, 0
    %p91 = por %p89, %p90
    %s93 = sadd.s32 %s92, 1
    %p96 = scmp.eq.s32.totalorder %s16, 1
    %p97 = scmp.ne.s32.totalorder %s92, %s94
    %p98 = scmp.eq.s32.totalorder %s16, 0
    %p99 = por %p97, %p98
    %p100 = scmp.ne.s32.totalorder %s92, %s94
    %p101 = scmp.eq.s32.totalorder %s21, 1
    %p102 = por %p100, %p101
    %p103 = scmp.ne.s32.totalorder %s94, %s95
    %p104 = scmp.eq.s32.totalorder %s21, 0
    %p105 = por %p103, %p104
    %p106 = scmp.ne.s32.totalorder %s94, %s95
    %p107 = scmp.eq.s32.totalorder %s22, 1
    %p108 = por %p106, %p107
    %p110 = scmp.ne.s32.totalorder %s95, %s109
    %p111 = scmp.eq.s32.totalorder %s22, 0
    %p112 = por %p110, %p111
    %s114 = sadd.s32 %s113, 1
    %p117 = scmp.eq.s32.totalorder %s16, 1
    %p118 = scmp.ne.s32.totalorder %s113, %s115
    %p119 = scmp.eq.s32.totalorder %s16, 0
    %p120 = por %p118, %p119
    %p121 = scmp.ne.s32.totalorder %s113, %s115
    %p122 = scmp.eq.s32.totalorder %s21, 1
    %p123 = por %p121, %p122
    %p124 = scmp.ne.s32.totalorder %s115, %s116
    %p125 = scmp.eq.s32.totalorder %s21, 0
    %p126 = por %p124, %p125
    %p127 = scmp.ne.s32.totalorder %s115, %s116
    %p128 = scmp.eq.s32.totalorder %s22, 1
    %p129 = por %p127, %p128
    %p131 = scmp.ne.s32.totalorder %s116, %s130
    %p132 = scmp.eq.s32.totalorder %s22, 0
    %p133 = por %p131, %p132
    %s135 = sadd.s32 %s134, 1
    %p138 = scmp.eq.s32.totalorder %s16, 1
    %p139 = scmp.ne.s32.totalorder %s134, %s136
    %p140 = scmp.eq.s32.totalorder %s16, 0
    %p141 = por %p139, %p140
    %p142 = scmp.ne.s32.totalorder %s134, %s136
    %p143 = scmp.eq.s32.totalorder %s21, 1
    %p144 = por %p142, %p143
    %p145 = scmp.ne.s32.totalorder %s136, %s137
    %p146 = scmp.eq.s32.totalorder %s21, 0
    %p147 = por %p145, %p146
    %p148 = scmp.ne.s32.totalorder %s136, %s137
    %p149 = scmp.eq.s32.totalorder %s22, 1
    %p150 = por %p148, %p149
    %p152 = scmp.ne.s32.totalorder %s137, %s151
    %p153 = scmp.eq.s32.totalorder %s22, 0
    %p154 = por %p152, %p153
    %s156 = sadd.s32 %s155, 1
    %p159 = scmp.eq.s32.totalorder %s16, 1
    %p160 = scmp.ne.s32.totalorder %s155, %s157
    %p161 = scmp.eq.s32.totalorder %s16, 0
    %p162 = por %p160, %p161
    %p163 = scmp.ne.s32.totalorder %s155, %s157
    %p164 = scmp.eq.s32.totalorder %s21, 1
    %p165 = por %p163, %p164
    %p166 = scmp.ne.s32.totalorder %s157, %s158
    %p167 = scmp.eq.s32.totalorder %s21, 0
    %p168 = por %p166, %p167
    %p169 = scmp.ne.s32.totalorder %s157, %s158
    %p170 = scmp.eq.s32.totalorder %s22, 1
    %p171 = por %p169, %p170
    %p173 = scmp.ne.s32.totalorder %s158, %s172
    %p174 = scmp.eq.s32.totalorder %s22, 0
    %p175 = por %p173, %p174
    %s177 = sadd.s32 %s176, 1
    %p180 = scmp.eq.s32.totalorder %s16, 1
    %p181 = scmp.ne.s32.totalorder %s176, %s178
    %p182 = scmp.eq.s32.totalorder %s16, 0
    %p183 = por %p181, %p182
    %p184 = scmp.ne.s32.totalorder %s176, %s178
    %p185 = scmp.eq.s32.totalorder %s21, 1
    %p186 = por %p184, %p185
    %p187 = scmp.ne.s32.totalorder %s178, %s179
    %p188 = scmp.eq.s32.totalorder %s21, 0
    %p189 = por %p187, %p188
    %p190 = scmp.ne.s32.totalorder %s178, %s179
    %p191 = scmp.eq.s32.totalorder %s22, 1
    %p192 = por %p190, %p191
    %p194 = scmp.ne.s32.totalorder %s179, %s193
    %p195 = scmp.eq.s32.totalorder %s22, 0
    %p196 = por %p194, %p195
    %s197 = ssub.s32 %s16, %s23
    %p198 = scmp.eq.s32.totalorder %s197, 0
    %s200 = sadd.s32 %s199, 1
    %s201 = scalar_select %p198, %s199, %s200
    %p204 = pneg %p198
    %p205 = scmp.eq.s32.totalorder %s16, 1
    %p206 = por %p204, %p205
    %p207 = scmp.ne.s32.totalorder %s199, %s202
    %p208 = scmp.eq.s32.totalorder %s16, 0
    %p209 = por %p207, %p208
    %p210 = scmp.ne.s32.totalorder %s199, %s202
    %p211 = scmp.eq.s32.totalorder %s21, 1
    %p212 = por %p210, %p211
    %p213 = scmp.ne.s32.totalorder %s202, %s203
    %p214 = scmp.eq.s32.totalorder %s21, 0
    %p215 = por %p213, %p214
    %p216 = scmp.ne.s32.totalorder %s202, %s203
    %p217 = scmp.eq.s32.totalorder %s22, 1
    %p218 = por %p216, %p217
    %p220 = scmp.ne.s32.totalorder %s203, %s219
    %p221 = scmp.eq.s32.totalorder %s22, 0
    %p222 = por %p220, %p221
    %s223 = ssub.s32 %s16, %s23
    %p224 = scmp.eq.s32.totalorder %s223, 0
    %s226 = sadd.s32 %s225, 1
    %s227 = scalar_select %p224, %s225, %s226
    %p230 = pneg %p224
    %p231 = scmp.eq.s32.totalorder %s16, 1
    %p232 = por %p230, %p231
    %p233 = scmp.ne.s32.totalorder %s225, %s228
    %p234 = scmp.eq.s32.totalorder %s16, 0
    %p235 = por %p233, %p234
    %p236 = scmp.ne.s32.totalorder %s225, %s228
    %p237 = scmp.eq.s32.totalorder %s21, 1
    %p238 = por %p236, %p237
    %p239 = scmp.ne.s32.totalorder %s228, %s229
    %p240 = scmp.eq.s32.totalorder %s21, 0
    %p241 = por %p239, %p240
    %p242 = scmp.ne.s32.totalorder %s228, %s229
    %p243 = scmp.eq.s32.totalorder %s22, 1
    %p244 = por %p242, %p243
    %p246 = scmp.ne.s32.totalorder %s229, %s245
    %p247 = scmp.eq.s32.totalorder %s22, 0
    %p248 = por %p246, %p247
    %p249 = scmp.le.s32.totalorder 1, %s16
    %p250 = scmp.lt.s32.totalorder %s16, 3
    %p251 = pnand %p249, %p250
    %p252 = pneg %p251
    // Predicated region
    $region9: #{layer_forward.12} parent=5 // pred_check
      _
    $region10: #{layer_forward.12} parent=5 // pred_check_branch
      %254 = sbr.rel (%p251) target = $region12
    $region11: #{layer_forward.12} parent=5 // pred_region
      %s255 = ssub.s32 %s16, 1
      // Predicated region
      $region13: #{layer_forward.12} parent=11 // pred_check
        %p256 = pneg %p63
      $region14: #{layer_forward.12} parent=11 // pred_check_branch
        %258 = sbr.rel (%p256) target = $region16
      $region15: #{layer_forward.12} parent=11 // pred_region
        _
      $region16: #{layer_forward.12} parent=11 // pred_fallthru
        _
      // Predicated region
      $region17: #{layer_forward.12} parent=11 // pred_check
        %p259 = pneg %p84
      $region18: #{layer_forward.12} parent=11 // pred_check_branch
        %261 = sbr.rel (%p259) target = $region20
      $region19: #{layer_forward.12} parent=11 // pred_region
        _
      $region20: #{layer_forward.12} parent=11 // pred_fallthru
        _
      // Predicated region
      $region21: #{layer_forward.12} parent=11 // pred_check
        %p262 = pneg %p105
      $region22: #{layer_forward.12} parent=11 // pred_check_branch
        %264 = sbr.rel (%p262) target = $region24
      $region23: #{layer_forward.12} parent=11 // pred_region
        _
      $region24: #{layer_forward.12} parent=11 // pred_fallthru
        _
      // Predicated region
      $region25: #{layer_forward.12} parent=11 // pred_check
        %p265 = pneg %p126
      $region26: #{layer_forward.12} parent=11 // pred_check_branch
        %267 = sbr.rel (%p265) target = $region28
      $region27: #{layer_forward.12} parent=11 // pred_region
        _
      $region28: #{layer_forward.12} parent=11 // pred_fallthru
        _
      // Predicated region
      $region29: #{layer_forward.12} parent=11 // pred_check
        %p268 = pneg %p147
      $region30: #{layer_forward.12} parent=11 // pred_check_branch
        %270 = sbr.rel (%p268) target = $region32
      $region31: #{layer_forward.12} parent=11 // pred_region
        _
      $region32: #{layer_forward.12} parent=11 // pred_fallthru
        _
      // Predicated region
      $region33: #{layer_forward.12} parent=11 // pred_check
        %p271 = pneg %p168
      $region34: #{layer_forward.12} parent=11 // pred_check_branch
        %273 = sbr.rel (%p271) target = $region36
      $region35: #{layer_forward.12} parent=11 // pred_region
        _
      $region36: #{layer_forward.12} parent=11 // pred_fallthru
        _
      // Predicated region
      $region37: #{layer_forward.12} parent=11 // pred_check
        %p274 = pneg %p189
      $region38: #{layer_forward.12} parent=11 // pred_check_branch
        %276 = sbr.rel (%p274) target = $region40
      $region39: #{layer_forward.12} parent=11 // pred_region
        _
      $region40: #{layer_forward.12} parent=11 // pred_fallthru
        _
    $region12: #{layer_forward.12} parent=5 // pred_fallthru
      _
    %p277 = scmp.lt.s32.totalorder %s16, 2
    // Predicated region
    $region41: #{layer_forward.12} parent=5 // pred_check
      %p278 = pneg %p277
    $region42: #{layer_forward.12} parent=5 // pred_check_branch
      %280 = sbr.rel (%p278) target = $region44
    $region43: #{layer_forward.12} parent=5 // pred_region
      // Predicated region
      $region45: #{layer_forward.12} parent=43 // pred_check
        %p281 = pneg %p36
      $region46: #{layer_forward.12} parent=43 // pred_check_branch
        %283 = sbr.rel (%p281) target = $region48
      $region47: #{layer_forward.12} parent=43 // pred_region
        %s284 = smul.u32 34, %s16
        %p285 = scmp.lt.s32.totalorder %s284, 67
        %s286 = scalar_select %p285, %s284, 67
        %s287 = smul.addr %s286, 8
        %s288 = scalar_lea.vmem %s0, %s287
        %s289 = smul.u32 34, %s16
      $region48: #{layer_forward.12} parent=43 // pred_fallthru
        _
    $region44: #{layer_forward.12} parent=5 // pred_fallthru
      _
    %p290 = scmp.le.s32.totalorder 1, %s16
    %p291 = scmp.lt.s32.totalorder %s16, 3
    %p292 = pnand %p290, %p291
    %p293 = pneg %p292
    // Predicated region
    $region49: #{layer_forward.12} parent=5 // pred_check
      _
    $region50: #{layer_forward.12} parent=5 // pred_check_branch
      %295 = sbr.rel (%p292) target = $region52
    $region51: #{layer_forward.12} parent=5 // pred_region
      %s296 = ssub.s32 %s16, 1
      %s297 = smul.u32 34, %s21
      %p298 = scmp.lt.s32.totalorder %s297, 67
      %s299 = scalar_select %p298, %s297, 67
      %s300 = smul.addr %s299, 8
      %s301 = scalar_lea.vmem %s0, %s300
      %p302 = pneg %p42
      %p303 = pneg %p39
      %p304 = pneg %p63
      %p305 = pneg %p60
      %p306 = pneg %p84
      %p307 = pneg %p81
      %p308 = pneg %p105
      %p309 = pneg %p102
      %p310 = pneg %p126
      %p311 = pneg %p123
      %p312 = pneg %p147
      %p313 = pneg %p144
      %p314 = pneg %p168
      %p315 = pneg %p165
      %p316 = pneg %p189
      %p317 = pneg %p186
      %p318 = pneg %p215
      %p319 = pneg %p212
      %s320 = smul.u32 17, %s21
      %p321 = scmp.lt.s32.totalorder %s320, 33
      %s322 = scalar_select %p321, %s320, 33
      %s323 = smul.addr %s322, 8
      %s324 = scalar_lea.vmem %s8, %s323
      %p325 = pneg %p241
      %p326 = pneg %p238
      %p327 = scmp.lt.s32.totalorder %s21, 1
      %s328 = scalar_select %p327, %s21, 1
      %s329 = smul.addr %s328, 2
      %s330 = scalar_lea.vmem %s9, %s329
      %s331 = smul.u32 34, %s21
      %p332 = scmp.lt.s32.totalorder %s331, 67
      %s333 = scalar_select %p332, %s331, 67
      %s334 = smul.addr %s333, 8
      %s335 = scalar_lea.vmem %s0, %s334
      %s336 = smul.u32 34, %s21
      %s337 = smul.u32 17, %s21
      %p338 = scmp.lt.s32.totalorder %s337, 33
      %s339 = scalar_select %p338, %s337, 33
      %s340 = smul.addr %s339, 8
      %s341 = scalar_lea.vmem %s8, %s340
      %s342 = smul.u32 17, %s21
      %p343 = scmp.lt.s32.totalorder %s21, 1
      %s344 = scalar_select %p343, %s21, 1
      %s345 = smul.addr %s344, 2
      %s346 = scalar_lea.vmem %s9, %s345
      %v348 = vld [vmem:[%s1] sm:$0x1]
      %v349 = vld [vmem:[%s2] sm:$0x1]
      %v350 = vld [vmem:[%s3] sm:$0x1]
      %v351 = vld [vmem:[%s7] sm:$0x1]
      %v353 = vlaneseq
      %v354 = vshrl.u32 %v353, 7
      %v355 = vsub.s32 0, %v354
      %v356 = vrot.slane %v351, %v355
      %v358 = vadd.f32 %v356, 0.0
      %359 = vst [vmem:[%s341] sm:$0xff] %v358
      %360 = vst [vmem:[%s341 + $0x8] sm:$0xff] %v358
      %361 = vst [vmem:[%s341 + $0x10] sm:$0xff] %v358
      %362 = vst [vmem:[%s341 + $0x18] sm:$0xff] %v358
      %363 = vst [vmem:[%s341 + $0x20] sm:$0xff] %v358
      %364 = vst [vmem:[%s341 + $0x28] sm:$0xff] %v358
      %365 = vst [vmem:[%s341 + $0x30] sm:$0xff] %v358
      %366 = vst [vmem:[%s341 + $0x38] sm:$0xff] %v358
      %367 = vst [vmem:[%s341 + $0x40] sm:$0xff] %v358
      %368 = vst [vmem:[%s341 + $0x48] sm:$0xff] %v358
      %369 = vst [vmem:[%s341 + $0x50] sm:$0xff] %v358
      %370 = vst [vmem:[%s341 + $0x58] sm:$0xff] %v358
      %371 = vst [vmem:[%s341 + $0x60] sm:$0xff] %v358
      %372 = vst [vmem:[%s341 + $0x68] sm:$0xff] %v358
      %373 = vst [vmem:[%s341 + $0x70] sm:$0xff] %v358
      %374 = vst [vmem:[%s341 + $0x78] sm:$0xff] %v358
      %375 = vst [vmem:[%s341 + $0x80] sm:$0xff] %v358
      %v376 = vld [vmem:[%s335] sm:$0xff]
      %v377 = vld [vmem:[%s335 + $0x8] sm:$0xff]
      %v378 = vld [vmem:[%s335 + $0x10] sm:$0xff]
      %v379 = vld [vmem:[%s335 + $0x18] sm:$0xff]
      %v380 = vld [vmem:[%s335 + $0x20] sm:$0xff]
      %v381 = vld [vmem:[%s335 + $0x28] sm:$0xff]
      %v382 = vld [vmem:[%s335 + $0x30] sm:$0xff]
      %v383 = vld [vmem:[%s335 + $0x38] sm:$0xff]
      %v384 = vld [vmem:[%s335 + $0x40] sm:$0xff]
      %v385 = vld [vmem:[%s335 + $0x48] sm:$0xff]
      %v386 = vld [vmem:[%s335 + $0x50] sm:$0xff]
      %v387 = vld [vmem:[%s335 + $0x58] sm:$0xff]
      %v388 = vld [vmem:[%s335 + $0x60] sm:$0xff]
      %v389 = vld [vmem:[%s335 + $0x68] sm:$0xff]
      %v390 = vld [vmem:[%s335 + $0x70] sm:$0x7f]
      %v392 = vlaneseq
      %v393 = vshrl.u32 %v392, 7
      %v394 = vsub.s32 0, %v393
      %v395 = vrot.slane %v348, %v394
      %v397 = vmul.f32 %v376, %v395
      %v398 = vmul.f32 %v377, %v395
      %v399 = vmul.f32 %v378, %v395
      %v400 = vmul.f32 %v379, %v395
      %v401 = vmul.f32 %v380, %v395
      %v402 = vmul.f32 %v381, %v395
      %v403 = vmul.f32 %v382, %v395
      %v404 = vmul.f32 %v383, %v395
      %v405 = vmul.f32 %v384, %v395
      %v406 = vmul.f32 %v385, %v395
      %v407 = vmul.f32 %v386, %v395
      %v408 = vmul.f32 %v387, %v395
      %v409 = vmul.f32 %v388, %v395
      %v410 = vmul.f32 %v389, %v395
      %v411 = vmul.f32 %v390, %v395
      %v413 = vlaneseq
      %v414 = vshrl.u32 %v413, 7
      %v415 = vsub.s32 0, %v414
      %v416 = vrot.slane %v349, %v415
      %v418 = vadd.f32 %v397, %v416
      %v419 = vadd.f32 %v398, %v416
      %v420 = vadd.f32 %v399, %v416
      %v421 = vadd.f32 %v400, %v416
      %v422 = vadd.f32 %v401, %v416
      %v423 = vadd.f32 %v402, %v416
      %v424 = vadd.f32 %v403, %v416
      %v425 = vadd.f32 %v404, %v416
      %v426 = vadd.f32 %v405, %v416
      %v427 = vadd.f32 %v406, %v416
      %v428 = vadd.f32 %v407, %v416
      %v429 = vadd.f32 %v408, %v416
      %v430 = vadd.f32 %v409, %v416
      %v431 = vadd.f32 %v410, %v416
      %v432 = vadd.f32 %v411, %v416
      %v433 = vmax.f32 %v418, 0.0
      %v434 = vmax.f32 %v419, 0.0
      %v435 = vmax.f32 %v420, 0.0
      %v436 = vmax.f32 %v421, 0.0
      %v437 = vmax.f32 %v422, 0.0
      %v438 = vmax.f32 %v423, 0.0
      %v439 = vmax.f32 %v424, 0.0
      %v440 = vmax.f32 %v425, 0.0
      %v441 = vmax.f32 %v426, 0.0
      %v442 = vmax.f32 %v427, 0.0
      %v443 = vmax.f32 %v428, 0.0
      %v444 = vmax.f32 %v429, 0.0
      %v445 = vmax.f32 %v430, 0.0
      %v446 = vmax.f32 %v431, 0.0
      %v447 = vmax.f32 %v432, 0.0
      %v448 = vsub.f32 %v433, %v418
      %v449 = vsub.f32 %v434, %v419
      %v450 = vsub.f32 %v435, %v420
      %v451 = vsub.f32 %v436, %v421
      %v452 = vsub.f32 %v437, %v422
      %v453 = vsub.f32 %v438, %v423
      %v454 = vsub.f32 %v439, %v424
      %v455 = vsub.f32 %v440, %v425
      %v456 = vsub.f32 %v441, %v426
      %v457 = vsub.f32 %v442, %v427
      %v458 = vsub.f32 %v443, %v428
      %v459 = vsub.f32 %v444, %v429
      %v460 = vsub.f32 %v445, %v430
      %v461 = vsub.f32 %v446, %v431
      %v462 = vsub.f32 %v447, %v432
      %v464 = vlaneseq
      %v465 = vshrl.u32 %v464, 7
      %v466 = vsub.s32 0, %v465
      %v467 = vrot.slane %v350, %v466
      %v469 = vmul.f32 %v467, %v448
      %v470 = vmul.f32 %v467, %v449
      %v471 = vmul.f32 %v467, %v450
      %v472 = vmul.f32 %v467, %v451
      %v473 = vmul.f32 %v467, %v452
      %v474 = vmul.f32 %v467, %v453
      %v475 = vmul.f32 %v467, %v454
      %v476 = vmul.f32 %v467, %v455
      %v477 = vmul.f32 %v467, %v456
      %v478 = vmul.f32 %v467, %v457
      %v479 = vmul.f32 %v467, %v458
      %v480 = vmul.f32 %v467, %v459
      %v481 = vmul.f32 %v467, %v460
      %v482 = vmul.f32 %v467, %v461
      %v483 = vmul.f32 %v467, %v462
      %v484 = vadd.f32 %v418, %v469
      %v485 = vadd.f32 %v419, %v470
      %v486 = vadd.f32 %v420, %v471
      %v487 = vadd.f32 %v421, %v472
      %v488 = vadd.f32 %v422, %v473
      %v489 = vadd.f32 %v423, %v474
      %v490 = vadd.f32 %v424, %v475
      %v491 = vadd.f32 %v425, %v476
      %v492 = vadd.f32 %v426, %v477
      %v493 = vadd.f32 %v427, %v478
      %v494 = vadd.f32 %v428, %v479
      %v495 = vadd.f32 %v429, %v480
      %v496 = vadd.f32 %v430, %v481
      %v497 = vadd.f32 %v431, %v482
      %v498 = vadd.f32 %v432, %v483
      %v499 = vpack.c.bf16 %v485, %v484
      %v500 = vpack.c.bf16 %v487, %v486
      %v501 = vpack.c.bf16 %v489, %v488
      %v502 = vpack.c.bf16 %v491, %v490
      %v503 = vpack.c.bf16 %v493, %v492
      %v504 = vpack.c.bf16 %v495, %v494
      %v505 = vpack.c.bf16 %v497, %v496
      %v506 = vpack.c.bf16 %v498, %v498
      %v507 = vld [vmem:[%s341 + $0x11] sm:$0xff]
      %v508 = vld [vmem:[%s341 + $0x19] sm:$0xff]
      %v509 = vld [vmem:[%s341 + $0x21] sm:$0xff]
      %v510 = vld [vmem:[%s341 + $0x29] sm:$0xff]
      %v511 = vld [vmem:[%s341 + $0x31] sm:$0xff]
      %v512 = vld [vmem:[%s341 + $0x39] sm:$0xff]
      %v513 = vld [vmem:[%s341 + $0x41] sm:$0xff]
      %v514 = vld [vmem:[%s341 + $0x49] sm:$0xff]
      %v515 = vld [vmem:[%s341 + $0x51] sm:$0xff]
      %v516 = vld [vmem:[%s341 + $0x59] sm:$0xff]
      %v517 = vld [vmem:[%s341 + $0x61] sm:$0xff]
      %v518 = vld [vmem:[%s341 + $0x69] sm:$0xff]
      %v519 = vld [vmem:[%s341 + $0x71] sm:$0xff]
      %v520 = vld [vmem:[%s341 + $0x79] sm:$0xff]
      %v521 = vld [vmem:[%s341 + $0x81] sm:$0x7f]
      %v522 = vld [vmem:[%s6] sm:$0xf]
      %v523 = vld [vmem:[%s6 + $0x4] sm:$0xf]
      %v524 = vld [vmem:[%s6 + $0x8] sm:$0xf]
      %v525 = vld [vmem:[%s6 + $0xc] sm:$0xf]
      %v526 = vld [vmem:[%s6 + $0x10] sm:$0xf]
      %v527 = vld [vmem:[%s6 + $0x14] sm:$0xf]
      %v528 = vld [vmem:[%s6 + $0x18] sm:$0xf]
      %v529 = vld [vmem:[%s6 + $0x1c] sm:$0xf]
      %v530 = vld [vmem:[%s6 + $0x20] sm:$0xf]
      %v531 = vld [vmem:[%s6 + $0x24] sm:$0xf]
      %v532 = vld [vmem:[%s6 + $0x28] sm:$0xf]
      %v533 = vld [vmem:[%s6 + $0x2c] sm:$0xf]
      %v534 = vld [vmem:[%s6 + $0x30] sm:$0xf]
      %v535 = vld [vmem:[%s6 + $0x34] sm:$0xf]
      %v536 = vld [vmem:[%s6 + $0x38] sm:$0xf]
      %v537 = vld [vmem:[%s6 + $0x3c] sm:$0xf]
      %v554 = vunpack.c.l.b16 %v522
      %v555 = vunpack.c.l.b16 %v523
      %v556 = vunpack.c.l.b16 %v524
      %v557 = vunpack.c.l.b16 %v525
      %v558 = vunpack.c.l.b16 %v526
      %v559 = vunpack.c.l.b16 %v527
      %v560 = vunpack.c.l.b16 %v528
      %v561 = vunpack.c.l.b16 %v529
      %v562 = vunpack.c.l.b16 %v530
      %v563 = vunpack.c.l.b16 %v531
      %v564 = vunpack.c.l.b16 %v532
      %v565 = vunpack.c.l.b16 %v533
      %v566 = vunpack.c.l.b16 %v534
      %v567 = vunpack.c.l.b16 %v535
      %v568 = vunpack.c.l.b16 %v536
      %v569 = vunpack.c.l.b16 %v537
      %v570 = vpack.c.b16 %v555, %v554
      %v571 = vpack.c.b16 %v557, %v556
      %v572 = vpack.c.b16 %v559, %v558
      %v573 = vpack.c.b16 %v561, %v560
      %v574 = vpack.c.b16 %v563, %v562
      %v575 = vpack.c.b16 %v565, %v564
      %v576 = vpack.c.b16 %v567, %v566
      %v577 = vpack.c.b16 %v569, %v568
      %586 = vmatprep.subr.bf16.mxu0 0
      %587 = vmatpush1.bf16.msra.mxu0 %v570
      %588 = vmatprep.subr.bf16.mxu0 0
      %589 = vmatpush1.bf16.msra.mxu0 %v571
      %590 = vmatprep.subr.bf16.mxu0 0
      %591 = vmatpush1.bf16.msra.mxu0 %v572
      %592 = vmatprep.subr.bf16.mxu0 0
      %593 = vmatpush1.bf16.msra.mxu0 %v573
      %594 = vmatprep.subr.bf16.mxu0 0
      %595 = vmatpush1.bf16.msra.mxu0 %v574
      %596 = vmatprep.subr.bf16.mxu0 0
      %597 = vmatpush1.bf16.msra.mxu0 %v575
      %598 = vmatprep.subr.bf16.mxu0 0
      %599 = vmatpush1.bf16.msra.mxu0 %v576
      %600 = vmatprep.subr.bf16.mxu0 0
      %601 = vmatpush1.bf16.msra.mxu0 %v577
      %602 = vmatprep.subr.bf16.mxu0 0
      %603 = vmatpush1.bf16.msra.mxu0 0
      %604 = vmatprep.subr.bf16.mxu0 0
      %605 = vmatpush1.bf16.msra.mxu0 0
      %606 = vmatprep.subr.bf16.mxu0 0
      %607 = vmatpush1.bf16.msra.mxu0 0
      %608 = vmatprep.subr.bf16.mxu0 0
      %609 = vmatpush1.bf16.msra.mxu0 0
      %610 = vmatprep.subr.bf16.mxu0 0
      %611 = vmatpush1.bf16.msra.mxu0 0
      %612 = vmatprep.subr.bf16.mxu0 0
      %613 = vmatpush1.bf16.msra.mxu0 0
      %614 = vmatprep.subr.bf16.mxu0 0
      %615 = vmatpush1.bf16.msra.mxu0 0
      %616 = vmatprep.subr.bf16.mxu0 0
      %617 = vmatpush1.bf16.msra.mxu0 0
      %618 = vmatprep.mubr.bf16.mxu0 0
      %619 = vmatmul.mubr.bf16.gmra.mrb[0].mxu0 %v499
      %v620 = vpop.f32.mrb[0].mxu0
      %v621 = vadd.f32 0.0, %v620
      %v622 = vpop.f32.mrb[0].mxu0
      %v623 = vpop.f32.mrb[0].mxu0
      %v624 = vadd.f32 0.0, %v623
      %v625 = vpop.f32.mrb[0].mxu0
      %626 = vmatprep.mubr.bf16.mxu0 0
      %627 = vmatmul.mubr.bf16.gmra.mrb[0].mxu0 %v500
      %v628 = vpop.f32.mrb[0].mxu0
      %v629 = vadd.f32 0.0, %v628
      %v630 = vpop.f32.mrb[0].mxu0
      %v631 = vpop.f32.mrb[0].mxu0
      %v632 = vadd.f32 0.0, %v631
      %v633 = vpop.f32.mrb[0].mxu0
      %634 = vmatprep.mubr.bf16.mxu0 0
      %635 = vmatmul.mubr.bf16.gmra.mrb[0].mxu0 %v501
      %v636 = vpop.f32.mrb[0].mxu0
      %v637 = vadd.f32 0.0, %v636
      %v638 = vpop.f32.mrb[0].mxu0
      %v639 = vpop.f32.mrb[0].mxu0
      %v640 = vadd.f32 0.0, %v639
      %v641 = vpop.f32.mrb[0].mxu0
      %642 = vmatprep.mubr.bf16.mxu0 0
      %643 = vmatmul.mubr.bf16.gmra.mrb[0].mxu0 %v502
      %v644 = vpop.f32.mrb[0].mxu0
      %v645 = vadd.f32 0.0, %v644
      %v646 = vpop.f32.mrb[0].mxu0
      %v647 = vpop.f32.mrb[0].mxu0
      %v648 = vadd.f32 0.0, %v647
      %v649 = vpop.f32.mrb[0].mxu0
      %650 = vmatprep.mubr.bf16.mxu0 0
      %651 = vmatmul.mubr.bf16.gmra.mrb[0].mxu0 %v503
      %v652 = vpop.f32.mrb[0].mxu0
      %v653 = vadd.f32 0.0, %v652
      %v654 = vpop.f32.mrb[0].mxu0
      %v655 = vpop.f32.mrb[0].mxu0
      %v656 = vadd.f32 0.0, %v655
      %v657 = vpop.f32.mrb[0].mxu0
      %658 = vmatprep.mubr.bf16.mxu0 0
      %659 = vmatmul.mubr.bf16.gmra.mrb[0].mxu0 %v504
      %v660 = vpop.f32.mrb[0].mxu0
      %v661 = vadd.f32 0.0, %v660
      %v662 = vpop.f32.mrb[0].mxu0
      %v663 = vpop.f32.mrb[0].mxu0
      %v664 = vadd.f32 0.0, %v663
      %v665 = vpop.f32.mrb[0].mxu0
      %666 = vmatprep.mubr.bf16.mxu0 0
      %667 = vmatmul.mubr.bf16.gmra.mrb[0].mxu0 %v505
      %v668 = vpop.f32.mrb[0].mxu0
      %v669 = vadd.f32 0.0, %v668
      %v670 = vpop.f32.mrb[0].mxu0
      %v671 = vpop.f32.mrb[0].mxu0
      %v672 = vadd.f32 0.0, %v671
      %v673 = vpop.f32.mrb[0].mxu0
      %674 = vmatprep.mubr.bf16.mxu0 0
      %675 = vmatmul.mubr.bf16.gmra.mrb[0].mxu0 %v506
      %v676 = vpop.f32.mrb[0].mxu0
      %v677 = vadd.f32 0.0, %v676
      %v678 = vpop.f32.mrb[0].mxu0
      %v679 = vpop.f32.mrb[0].mxu0
      %v680 = vpop.f32.mrb[0].mxu0
      %681 = vdwg.mxu0
      %v682 = vadd.f32 %v507, %v621
      %v683 = vadd.f32 %v508, %v624
      %v684 = vadd.f32 %v509, %v629
      %v685 = vadd.f32 %v510, %v632
      %v686 = vadd.f32 %v511, %v637
      %v687 = vadd.f32 %v512, %v640
      %v688 = vadd.f32 %v513, %v645
      %v689 = vadd.f32 %v514, %v648
      %v690 = vadd.f32 %v515, %v653
      %v691 = vadd.f32 %v516, %v656
      %v692 = vadd.f32 %v517, %v661
      %v693 = vadd.f32 %v518, %v664
      %v694 = vadd.f32 %v519, %v669
      %v695 = vadd.f32 %v520, %v672
      %v696 = vadd.f32 %v521, %v677
      %697 = vst [vmem:[%s341 + $0x11] sm:$0xff] %v682
      %698 = vst [vmem:[%s341 + $0x19] sm:$0xff] %v683
      %699 = vst [vmem:[%s341 + $0x21] sm:$0xff] %v684
      %700 = vst [vmem:[%s341 + $0x29] sm:$0xff] %v685
      %701 = vst [vmem:[%s341 + $0x31] sm:$0xff] %v686
      %702 = vst [vmem:[%s341 + $0x39] sm:$0xff] %v687
      %703 = vst [vmem:[%s341 + $0x41] sm:$0xff] %v688
      %704 = vst [vmem:[%s341 + $0x49] sm:$0xff] %v689
      %705 = vst [vmem:[%s341 + $0x51] sm:$0xff] %v690
      %706 = vst [vmem:[%s341 + $0x59] sm:$0xff] %v691
      %707 = vst [vmem:[%s341 + $0x61] sm:$0xff] %v692
      %708 = vst [vmem:[%s341 + $0x69] sm:$0xff] %v693
      %709 = vst [vmem:[%s341 + $0x71] sm:$0xff] %v694
      %710 = vst [vmem:[%s341 + $0x79] sm:$0xff] %v695
      %711 = vst [vmem:[%s341 + $0x81] sm:$0x7f] %v696
      %v712 = vld [vmem:[%s335 + $0x88] sm:$0xff]
      %v713 = vld [vmem:[%s335 + $0x90] sm:$0xff]
      %v714 = vld [vmem:[%s335 + $0x98] sm:$0xff]
      %v715 = vld [vmem:[%s335 + $0xa0] sm:$0xff]
      %v716 = vld [vmem:[%s335 + $0xa8] sm:$0xff]
      %v717 = vld [vmem:[%s335 + $0xb0] sm:$0xff]
      %v718 = vld [vmem:[%s335 + $0xb8] sm:$0xff]
      %v719 = vld [vmem:[%s335 + $0xc0] sm:$0xff]
      %v720 = vld [vmem:[%s335 + $0xc8] sm:$0xff]
      %v721 = vld [vmem:[%s335 + $0xd0] sm:$0xff]
      %v722 = vld [vmem:[%s335 + $0xd8] sm:$0xff]
      %v723 = vld [vmem:[%s335 + $0xe0] sm:$0xff]
      %v724 = vld [vmem:[%s335 + $0xe8] sm:$0xff]
      %v725 = vld [vmem:[%s335 + $0xf0] sm:$0xff]
      %v726 = vld [vmem:[%s335 + $0xf8] sm:$0x7f]
      %v727 = vmul.f32 %v712, %v395
      %v728 = vmul.f32 %v713, %v395
      %v729 = vmul.f32 %v714, %v395
      %v730 = vmul.f32 %v715, %v395
      %v731 = vmul.f32 %v716, %v395
      %v732 = vmul.f32 %v717, %v395
      %v733 = vmul.f32 %v718, %v395
      %v734 = vmul.f32 %v719, %v395
      %v735 = vmul.f32 %v720, %v395
      %v736 = vmul.f32 %v721, %v395
      %v737 = vmul.f32 %v722, %v395
      %v738 = vmul.f32 %v723, %v395
      %v739 = vmul.f32 %v724, %v395
      %v740 = vmul.f32 %v725, %v395
      %v741 = vmul.f32 %v726, %v395
      %v742 = vadd.f32 %v727, %v416
      %v743 = vadd.f32 %v728, %v416
      %v744 = vadd.f32 %v729, %v416
      %v745 = vadd.f32 %v730, %v416
      %v746 = vadd.f32 %v731, %v416
      %v747 = vadd.f32 %v732, %v416
      %v748 = vadd.f32 %v733, %v416
      %v749 = vadd.f32 %v734, %v416
      %v750 = vadd.f32 %v735, %v416
      %v751 = vadd.f32 %v736, %v416
      %v752 = vadd.f32 %v737, %v416
      %v753 = vadd.f32 %v738, %v416
      %v754 = vadd.f32 %v739, %v416
      %v755 = vadd.f32 %v740, %v416
      %v756 = vadd.f32 %v741, %v416
      %v757 = vmax.f32 %v742, 0.0
      %v758 = vmax.f32 %v743, 0.0
      %v759 = vmax.f32 %v744, 0.0
      %v760 = vmax.f32 %v745, 0.0
      %v761 = vmax.f32 %v746, 0.0
      %v762 = vmax.f32 %v747, 0.0
      %v763 = vmax.f32 %v748, 0.0
      %v764 = vmax.f32 %v749, 0.0
      %v765 = vmax.f32 %v750, 0.0
      %v766 = vmax.f32 %v751, 0.0
      %v767 = vmax.f32 %v752, 0.0
      %v768 = vmax.f32 %v753, 0.0
      %v769 = vmax.f32 %v754, 0.0
      %v770 = vmax.f32 %v755, 0.0
      %v771 = vmax.f32 %v756, 0.0
      %v772 = vsub.f32 %v757, %v742
      %v773 = vsub.f32 %v758, %v743
      %v774 = vsub.f32 %v759, %v744
      %v775 = vsub.f32 %v760, %v745
      %v776 = vsub.f32 %v761, %v746
      %v777 = vsub.f32 %v762, %v747
      %v778 = vsub.f32 %v763, %v748
      %v779 = vsub.f32 %v764, %v749
      %v780 = vsub.f32 %v765, %v750
      %v781 = vsub.f32 %v766, %v751
      %v782 = vsub.f32 %v767, %v752
      %v783 = vsub.f32 %v768, %v753
      %v784 = vsub.f32 %v769, %v754
      %v785 = vsub.f32 %v770, %v755
      %v786 = vsub.f32 %v771, %v756
      %v787 = vmul.f32 %v467, %v772
      %v788 = vmul.f32 %v467, %v773
      %v789 = vmul.f32 %v467, %v774
      %v790 = vmul.f32 %v467, %v775
      %v791 = vmul.f32 %v467, %v776
      %v792 = vmul.f32 %v467, %v777
      %v793 = vmul.f32 %v467, %v778
      %v794 = vmul.f32 %v467, %v779
      %v795 = vmul.f32 %v467, %v780
      %v796 = vmul.f32 %v467, %v781
      %v797 = vmul.f32 %v467, %v782
      %v798 = vmul.f32 %v467, %v783
      %v799 = vmul.f32 %v467, %v784
      %v800 = vmul.f32 %v467, %v785
      %v801 = vmul.f32 %v467, %v786
      %v802 = vadd.f32 %v742, %v787
      %v803 = vadd.f32 %v743, %v788
      %v804 = vadd.f32 %v744, %v789
      %v805 = vadd.f32 %v745, %v790
      %v806 = vadd.f32 %v746, %v791
      %v807 = vadd.f32 %v747, %v792
      %v808 = vadd.f32 %v748, %v793
      %v809 = vadd.f32 %v749, %v794
      %v810 = vadd.f32 %v750, %v795
      %v811 = vadd.f32 %v751, %v796
      %v812 = vadd.f32 %v752, %v797
      %v813 = vadd.f32 %v753, %v798
      %v814 = vadd.f32 %v754, %v799
      %v815 = vadd.f32 %v755, %v800
      %v816 = vadd.f32 %v756, %v801
      %v817 = vpack.c.bf16 %v803, %v802
      %v818 = vpack.c.bf16 %v805, %v804
      %v819 = vpack.c.bf16 %v807, %v806
      %v820 = vpack.c.bf16 %v809, %v808
      %v821 = vpack.c.bf16 %v811, %v810
      %v822 = vpack.c.bf16 %v813, %v812
      %v823 = vpack.c.bf16 %v815, %v814
      %v824 = vpack.c.bf16 %v816, %v816
      %v825 = vld [vmem:[%s341 + $0x11] sm:$0xff]
      %v826 = vld [vmem:[%s341 + $0x19] sm:$0xff]
      %v827 = vld [vmem:[%s341 + $0x21] sm:$0xff]
      %v828 = vld [vmem:[%s341 + $0x29] sm:$0xff]
      %v829 = vld [vmem:[%s341 + $0x31] sm:$0xff]
      %v830 = vld [vmem:[%s341 + $0x39] sm:$0xff]
      %v831 = vld [vmem:[%s341 + $0x41] sm:$0xff]
      %v832 = vld [vmem:[%s341 + $0x49] sm:$0xff]
      %v833 = vld [vmem:[%s341 + $0x51] sm:$0xff]
      %v834 = vld [vmem:[%s341 + $0x59] sm:$0xff]
      %v835 = vld [vmem:[%s341 + $0x61] sm:$0xff]
      %v836 = vld [vmem:[%s341 + $0x69] sm:$0xff]
      %v837 = vld [vmem:[%s341 + $0x71] sm:$0xff]
      %v838 = vld [vmem:[%s341 + $0x79] sm:$0xff]
      %v839 = vld [vmem:[%s341 + $0x81] sm:$0x7f]
      %s840 = scalar_lea.vmem %s6, 64
      %v841 = vld [vmem:[%s840] sm:$0xf]
      %v842 = vld [vmem:[%s840 + $0x4] sm:$0xf]
      %v843 = vld [vmem:[%s840 + $0x8] sm:$0xf]
      %v844 = vld [vmem:[%s840 + $0xc] sm:$0xf]
      %v845 = vld [vmem:[%s840 + $0x10] sm:$0xf]
      %v846 = vld [vmem:[%s840 + $0x14] sm:$0xf]
      %v847 = vld [vmem:[%s840 + $0x18] sm:$0xf]
      %v848 = vld [vmem:[%s840 + $0x1c] sm:$0xf]
      %v849 = vld [vmem:[%s840 + $0x20] sm:$0xf]
      %v850 = vld [vmem:[%s840 + $0x24] sm:$0xf]
      %v851 = vld [vmem:[%s840 + $0x28] sm:$0xf]
      %v852 = vld [vmem:[%s840 + $0x2c] sm:$0xf]
      %v853 = vld [vmem:[%s840 + $0x30] sm:$0xf]
      %v854 = vld [vmem:[%s840 + $0x34] sm:$0xf]
      %v855 = vld [vmem:[%s840 + $0x38] sm:$0xf]
      %v856 = vld [vmem:[%s840 + $0x3c] sm:$0xf]
      %v873 = vunpack.c.l.b16 %v841
      %v874 = vunpack.c.l.b16 %v842
      %v875 = vunpack.c.l.b16 %v843
      %v876 = vunpack.c.l.b16 %v844
      %v877 = vunpack.c.l.b16 %v845
      %v878 = vunpack.c.l.b16 %v846
      %v879 = vunpack.c.l.b16 %v847
      %v880 = vunpack.c.l.b16 %v848
      %v881 = vunpack.c.l.b16 %v849
      %v882 = vunpack.c.l.b16 %v850
      %v883 = vunpack.c.l.b16 %v851
      %v884 = vunpack.c.l.b16 %v852
      %v885 = vunpack.c.l.b16 %v853
      %v886 = vunpack.c.l.b16 %v854
      %v887 = vunpack.c.l.b16 %v855
      %v888 = vunpack.c.l.b16 %v856
      %v889 = vpack.c.b16 %v874, %v873
      %v890 = vpack.c.b16 %v876, %v875
      %v891 = vpack.c.b16 %v878, %v877
      %v892 = vpack.c.b16 %v880, %v879
      %v893 = vpack.c.b16 %v882, %v881
      %v894 = vpack.c.b16 %v884, %v883
      %v895 = vpack.c.b16 %v886, %v885
      %v896 = vpack.c.b16 %v888, %v887
      %905 = vmatprep.subr.bf16.mxu0 0
      %906 = vmatpush1.bf16.msra.mxu0 %v889
      %907 = vmatprep.subr.bf16.mxu0 0
      %908 = vmatpush1.bf16.msra.mxu0 %v890
      %909 = vmatprep.subr.bf16.mxu0 0
      %910 = vmatpush1.bf16.msra.mxu0 %v891
      %911 = vmatprep.subr.bf16.mxu0 0
      %912 = vmatpush1.bf16.msra.mxu0 %v892
      %913 = vmatprep.subr.bf16.mxu0 0
      %914 = vmatpush1.bf16.msra.mxu0 %v893
      %915 = vmatprep.subr.bf16.mxu0 0
      %916 = vmatpush1.bf16.msra.mxu0 %v894
      %917 = vmatprep.subr.bf16.mxu0 0
      %918 = vmatpush1.bf16.msra.mxu0 %v895
      %919 = vmatprep.subr.bf16.mxu0 0
      %920 = vmatpush1.bf16.msra.mxu0 %v896
      %921 = vmatprep.subr.bf16.mxu0 0
      %922 = vmatpush1.bf16.msra.mxu0 0
      %923 = vmatprep.subr.bf16.mxu0 0
      %924 = vmatpush1.bf16.msra.mxu0 0
      %925 = vmatprep.subr.bf16.mxu0 0
      %926 = vmatpush1.bf16.msra.mxu0 0
      %927 = vmatprep.subr.bf16.mxu0 0
      %928 = vmatpush1.bf16.msra.mxu0 0
      %929 = vmatprep.subr.bf16.mxu0 0
      %930 = vmatpush1.bf16.msra.mxu0 0
      %931 = vmatprep.subr.bf16.mxu0 0
      %932 = vmatpush1.bf16.msra.mxu0 0
      %933 = vmatprep.subr.bf16.mxu0 0
      %934 = vmatpush1.bf16.msra.mxu0 0
      %935 = vmatprep.subr.bf16.mxu0 0
      %936 = vmatpush1.bf16.msra.mxu0 0
      %937 = vmatprep.mubr.bf16.mxu0 0
      %938 = vmatmul.mubr.bf16.gmra.mrb[0].mxu0 %v817
      %v939 = vpop.f32.mrb[0].mxu0
      %v940 = vadd.f32 0.0, %v939
      %v941 = vpop.f32.mrb[0].mxu0
      %v942 = vpop.f32.mrb[0].mxu0
      %v943 = vadd.f32 0.0, %v942
      %v944 = vpop.f32.mrb[0].mxu0
      %945 = vmatprep.mubr.bf16.mxu0 0
      %946 = vmatmul.mubr.bf16.gmra.mrb[0].mxu0 %v818
      %v947 = vpop.f32.mrb[0].mxu0
      %v948 = vadd.f32 0.0, %v947
      %v949 = vpop.f32.mrb[0].mxu0
      %v950 = vpop.f32.mrb[0].mxu0
      %v951 = vadd.f32 0.0, %v950
      %v952 = vpop.f32.mrb[0].mxu0
      %953 = vmatprep.mubr.bf16.mxu0 0
      %954 = vmatmul.mubr.bf16.gmra.mrb[0].mxu0 %v819
      %v955 = vpop.f32.mrb[0].mxu0
      %v956 = vadd.f32 0.0, %v955
      %v957 = vpop.f32.mrb[0].mxu0
      %v958 = vpop.f32.mrb[0].mxu0
      %v959 = vadd.f32 0.0, %v958
      %v960 = vpop.f32.mrb[0].mxu0
      %961 = vmatprep.mubr.bf16.mxu0 0
      %962 = vmatmul.mubr.bf16.gmra.mrb[0].mxu0 %v820
      %v963 = vpop.f32.mrb[0].mxu0
      %v964 = vadd.f32 0.0, %v963
      %v965 = vpop.f32.mrb[0].mxu0
      %v966 = vpop.f32.mrb[0].mxu0
      %v967 = vadd.f32 0.0, %v966
      %v968 = vpop.f32.mrb[0].mxu0
      %969 = vmatprep.mubr.bf16.mxu0 0
      %970 = vmatmul.mubr.bf16.gmra.mrb[0].mxu0 %v821
      %v971 = vpop.f32.mrb[0].mxu0
      %v972 = vadd.f32 0.0, %v971
      %v973 = vpop.f32.mrb[0].mxu0
      %v974 = vpop.f32.mrb[0].mxu0
      %v975 = vadd.f32 0.0, %v974
      %v976 = vpop.f32.mrb[0].mxu0
      %977 = vmatprep.mubr.bf16.mxu0 0
      %978 = vmatmul.mubr.bf16.gmra.mrb[0].mxu0 %v822
      %v979 = vpop.f32.mrb[0].mxu0
      %v980 = vadd.f32 0.0, %v979
      %v981 = vpop.f32.mrb[0].mxu0
      %v982 = vpop.f32.mrb[0].mxu0
      %v983 = vadd.f32 0.0, %v982
      %v984 = vpop.f32.mrb[0].mxu0
      %985 = vmatprep.mubr.bf16.mxu0 0
      %986 = vmatmul.mubr.bf16.gmra.mrb[0].mxu0 %v823
      %v987 = vpop.f32.mrb[0].mxu0
      %v988 = vadd.f32 0.0, %v987
      %v989 = vpop.f32.mrb[0].mxu0
      %v990 = vpop.f32.mrb[0].mxu0
      %v991 = vadd.f32 0.0, %v990
      %v992 = vpop.f32.mrb[0].mxu0
      %993 = vmatprep.mubr.bf16.mxu0 0
      %994 = vmatmul.mubr.bf16.gmra.mrb[0].mxu0 %v824
      %v995 = vpop.f32.mrb[0].mxu0
      %v996 = vadd.f32 0.0, %v995
      %v997 = vpop.f32.mrb[0].mxu0
      %v998 = vpop.f32.mrb[0].mxu0
      %v999 = vpop.f32.mrb[0].mxu0
      %1000 = vdwg.mxu0
      %v1001 = vadd.f32 %v825, %v940
      %v1002 = vadd.f32 %v826, %v943
      %v1003 = vadd.f32 %v827, %v948
      %v1004 = vadd.f32 %v828, %v951
      %v1005 = vadd.f32 %v829, %v956
      %v1006 = vadd.f32 %v830, %v959
      %v1007 = vadd.f32 %v831, %v964
      %v1008 = vadd.f32 %v832, %v967
      %v1009 = vadd.f32 %v833, %v972
      %v1010 = vadd.f32 %v834, %v975
      %v1011 = vadd.f32 %v835, %v980
      %v1012 = vadd.f32 %v836, %v983
      %v1013 = vadd.f32 %v837, %v988
      %v1014 = vadd.f32 %v838, %v991
      %v1015 = vadd.f32 %v839, %v996
      %1016 = vst [vmem:[%s341 + $0x11] sm:$0xff] %v1001
      %1017 = vst [vmem:[%s341 + $0x19] sm:$0xff] %v1002
      %1018 = vst [vmem:[%s341 + $0x21] sm:$0xff] %v1003
      %1019 = vst [vmem:[%s341 + $0x29] sm:$0xff] %v1004
      %1020 = vst [vmem:[%s341 + $0x31] sm:$0xff] %v1005
      %1021 = vst [vmem:[%s341 + $0x39] sm:$0xff] %v1006
      %1022 = vst [vmem:[%s341 + $0x41] sm:$0xff] %v1007
      %1023 = vst [vmem:[%s341 + $0x49] sm:$0xff] %v1008
      %1024 = vst [vmem:[%s341 + $0x51] sm:$0xff] %v1009
      %1025 = vst [vmem:[%s341 + $0x59] sm:$0xff] %v1010
      %1026 = vst [vmem:[%s341 + $0x61] sm:$0xff] %v1011
      %1027 = vst [vmem:[%s341 + $0x69] sm:$0xff] %v1012
      %1028 = vst [vmem:[%s341 + $0x71] sm:$0xff] %v1013
      %1029 = vst [vmem:[%s341 + $0x79] sm:$0xff] %v1014
      %1030 = vst [vmem:[%s341 + $0x81] sm:$0x7f] %v1015
      %v1031 = vld [vmem:[%s335] sm:$0xff]
      %v1032 = vld [vmem:[%s335 + $0x8] sm:$0xff]
      %v1033 = vld [vmem:[%s335 + $0x10] sm:$0xff]
      %v1034 = vld [vmem:[%s335 + $0x18] sm:$0xff]
      %v1035 = vld [vmem:[%s335 + $0x20] sm:$0xff]
      %v1036 = vld [vmem:[%s335 + $0x28] sm:$0xff]
      %v1037 = vld [vmem:[%s335 + $0x30] sm:$0xff]
      %v1038 = vld [vmem:[%s335 + $0x38] sm:$0xff]
      %v1039 = vld [vmem:[%s335 + $0x40] sm:$0xff]
      %v1040 = vld [vmem:[%s335 + $0x48] sm:$0xff]
      %v1041 = vld [vmem:[%s335 + $0x50] sm:$0xff]
      %v1042 = vld [vmem:[%s335 + $0x58] sm:$0xff]
      %v1043 = vld [vmem:[%s335 + $0x60] sm:$0xff]
      %v1044 = vld [vmem:[%s335 + $0x68] sm:$0xff]
      %v1045 = vld [vmem:[%s335 + $0x70] sm:$0xff]
      %v1046 = vld [vmem:[%s335 + $0x78] sm:$0xff]
      %v1047 = vld [vmem:[%s335 + $0x80] sm:$0xff]
      %v1048 = vmul.f32 %v1031, %v395
      %v1049 = vmul.f32 %v1032, %v395
      %v1050 = vmul.f32 %v1033, %v395
      %v1051 = vmul.f32 %v1034, %v395
      %v1052 = vmul.f32 %v1035, %v395
      %v1053 = vmul.f32 %v1036, %v395
      %v1054 = vmul.f32 %v1037, %v395
      %v1055 = vmul.f32 %v1038, %v395
      %v1056 = vmul.f32 %v1039, %v395
      %v1057 = vmul.f32 %v1040, %v395
      %v1058 = vmul.f32 %v1041, %v395
      %v1059 = vmul.f32 %v1042, %v395
      %v1060 = vmul.f32 %v1043, %v395
      %v1061 = vmul.f32 %v1044, %v395
      %v1062 = vmul.f32 %v1045, %v395
      %v1063 = vmul.f32 %v1046, %v395
      %v1064 = vmul.f32 %v1047, %v395
      %v1065 = vadd.f32 %v1048, %v416
      %v1066 = vadd.f32 %v1049, %v416
      %v1067 = vadd.f32 %v1050, %v416
      %v1068 = vadd.f32 %v1051, %v416
      %v1069 = vadd.f32 %v1052, %v416
      %v1070 = vadd.f32 %v1053, %v416
      %v1071 = vadd.f32 %v1054, %v416
      %v1072 = vadd.f32 %v1055, %v416
      %v1073 = vadd.f32 %v1056, %v416
      %v1074 = vadd.f32 %v1057, %v416
      %v1075 = vadd.f32 %v1058, %v416
      %v1076 = vadd.f32 %v1059, %v416
      %v1077 = vadd.f32 %v1060, %v416
      %v1078 = vadd.f32 %v1061, %v416
      %v1079 = vadd.f32 %v1062, %v416
      %v1080 = vadd.f32 %v1063, %v416
      %v1081 = vadd.f32 %v1064, %v416
      %v1082 = vmax.f32 %v1065, 0.0
      %v1083 = vmax.f32 %v1066, 0.0
      %v1084 = vmax.f32 %v1067, 0.0
      %v1085 = vmax.f32 %v1068, 0.0
      %v1086 = vmax.f32 %v1069, 0.0
      %v1087 = vmax.f32 %v1070, 0.0
      %v1088 = vmax.f32 %v1071, 0.0
      %v1089 = vmax.f32 %v1072, 0.0
      %v1090 = vmax.f32 %v1073, 0.0
      %v1091 = vmax.f32 %v1074, 0.0
      %v1092 = vmax.f32 %v1075, 0.0
      %v1093 = vmax.f32 %v1076, 0.0
      %v1094 = vmax.f32 %v1077, 0.0
      %v1095 = vmax.f32 %v1078, 0.0
      %v1096 = vmax.f32 %v1079, 0.0
      %v1097 = vmax.f32 %v1080, 0.0
      %v1098 = vmax.f32 %v1081, 0.0
      %v1099 = vsub.f32 %v1082, %v1065
      %v1100 = vsub.f32 %v1083, %v1066
      %v1101 = vsub.f32 %v1084, %v1067
      %v1102 = vsub.f32 %v1085, %v1068
      %v1103 = vsub.f32 %v1086, %v1069
      %v1104 = vsub.f32 %v1087, %v1070
      %v1105 = vsub.f32 %v1088, %v1071
      %v1106 = vsub.f32 %v1089, %v1072
      %v1107 = vsub.f32 %v1090, %v1073
      %v1108 = vsub.f32 %v1091, %v1074
      %v1109 = vsub.f32 %v1092, %v1075
      %v1110 = vsub.f32 %v1093, %v1076
      %v1111 = vsub.f32 %v1094, %v1077
      %v1112 = vsub.f32 %v1095, %v1078
      %v1113 = vsub.f32 %v1096, %v1079
      %v1114 = vsub.f32 %v1097, %v1080
      %v1115 = vsub.f32 %v1098, %v1081
      %v1116 = vmul.f32 %v467, %v1099
      %v1117 = vmul.f32 %v467, %v1100
      %v1118 = vmul.f32 %v467, %v1101
      %v1119 = vmul.f32 %v467, %v1102
      %v1120 = vmul.f32 %v467, %v1103
      %v1121 = vmul.f32 %v467, %v1104
      %v1122 = vmul.f32 %v467, %v1105
      %v1123 = vmul.f32 %v467, %v1106
      %v1124 = vmul.f32 %v467, %v1107
      %v1125 = vmul.f32 %v467, %v1108
      %v1126 = vmul.f32 %v467, %v1109
      %v1127 = vmul.f32 %v467, %v1110
      %v1128 = vmul.f32 %v467, %v1111
      %v1129 = vmul.f32 %v467, %v1112
      %v1130 = vmul.f32 %v467, %v1113
      %v1131 = vmul.f32 %v467, %v1114
      %v1132 = vmul.f32 %v467, %v1115
      %v1133 = vadd.f32 %v1065, %v1116
      %v1134 = vadd.f32 %v1066, %v1117
      %v1135 = vadd.f32 %v1067, %v1118
      %v1136 = vadd.f32 %v1068, %v1119
      %v1137 = vadd.f32 %v1069, %v1120
      %v1138 = vadd.f32 %v1070, %v1121
      %v1139 = vadd.f32 %v1071, %v1122
      %v1140 = vadd.f32 %v1072, %v1123
      %v1141 = vadd.f32 %v1073, %v1124
      %v1142 = vadd.f32 %v1074, %v1125
      %v1143 = vadd.f32 %v1075, %v1126
      %v1144 = vadd.f32 %v1076, %v1127
      %v1145 = vadd.f32 %v1077, %v1128
      %v1146 = vadd.f32 %v1078, %v1129
      %v1147 = vadd.f32 %v1079, %v1130
      %v1148 = vadd.f32 %v1080, %v1131
      %v1149 = vadd.f32 %v1081, %v1132
      %v1150 = vpack.c.bf16 %v1134, %v1133
      %v1151 = vpack.c.bf16 %v1136, %v1135
      %v1152 = vpack.c.bf16 %v1138, %v1137
      %v1153 = vpack.c.bf16 %v1140, %v1139
      %v1154 = vpack.c.bf16 %v1142, %v1141
      %v1155 = vpack.c.bf16 %v1144, %v1143
      %v1156 = vpack.c.bf16 %v1146, %v1145
      %v1157 = vpack.c.bf16 %v1148, %v1147
      %v1158 = vpack.c.bf16 %v1149, %v1149
      %v1159 = vld [vmem:[%s341] sm:$0xff]
      %v1160 = vld [vmem:[%s341 + $0x8] sm:$0xff]
      %v1161 = vld [vmem:[%s341 + $0x10] sm:$0xff]
      %v1162 = vld [vmem:[%s341 + $0x18] sm:$0xff]
      %v1163 = vld [vmem:[%s341 + $0x20] sm:$0xff]
      %v1164 = vld [vmem:[%s341 + $0x28] sm:$0xff]
      %v1165 = vld [vmem:[%s341 + $0x30] sm:$0xff]
      %v1166 = vld [vmem:[%s341 + $0x38] sm:$0xff]
      %v1167 = vld [vmem:[%s341 + $0x40] sm:$0xff]
      %v1168 = vld [vmem:[%s341 + $0x48] sm:$0xff]
      %v1169 = vld [vmem:[%s341 + $0x50] sm:$0xff]
      %v1170 = vld [vmem:[%s341 + $0x58] sm:$0xff]
      %v1171 = vld [vmem:[%s341 + $0x60] sm:$0xff]
      %v1172 = vld [vmem:[%s341 + $0x68] sm:$0xff]
      %v1173 = vld [vmem:[%s341 + $0x70] sm:$0xff]
      %v1174 = vld [vmem:[%s341 + $0x78] sm:$0xff]
      %v1175 = vld [vmem:[%s341 + $0x80] sm:$0xff]
      %s1176 = scalar_lea.vmem %s6, 128
      %v1177 = vld [vmem:[%s1176] sm:$0xf]
      %v1178 = vld [vmem:[%s1176 + $0x4] sm:$0xf]
      %v1179 = vld [vmem:[%s1176 + $0x8] sm:$0xf]
      %v1180 = vld [vmem:[%s1176 + $0xc] sm:$0xf]
      %v1181 = vld [vmem:[%s1176 + $0x10] sm:$0xf]
      %v1182 = vld [vmem:[%s1176 + $0x14] sm:$0xf]
      %v1183 = vld [vmem:[%s1176 + $0x18] sm:$0xf]
      %v1184 = vld [vmem:[%s1176 + $0x1c] sm:$0xf]
      %v1185 = vld [vmem:[%s1176 + $0x20] sm:$0xf]
      %v1186 = vld [vmem:[%s1176 + $0x24] sm:$0xf]
      %v1187 = vld [vmem:[%s1176 + $0x28] sm:$0xf]
      %v1188 = vld [vmem:[%s1176 + $0x2c] sm:$0xf]
      %v1189 = vld [vmem:[%s1176 + $0x30] sm:$0xf]
      %v1190 = vld [vmem:[%s1176 + $0x34] sm:$0xf]
      %v1191 = vld [vmem:[%s1176 + $0x38] sm:$0xf]
      %v1192 = vld [vmem:[%s1176 + $0x3c] sm:$0xf]
      %v1209 = vunpack.c.l.b16 %v1177
      %v1210 = vunpack.c.l.b16 %v1178
      %v1211 = vunpack.c.l.b16 %v1179
      %v1212 = vunpack.c.l.b16 %v1180
      %v1213 = vunpack.c.l.b16 %v1181
      %v1214 = vunpack.c.l.b16 %v1182
      %v1215 = vunpack.c.l.b16 %v1183
      %v1216 = vunpack.c.l.b16 %v1184
      %v1217 = vunpack.c.l.b16 %v1185
      %v1218 = vunpack.c.l.b16 %v1186
      %v1219 = vunpack.c.l.b16 %v1187
      %v1220 = vunpack.c.l.b16 %v1188
      %v1221 = vunpack.c.l.b16 %v1189
      %v1222 = vunpack.c.l.b16 %v1190
      %v1223 = vunpack.c.l.b16 %v1191
      %v1224 = vunpack.c.l.b16 %v1192
      %v1225 = vpack.c.b16 %v1210, %v1209
      %v1226 = vpack.c.b16 %v1212, %v1211
      %v1227 = vpack.c.b16 %v1214, %v1213
      %v1228 = vpack.c.b16 %v1216, %v1215
      %v1229 = vpack.c.b16 %v1218, %v1217
      %v1230 = vpack.c.b16 %v1220, %v1219
      %v1231 = vpack.c.b16 %v1222, %v1221
      %v1232 = vpack.c.b16 %v1224, %v1223
      %1241 = vmatprep.subr.bf16.mxu0 0
      %1242 = vmatpush1.bf16.msra.mxu0 %v1225
      %1243 = vmatprep.subr.bf16.mxu0 0
      %1244 = vmatpush1.bf16.msra.mxu0 %v1226
      %1245 = vmatprep.subr.bf16.mxu0 0
      %1246 = vmatpush1.bf16.msra.mxu0 %v1227
      %1247 = vmatprep.subr.bf16.mxu0 0
      %1248 = vmatpush1.bf16.msra.mxu0 %v1228
      %1249 = vmatprep.subr.bf16.mxu0 0
      %1250 = vmatpush1.bf16.msra.mxu0 %v1229
      %1251 = vmatprep.subr.bf16.mxu0 0
      %1252 = vmatpush1.bf16.msra.mxu0 %v1230
      %1253 = vmatprep.subr.bf16.mxu0 0
      %1254 = vmatpush1.bf16.msra.mxu0 %v1231
      %1255 = vmatprep.subr.bf16.mxu0 0
      %1256 = vmatpush1.bf16.msra.mxu0 %v1232
      %1257 = vmatprep.subr.bf16.mxu0 0
      %1258 = vmatpush1.bf16.msra.mxu0 0
      %1259 = vmatprep.subr.bf16.mxu0 0
      %1260 = vmatpush1.bf16.msra.mxu0 0
      %1261 = vmatprep.subr.bf16.mxu0 0
      %1262 = vmatpush1.bf16.msra.mxu0 0
      %1263 = vmatprep.subr.bf16.mxu0 0
      %1264 = vmatpush1.bf16.msra.mxu0 0
      %1265 = vmatprep.subr.bf16.mxu0 0
      %1266 = vmatpush1.bf16.msra.mxu0 0
      %1267 = vmatprep.subr.bf16.mxu0 0
      %1268 = vmatpush1.bf16.msra.mxu0 0
      %1269 = vmatprep.subr.bf16.mxu0 0
      %1270 = vmatpush1.bf16.msra.mxu0 0
      %1271 = vmatprep.subr.bf16.mxu0 0
      %1272 = vmatpush1.bf16.msra.mxu0 0
      %1273 = vmatprep.mubr.bf16.mxu0 0
      %1274 = vmatmul.mubr.bf16.gmra.mrb[0].mxu0 %v1150
      %v1275 = vpop.f32.mrb[0].mxu0
      %v1276 = vadd.f32 0.0, %v1275
      %v1277 = vpop.f32.mrb[0].mxu0
      %v1278 = vpop.f32.mrb[0].mxu0
      %v1279 = vadd.f32 0.0, %v1278
      %v1280 = vpop.f32.mrb[0].mxu0
      %1281 = vmatprep.mubr.bf16.mxu0 0
      %1282 = vmatmul.mubr.bf16.gmra.mrb[0].mxu0 %v1151
      %v1283 = vpop.f32.mrb[0].mxu0
      %v1284 = vadd.f32 0.0, %v1283
      %v1285 = vpop.f32.mrb[0].mxu0
      %v1286 = vpop.f32.mrb[0].mxu0
      %v1287 = vadd.f32 0.0, %v1286
      %v1288 = vpop.f32.mrb[0].mxu0
      %1289 = vmatprep.mubr.bf16.mxu0 0
      %1290 = vmatmul.mubr.bf16.gmra.mrb[0].mxu0 %v1152
      %v1291 = vpop.f32.mrb[0].mxu0
      %v1292 = vadd.f32 0.0, %v1291
      %v1293 = vpop.f32.mrb[0].mxu0
      %v1294 = vpop.f32.mrb[0].mxu0
      %v1295 = vadd.f32 0.0, %v1294
      %v1296 = vpop.f32.mrb[0].mxu0
      %1297 = vmatprep.mubr.bf16.mxu0 0
      %1298 = vmatmul.mubr.bf16.gmra.mrb[0].mxu0 %v1153
      %v1299 = vpop.f32.mrb[0].mxu0
      %v1300 = vadd.f32 0.0, %v1299
      %v1301 = vpop.f32.mrb[0].mxu0
      %v1302 = vpop.f32.mrb[0].mxu0
      %v1303 = vadd.f32 0.0, %v1302
      %v1304 = vpop.f32.mrb[0].mxu0
      %1305 = vmatprep.mubr.bf16.mxu0 0
      %1306 = vmatmul.mubr.bf16.gmra.mrb[0].mxu0 %v1154
      %v1307 = vpop.f32.mrb[0].mxu0
      %v1308 = vadd.f32 0.0, %v1307
      %v1309 = vpop.f32.mrb[0].mxu0
      %v1310 = vpop.f32.mrb[0].mxu0
      %v1311 = vadd.f32 0.0, %v1310
      %v1312 = vpop.f32.mrb[0].mxu0
      %1313 = vmatprep.mubr.bf16.mxu0 0
      %1314 = vmatmul.mubr.bf16.gmra.mrb[0].mxu0 %v1155
      %v1315 = vpop.f32.mrb[0].mxu0
      %v1316 = vadd.f32 0.0, %v1315
      %v1317 = vpop.f32.mrb[0].mxu0
      %v1318 = vpop.f32.mrb[0].mxu0
      %v1319 = vadd.f32 0.0, %v1318
      %v1320 = vpop.f32.mrb[0].mxu0
      %1321 = vmatprep.mubr.bf16.mxu0 0
      %1322 = vmatmul.mubr.bf16.gmra.mrb[0].mxu0 %v1156
      %v1323 = vpop.f32.mrb[0].mxu0
      %v1324 = vadd.f32 0.0, %v1323
      %v1325 = vpop.f32.mrb[0].mxu0
      %v1326 = vpop.f32.mrb[0].mxu0
      %v1327 = vadd.f32 0.0, %v1326
      %v1328 = vpop.f32.mrb[0].mxu0
      %1329 = vmatprep.mubr.bf16.mxu0 0
      %1330 = vmatmul.mubr.bf16.gmra.mrb[0].mxu0 %v1157
      %v1331 = vpop.f32.mrb[0].mxu0
      %v1332 = vadd.f32 0.0, %v1331
      %v1333 = vpop.f32.mrb[0].mxu0
      %v1334 = vpop.f32.mrb[0].mxu0
      %v1335 = vadd.f32 0.0, %v1334
      %v1336 = vpop.f32.mrb[0].mxu0
      %1337 = vmatprep.mubr.bf16.mxu0 0
      %1338 = vmatmul.mubr.bf16.gmra.mrb[0].mxu0 %v1158
      %v1339 = vpop.f32.mrb[0].mxu0
      %v1340 = vadd.f32 0.0, %v1339
      %v1341 = vpop.f32.mrb[0].mxu0
      %v1342 = vpop.f32.mrb[0].mxu0
      %v1343 = vpop.f32.mrb[0].mxu0
      %1344 = vdwg.mxu0
      %v1345 = vadd.f32 %v1159, %v1276
      %v1346 = vadd.f32 %v1160, %v1279
      %v1347 = vadd.f32 %v1161, %v1284
      %v1348 = vadd.f32 %v1162, %v1287
      %v1349 = vadd.f32 %v1163, %v1292
      %v1350 = vadd.f32 %v1164, %v1295
      %v1351 = vadd.f32 %v1165, %v1300
      %v1352 = vadd.f32 %v1166, %v1303
      %v1353 = vadd.f32 %v1167, %v1308
      %v1354 = vadd.f32 %v1168, %v1311
      %v1355 = vadd.f32 %v1169, %v1316
      %v1356 = vadd.f32 %v1170, %v1319
      %v1357 = vadd.f32 %v1171, %v1324
      %v1358 = vadd.f32 %v1172, %v1327
      %v1359 = vadd.f32 %v1173, %v1332
      %v1360 = vadd.f32 %v1174, %v1335
      %v1361 = vadd.f32 %v1175, %v1340
      %1362 = vst [vmem:[%s341] sm:$0xff] %v1345
      %1363 = vst [vmem:[%s341 + $0x8] sm:$0xff] %v1346
      %1364 = vst [vmem:[%s341 + $0x10] sm:$0xff] %v1347
      %1365 = vst [vmem:[%s341 + $0x18] sm:$0xff] %v1348
      %1366 = vst [vmem:[%s341 + $0x20] sm:$0xff] %v1349
      %1367 = vst [vmem:[%s341 + $0x28] sm:$0xff] %v1350
      %1368 = vst [vmem:[%s341 + $0x30] sm:$0xff] %v1351
      %1369 = vst [vmem:[%s341 + $0x38] sm:$0xff] %v1352
      %1370 = vst [vmem:[%s341 + $0x40] sm:$0xff] %v1353
      %1371 = vst [vmem:[%s341 + $0x48] sm:$0xff] %v1354
      %1372 = vst [vmem:[%s341 + $0x50] sm:$0xff] %v1355
      %1373 = vst [vmem:[%s341 + $0x58] sm:$0xff] %v1356
      %1374 = vst [vmem:[%s341 + $0x60] sm:$0xff] %v1357
      %1375 = vst [vmem:[%s341 + $0x68] sm:$0xff] %v1358
      %1376 = vst [vmem:[%s341 + $0x70] sm:$0xff] %v1359
      %1377 = vst [vmem:[%s341 + $0x78] sm:$0xff] %v1360
      %1378 = vst [vmem:[%s341 + $0x80] sm:$0xff] %v1361
      %v1379 = vld [vmem:[%s335 + $0x88] sm:$0xff]
      %v1380 = vld [vmem:[%s335 + $0x90] sm:$0xff]
      %v1381 = vld [vmem:[%s335 + $0x98] sm:$0xff]
      %v1382 = vld [vmem:[%s335 + $0xa0] sm:$0xff]
      %v1383 = vld [vmem:[%s335 + $0xa8] sm:$0xff]
      %v1384 = vld [vmem:[%s335 + $0xb0] sm:$0xff]
      %v1385 = vld [vmem:[%s335 + $0xb8] sm:$0xff]
      %v1386 = vld [vmem:[%s335 + $0xc0] sm:$0xff]
      %v1387 = vld [vmem:[%s335 + $0xc8] sm:$0xff]
      %v1388 = vld [vmem:[%s335 + $0xd0] sm:$0xff]
      %v1389 = vld [vmem:[%s335 + $0xd8] sm:$0xff]
      %v1390 = vld [vmem:[%s335 + $0xe0] sm:$0xff]
      %v1391 = vld [vmem:[%s335 + $0xe8] sm:$0xff]
      %v1392 = vld [vmem:[%s335 + $0xf0] sm:$0xff]
      %v1393 = vld [vmem:[%s335 + $0xf8] sm:$0xff]
      %v1394 = vld [vmem:[%s335 + $0x100] sm:$0xff]
      %v1395 = vld [vmem:[%s335 + $0x108] sm:$0xff]
      %v1396 = vmul.f32 %v1379, %v395
      %v1397 = vmul.f32 %v1380, %v395
      %v1398 = vmul.f32 %v1381, %v395
      %v1399 = vmul.f32 %v1382, %v395
      %v1400 = vmul.f32 %v1383, %v395
      %v1401 = vmul.f32 %v1384, %v395
      %v1402 = vmul.f32 %v1385, %v395
      %v1403 = vmul.f32 %v1386, %v395
      %v1404 = vmul.f32 %v1387, %v395
      %v1405 = vmul.f32 %v1388, %v395
      %v1406 = vmul.f32 %v1389, %v395
      %v1407 = vmul.f32 %v1390, %v395
      %v1408 = vmul.f32 %v1391, %v395
      %v1409 = vmul.f32 %v1392, %v395
      %v1410 = vmul.f32 %v1393, %v395
      %v1411 = vmul.f32 %v1394, %v395
      %v1412 = vmul.f32 %v1395, %v395
      %v1413 = vadd.f32 %v1396, %v416
      %v1414 = vadd.f32 %v1397, %v416
      %v1415 = vadd.f32 %v1398, %v416
      %v1416 = vadd.f32 %v1399, %v416
      %v1417 = vadd.f32 %v1400, %v416
      %v1418 = vadd.f32 %v1401, %v416
      %v1419 = vadd.f32 %v1402, %v416
      %v1420 = vadd.f32 %v1403, %v416
      %v1421 = vadd.f32 %v1404, %v416
      %v1422 = vadd.f32 %v1405, %v416
      %v1423 = vadd.f32 %v1406, %v416
      %v1424 = vadd.f32 %v1407, %v416
      %v1425 = vadd.f32 %v1408, %v416
      %v1426 = vadd.f32 %v1409, %v416
      %v1427 = vadd.f32 %v1410, %v416
      %v1428 = vadd.f32 %v1411, %v416
      %v1429 = vadd.f32 %v1412, %v416
      %v1430 = vmax.f32 %v1413, 0.0
      %v1431 = vmax.f32 %v1414, 0.0
      %v1432 = vmax.f32 %v1415, 0.0
      %v1433 = vmax.f32 %v1416, 0.0
      %v1434 = vmax.f32 %v1417, 0.0
      %v1435 = vmax.f32 %v1418, 0.0
      %v1436 = vmax.f32 %v1419, 0.0
      %v1437 = vmax.f32 %v1420, 0.0
      %v1438 = vmax.f32 %v1421, 0.0
      %v1439 = vmax.f32 %v1422, 0.0
      %v1440 = vmax.f32 %v1423, 0.0
      %v1441 = vmax.f32 %v1424, 0.0
      %v1442 = vmax.f32 %v1425, 0.0
      %v1443 = vmax.f32 %v1426, 0.0
      %v1444 = vmax.f32 %v1427, 0.0
      %v1445 = vmax.f32 %v1428, 0.0
      %v1446 = vmax.f32 %v1429, 0.0
      %v1447 = vsub.f32 %v1430, %v1413
      %v1448 = vsub.f32 %v1431, %v1414
      %v1449 = vsub.f32 %v1432, %v1415
      %v1450 = vsub.f32 %v1433, %v1416
      %v1451 = vsub.f32 %v1434, %v1417
      %v1452 = vsub.f32 %v1435, %v1418
      %v1453 = vsub.f32 %v1436, %v1419
      %v1454 = vsub.f32 %v1437, %v1420
      %v1455 = vsub.f32 %v1438, %v1421
      %v1456 = vsub.f32 %v1439, %v1422
      %v1457 = vsub.f32 %v1440, %v1423
      %v1458 = vsub.f32 %v1441, %v1424
      %v1459 = vsub.f32 %v1442, %v1425
      %v1460 = vsub.f32 %v1443, %v1426
      %v1461 = vsub.f32 %v1444, %v1427
      %v1462 = vsub.f32 %v1445, %v1428
      %v1463 = vsub.f32 %v1446, %v1429
      %v1464 = vmul.f32 %v467, %v1447
      %v1465 = vmul.f32 %v467, %v1448
      %v1466 = vmul.f32 %v467, %v1449
      %v1467 = vmul.f32 %v467, %v1450
      %v1468 = vmul.f32 %v467, %v1451
      %v1469 = vmul.f32 %v467, %v1452
      %v1470 = vmul.f32 %v467, %v1453
      %v1471 = vmul.f32 %v467, %v1454
      %v1472 = vmul.f32 %v467, %v1455
      %v1473 = vmul.f32 %v467, %v1456
      %v1474 = vmul.f32 %v467, %v1457
      %v1475 = vmul.f32 %v467, %v1458
      %v1476 = vmul.f32 %v467, %v1459
      %v1477 = vmul.f32 %v467, %v1460
      %v1478 = vmul.f32 %v467, %v1461
      %v1479 = vmul.f32 %v467, %v1462
      %v1480 = vmul.f32 %v467, %v1463
      %v1481 = vadd.f32 %v1413, %v1464
      %v1482 = vadd.f32 %v1414, %v1465
      %v1483 = vadd.f32 %v1415, %v1466
      %v1484 = vadd.f32 %v1416, %v1467
      %v1485 = vadd.f32 %v1417, %v1468
      %v1486 = vadd.f32 %v1418, %v1469
      %v1487 = vadd.f32 %v1419, %v1470
      %v1488 = vadd.f32 %v1420, %v1471
      %v1489 = vadd.f32 %v1421, %v1472
      %v1490 = vadd.f32 %v1422, %v1473
      %v1491 = vadd.f32 %v1423, %v1474
      %v1492 = vadd.f32 %v1424, %v1475
      %v1493 = vadd.f32 %v1425, %v1476
      %v1494 = vadd.f32 %v1426, %v1477
      %v1495 = vadd.f32 %v1427, %v1478
      %v1496 = vadd.f32 %v1428, %v1479
      %v1497 = vadd.f32 %v1429, %v1480
      %v1498 = vpack.c.bf16 %v1482, %v1481
      %v1499 = vpack.c.bf16 %v1484, %v1483
      %v1500 = vpack.c.bf16 %v1486, %v1485
      %v1501 = vpack.c.bf16 %v1488, %v1487
      %v1502 = vpack.c.bf16 %v1490, %v1489
      %v1503 = vpack.c.bf16 %v1492, %v1491
      %v1504 = vpack.c.bf16 %v1494, %v1493
      %v1505 = vpack.c.bf16 %v1496, %v1495
      %v1506 = vpack.c.bf16 %v1497, %v1497
      %v1507 = vld [vmem:[%s341] sm:$0xff]
      %v1508 = vld [vmem:[%s341 + $0x8] sm:$0xff]
      %v1509 = vld [vmem:[%s341 + $0x10] sm:$0xff]
      %v1510 = vld [vmem:[%s341 + $0x18] sm:$0xff]
      %v1511 = vld [vmem:[%s341 + $0x20] sm:$0xff]
      %v1512 = vld [vmem:[%s341 + $0x28] sm:$0xff]
      %v1513 = vld [vmem:[%s341 + $0x30] sm:$0xff]
      %v1514 = vld [vmem:[%s341 + $0x38] sm:$0xff]
      %v1515 = vld [vmem:[%s341 + $0x40] sm:$0xff]
      %v1516 = vld [vmem:[%s341 + $0x48] sm:$0xff]
      %v1517 = vld [vmem:[%s341 + $0x50] sm:$0xff]
      %v1518 = vld [vmem:[%s341 + $0x58] sm:$0xff]
      %v1519 = vld [vmem:[%s341 + $0x60] sm:$0xff]
      %v1520 = vld [vmem:[%s341 + $0x68] sm:$0xff]
      %v1521 = vld [vmem:[%s341 + $0x70] sm:$0xff]
      %v1522 = vld [vmem:[%s341 + $0x78] sm:$0xff]
      %v1523 = vld [vmem:[%s341 + $0x80] sm:$0xff]
      %s1524 = scalar_lea.vmem %s6, 192
      %v1525 = vld [vmem:[%s1524] sm:$0xf]
      %v1526 = vld [vmem:[%s1524 + $0x4] sm:$0xf]
      %v1527 = vld [vmem:[%s1524 + $0x8] sm:$0xf]
      %v1528 = vld [vmem:[%s1524 + $0xc] sm:$0xf]
      %v1529 = vld [vmem:[%s1524 + $0x10] sm:$0xf]
      %v1530 = vld [vmem:[%s1524 + $0x14] sm:$0xf]
      %v1531 = vld [vmem:[%s1524 + $0x18] sm:$0xf]
      %v1532 = vld [vmem:[%s1524 + $0x1c] sm:$0xf]
      %v1533 = vld [vmem:[%s1524 + $0x20] sm:$0xf]
      %v1534 = vld [vmem:[%s1524 + $0x24] sm:$0xf]
      %v1535 = vld [vmem:[%s1524 + $0x28] sm:$0xf]
      %v1536 = vld [vmem:[%s1524 + $0x2c] sm:$0xf]
      %v1537 = vld [vmem:[%s1524 + $0x30] sm:$0xf]
      %v1538 = vld [vmem:[%s1524 + $0x34] sm:$0xf]
      %v1539 = vld [vmem:[%s1524 + $0x38] sm:$0xf]
      %v1540 = vld [vmem:[%s1524 + $0x3c] sm:$0xf]
      %v1557 = vunpack.c.l.b16 %v1525
      %v1558 = vunpack.c.l.b16 %v1526
      %v1559 = vunpack.c.l.b16 %v1527
      %v1560 = vunpack.c.l.b16 %v1528
      %v1561 = vunpack.c.l.b16 %v1529
      %v1562 = vunpack.c.l.b16 %v1530
      %v1563 = vunpack.c.l.b16 %v1531
      %v1564 = vunpack.c.l.b16 %v1532
      %v1565 = vunpack.c.l.b16 %v1533
      %v1566 = vunpack.c.l.b16 %v1534
      %v1567 = vunpack.c.l.b16 %v1535
      %v1568 = vunpack.c.l.b16 %v1536
      %v1569 = vunpack.c.l.b16 %v1537
      %v1570 = vunpack.c.l.b16 %v1538
      %v1571 = vunpack.c.l.b16 %v1539
      %v1572 = vunpack.c.l.b16 %v1540
      %v1573 = vpack.c.b16 %v1558, %v1557
      %v1574 = vpack.c.b16 %v1560, %v1559
      %v1575 = vpack.c.b16 %v1562, %v1561
      %v1576 = vpack.c.b16 %v1564, %v1563
      %v1577 = vpack.c.b16 %v1566, %v1565
      %v1578 = vpack.c.b16 %v1568, %v1567
      %v1579 = vpack.c.b16 %v1570, %v1569
      %v1580 = vpack.c.b16 %v1572, %v1571
      %1589 = vmatprep.subr.bf16.mxu0 0
      %1590 = vmatpush1.bf16.msra.mxu0 %v1573
      %1591 = vmatprep.subr.bf16.mxu0 0
      %1592 = vmatpush1.bf16.msra.mxu0 %v1574
      %1593 = vmatprep.subr.bf16.mxu0 0
      %1594 = vmatpush1.bf16.msra.mxu0 %v1575
      %1595 = vmatprep.subr.bf16.mxu0 0
      %1596 = vmatpush1.bf16.msra.mxu0 %v1576
      %1597 = vmatprep.subr.bf16.mxu0 0
      %1598 = vmatpush1.bf16.msra.mxu0 %v1577
      %1599 = vmatprep.subr.bf16.mxu0 0
      %1600 = vmatpush1.bf16.msra.mxu0 %v1578
      %1601 = vmatprep.subr.bf16.mxu0 0
      %1602 = vmatpush1.bf16.msra.mxu0 %v1579
      %1603 = vmatprep.subr.bf16.mxu0 0
      %1604 = vmatpush1.bf16.msra.mxu0 %v1580
      %1605 = vmatprep.subr.bf16.mxu0 0
      %1606 = vmatpush1.bf16.msra.mxu0 0
      %1607 = vmatprep.subr.bf16.mxu0 0
      %1608 = vmatpush1.bf16.msra.mxu0 0
      %1609 = vmatprep.subr.bf16.mxu0 0
      %1610 = vmatpush1.bf16.msra.mxu0 0
      %1611 = vmatprep.subr.bf16.mxu0 0
      %1612 = vmatpush1.bf16.msra.mxu0 0
      %1613 = vmatprep.subr.bf16.mxu0 0
      %1614 = vmatpush1.bf16.msra.mxu0 0
      %1615 = vmatprep.subr.bf16.mxu0 0
      %1616 = vmatpush1.bf16.msra.mxu0 0
      %1617 = vmatprep.subr.bf16.mxu0 0
      %1618 = vmatpush1.bf16.msra.mxu0 0
      %1619 = vmatprep.subr.bf16.mxu0 0
      %1620 = vmatpush1.bf16.msra.mxu0 0
      %1621 = vmatprep.mubr.bf16.mxu0 0
      %1622 = vmatmul.mubr.bf16.gmra.mrb[0].mxu0 %v1498
      %v1623 = vpop.f32.mrb[0].mxu0
      %v1624 = vadd.f32 0.0, %v1623
      %v1625 = vpop.f32.mrb[0].mxu0
      %v1626 = vpop.f32.mrb[0].mxu0
      %v1627 = vadd.f32 0.0, %v1626
      %v1628 = vpop.f32.mrb[0].mxu0
      %1629 = vmatprep.mubr.bf16.mxu0 0
      %1630 = vmatmul.mubr.bf16.gmra.mrb[0].mxu0 %v1499
      %v1631 = vpop.f32.mrb[0].mxu0
      %v1632 = vadd.f32 0.0, %v1631
      %v1633 = vpop.f32.mrb[0].mxu0
      %v1634 = vpop.f32.mrb[0].mxu0
      %v1635 = vadd.f32 0.0, %v1634
      %v1636 = vpop.f32.mrb[0].mxu0
      %1637 = vmatprep.mubr.bf16.mxu0 0
      %1638 = vmatmul.mubr.bf16.gmra.mrb[0].mxu0 %v1500
      %v1639 = vpop.f32.mrb[0].mxu0
      %v1640 = vadd.f32 0.0, %v1639
      %v1641 = vpop.f32.mrb[0].mxu0
      %v1642 = vpop.f32.mrb[0].mxu0
      %v1643 = vadd.f32 0.0, %v1642
      %v1644 = vpop.f32.mrb[0].mxu0
      %1645 = vmatprep.mubr.bf16.mxu0 0
      %1646 = vmatmul.mubr.bf16.gmra.mrb[0].mxu0 %v1501
      %v1647 = vpop.f32.mrb[0].mxu0
      %v1648 = vadd.f32 0.0, %v1647
      %v1649 = vpop.f32.mrb[0].mxu0
      %v1650 = vpop.f32.mrb[0].mxu0
      %v1651 = vadd.f32 0.0, %v1650
      %v1652 = vpop.f32.mrb[0].mxu0
      %1653 = vmatprep.mubr.bf16.mxu0 0
      %1654 = vmatmul.mubr.bf16.gmra.mrb[0].mxu0 %v1502
      %v1655 = vpop.f32.mrb[0].mxu0
      %v1656 = vadd.f32 0.0, %v1655
      %v1657 = vpop.f32.mrb[0].mxu0
      %v1658 = vpop.f32.mrb[0].mxu0
      %v1659 = vadd.f32 0.0, %v1658
      %v1660 = vpop.f32.mrb[0].mxu0
      %1661 = vmatprep.mubr.bf16.mxu0 0
      %1662 = vmatmul.mubr.bf16.gmra.mrb[0].mxu0 %v1503
      %v1663 = vpop.f32.mrb[0].mxu0
      %v1664 = vadd.f32 0.0, %v1663
      %v1665 = vpop.f32.mrb[0].mxu0
      %v1666 = vpop.f32.mrb[0].mxu0
      %v1667 = vadd.f32 0.0, %v1666
      %v1668 = vpop.f32.mrb[0].mxu0
      %1669 = vmatprep.mubr.bf16.mxu0 0
      %1670 = vmatmul.mubr.bf16.gmra.mrb[0].mxu0 %v1504
      %v1671 = vpop.f32.mrb[0].mxu0
      %v1672 = vadd.f32 0.0, %v1671
      %v1673 = vpop.f32.mrb[0].mxu0
      %v1674 = vpop.f32.mrb[0].mxu0
      %v1675 = vadd.f32 0.0, %v1674
      %v1676 = vpop.f32.mrb[0].mxu0
      %1677 = vmatprep.mubr.bf16.mxu0 0
      %1678 = vmatmul.mubr.bf16.gmra.mrb[0].mxu0 %v1505
      %v1679 = vpop.f32.mrb[0].mxu0
      %v1680 = vadd.f32 0.0, %v1679
      %v1681 = vpop.f32.mrb[0].mxu0
      %v1682 = vpop.f32.mrb[0].mxu0
      %v1683 = vadd.f32 0.0, %v1682
      %v1684 = vpop.f32.mrb[0].mxu0
      %1685 = vmatprep.mubr.bf16.mxu0 0
      %1686 = vmatmul.mubr.bf16.gmra.mrb[0].mxu0 %v1506
      %v1687 = vpop.f32.mrb[0].mxu0
      %v1688 = vadd.f32 0.0, %v1687
      %v1689 = vpop.f32.mrb[0].mxu0
      %v1690 = vpop.f32.mrb[0].mxu0
      %v1691 = vpop.f32.mrb[0].mxu0
      %1692 = vdwg.mxu0
      %v1693 = vadd.f32 %v1507, %v1624
      %v1694 = vadd.f32 %v1508, %v1627
      %v1695 = vadd.f32 %v1509, %v1632
      %v1696 = vadd.f32 %v1510, %v1635
      %v1697 = vadd.f32 %v1511, %v1640
      %v1698 = vadd.f32 %v1512, %v1643
      %v1699 = vadd.f32 %v1513, %v1648
      %v1700 = vadd.f32 %v1514, %v1651
      %v1701 = vadd.f32 %v1515, %v1656
      %v1702 = vadd.f32 %v1516, %v1659
      %v1703 = vadd.f32 %v1517, %v1664
      %v1704 = vadd.f32 %v1518, %v1667
      %v1705 = vadd.f32 %v1519, %v1672
      %v1706 = vadd.f32 %v1520, %v1675
      %v1707 = vadd.f32 %v1521, %v1680
      %v1708 = vadd.f32 %v1522, %v1683
      %v1709 = vadd.f32 %v1523, %v1688
      %1710 = vst [vmem:[%s341] sm:$0xff] %v1693
      %1711 = vst [vmem:[%s341 + $0x8] sm:$0xff] %v1694
      %1712 = vst [vmem:[%s341 + $0x10] sm:$0xff] %v1695
      %1713 = vst [vmem:[%s341 + $0x18] sm:$0xff] %v1696
      %1714 = vst [vmem:[%s341 + $0x20] sm:$0xff] %v1697
      %1715 = vst [vmem:[%s341 + $0x28] sm:$0xff] %v1698
      %1716 = vst [vmem:[%s341 + $0x30] sm:$0xff] %v1699
      %1717 = vst [vmem:[%s341 + $0x38] sm:$0xff] %v1700
      %1718 = vst [vmem:[%s341 + $0x40] sm:$0xff] %v1701
      %1719 = vst [vmem:[%s341 + $0x48] sm:$0xff] %v1702
      %1720 = vst [vmem:[%s341 + $0x50] sm:$0xff] %v1703
      %1721 = vst [vmem:[%s341 + $0x58] sm:$0xff] %v1704
      %1722 = vst [vmem:[%s341 + $0x60] sm:$0xff] %v1705
      %1723 = vst [vmem:[%s341 + $0x68] sm:$0xff] %v1706
      %1724 = vst [vmem:[%s341 + $0x70] sm:$0xff] %v1707
      %1725 = vst [vmem:[%s341 + $0x78] sm:$0xff] %v1708
      %1726 = vst [vmem:[%s341 + $0x80] sm:$0xff] %v1709
      %v1727 = vld [vmem:[%s335 + $0x11] sm:$0xff]
      %v1728 = vld [vmem:[%s335 + $0x19] sm:$0xff]
      %v1729 = vld [vmem:[%s335 + $0x21] sm:$0xff]
      %v1730 = vld [vmem:[%s335 + $0x29] sm:$0xff]
      %v1731 = vld [vmem:[%s335 + $0x31] sm:$0xff]
      %v1732 = vld [vmem:[%s335 + $0x39] sm:$0xff]
      %v1733 = vld [vmem:[%s335 + $0x41] sm:$0xff]
      %v1734 = vld [vmem:[%s335 + $0x49] sm:$0xff]
      %v1735 = vld [vmem:[%s335 + $0x51] sm:$0xff]
      %v1736 = vld [vmem:[%s335 + $0x59] sm:$0xff]
      %v1737 = vld [vmem:[%s335 + $0x61] sm:$0xff]
      %v1738 = vld [vmem:[%s335 + $0x69] sm:$0xff]
      %v1739 = vld [vmem:[%s335 + $0x71] sm:$0xff]
      %v1740 = vld [vmem:[%s335 + $0x79] sm:$0xff]
      %v1741 = vld [vmem:[%s335 + $0x81] sm:$0x7f]
      %v1742 = vmul.f32 %v1727, %v395
      %v1743 = vmul.f32 %v1728, %v395
      %v1744 = vmul.f32 %v1729, %v395
      %v1745 = vmul.f32 %v1730, %v395
      %v1746 = vmul.f32 %v1731, %v395
      %v1747 = vmul.f32 %v1732, %v395
      %v1748 = vmul.f32 %v1733, %v395
      %v1749 = vmul.f32 %v1734, %v395
      %v1750 = vmul.f32 %v1735, %v395
      %v1751 = vmul.f32 %v1736, %v395
      %v1752 = vmul.f32 %v1737, %v395
      %v1753 = vmul.f32 %v1738, %v395
      %v1754 = vmul.f32 %v1739, %v395
      %v1755 = vmul.f32 %v1740, %v395
      %v1756 = vmul.f32 %v1741, %v395
      %v1757 = vadd.f32 %v1742, %v416
      %v1758 = vadd.f32 %v1743, %v416
      %v1759 = vadd.f32 %v1744, %v416
      %v1760 = vadd.f32 %v1745, %v416
      %v1761 = vadd.f32 %v1746, %v416
      %v1762 = vadd.f32 %v1747, %v416
      %v1763 = vadd.f32 %v1748, %v416
      %v1764 = vadd.f32 %v1749, %v416
      %v1765 = vadd.f32 %v1750, %v416
      %v1766 = vadd.f32 %v1751, %v416
      %v1767 = vadd.f32 %v1752, %v416
      %v1768 = vadd.f32 %v1753, %v416
      %v1769 = vadd.f32 %v1754, %v416
      %v1770 = vadd.f32 %v1755, %v416
      %v1771 = vadd.f32 %v1756, %v416
      %v1772 = vmax.f32 %v1757, 0.0
      %v1773 = vmax.f32 %v1758, 0.0
      %v1774 = vmax.f32 %v1759, 0.0
      %v1775 = vmax.f32 %v1760, 0.0
      %v1776 = vmax.f32 %v1761, 0.0
      %v1777 = vmax.f32 %v1762, 0.0
      %v1778 = vmax.f32 %v1763, 0.0
      %v1779 = vmax.f32 %v1764, 0.0
      %v1780 = vmax.f32 %v1765, 0.0
      %v1781 = vmax.f32 %v1766, 0.0
      %v1782 = vmax.f32 %v1767, 0.0
      %v1783 = vmax.f32 %v1768, 0.0
      %v1784 = vmax.f32 %v1769, 0.0
      %v1785 = vmax.f32 %v1770, 0.0
      %v1786 = vmax.f32 %v1771, 0.0
      %v1787 = vsub.f32 %v1772, %v1757
      %v1788 = vsub.f32 %v1773, %v1758
      %v1789 = vsub.f32 %v1774, %v1759
      %v1790 = vsub.f32 %v1775, %v1760
      %v1791 = vsub.f32 %v1776, %v1761
      %v1792 = vsub.f32 %v1777, %v1762
      %v1793 = vsub.f32 %v1778, %v1763
      %v1794 = vsub.f32 %v1779, %v1764
      %v1795 = vsub.f32 %v1780, %v1765
      %v1796 = vsub.f32 %v1781, %v1766
      %v1797 = vsub.f32 %v1782, %v1767
      %v1798 = vsub.f32 %v1783, %v1768
      %v1799 = vsub.f32 %v1784, %v1769
      %v1800 = vsub.f32 %v1785, %v1770
      %v1801 = vsub.f32 %v1786, %v1771
      %v1802 = vmul.f32 %v467, %v1787
      %v1803 = vmul.f32 %v467, %v1788
      %v1804 = vmul.f32 %v467, %v1789
      %v1805 = vmul.f32 %v467, %v1790
      %v1806 = vmul.f32 %v467, %v1791
      %v1807 = vmul.f32 %v467, %v1792
      %v1808 = vmul.f32 %v467, %v1793
      %v1809 = vmul.f32 %v467, %v1794
      %v1810 = vmul.f32 %v467, %v1795
      %v1811 = vmul.f32 %v467, %v1796
      %v1812 = vmul.f32 %v467, %v1797
      %v1813 = vmul.f32 %v467, %v1798
      %v1814 = vmul.f32 %v467, %v1799
      %v1815 = vmul.f32 %v467, %v1800
      %v1816 = vmul.f32 %v467, %v1801
      %v1817 = vadd.f32 %v1757, %v1802
      %v1818 = vadd.f32 %v1758, %v1803
      %v1819 = vadd.f32 %v1759, %v1804
      %v1820 = vadd.f32 %v1760, %v1805
      %v1821 = vadd.f32 %v1761, %v1806
      %v1822 = vadd.f32 %v1762, %v1807
      %v1823 = vadd.f32 %v1763, %v1808
      %v1824 = vadd.f32 %v1764, %v1809
      %v1825 = vadd.f32 %v1765, %v1810
      %v1826 = vadd.f32 %v1766, %v1811
      %v1827 = vadd.f32 %v1767, %v1812
      %v1828 = vadd.f32 %v1768, %v1813
      %v1829 = vadd.f32 %v1769, %v1814
      %v1830 = vadd.f32 %v1770, %v1815
      %v1831 = vadd.f32 %v1771, %v1816
      %v1832 = vpack.c.bf16 %v1818, %v1817
      %v1833 = vpack.c.bf16 %v1820, %v1819
      %v1834 = vpack.c.bf16 %v1822, %v1821
      %v1835 = vpack.c.bf16 %v1824, %v1823
      %v1836 = vpack.c.bf16 %v1826, %v1825
      %v1837 = vpack.c.bf16 %v1828, %v1827
      %v1838 = vpack.c.bf16 %v1830, %v1829
      %v1839 = vpack.c.bf16 %v1831, %v1831
      %v1840 = vld [vmem:[%s341] sm:$0xff]
      %v1841 = vld [vmem:[%s341 + $0x8] sm:$0xff]
      %v1842 = vld [vmem:[%s341 + $0x10] sm:$0xff]
      %v1843 = vld [vmem:[%s341 + $0x18] sm:$0xff]
      %v1844 = vld [vmem:[%s341 + $0x20] sm:$0xff]
      %v1845 = vld [vmem:[%s341 + $0x28] sm:$0xff]
      %v1846 = vld [vmem:[%s341 + $0x30] sm:$0xff]
      %v1847 = vld [vmem:[%s341 + $0x38] sm:$0xff]
      %v1848 = vld [vmem:[%s341 + $0x40] sm:$0xff]
      %v1849 = vld [vmem:[%s341 + $0x48] sm:$0xff]
      %v1850 = vld [vmem:[%s341 + $0x50] sm:$0xff]
      %v1851 = vld [vmem:[%s341 + $0x58] sm:$0xff]
      %v1852 = vld [vmem:[%s341 + $0x60] sm:$0xff]
      %v1853 = vld [vmem:[%s341 + $0x68] sm:$0xff]
      %v1854 = vld [vmem:[%s341 + $0x70] sm:$0x7f]
      %s1855 = scalar_lea.vmem %s6, 256
      %v1856 = vld [vmem:[%s1855] sm:$0xf]
      %v1857 = vld [vmem:[%s1855 + $0x4] sm:$0xf]
      %v1858 = vld [vmem:[%s1855 + $0x8] sm:$0xf]
      %v1859 = vld [vmem:[%s1855 + $0xc] sm:$0xf]
      %v1860 = vld [vmem:[%s1855 + $0x10] sm:$0xf]
      %v1861 = vld [vmem:[%s1855 + $0x14] sm:$0xf]
      %v1862 = vld [vmem:[%s1855 + $0x18] sm:$0xf]
      %v1863 = vld [vmem:[%s1855 + $0x1c] sm:$0xf]
      %v1864 = vld [vmem:[%s1855 + $0x20] sm:$0xf]
      %v1865 = vld [vmem:[%s1855 + $0x24] sm:$0xf]
      %v1866 = vld [vmem:[%s1855 + $0x28] sm:$0xf]
      %v1867 = vld [vmem:[%s1855 + $0x2c] sm:$0xf]
      %v1868 = vld [vmem:[%s1855 + $0x30] sm:$0xf]
      %v1869 = vld [vmem:[%s1855 + $0x34] sm:$0xf]
      %v1870 = vld [vmem:[%s1855 + $0x38] sm:$0xf]
      %v1871 = vld [vmem:[%s1855 + $0x3c] sm:$0xf]
      %v1888 = vunpack.c.l.b16 %v1856
      %v1889 = vunpack.c.l.b16 %v1857
      %v1890 = vunpack.c.l.b16 %v1858
      %v1891 = vunpack.c.l.b16 %v1859
      %v1892 = vunpack.c.l.b16 %v1860
      %v1893 = vunpack.c.l.b16 %v1861
      %v1894 = vunpack.c.l.b16 %v1862
      %v1895 = vunpack.c.l.b16 %v1863
      %v1896 = vunpack.c.l.b16 %v1864
      %v1897 = vunpack.c.l.b16 %v1865
      %v1898 = vunpack.c.l.b16 %v1866
      %v1899 = vunpack.c.l.b16 %v1867
      %v1900 = vunpack.c.l.b16 %v1868
      %v1901 = vunpack.c.l.b16 %v1869
      %v1902 = vunpack.c.l.b16 %v1870
      %v1903 = vunpack.c.l.b16 %v1871
      %v1904 = vpack.c.b16 %v1889, %v1888
      %v1905 = vpack.c.b16 %v1891, %v1890
      %v1906 = vpack.c.b16 %v1893, %v1892
      %v1907 = vpack.c.b16 %v1895, %v1894
      %v1908 = vpack.c.b16 %v1897, %v1896
      %v1909 = vpack.c.b16 %v1899, %v1898
      %v1910 = vpack.c.b16 %v1901, %v1900
      %v1911 = vpack.c.b16 %v1903, %v1902
      %1920 = vmatprep.subr.bf16.mxu0 0
      %1921 = vmatpush1.bf16.msra.mxu0 %v1904
      %1922 = vmatprep.subr.bf16.mxu0 0
      %1923 = vmatpush1.bf16.msra.mxu0 %v1905
      %1924 = vmatprep.subr.bf16.mxu0 0
      %1925 = vmatpush1.bf16.msra.mxu0 %v1906
      %1926 = vmatprep.subr.bf16.mxu0 0
      %1927 = vmatpush1.bf16.msra.mxu0 %v1907
      %1928 = vmatprep.subr.bf16.mxu0 0
      %1929 = vmatpush1.bf16.msra.mxu0 %v1908
      %1930 = vmatprep.subr.bf16.mxu0 0
      %1931 = vmatpush1.bf16.msra.mxu0 %v1909
      %1932 = vmatprep.subr.bf16.mxu0 0
      %1933 = vmatpush1.bf16.msra.mxu0 %v1910
      %1934 = vmatprep.subr.bf16.mxu0 0
      %1935 = vmatpush1.bf16.msra.mxu0 %v1911
      %1936 = vmatprep.subr.bf16.mxu0 0
      %1937 = vmatpush1.bf16.msra.mxu0 0
      %1938 = vmatprep.subr.bf16.mxu0 0
      %1939 = vmatpush1.bf16.msra.mxu0 0
      %1940 = vmatprep.subr.bf16.mxu0 0
      %1941 = vmatpush1.bf16.msra.mxu0 0
      %1942 = vmatprep.subr.bf16.mxu0 0
      %1943 = vmatpush1.bf16.msra.mxu0 0
      %1944 = vmatprep.subr.bf16.mxu0 0
      %1945 = vmatpush1.bf16.msra.mxu0 0
      %1946 = vmatprep.subr.bf16.mxu0 0
      %1947 = vmatpush1.bf16.msra.mxu0 0
      %1948 = vmatprep.subr.bf16.mxu0 0
      %1949 = vmatpush1.bf16.msra.mxu0 0
      %1950 = vmatprep.subr.bf16.mxu0 0
      %1951 = vmatpush1.bf16.msra.mxu0 0
      %1952 = vmatprep.mubr.bf16.mxu0 0
      %1953 = vmatmul.mubr.bf16.gmra.mrb[0].mxu0 %v1832
      %v1954 = vpop.f32.mrb[0].mxu0
      %v1955 = vadd.f32 0.0, %v1954
      %v1956 = vpop.f32.mrb[0].mxu0
      %v1957 = vpop.f32.mrb[0].mxu0
      %v1958 = vadd.f32 0.0, %v1957
      %v1959 = vpop.f32.mrb[0].mxu0
      %1960 = vmatprep.mubr.bf16.mxu0 0
      %1961 = vmatmul.mubr.bf16.gmra.mrb[0].mxu0 %v1833
      %v1962 = vpop.f32.mrb[0].mxu0
      %v1963 = vadd.f32 0.0, %v1962
      %v1964 = vpop.f32.mrb[0].mxu0
      %v1965 = vpop.f32.mrb[0].mxu0
      %v1966 = vadd.f32 0.0, %v1965
      %v1967 = vpop.f32.mrb[0].mxu0
      %1968 = vmatprep.mubr.bf16.mxu0 0
      %1969 = vmatmul.mubr.bf16.gmra.mrb[0].mxu0 %v1834
      %v1970 = vpop.f32.mrb[0].mxu0
      %v1971 = vadd.f32 0.0, %v1970
      %v1972 = vpop.f32.mrb[0].mxu0
      %v1973 = vpop.f32.mrb[0].mxu0
      %v1974 = vadd.f32 0.0, %v1973
      %v1975 = vpop.f32.mrb[0].mxu0
      %1976 = vmatprep.mubr.bf16.mxu0 0
      %1977 = vmatmul.mubr.bf16.gmra.mrb[0].mxu0 %v1835
      %v1978 = vpop.f32.mrb[0].mxu0
      %v1979 = vadd.f32 0.0, %v1978
      %v1980 = vpop.f32.mrb[0].mxu0
      %v1981 = vpop.f32.mrb[0].mxu0
      %v1982 = vadd.f32 0.0, %v1981
      %v1983 = vpop.f32.mrb[0].mxu0
      %1984 = vmatprep.mubr.bf16.mxu0 0
      %1985 = vmatmul.mubr.bf16.gmra.mrb[0].mxu0 %v1836
      %v1986 = vpop.f32.mrb[0].mxu0
      %v1987 = vadd.f32 0.0, %v1986
      %v1988 = vpop.f32.mrb[0].mxu0
      %v1989 = vpop.f32.mrb[0].mxu0
      %v1990 = vadd.f32 0.0, %v1989
      %v1991 = vpop.f32.mrb[0].mxu0
      %1992 = vmatprep.mubr.bf16.mxu0 0
      %1993 = vmatmul.mubr.bf16.gmra.mrb[0].mxu0 %v1837
      %v1994 = vpop.f32.mrb[0].mxu0
      %v1995 = vadd.f32 0.0, %v1994
      %v1996 = vpop.f32.mrb[0].mxu0
      %v1997 = vpop.f32.mrb[0].mxu0
      %v1998 = vadd.f32 0.0, %v1997
      %v1999 = vpop.f32.mrb[0].mxu0
      %2000 = vmatprep.mubr.bf16.mxu0 0
      %2001 = vmatmul.mubr.bf16.gmra.mrb[0].mxu0 %v1838
      %v2002 = vpop.f32.mrb[0].mxu0
      %v2003 = vadd.f32 0.0, %v2002
      %v2004 = vpop.f32.mrb[0].mxu0
      %v2005 = vpop.f32.mrb[0].mxu0
      %v2006 = vadd.f32 0.0, %v2005
      %v2007 = vpop.f32.mrb[0].mxu0
      %2008 = vmatprep.mubr.bf16.mxu0 0
      %2009 = vmatmul.mubr.bf16.gmra.mrb[0].mxu0 %v1839
      %v2010 = vpop.f32.mrb[0].mxu0
      %v2011 = vadd.f32 0.0, %v2010
      %v2012 = vpop.f32.mrb[0].mxu0
      %v2013 = vpop.f32.mrb[0].mxu0
      %v2014 = vpop.f32.mrb[0].mxu0
      %2015 = vdwg.mxu0
      %v2016 = vadd.f32 %v1840, %v1955
      %v2017 = vadd.f32 %v1841, %v1958
      %v2018 = vadd.f32 %v1842, %v1963
      %v2019 = vadd.f32 %v1843, %v1966
      %v2020 = vadd.f32 %v1844, %v1971
      %v2021 = vadd.f32 %v1845, %v1974
      %v2022 = vadd.f32 %v1846, %v1979
      %v2023 = vadd.f32 %v1847, %v1982
      %v2024 = vadd.f32 %v1848, %v1987
      %v2025 = vadd.f32 %v1849, %v1990
      %v2026 = vadd.f32 %v1850, %v1995
      %v2027 = vadd.f32 %v1851, %v1998
      %v2028 = vadd.f32 %v1852, %v2003
      %v2029 = vadd.f32 %v1853, %v2006
      %v2030 = vadd.f32 %v1854, %v2011
      %2031 = vst [vmem:[%s341] sm:$0xff] %v2016
      %2032 = vst [vmem:[%s341 + $0x8] sm:$0xff] %v2017
      %2033 = vst [vmem:[%s341 + $0x10] sm:$0xff] %v2018
      %2034 = vst [vmem:[%s341 + $0x18] sm:$0xff] %v2019
      %2035 = vst [vmem:[%s341 + $0x20] sm:$0xff] %v2020
      %2036 = vst [vmem:[%s341 + $0x28] sm:$0xff] %v2021
      %2037 = vst [vmem:[%s341 + $0x30] sm:$0xff] %v2022
      %2038 = vst [vmem:[%s341 + $0x38] sm:$0xff] %v2023
      %2039 = vst [vmem:[%s341 + $0x40] sm:$0xff] %v2024
      %2040 = vst [vmem:[%s341 + $0x48] sm:$0xff] %v2025
      %2041 = vst [vmem:[%s341 + $0x50] sm:$0xff] %v2026
      %2042 = vst [vmem:[%s341 + $0x58] sm:$0xff] %v2027
      %2043 = vst [vmem:[%s341 + $0x60] sm:$0xff] %v2028
      %2044 = vst [vmem:[%s341 + $0x68] sm:$0xff] %v2029
      %2045 = vst [vmem:[%s341 + $0x70] sm:$0x7f] %v2030
      %v2046 = vld [vmem:[%s335] sm:$0xff]
      %v2047 = vld [vmem:[%s335 + $0x8] sm:$0xff]
      %v2048 = vld [vmem:[%s335 + $0x10] sm:$0xff]
      %v2049 = vld [vmem:[%s335 + $0x18] sm:$0xff]
      %v2050 = vld [vmem:[%s335 + $0x20] sm:$0xff]
      %v2051 = vld [vmem:[%s335 + $0x28] sm:$0xff]
      %v2052 = vld [vmem:[%s335 + $0x30] sm:$0xff]
      %v2053 = vld [vmem:[%s335 + $0x38] sm:$0xff]
      %v2054 = vld [vmem:[%s335 + $0x40] sm:$0xff]
      %v2055 = vld [vmem:[%s335 + $0x48] sm:$0xff]
      %v2056 = vld [vmem:[%s335 + $0x50] sm:$0xff]
      %v2057 = vld [vmem:[%s335 + $0x58] sm:$0xff]
      %v2058 = vld [vmem:[%s335 + $0x60] sm:$0x3f]
      %v2059 = vmul.f32 %v2046, %v395
      %v2060 = vmul.f32 %v2047, %v395
      %v2061 = vmul.f32 %v2048, %v395
      %v2062 = vmul.f32 %v2049, %v395
      %v2063 = vmul.f32 %v2050, %v395
      %v2064 = vmul.f32 %v2051, %v395
      %v2065 = vmul.f32 %v2052, %v395
      %v2066 = vmul.f32 %v2053, %v395
      %v2067 = vmul.f32 %v2054, %v395
      %v2068 = vmul.f32 %v2055, %v395
      %v2069 = vmul.f32 %v2056, %v395
      %v2070 = vmul.f32 %v2057, %v395
      %v2071 = vmul.f32 %v2058, %v395
      %v2072 = vadd.f32 %v2059, %v416
      %v2073 = vadd.f32 %v2060, %v416
      %v2074 = vadd.f32 %v2061, %v416
      %v2075 = vadd.f32 %v2062, %v416
      %v2076 = vadd.f32 %v2063, %v416
      %v2077 = vadd.f32 %v2064, %v416
      %v2078 = vadd.f32 %v2065, %v416
      %v2079 = vadd.f32 %v2066, %v416
      %v2080 = vadd.f32 %v2067, %v416
      %v2081 = vadd.f32 %v2068, %v416
      %v2082 = vadd.f32 %v2069, %v416
      %v2083 = vadd.f32 %v2070, %v416
      %v2084 = vadd.f32 %v2071, %v416
      %v2085 = vmax.f32 %v2072, 0.0
      %v2086 = vmax.f32 %v2073, 0.0
      %v2087 = vmax.f32 %v2074, 0.0
      %v2088 = vmax.f32 %v2075, 0.0
      %v2089 = vmax.f32 %v2076, 0.0
      %v2090 = vmax.f32 %v2077, 0.0
      %v2091 = vmax.f32 %v2078, 0.0
      %v2092 = vmax.f32 %v2079, 0.0
      %v2093 = vmax.f32 %v2080, 0.0
      %v2094 = vmax.f32 %v2081, 0.0
      %v2095 = vmax.f32 %v2082, 0.0
      %v2096 = vmax.f32 %v2083, 0.0
      %v2097 = vmax.f32 %v2084, 0.0
      %v2098 = vsub.f32 %v2085, %v2072
      %v2099 = vsub.f32 %v2086, %v2073
      %v2100 = vsub.f32 %v2087, %v2074
      %v2101 = vsub.f32 %v2088, %v2075
      %v2102 = vsub.f32 %v2089, %v2076
      %v2103 = vsub.f32 %v2090, %v2077
      %v2104 = vsub.f32 %v2091, %v2078
      %v2105 = vsub.f32 %v2092, %v2079
      %v2106 = vsub.f32 %v2093, %v2080
      %v2107 = vsub.f32 %v2094, %v2081
      %v2108 = vsub.f32 %v2095, %v2082
      %v2109 = vsub.f32 %v2096, %v2083
      %v2110 = vsub.f32 %v2097, %v2084
      %v2111 = vmul.f32 %v467, %v2098
      %v2112 = vmul.f32 %v467, %v2099
      %v2113 = vmul.f32 %v467, %v2100
      %v2114 = vmul.f32 %v467, %v2101
      %v2115 = vmul.f32 %v467, %v2102
      %v2116 = vmul.f32 %v467, %v2103
      %v2117 = vmul.f32 %v467, %v2104
      %v2118 = vmul.f32 %v467, %v2105
      %v2119 = vmul.f32 %v467, %v2106
      %v2120 = vmul.f32 %v467, %v2107
      %v2121 = vmul.f32 %v467, %v2108
      %v2122 = vmul.f32 %v467, %v2109
      %v2123 = vmul.f32 %v467, %v2110
      %v2124 = vadd.f32 %v2072, %v2111
      %v2125 = vadd.f32 %v2073, %v2112
      %v2126 = vadd.f32 %v2074, %v2113
      %v2127 = vadd.f32 %v2075, %v2114
      %v2128 = vadd.f32 %v2076, %v2115
      %v2129 = vadd.f32 %v2077, %v2116
      %v2130 = vadd.f32 %v2078, %v2117
      %v2131 = vadd.f32 %v2079, %v2118
      %v2132 = vadd.f32 %v2080, %v2119
      %v2133 = vadd.f32 %v2081, %v2120
      %v2134 = vadd.f32 %v2082, %v2121
      %v2135 = vadd.f32 %v2083, %v2122
      %v2136 = vadd.f32 %v2084, %v2123
      %v2137 = vpack.c.bf16 %v2125, %v2124
      %v2138 = vpack.c.bf16 %v2127, %v2126
      %v2139 = vpack.c.bf16 %v2129, %v2128
      %v2140 = vpack.c.bf16 %v2131, %v2130
      %v2141 = vpack.c.bf16 %v2133, %v2132
      %v2142 = vpack.c.bf16 %v2135, %v2134
      %v2143 = vpack.c.bf16 %v2136, %v2136
      %v2144 = vld [vmem:[%s341 + $0x22] sm:$0xff]
      %v2145 = vld [vmem:[%s341 + $0x2a] sm:$0xff]
      %v2146 = vld [vmem:[%s341 + $0x32] sm:$0xff]
      %v2147 = vld [vmem:[%s341 + $0x3a] sm:$0xff]
      %v2148 = vld [vmem:[%s341 + $0x42] sm:$0xff]
      %v2149 = vld [vmem:[%s341 + $0x4a] sm:$0xff]
      %v2150 = vld [vmem:[%s341 + $0x52] sm:$0xff]
      %v2151 = vld [vmem:[%s341 + $0x5a] sm:$0xff]
      %v2152 = vld [vmem:[%s341 + $0x62] sm:$0xff]
      %v2153 = vld [vmem:[%s341 + $0x6a] sm:$0xff]
      %v2154 = vld [vmem:[%s341 + $0x72] sm:$0xff]
      %v2155 = vld [vmem:[%s341 + $0x7a] sm:$0xff]
      %v2156 = vld [vmem:[%s341 + $0x82] sm:$0x3f]
      %s2157 = scalar_lea.vmem %s6, 320
      %v2158 = vld [vmem:[%s2157] sm:$0xf]
      %v2159 = vld [vmem:[%s2157 + $0x4] sm:$0xf]
      %v2160 = vld [vmem:[%s2157 + $0x8] sm:$0xf]
      %v2161 = vld [vmem:[%s2157 + $0xc] sm:$0xf]
      %v2162 = vld [vmem:[%s2157 + $0x10] sm:$0xf]
      %v2163 = vld [vmem:[%s2157 + $0x14] sm:$0xf]
      %v2164 = vld [vmem:[%s2157 + $0x18] sm:$0xf]
      %v2165 = vld [vmem:[%s2157 + $0x1c] sm:$0xf]
      %v2166 = vld [vmem:[%s2157 + $0x20] sm:$0xf]
      %v2167 = vld [vmem:[%s2157 + $0x24] sm:$0xf]
      %v2168 = vld [vmem:[%s2157 + $0x28] sm:$0xf]
      %v2169 = vld [vmem:[%s2157 + $0x2c] sm:$0xf]
      %v2170 = vld [vmem:[%s2157 + $0x30] sm:$0xf]
      %v2171 = vld [vmem:[%s2157 + $0x34] sm:$0xf]
      %v2172 = vld [vmem:[%s2157 + $0x38] sm:$0xf]
      %v2173 = vld [vmem:[%s2157 + $0x3c] sm:$0xf]
      %v2190 = vunpack.c.l.b16 %v2158
      %v2191 = vunpack.c.l.b16 %v2159
      %v2192 = vunpack.c.l.b16 %v2160
      %v2193 = vunpack.c.l.b16 %v2161
      %v2194 = vunpack.c.l.b16 %v2162
      %v2195 = vunpack.c.l.b16 %v2163
      %v2196 = vunpack.c.l.b16 %v2164
      %v2197 = vunpack.c.l.b16 %v2165
      %v2198 = vunpack.c.l.b16 %v2166
      %v2199 = vunpack.c.l.b16 %v2167
      %v2200 = vunpack.c.l.b16 %v2168
      %v2201 = vunpack.c.l.b16 %v2169
      %v2202 = vunpack.c.l.b16 %v2170
      %v2203 = vunpack.c.l.b16 %v2171
      %v2204 = vunpack.c.l.b16 %v2172
      %v2205 = vunpack.c.l.b16 %v2173
      %v2206 = vpack.c.b16 %v2191, %v2190
      %v2207 = vpack.c.b16 %v2193, %v2192
      %v2208 = vpack.c.b16 %v2195, %v2194
      %v2209 = vpack.c.b16 %v2197, %v2196
      %v2210 = vpack.c.b16 %v2199, %v2198
      %v2211 = vpack.c.b16 %v2201, %v2200
      %v2212 = vpack.c.b16 %v2203, %v2202
      %v2213 = vpack.c.b16 %v2205, %v2204
      %2222 = vmatprep.subr.bf16.mxu0 0
      %2223 = vmatpush1.bf16.msra.mxu0 %v2206
      %2224 = vmatprep.subr.bf16.mxu0 0
      %2225 = vmatpush1.bf16.msra.mxu0 %v2207
      %2226 = vmatprep.subr.bf16.mxu0 0
      %2227 = vmatpush1.bf16.msra.mxu0 %v2208
      %2228 = vmatprep.subr.bf16.mxu0 0
      %2229 = vmatpush1.bf16.msra.mxu0 %v2209
      %2230 = vmatprep.subr.bf16.mxu0 0
      %2231 = vmatpush1.bf16.msra.mxu0 %v2210
      %2232 = vmatprep.subr.bf16.mxu0 0
      %2233 = vmatpush1.bf16.msra.mxu0 %v2211
      %2234 = vmatprep.subr.bf16.mxu0 0
      %2235 = vmatpush1.bf16.msra.mxu0 %v2212
      %2236 = vmatprep.subr.bf16.mxu0 0
      %2237 = vmatpush1.bf16.msra.mxu0 %v2213
      %2238 = vmatprep.subr.bf16.mxu0 0
      %2239 = vmatpush1.bf16.msra.mxu0 0
      %2240 = vmatprep.subr.bf16.mxu0 0
      %2241 = vmatpush1.bf16.msra.mxu0 0
      %2242 = vmatprep.subr.bf16.mxu0 0
      %2243 = vmatpush1.bf16.msra.mxu0 0
      %2244 = vmatprep.subr.bf16.mxu0 0
      %2245 = vmatpush1.bf16.msra.mxu0 0
      %2246 = vmatprep.subr.bf16.mxu0 0
      %2247 = vmatpush1.bf16.msra.mxu0 0
      %2248 = vmatprep.subr.bf16.mxu0 0
      %2249 = vmatpush1.bf16.msra.mxu0 0
      %2250 = vmatprep.subr.bf16.mxu0 0
      %2251 = vmatpush1.bf16.msra.mxu0 0
      %2252 = vmatprep.subr.bf16.mxu0 0
      %2253 = vmatpush1.bf16.msra.mxu0 0
      %2254 = vmatprep.mubr.bf16.mxu0 0
      %2255 = vmatmul.mubr.bf16.gmra.mrb[0].mxu0 %v2137
      %v2256 = vpop.f32.mrb[0].mxu0
      %v2257 = vadd.f32 0.0, %v2256
      %v2258 = vpop.f32.mrb[0].mxu0
      %v2259 = vpop.f32.mrb[0].mxu0
      %v2260 = vadd.f32 0.0, %v2259
      %v2261 = vpop.f32.mrb[0].mxu0
      %2262 = vmatprep.mubr.bf16.mxu0 0
      %2263 = vmatmul.mubr.bf16.gmra.mrb[0].mxu0 %v2138
      %v2264 = vpop.f32.mrb[0].mxu0
      %v2265 = vadd.f32 0.0, %v2264
      %v2266 = vpop.f32.mrb[0].mxu0
      %v2267 = vpop.f32.mrb[0].mxu0
      %v2268 = vadd.f32 0.0, %v2267
      %v2269 = vpop.f32.mrb[0].mxu0
      %2270 = vmatprep.mubr.bf16.mxu0 0
      %2271 = vmatmul.mubr.bf16.gmra.mrb[0].mxu0 %v2139
      %v2272 = vpop.f32.mrb[0].mxu0
      %v2273 = vadd.f32 0.0, %v2272
      %v2274 = vpop.f32.mrb[0].mxu0
      %v2275 = vpop.f32.mrb[0].mxu0
      %v2276 = vadd.f32 0.0, %v2275
      %v2277 = vpop.f32.mrb[0].mxu0
      %2278 = vmatprep.mubr.bf16.mxu0 0
      %2279 = vmatmul.mubr.bf16.gmra.mrb[0].mxu0 %v2140
      %v2280 = vpop.f32.mrb[0].mxu0
      %v2281 = vadd.f32 0.0, %v2280
      %v2282 = vpop.f32.mrb[0].mxu0
      %v2283 = vpop.f32.mrb[0].mxu0
      %v2284 = vadd.f32 0.0, %v2283
      %v2285 = vpop.f32.mrb[0].mxu0
      %2286 = vmatprep.mubr.bf16.mxu0 0
      %2287 = vmatmul.mubr.bf16.gmra.mrb[0].mxu0 %v2141
      %v2288 = vpop.f32.mrb[0].mxu0
      %v2289 = vadd.f32 0.0, %v2288
      %v2290 = vpop.f32.mrb[0].mxu0
      %v2291 = vpop.f32.mrb[0].mxu0
      %v2292 = vadd.f32 0.0, %v2291
      %v2293 = vpop.f32.mrb[0].mxu0
      %2294 = vmatprep.mubr.bf16.mxu0 0
      %2295 = vmatmul.mubr.bf16.gmra.mrb[0].mxu0 %v2142
      %v2296 = vpop.f32.mrb[0].mxu0
      %v2297 = vadd.f32 0.0, %v2296
      %v2298 = vpop.f32.mrb[0].mxu0
      %v2299 = vpop.f32.mrb[0].mxu0
      %v2300 = vadd.f32 0.0, %v2299
      %v2301 = vpop.f32.mrb[0].mxu0
      %2302 = vmatprep.mubr.bf16.mxu0 0
      %2303 = vmatmul.mubr.bf16.gmra.mrb[0].mxu0 %v2143
      %v2304 = vpop.f32.mrb[0].mxu0
      %v2305 = vadd.f32 0.0, %v2304
      %v2306 = vpop.f32.mrb[0].mxu0
      %v2307 = vpop.f32.mrb[0].mxu0
      %v2308 = vpop.f32.mrb[0].mxu0
      %2309 = vdwg.mxu0
      %v2310 = vadd.f32 %v2144, %v2257
      %v2311 = vadd.f32 %v2145, %v2260
      %v2312 = vadd.f32 %v2146, %v2265
      %v2313 = vadd.f32 %v2147, %v2268
      %v2314 = vadd.f32 %v2148, %v2273
      %v2315 = vadd.f32 %v2149, %v2276
      %v2316 = vadd.f32 %v2150, %v2281
      %v2317 = vadd.f32 %v2151, %v2284
      %v2318 = vadd.f32 %v2152, %v2289
      %v2319 = vadd.f32 %v2153, %v2292
      %v2320 = vadd.f32 %v2154, %v2297
      %v2321 = vadd.f32 %v2155, %v2300
      %v2322 = vadd.f32 %v2156, %v2305
      %2323 = vst [vmem:[%s341 + $0x22] sm:$0xff] %v2310
      %2324 = vst [vmem:[%s341 + $0x2a] sm:$0xff] %v2311
      %2325 = vst [vmem:[%s341 + $0x32] sm:$0xff] %v2312
      %2326 = vst [vmem:[%s341 + $0x3a] sm:$0xff] %v2313
      %2327 = vst [vmem:[%s341 + $0x42] sm:$0xff] %v2314
      %2328 = vst [vmem:[%s341 + $0x4a] sm:$0xff] %v2315
      %2329 = vst [vmem:[%s341 + $0x52] sm:$0xff] %v2316
      %2330 = vst [vmem:[%s341 + $0x5a] sm:$0xff] %v2317
      %2331 = vst [vmem:[%s341 + $0x62] sm:$0xff] %v2318
      %2332 = vst [vmem:[%s341 + $0x6a] sm:$0xff] %v2319
      %2333 = vst [vmem:[%s341 + $0x72] sm:$0xff] %v2320
      %2334 = vst [vmem:[%s341 + $0x7a] sm:$0xff] %v2321
      %2335 = vst [vmem:[%s341 + $0x82] sm:$0x3f] %v2322
      %v2336 = vld [vmem:[%s335] sm:$0xff]
      %v2337 = vld [vmem:[%s335 + $0x8] sm:$0xff]
      %v2338 = vld [vmem:[%s335 + $0x10] sm:$0xff]
      %v2339 = vld [vmem:[%s335 + $0x18] sm:$0xff]
      %v2340 = vld [vmem:[%s335 + $0x20] sm:$0xff]
      %v2341 = vld [vmem:[%s335 + $0x28] sm:$0xff]
      %v2342 = vld [vmem:[%s335 + $0x30] sm:$0xff]
      %v2343 = vld [vmem:[%s335 + $0x38] sm:$0xff]
      %v2344 = vld [vmem:[%s335 + $0x40] sm:$0xff]
      %v2345 = vld [vmem:[%s335 + $0x48] sm:$0xff]
      %v2346 = vld [vmem:[%s335 + $0x50] sm:$0xff]
      %v2347 = vld [vmem:[%s335 + $0x58] sm:$0xff]
      %v2348 = vld [vmem:[%s335 + $0x60] sm:$0xff]
      %v2349 = vld [vmem:[%s335 + $0x68] sm:$0xff]
      %v2350 = vld [vmem:[%s335 + $0x70] sm:$0x7f]
      %v2351 = vmul.f32 %v2336, %v395
      %v2352 = vmul.f32 %v2337, %v395
      %v2353 = vmul.f32 %v2338, %v395
      %v2354 = vmul.f32 %v2339, %v395
      %v2355 = vmul.f32 %v2340, %v395
      %v2356 = vmul.f32 %v2341, %v395
      %v2357 = vmul.f32 %v2342, %v395
      %v2358 = vmul.f32 %v2343, %v395
      %v2359 = vmul.f32 %v2344, %v395
      %v2360 = vmul.f32 %v2345, %v395
      %v2361 = vmul.f32 %v2346, %v395
      %v2362 = vmul.f32 %v2347, %v395
      %v2363 = vmul.f32 %v2348, %v395
      %v2364 = vmul.f32 %v2349, %v395
      %v2365 = vmul.f32 %v2350, %v395
      %v2366 = vadd.f32 %v2351, %v416
      %v2367 = vadd.f32 %v2352, %v416
      %v2368 = vadd.f32 %v2353, %v416
      %v2369 = vadd.f32 %v2354, %v416
      %v2370 = vadd.f32 %v2355, %v416
      %v2371 = vadd.f32 %v2356, %v416
      %v2372 = vadd.f32 %v2357, %v416
      %v2373 = vadd.f32 %v2358, %v416
      %v2374 = vadd.f32 %v2359, %v416
      %v2375 = vadd.f32 %v2360, %v416
      %v2376 = vadd.f32 %v2361, %v416
      %v2377 = vadd.f32 %v2362, %v416
      %v2378 = vadd.f32 %v2363, %v416
      %v2379 = vadd.f32 %v2364, %v416
      %v2380 = vadd.f32 %v2365, %v416
      %v2381 = vmax.f32 %v2366, 0.0
      %v2382 = vmax.f32 %v2367, 0.0
      %v2383 = vmax.f32 %v2368, 0.0
      %v2384 = vmax.f32 %v2369, 0.0
      %v2385 = vmax.f32 %v2370, 0.0
      %v2386 = vmax.f32 %v2371, 0.0
      %v2387 = vmax.f32 %v2372, 0.0
      %v2388 = vmax.f32 %v2373, 0.0
      %v2389 = vmax.f32 %v2374, 0.0
      %v2390 = vmax.f32 %v2375, 0.0
      %v2391 = vmax.f32 %v2376, 0.0
      %v2392 = vmax.f32 %v2377, 0.0
      %v2393 = vmax.f32 %v2378, 0.0
      %v2394 = vmax.f32 %v2379, 0.0
      %v2395 = vmax.f32 %v2380, 0.0
      %v2396 = vsub.f32 %v2381, %v2366
      %v2397 = vsub.f32 %v2382, %v2367
      %v2398 = vsub.f32 %v2383, %v2368
      %v2399 = vsub.f32 %v2384, %v2369
      %v2400 = vsub.f32 %v2385, %v2370
      %v2401 = vsub.f32 %v2386, %v2371
      %v2402 = vsub.f32 %v2387, %v2372
      %v2403 = vsub.f32 %v2388, %v2373
      %v2404 = vsub.f32 %v2389, %v2374
      %v2405 = vsub.f32 %v2390, %v2375
      %v2406 = vsub.f32 %v2391, %v2376
      %v2407 = vsub.f32 %v2392, %v2377
      %v2408 = vsub.f32 %v2393, %v2378
      %v2409 = vsub.f32 %v2394, %v2379
      %v2410 = vsub.f32 %v2395, %v2380
      %v2411 = vmul.f32 %v467, %v2396
      %v2412 = vmul.f32 %v467, %v2397
      %v2413 = vmul.f32 %v467, %v2398
      %v2414 = vmul.f32 %v467, %v2399
      %v2415 = vmul.f32 %v467, %v2400
      %v2416 = vmul.f32 %v467, %v2401
      %v2417 = vmul.f32 %v467, %v2402
      %v2418 = vmul.f32 %v467, %v2403
      %v2419 = vmul.f32 %v467, %v2404
      %v2420 = vmul.f32 %v467, %v2405
      %v2421 = vmul.f32 %v467, %v2406
      %v2422 = vmul.f32 %v467, %v2407
      %v2423 = vmul.f32 %v467, %v2408
      %v2424 = vmul.f32 %v467, %v2409
      %v2425 = vmul.f32 %v467, %v2410
      %v2426 = vadd.f32 %v2366, %v2411
      %v2427 = vadd.f32 %v2367, %v2412
      %v2428 = vadd.f32 %v2368, %v2413
      %v2429 = vadd.f32 %v2369, %v2414
      %v2430 = vadd.f32 %v2370, %v2415
      %v2431 = vadd.f32 %v2371, %v2416
      %v2432 = vadd.f32 %v2372, %v2417
      %v2433 = vadd.f32 %v2373, %v2418
      %v2434 = vadd.f32 %v2374, %v2419
      %v2435 = vadd.f32 %v2375, %v2420
      %v2436 = vadd.f32 %v2376, %v2421
      %v2437 = vadd.f32 %v2377, %v2422
      %v2438 = vadd.f32 %v2378, %v2423
      %v2439 = vadd.f32 %v2379, %v2424
      %v2440 = vadd.f32 %v2380, %v2425
      %v2441 = vpack.c.bf16 %v2427, %v2426
      %v2442 = vpack.c.bf16 %v2429, %v2428
      %v2443 = vpack.c.bf16 %v2431, %v2430
      %v2444 = vpack.c.bf16 %v2433, %v2432
      %v2445 = vpack.c.bf16 %v2435, %v2434
      %v2446 = vpack.c.bf16 %v2437, %v2436
      %v2447 = vpack.c.bf16 %v2439, %v2438
      %v2448 = vpack.c.bf16 %v2440, %v2440
      %v2449 = vld [vmem:[%s341 + $0x11] sm:$0xff]
      %v2450 = vld [vmem:[%s341 + $0x19] sm:$0xff]
      %v2451 = vld [vmem:[%s341 + $0x21] sm:$0xff]
      %v2452 = vld [vmem:[%s341 + $0x29] sm:$0xff]
      %v2453 = vld [vmem:[%s341 + $0x31] sm:$0xff]
      %v2454 = vld [vmem:[%s341 + $0x39] sm:$0xff]
      %v2455 = vld [vmem:[%s341 + $0x41] sm:$0xff]
      %v2456 = vld [vmem:[%s341 + $0x49] sm:$0xff]
      %v2457 = vld [vmem:[%s341 + $0x51] sm:$0xff]
      %v2458 = vld [vmem:[%s341 + $0x59] sm:$0xff]
      %v2459 = vld [vmem:[%s341 + $0x61] sm:$0xff]
      %v2460 = vld [vmem:[%s341 + $0x69] sm:$0xff]
      %v2461 = vld [vmem:[%s341 + $0x71] sm:$0xff]
      %v2462 = vld [vmem:[%s341 + $0x79] sm:$0xff]
      %v2463 = vld [vmem:[%s341 + $0x81] sm:$0x7f]
      %s2464 = scalar_lea.vmem %s6, 384
      %v2465 = vld [vmem:[%s2464] sm:$0xf]
      %v2466 = vld [vmem:[%s2464 + $0x4] sm:$0xf]
      %v2467 = vld [vmem:[%s2464 + $0x8] sm:$0xf]
      %v2468 = vld [vmem:[%s2464 + $0xc] sm:$0xf]
      %v2469 = vld [vmem:[%s2464 + $0x10] sm:$0xf]
      %v2470 = vld [vmem:[%s2464 + $0x14] sm:$0xf]
      %v2471 = vld [vmem:[%s2464 + $0x18] sm:$0xf]
      %v2472 = vld [vmem:[%s2464 + $0x1c] sm:$0xf]
      %v2473 = vld [vmem:[%s2464 + $0x20] sm:$0xf]
      %v2474 = vld [vmem:[%s2464 + $0x24] sm:$0xf]
      %v2475 = vld [vmem:[%s2464 + $0x28] sm:$0xf]
      %v2476 = vld [vmem:[%s2464 + $0x2c] sm:$0xf]
      %v2477 = vld [vmem:[%s2464 + $0x30] sm:$0xf]
      %v2478 = vld [vmem:[%s2464 + $0x34] sm:$0xf]
      %v2479 = vld [vmem:[%s2464 + $0x38] sm:$0xf]
      %v2480 = vld [vmem:[%s2464 + $0x3c] sm:$0xf]
      %v2497 = vunpack.c.l.b16 %v2465
      %v2498 = vunpack.c.l.b16 %v2466
      %v2499 = vunpack.c.l.b16 %v2467
      %v2500 = vunpack.c.l.b16 %v2468
      %v2501 = vunpack.c.l.b16 %v2469
      %v2502 = vunpack.c.l.b16 %v2470
      %v2503 = vunpack.c.l.b16 %v2471
      %v2504 = vunpack.c.l.b16 %v2472
      %v2505 = vunpack.c.l.b16 %v2473
      %v2506 = vunpack.c.l.b16 %v2474
      %v2507 = vunpack.c.l.b16 %v2475
      %v2508 = vunpack.c.l.b16 %v2476
      %v2509 = vunpack.c.l.b16 %v2477
      %v2510 = vunpack.c.l.b16 %v2478
      %v2511 = vunpack.c.l.b16 %v2479
      %v2512 = vunpack.c.l.b16 %v2480
      %v2513 = vpack.c.b16 %v2498, %v2497
      %v2514 = vpack.c.b16 %v2500, %v2499
      %v2515 = vpack.c.b16 %v2502, %v2501
      %v2516 = vpack.c.b16 %v2504, %v2503
      %v2517 = vpack.c.b16 %v2506, %v2505
      %v2518 = vpack.c.b16 %v2508, %v2507
      %v2519 = vpack.c.b16 %v2510, %v2509
      %v2520 = vpack.c.b16 %v2512, %v2511
      %2529 = vmatprep.subr.bf16.mxu0 0
      %2530 = vmatpush1.bf16.msra.mxu0 %v2513
      %2531 = vmatprep.subr.bf16.mxu0 0
      %2532 = vmatpush1.bf16.msra.mxu0 %v2514
      %2533 = vmatprep.subr.bf16.mxu0 0
      %2534 = vmatpush1.bf16.msra.mxu0 %v2515
      %2535 = vmatprep.subr.bf16.mxu0 0
      %2536 = vmatpush1.bf16.msra.mxu0 %v2516
      %2537 = vmatprep.subr.bf16.mxu0 0
      %2538 = vmatpush1.bf16.msra.mxu0 %v2517
      %2539 = vmatprep.subr.bf16.mxu0 0
      %2540 = vmatpush1.bf16.msra.mxu0 %v2518
      %2541 = vmatprep.subr.bf16.mxu0 0
      %2542 = vmatpush1.bf16.msra.mxu0 %v2519
      %2543 = vmatprep.subr.bf16.mxu0 0
      %2544 = vmatpush1.bf16.msra.mxu0 %v2520
      %2545 = vmatprep.subr.bf16.mxu0 0
      %2546 = vmatpush1.bf16.msra.mxu0 0
      %2547 = vmatprep.subr.bf16.mxu0 0
      %2548 = vmatpush1.bf16.msra.mxu0 0
      %2549 = vmatprep.subr.bf16.mxu0 0
      %2550 = vmatpush1.bf16.msra.mxu0 0
      %2551 = vmatprep.subr.bf16.mxu0 0
      %2552 = vmatpush1.bf16.msra.mxu0 0
      %2553 = vmatprep.subr.bf16.mxu0 0
      %2554 = vmatpush1.bf16.msra.mxu0 0
      %2555 = vmatprep.subr.bf16.mxu0 0
      %2556 = vmatpush1.bf16.msra.mxu0 0
      %2557 = vmatprep.subr.bf16.mxu0 0
      %2558 = vmatpush1.bf16.msra.mxu0 0
      %2559 = vmatprep.subr.bf16.mxu0 0
      %2560 = vmatpush1.bf16.msra.mxu0 0
      %2561 = vmatprep.mubr.bf16.mxu0 0
      %2562 = vmatmul.mubr.bf16.gmra.mrb[0].mxu0 %v2441
      %v2563 = vpop.f32.mrb[0].mxu0
      %v2564 = vadd.f32 0.0, %v2563
      %v2565 = vpop.f32.mrb[0].mxu0
      %v2566 = vpop.f32.mrb[0].mxu0
      %v2567 = vadd.f32 0.0, %v2566
      %v2568 = vpop.f32.mrb[0].mxu0
      %2569 = vmatprep.mubr.bf16.mxu0 0
      %2570 = vmatmul.mubr.bf16.gmra.mrb[0].mxu0 %v2442
      %v2571 = vpop.f32.mrb[0].mxu0
      %v2572 = vadd.f32 0.0, %v2571
      %v2573 = vpop.f32.mrb[0].mxu0
      %v2574 = vpop.f32.mrb[0].mxu0
      %v2575 = vadd.f32 0.0, %v2574
      %v2576 = vpop.f32.mrb[0].mxu0
      %2577 = vmatprep.mubr.bf16.mxu0 0
      %2578 = vmatmul.mubr.bf16.gmra.mrb[0].mxu0 %v2443
      %v2579 = vpop.f32.mrb[0].mxu0
      %v2580 = vadd.f32 0.0, %v2579
      %v2581 = vpop.f32.mrb[0].mxu0
      %v2582 = vpop.f32.mrb[0].mxu0
      %v2583 = vadd.f32 0.0, %v2582
      %v2584 = vpop.f32.mrb[0].mxu0
      %2585 = vmatprep.mubr.bf16.mxu0 0
      %2586 = vmatmul.mubr.bf16.gmra.mrb[0].mxu0 %v2444
      %v2587 = vpop.f32.mrb[0].mxu0
      %v2588 = vadd.f32 0.0, %v2587
      %v2589 = vpop.f32.mrb[0].mxu0
      %v2590 = vpop.f32.mrb[0].mxu0
      %v2591 = vadd.f32 0.0, %v2590
      %v2592 = vpop.f32.mrb[0].mxu0
      %2593 = vmatprep.mubr.bf16.mxu0 0
      %2594 = vmatmul.mubr.bf16.gmra.mrb[0].mxu0 %v2445
      %v2595 = vpop.f32.mrb[0].mxu0
      %v2596 = vadd.f32 0.0, %v2595
      %v2597 = vpop.f32.mrb[0].mxu0
      %v2598 = vpop.f32.mrb[0].mxu0
      %v2599 = vadd.f32 0.0, %v2598
      %v2600 = vpop.f32.mrb[0].mxu0
      %2601 = vmatprep.mubr.bf16.mxu0 0
      %2602 = vmatmul.mubr.bf16.gmra.mrb[0].mxu0 %v2446
      %v2603 = vpop.f32.mrb[0].mxu0
      %v2604 = vadd.f32 0.0, %v2603
      %v2605 = vpop.f32.mrb[0].mxu0
      %v2606 = vpop.f32.mrb[0].mxu0
      %v2607 = vadd.f32 0.0, %v2606
      %v2608 = vpop.f32.mrb[0].mxu0
      %2609 = vmatprep.mubr.bf16.mxu0 0
      %2610 = vmatmul.mubr.bf16.gmra.mrb[0].mxu0 %v2447
      %v2611 = vpop.f32.mrb[0].mxu0
      %v2612 = vadd.f32 0.0, %v2611
      %v2613 = vpop.f32.mrb[0].mxu0
      %v2614 = vpop.f32.mrb[0].mxu0
      %v2615 = vadd.f32 0.0, %v2614
      %v2616 = vpop.f32.mrb[0].mxu0
      %2617 = vmatprep.mubr.bf16.mxu0 0
      %2618 = vmatmul.mubr.bf16.gmra.mrb[0].mxu0 %v2448
      %v2619 = vpop.f32.mrb[0].mxu0
      %v2620 = vadd.f32 0.0, %v2619
      %v2621 = vpop.f32.mrb[0].mxu0
      %v2622 = vpop.f32.mrb[0].mxu0
      %v2623 = vpop.f32.mrb[0].mxu0
      %2624 = vdwg.mxu0
      %v2625 = vadd.f32 %v2449, %v2564
      %v2626 = vadd.f32 %v2450, %v2567
      %v2627 = vadd.f32 %v2451, %v2572
      %v2628 = vadd.f32 %v2452, %v2575
      %v2629 = vadd.f32 %v2453, %v2580
      %v2630 = vadd.f32 %v2454, %v2583
      %v2631 = vadd.f32 %v2455, %v2588
      %v2632 = vadd.f32 %v2456, %v2591
      %v2633 = vadd.f32 %v2457, %v2596
      %v2634 = vadd.f32 %v2458, %v2599
      %v2635 = vadd.f32 %v2459, %v2604
      %v2636 = vadd.f32 %v2460, %v2607
      %v2637 = vadd.f32 %v2461, %v2612
      %v2638 = vadd.f32 %v2462, %v2615
      %v2639 = vadd.f32 %v2463, %v2620
      %2640 = vst [vmem:[%s341 + $0x11] sm:$0xff] %v2625
      %2641 = vst [vmem:[%s341 + $0x19] sm:$0xff] %v2626
      %2642 = vst [vmem:[%s341 + $0x21] sm:$0xff] %v2627
      %2643 = vst [vmem:[%s341 + $0x29] sm:$0xff] %v2628
      %2644 = vst [vmem:[%s341 + $0x31] sm:$0xff] %v2629
      %2645 = vst [vmem:[%s341 + $0x39] sm:$0xff] %v2630
      %2646 = vst [vmem:[%s341 + $0x41] sm:$0xff] %v2631
      %2647 = vst [vmem:[%s341 + $0x49] sm:$0xff] %v2632
      %2648 = vst [vmem:[%s341 + $0x51] sm:$0xff] %v2633
      %2649 = vst [vmem:[%s341 + $0x59] sm:$0xff] %v2634
      %2650 = vst [vmem:[%s341 + $0x61] sm:$0xff] %v2635
      %2651 = vst [vmem:[%s341 + $0x69] sm:$0xff] %v2636
      %2652 = vst [vmem:[%s341 + $0x71] sm:$0xff] %v2637
      %2653 = vst [vmem:[%s341 + $0x79] sm:$0xff] %v2638
      %2654 = vst [vmem:[%s341 + $0x81] sm:$0x7f] %v2639
      %v2655 = vld [vmem:[%s335] sm:$0xff]
      %v2656 = vld [vmem:[%s335 + $0x8] sm:$0xff]
      %v2657 = vld [vmem:[%s335 + $0x10] sm:$0xff]
      %v2658 = vld [vmem:[%s335 + $0x18] sm:$0xff]
      %v2659 = vld [vmem:[%s335 + $0x20] sm:$0xff]
      %v2660 = vld [vmem:[%s335 + $0x28] sm:$0xff]
      %v2661 = vld [vmem:[%s335 + $0x30] sm:$0xff]
      %v2662 = vld [vmem:[%s335 + $0x38] sm:$0xff]
      %v2663 = vld [vmem:[%s335 + $0x40] sm:$0xff]
      %v2664 = vld [vmem:[%s335 + $0x48] sm:$0xff]
      %v2665 = vld [vmem:[%s335 + $0x50] sm:$0xff]
      %v2666 = vld [vmem:[%s335 + $0x58] sm:$0xff]
      %v2667 = vld [vmem:[%s335 + $0x60] sm:$0xff]
      %v2668 = vld [vmem:[%s335 + $0x68] sm:$0xff]
      %v2669 = vld [vmem:[%s335 + $0x70] sm:$0xff]
      %v2670 = vld [vmem:[%s335 + $0x78] sm:$0xff]
      %v2671 = vld [vmem:[%s335 + $0x80] sm:$0xff]
      %v2672 = vmul.f32 %v2655, %v395
      %v2673 = vmul.f32 %v2656, %v395
      %v2674 = vmul.f32 %v2657, %v395
      %v2675 = vmul.f32 %v2658, %v395
      %v2676 = vmul.f32 %v2659, %v395
      %v2677 = vmul.f32 %v2660, %v395
      %v2678 = vmul.f32 %v2661, %v395
      %v2679 = vmul.f32 %v2662, %v395
      %v2680 = vmul.f32 %v2663, %v395
      %v2681 = vmul.f32 %v2664, %v395
      %v2682 = vmul.f32 %v2665, %v395
      %v2683 = vmul.f32 %v2666, %v395
      %v2684 = vmul.f32 %v2667, %v395
      %v2685 = vmul.f32 %v2668, %v395
      %v2686 = vmul.f32 %v2669, %v395
      %v2687 = vmul.f32 %v2670, %v395
      %v2688 = vmul.f32 %v2671, %v395
      %v2689 = vadd.f32 %v2672, %v416
      %v2690 = vadd.f32 %v2673, %v416
      %v2691 = vadd.f32 %v2674, %v416
      %v2692 = vadd.f32 %v2675, %v416
      %v2693 = vadd.f32 %v2676, %v416
      %v2694 = vadd.f32 %v2677, %v416
      %v2695 = vadd.f32 %v2678, %v416
      %v2696 = vadd.f32 %v2679, %v416
      %v2697 = vadd.f32 %v2680, %v416
      %v2698 = vadd.f32 %v2681, %v416
      %v2699 = vadd.f32 %v2682, %v416
      %v2700 = vadd.f32 %v2683, %v416
      %v2701 = vadd.f32 %v2684, %v416
      %v2702 = vadd.f32 %v2685, %v416
      %v2703 = vadd.f32 %v2686, %v416
      %v2704 = vadd.f32 %v2687, %v416
      %v2705 = vadd.f32 %v2688, %v416
      %v2706 = vmax.f32 %v2689, 0.0
      %v2707 = vmax.f32 %v2690, 0.0
      %v2708 = vmax.f32 %v2691, 0.0
      %v2709 = vmax.f32 %v2692, 0.0
      %v2710 = vmax.f32 %v2693, 0.0
      %v2711 = vmax.f32 %v2694, 0.0
      %v2712 = vmax.f32 %v2695, 0.0
      %v2713 = vmax.f32 %v2696, 0.0
      %v2714 = vmax.f32 %v2697, 0.0
      %v2715 = vmax.f32 %v2698, 0.0
      %v2716 = vmax.f32 %v2699, 0.0
      %v2717 = vmax.f32 %v2700, 0.0
      %v2718 = vmax.f32 %v2701, 0.0
      %v2719 = vmax.f32 %v2702, 0.0
      %v2720 = vmax.f32 %v2703, 0.0
      %v2721 = vmax.f32 %v2704, 0.0
      %v2722 = vmax.f32 %v2705, 0.0
      %v2723 = vsub.f32 %v2706, %v2689
      %v2724 = vsub.f32 %v2707, %v2690
      %v2725 = vsub.f32 %v2708, %v2691
      %v2726 = vsub.f32 %v2709, %v2692
      %v2727 = vsub.f32 %v2710, %v2693
      %v2728 = vsub.f32 %v2711, %v2694
      %v2729 = vsub.f32 %v2712, %v2695
      %v2730 = vsub.f32 %v2713, %v2696
      %v2731 = vsub.f32 %v2714, %v2697
      %v2732 = vsub.f32 %v2715, %v2698
      %v2733 = vsub.f32 %v2716, %v2699
      %v2734 = vsub.f32 %v2717, %v2700
      %v2735 = vsub.f32 %v2718, %v2701
      %v2736 = vsub.f32 %v2719, %v2702
      %v2737 = vsub.f32 %v2720, %v2703
      %v2738 = vsub.f32 %v2721, %v2704
      %v2739 = vsub.f32 %v2722, %v2705
      %v2740 = vmul.f32 %v467, %v2723
      %v2741 = vmul.f32 %v467, %v2724
      %v2742 = vmul.f32 %v467, %v2725
      %v2743 = vmul.f32 %v467, %v2726
      %v2744 = vmul.f32 %v467, %v2727
      %v2745 = vmul.f32 %v467, %v2728
      %v2746 = vmul.f32 %v467, %v2729
      %v2747 = vmul.f32 %v467, %v2730
      %v2748 = vmul.f32 %v467, %v2731
      %v2749 = vmul.f32 %v467, %v2732
      %v2750 = vmul.f32 %v467, %v2733
      %v2751 = vmul.f32 %v467, %v2734
      %v2752 = vmul.f32 %v467, %v2735
      %v2753 = vmul.f32 %v467, %v2736
      %v2754 = vmul.f32 %v467, %v2737
      %v2755 = vmul.f32 %v467, %v2738
      %v2756 = vmul.f32 %v467, %v2739
      %v2757 = vadd.f32 %v2689, %v2740
      %v2758 = vadd.f32 %v2690, %v2741
      %v2759 = vadd.f32 %v2691, %v2742
      %v2760 = vadd.f32 %v2692, %v2743
      %v2761 = vadd.f32 %v2693, %v2744
      %v2762 = vadd.f32 %v2694, %v2745
      %v2763 = vadd.f32 %v2695, %v2746
      %v2764 = vadd.f32 %v2696, %v2747
      %v2765 = vadd.f32 %v2697, %v2748
      %v2766 = vadd.f32 %v2698, %v2749
      %v2767 = vadd.f32 %v2699, %v2750
      %v2768 = vadd.f32 %v2700, %v2751
      %v2769 = vadd.f32 %v2701, %v2752
      %v2770 = vadd.f32 %v2702, %v2753
      %v2771 = vadd.f32 %v2703, %v2754
      %v2772 = vadd.f32 %v2704, %v2755
      %v2773 = vadd.f32 %v2705, %v2756
      %v2774 = vpack.c.bf16 %v2758, %v2757
      %v2775 = vpack.c.bf16 %v2760, %v2759
      %v2776 = vpack.c.bf16 %v2762, %v2761
      %v2777 = vpack.c.bf16 %v2764, %v2763
      %v2778 = vpack.c.bf16 %v2766, %v2765
      %v2779 = vpack.c.bf16 %v2768, %v2767
      %v2780 = vpack.c.bf16 %v2770, %v2769
      %v2781 = vpack.c.bf16 %v2772, %v2771
      %v2782 = vpack.c.bf16 %v2773, %v2773
      %v2783 = vld [vmem:[%s341] sm:$0xff]
      %v2784 = vld [vmem:[%s341 + $0x8] sm:$0xff]
      %v2785 = vld [vmem:[%s341 + $0x10] sm:$0xff]
      %v2786 = vld [vmem:[%s341 + $0x18] sm:$0xff]
      %v2787 = vld [vmem:[%s341 + $0x20] sm:$0xff]
      %v2788 = vld [vmem:[%s341 + $0x28] sm:$0xff]
      %v2789 = vld [vmem:[%s341 + $0x30] sm:$0xff]
      %v2790 = vld [vmem:[%s341 + $0x38] sm:$0xff]
      %v2791 = vld [vmem:[%s341 + $0x40] sm:$0xff]
      %v2792 = vld [vmem:[%s341 + $0x48] sm:$0xff]
      %v2793 = vld [vmem:[%s341 + $0x50] sm:$0xff]
      %v2794 = vld [vmem:[%s341 + $0x58] sm:$0xff]
      %v2795 = vld [vmem:[%s341 + $0x60] sm:$0xff]
      %v2796 = vld [vmem:[%s341 + $0x68] sm:$0xff]
      %v2797 = vld [vmem:[%s341 + $0x70] sm:$0xff]
      %v2798 = vld [vmem:[%s341 + $0x78] sm:$0xff]
      %v2799 = vld [vmem:[%s341 + $0x80] sm:$0xff]
      %s2800 = scalar_lea.vmem %s6, 448
      %v2801 = vld [vmem:[%s2800] sm:$0xf]
      %v2802 = vld [vmem:[%s2800 + $0x4] sm:$0xf]
      %v2803 = vld [vmem:[%s2800 + $0x8] sm:$0xf]
      %v2804 = vld [vmem:[%s2800 + $0xc] sm:$0xf]
      %v2805 = vld [vmem:[%s2800 + $0x10] sm:$0xf]
      %v2806 = vld [vmem:[%s2800 + $0x14] sm:$0xf]
      %v2807 = vld [vmem:[%s2800 + $0x18] sm:$0xf]
      %v2808 = vld [vmem:[%s2800 + $0x1c] sm:$0xf]
      %v2809 = vld [vmem:[%s2800 + $0x20] sm:$0xf]
      %v2810 = vld [vmem:[%s2800 + $0x24] sm:$0xf]
      %v2811 = vld [vmem:[%s2800 + $0x28] sm:$0xf]
      %v2812 = vld [vmem:[%s2800 + $0x2c] sm:$0xf]
      %v2813 = vld [vmem:[%s2800 + $0x30] sm:$0xf]
      %v2814 = vld [vmem:[%s2800 + $0x34] sm:$0xf]
      %v2815 = vld [vmem:[%s2800 + $0x38] sm:$0xf]
      %v2816 = vld [vmem:[%s2800 + $0x3c] sm:$0xf]
      %v2833 = vunpack.c.l.b16 %v2801
      %v2834 = vunpack.c.l.b16 %v2802
      %v2835 = vunpack.c.l.b16 %v2803
      %v2836 = vunpack.c.l.b16 %v2804
      %v2837 = vunpack.c.l.b16 %v2805
      %v2838 = vunpack.c.l.b16 %v2806
      %v2839 = vunpack.c.l.b16 %v2807
      %v2840 = vunpack.c.l.b16 %v2808
      %v2841 = vunpack.c.l.b16 %v2809
      %v2842 = vunpack.c.l.b16 %v2810
      %v2843 = vunpack.c.l.b16 %v2811
      %v2844 = vunpack.c.l.b16 %v2812
      %v2845 = vunpack.c.l.b16 %v2813
      %v2846 = vunpack.c.l.b16 %v2814
      %v2847 = vunpack.c.l.b16 %v2815
      %v2848 = vunpack.c.l.b16 %v2816
      %v2849 = vpack.c.b16 %v2834, %v2833
      %v2850 = vpack.c.b16 %v2836, %v2835
      %v2851 = vpack.c.b16 %v2838, %v2837
      %v2852 = vpack.c.b16 %v2840, %v2839
      %v2853 = vpack.c.b16 %v2842, %v2841
      %v2854 = vpack.c.b16 %v2844, %v2843
      %v2855 = vpack.c.b16 %v2846, %v2845
      %v2856 = vpack.c.b16 %v2848, %v2847
      %2865 = vmatprep.subr.bf16.mxu0 0
      %2866 = vmatpush1.bf16.msra.mxu0 %v2849
      %2867 = vmatprep.subr.bf16.mxu0 0
      %2868 = vmatpush1.bf16.msra.mxu0 %v2850
      %2869 = vmatprep.subr.bf16.mxu0 0
      %2870 = vmatpush1.bf16.msra.mxu0 %v2851
      %2871 = vmatprep.subr.bf16.mxu0 0
      %2872 = vmatpush1.bf16.msra.mxu0 %v2852
      %2873 = vmatprep.subr.bf16.mxu0 0
      %2874 = vmatpush1.bf16.msra.mxu0 %v2853
      %2875 = vmatprep.subr.bf16.mxu0 0
      %2876 = vmatpush1.bf16.msra.mxu0 %v2854
      %2877 = vmatprep.subr.bf16.mxu0 0
      %2878 = vmatpush1.bf16.msra.mxu0 %v2855
      %2879 = vmatprep.subr.bf16.mxu0 0
      %2880 = vmatpush1.bf16.msra.mxu0 %v2856
      %2881 = vmatprep.subr.bf16.mxu0 0
      %2882 = vmatpush1.bf16.msra.mxu0 0
      %2883 = vmatprep.subr.bf16.mxu0 0
      %2884 = vmatpush1.bf16.msra.mxu0 0
      %2885 = vmatprep.subr.bf16.mxu0 0
      %2886 = vmatpush1.bf16.msra.mxu0 0
      %2887 = vmatprep.subr.bf16.mxu0 0
      %2888 = vmatpush1.bf16.msra.mxu0 0
      %2889 = vmatprep.subr.bf16.mxu0 0
      %2890 = vmatpush1.bf16.msra.mxu0 0
      %2891 = vmatprep.subr.bf16.mxu0 0
      %2892 = vmatpush1.bf16.msra.mxu0 0
      %2893 = vmatprep.subr.bf16.mxu0 0
      %2894 = vmatpush1.bf16.msra.mxu0 0
      %2895 = vmatprep.subr.bf16.mxu0 0
      %2896 = vmatpush1.bf16.msra.mxu0 0
      %2897 = vmatprep.mubr.bf16.mxu0 0
      %2898 = vmatmul.mubr.bf16.gmra.mrb[0].mxu0 %v2774
      %v2899 = vpop.f32.mrb[0].mxu0
      %v2900 = vadd.f32 0.0, %v2899
      %v2901 = vpop.f32.mrb[0].mxu0
      %v2902 = vpop.f32.mrb[0].mxu0
      %v2903 = vadd.f32 0.0, %v2902
      %v2904 = vpop.f32.mrb[0].mxu0
      %2905 = vmatprep.mubr.bf16.mxu0 0
      %2906 = vmatmul.mubr.bf16.gmra.mrb[0].mxu0 %v2775
      %v2907 = vpop.f32.mrb[0].mxu0
      %v2908 = vadd.f32 0.0, %v2907
      %v2909 = vpop.f32.mrb[0].mxu0
      %v2910 = vpop.f32.mrb[0].mxu0
      %v2911 = vadd.f32 0.0, %v2910
      %v2912 = vpop.f32.mrb[0].mxu0
      %2913 = vmatprep.mubr.bf16.mxu0 0
      %2914 = vmatmul.mubr.bf16.gmra.mrb[0].mxu0 %v2776
      %v2915 = vpop.f32.mrb[0].mxu0
      %v2916 = vadd.f32 0.0, %v2915
      %v2917 = vpop.f32.mrb[0].mxu0
      %v2918 = vpop.f32.mrb[0].mxu0
      %v2919 = vadd.f32 0.0, %v2918
      %v2920 = vpop.f32.mrb[0].mxu0
      %2921 = vmatprep.mubr.bf16.mxu0 0
      %2922 = vmatmul.mubr.bf16.gmra.mrb[0].mxu0 %v2777
      %v2923 = vpop.f32.mrb[0].mxu0
      %v2924 = vadd.f32 0.0, %v2923
      %v2925 = vpop.f32.mrb[0].mxu0
      %v2926 = vpop.f32.mrb[0].mxu0
      %v2927 = vadd.f32 0.0, %v2926
      %v2928 = vpop.f32.mrb[0].mxu0
      %2929 = vmatprep.mubr.bf16.mxu0 0
      %2930 = vmatmul.mubr.bf16.gmra.mrb[0].mxu0 %v2778
      %v2931 = vpop.f32.mrb[0].mxu0
      %v2932 = vadd.f32 0.0, %v2931
      %v2933 = vpop.f32.mrb[0].mxu0
      %v2934 = vpop.f32.mrb[0].mxu0
      %v2935 = vadd.f32 0.0, %v2934
      %v2936 = vpop.f32.mrb[0].mxu0
      %2937 = vmatprep.mubr.bf16.mxu0 0
      %2938 = vmatmul.mubr.bf16.gmra.mrb[0].mxu0 %v2779
      %v2939 = vpop.f32.mrb[0].mxu0
      %v2940 = vadd.f32 0.0, %v2939
      %v2941 = vpop.f32.mrb[0].mxu0
      %v2942 = vpop.f32.mrb[0].mxu0
      %v2943 = vadd.f32 0.0, %v2942
      %v2944 = vpop.f32.mrb[0].mxu0
      %2945 = vmatprep.mubr.bf16.mxu0 0
      %2946 = vmatmul.mubr.bf16.gmra.mrb[0].mxu0 %v2780
      %v2947 = vpop.f32.mrb[0].mxu0
      %v2948 = vadd.f32 0.0, %v2947
      %v2949 = vpop.f32.mrb[0].mxu0
      %v2950 = vpop.f32.mrb[0].mxu0
      %v2951 = vadd.f32 0.0, %v2950
      %v2952 = vpop.f32.mrb[0].mxu0
      %2953 = vmatprep.mubr.bf16.mxu0 0
      %2954 = vmatmul.mubr.bf16.gmra.mrb[0].mxu0 %v2781
      %v2955 = vpop.f32.mrb[0].mxu0
      %v2956 = vadd.f32 0.0, %v2955
      %v2957 = vpop.f32.mrb[0].mxu0
      %v2958 = vpop.f32.mrb[0].mxu0
      %v2959 = vadd.f32 0.0, %v2958
      %v2960 = vpop.f32.mrb[0].mxu0
      %2961 = vmatprep.mubr.bf16.mxu0 0
      %2962 = vmatmul.mubr.bf16.gmra.mrb[0].mxu0 %v2782
      %v2963 = vpop.f32.mrb[0].mxu0
      %v2964 = vadd.f32 0.0, %v2963
      %v2965 = vpop.f32.mrb[0].mxu0
      %v2966 = vpop.f32.mrb[0].mxu0
      %v2967 = vpop.f32.mrb[0].mxu0
      %2968 = vdwg.mxu0
      %v2969 = vadd.f32 %v2783, %v2900
      %v2970 = vadd.f32 %v2784, %v2903
      %v2971 = vadd.f32 %v2785, %v2908
      %v2972 = vadd.f32 %v2786, %v2911
      %v2973 = vadd.f32 %v2787, %v2916
      %v2974 = vadd.f32 %v2788, %v2919
      %v2975 = vadd.f32 %v2789, %v2924
      %v2976 = vadd.f32 %v2790, %v2927
      %v2977 = vadd.f32 %v2791, %v2932
      %v2978 = vadd.f32 %v2792, %v2935
      %v2979 = vadd.f32 %v2793, %v2940
      %v2980 = vadd.f32 %v2794, %v2943
      %v2981 = vadd.f32 %v2795, %v2948
      %v2982 = vadd.f32 %v2796, %v2951
      %v2983 = vadd.f32 %v2797, %v2956
      %v2984 = vadd.f32 %v2798, %v2959
      %v2985 = vadd.f32 %v2799, %v2964
      %2986 = vst [vmem:[%s341] sm:$0xff] %v2969
      %2987 = vst [vmem:[%s341 + $0x8] sm:$0xff] %v2970
      %2988 = vst [vmem:[%s341 + $0x10] sm:$0xff] %v2971
      %2989 = vst [vmem:[%s341 + $0x18] sm:$0xff] %v2972
      %2990 = vst [vmem:[%s341 + $0x20] sm:$0xff] %v2973
      %2991 = vst [vmem:[%s341 + $0x28] sm:$0xff] %v2974
      %2992 = vst [vmem:[%s341 + $0x30] sm:$0xff] %v2975
      %2993 = vst [vmem:[%s341 + $0x38] sm:$0xff] %v2976
      %2994 = vst [vmem:[%s341 + $0x40] sm:$0xff] %v2977
      %2995 = vst [vmem:[%s341 + $0x48] sm:$0xff] %v2978
      %2996 = vst [vmem:[%s341 + $0x50] sm:$0xff] %v2979
      %2997 = vst [vmem:[%s341 + $0x58] sm:$0xff] %v2980
      %2998 = vst [vmem:[%s341 + $0x60] sm:$0xff] %v2981
      %2999 = vst [vmem:[%s341 + $0x68] sm:$0xff] %v2982
      %3000 = vst [vmem:[%s341 + $0x70] sm:$0xff] %v2983
      %3001 = vst [vmem:[%s341 + $0x78] sm:$0xff] %v2984
      %3002 = vst [vmem:[%s341 + $0x80] sm:$0xff] %v2985
      %v3003 = vld [vmem:[%s335 + $0x11] sm:$0xff]
      %v3004 = vld [vmem:[%s335 + $0x19] sm:$0xff]
      %v3005 = vld [vmem:[%s335 + $0x21] sm:$0xff]
      %v3006 = vld [vmem:[%s335 + $0x29] sm:$0xff]
      %v3007 = vld [vmem:[%s335 + $0x31] sm:$0xff]
      %v3008 = vld [vmem:[%s335 + $0x39] sm:$0xff]
      %v3009 = vld [vmem:[%s335 + $0x41] sm:$0xff]
      %v3010 = vld [vmem:[%s335 + $0x49] sm:$0xff]
      %v3011 = vld [vmem:[%s335 + $0x51] sm:$0xff]
      %v3012 = vld [vmem:[%s335 + $0x59] sm:$0xff]
      %v3013 = vld [vmem:[%s335 + $0x61] sm:$0xff]
      %v3014 = vld [vmem:[%s335 + $0x69] sm:$0xff]
      %v3015 = vld [vmem:[%s335 + $0x71] sm:$0xff]
      %v3016 = vld [vmem:[%s335 + $0x79] sm:$0xff]
      %v3017 = vld [vmem:[%s335 + $0x81] sm:$0x7f]
      %v3018 = vmul.f32 %v3003, %v395
      %v3019 = vmul.f32 %v3004, %v395
      %v3020 = vmul.f32 %v3005, %v395
      %v3021 = vmul.f32 %v3006, %v395
      %v3022 = vmul.f32 %v3007, %v395
      %v3023 = vmul.f32 %v3008, %v395
      %v3024 = vmul.f32 %v3009, %v395
      %v3025 = vmul.f32 %v3010, %v395
      %v3026 = vmul.f32 %v3011, %v395
      %v3027 = vmul.f32 %v3012, %v395
      %v3028 = vmul.f32 %v3013, %v395
      %v3029 = vmul.f32 %v3014, %v395
      %v3030 = vmul.f32 %v3015, %v395
      %v3031 = vmul.f32 %v3016, %v395
      %v3032 = vmul.f32 %v3017, %v395
      %v3033 = vadd.f32 %v3018, %v416
      %v3034 = vadd.f32 %v3019, %v416
      %v3035 = vadd.f32 %v3020, %v416
      %v3036 = vadd.f32 %v3021, %v416
      %v3037 = vadd.f32 %v3022, %v416
      %v3038 = vadd.f32 %v3023, %v416
      %v3039 = vadd.f32 %v3024, %v416
      %v3040 = vadd.f32 %v3025, %v416
      %v3041 = vadd.f32 %v3026, %v416
      %v3042 = vadd.f32 %v3027, %v416
      %v3043 = vadd.f32 %v3028, %v416
      %v3044 = vadd.f32 %v3029, %v416
      %v3045 = vadd.f32 %v3030, %v416
      %v3046 = vadd.f32 %v3031, %v416
      %v3047 = vadd.f32 %v3032, %v416
      %v3048 = vmax.f32 %v3033, 0.0
      %v3049 = vmax.f32 %v3034, 0.0
      %v3050 = vmax.f32 %v3035, 0.0
      %v3051 = vmax.f32 %v3036, 0.0
      %v3052 = vmax.f32 %v3037, 0.0
      %v3053 = vmax.f32 %v3038, 0.0
      %v3054 = vmax.f32 %v3039, 0.0
      %v3055 = vmax.f32 %v3040, 0.0
      %v3056 = vmax.f32 %v3041, 0.0
      %v3057 = vmax.f32 %v3042, 0.0
      %v3058 = vmax.f32 %v3043, 0.0
      %v3059 = vmax.f32 %v3044, 0.0
      %v3060 = vmax.f32 %v3045, 0.0
      %v3061 = vmax.f32 %v3046, 0.0
      %v3062 = vmax.f32 %v3047, 0.0
      %v3063 = vsub.f32 %v3048, %v3033
      %v3064 = vsub.f32 %v3049, %v3034
      %v3065 = vsub.f32 %v3050, %v3035
      %v3066 = vsub.f32 %v3051, %v3036
      %v3067 = vsub.f32 %v3052, %v3037
      %v3068 = vsub.f32 %v3053, %v3038
      %v3069 = vsub.f32 %v3054, %v3039
      %v3070 = vsub.f32 %v3055, %v3040
      %v3071 = vsub.f32 %v3056, %v3041
      %v3072 = vsub.f32 %v3057, %v3042
      %v3073 = vsub.f32 %v3058, %v3043
      %v3074 = vsub.f32 %v3059, %v3044
      %v3075 = vsub.f32 %v3060, %v3045
      %v3076 = vsub.f32 %v3061, %v3046
      %v3077 = vsub.f32 %v3062, %v3047
      %v3078 = vmul.f32 %v467, %v3063
      %v3079 = vmul.f32 %v467, %v3064
      %v3080 = vmul.f32 %v467, %v3065
      %v3081 = vmul.f32 %v467, %v3066
      %v3082 = vmul.f32 %v467, %v3067
      %v3083 = vmul.f32 %v467, %v3068
      %v3084 = vmul.f32 %v467, %v3069
      %v3085 = vmul.f32 %v467, %v3070
      %v3086 = vmul.f32 %v467, %v3071
      %v3087 = vmul.f32 %v467, %v3072
      %v3088 = vmul.f32 %v467, %v3073
      %v3089 = vmul.f32 %v467, %v3074
      %v3090 = vmul.f32 %v467, %v3075
      %v3091 = vmul.f32 %v467, %v3076
      %v3092 = vmul.f32 %v467, %v3077
      %v3093 = vadd.f32 %v3033, %v3078
      %v3094 = vadd.f32 %v3034, %v3079
      %v3095 = vadd.f32 %v3035, %v3080
      %v3096 = vadd.f32 %v3036, %v3081
      %v3097 = vadd.f32 %v3037, %v3082
      %v3098 = vadd.f32 %v3038, %v3083
      %v3099 = vadd.f32 %v3039, %v3084
      %v3100 = vadd.f32 %v3040, %v3085
      %v3101 = vadd.f32 %v3041, %v3086
      %v3102 = vadd.f32 %v3042, %v3087
      %v3103 = vadd.f32 %v3043, %v3088
      %v3104 = vadd.f32 %v3044, %v3089
      %v3105 = vadd.f32 %v3045, %v3090
      %v3106 = vadd.f32 %v3046, %v3091
      %v3107 = vadd.f32 %v3047, %v3092
      %v3108 = vpack.c.bf16 %v3094, %v3093
      %v3109 = vpack.c.bf16 %v3096, %v3095
      %v3110 = vpack.c.bf16 %v3098, %v3097
      %v3111 = vpack.c.bf16 %v3100, %v3099
      %v3112 = vpack.c.bf16 %v3102, %v3101
      %v3113 = vpack.c.bf16 %v3104, %v3103
      %v3114 = vpack.c.bf16 %v3106, %v3105
      %v3115 = vpack.c.bf16 %v3107, %v3107
      %v3116 = vld [vmem:[%s341] sm:$0xff]
      %v3117 = vld [vmem:[%s341 + $0x8] sm:$0xff]
      %v3118 = vld [vmem:[%s341 + $0x10] sm:$0xff]
      %v3119 = vld [vmem:[%s341 + $0x18] sm:$0xff]
      %v3120 = vld [vmem:[%s341 + $0x20] sm:$0xff]
      %v3121 = vld [vmem:[%s341 + $0x28] sm:$0xff]
      %v3122 = vld [vmem:[%s341 + $0x30] sm:$0xff]
      %v3123 = vld [vmem:[%s341 + $0x38] sm:$0xff]
      %v3124 = vld [vmem:[%s341 + $0x40] sm:$0xff]
      %v3125 = vld [vmem:[%s341 + $0x48] sm:$0xff]
      %v3126 = vld [vmem:[%s341 + $0x50] sm:$0xff]
      %v3127 = vld [vmem:[%s341 + $0x58] sm:$0xff]
      %v3128 = vld [vmem:[%s341 + $0x60] sm:$0xff]
      %v3129 = vld [vmem:[%s341 + $0x68] sm:$0xff]
      %v3130 = vld [vmem:[%s341 + $0x70] sm:$0x7f]
      %s3131 = scalar_lea.vmem %s6, 512
      %v3132 = vld [vmem:[%s3131] sm:$0xf]
      %v3133 = vld [vmem:[%s3131 + $0x4] sm:$0xf]
      %v3134 = vld [vmem:[%s3131 + $0x8] sm:$0xf]
      %v3135 = vld [vmem:[%s3131 + $0xc] sm:$0xf]
      %v3136 = vld [vmem:[%s3131 + $0x10] sm:$0xf]
      %v3137 = vld [vmem:[%s3131 + $0x14] sm:$0xf]
      %v3138 = vld [vmem:[%s3131 + $0x18] sm:$0xf]
      %v3139 = vld [vmem:[%s3131 + $0x1c] sm:$0xf]
      %v3140 = vld [vmem:[%s3131 + $0x20] sm:$0xf]
      %v3141 = vld [vmem:[%s3131 + $0x24] sm:$0xf]
      %v3142 = vld [vmem:[%s3131 + $0x28] sm:$0xf]
      %v3143 = vld [vmem:[%s3131 + $0x2c] sm:$0xf]
      %v3144 = vld [vmem:[%s3131 + $0x30] sm:$0xf]
      %v3145 = vld [vmem:[%s3131 + $0x34] sm:$0xf]
      %v3146 = vld [vmem:[%s3131 + $0x38] sm:$0xf]
      %v3147 = vld [vmem:[%s3131 + $0x3c] sm:$0xf]
      %v3164 = vunpack.c.l.b16 %v3132
      %v3165 = vunpack.c.l.b16 %v3133
      %v3166 = vunpack.c.l.b16 %v3134
      %v3167 = vunpack.c.l.b16 %v3135
      %v3168 = vunpack.c.l.b16 %v3136
      %v3169 = vunpack.c.l.b16 %v3137
      %v3170 = vunpack.c.l.b16 %v3138
      %v3171 = vunpack.c.l.b16 %v3139
      %v3172 = vunpack.c.l.b16 %v3140
      %v3173 = vunpack.c.l.b16 %v3141
      %v3174 = vunpack.c.l.b16 %v3142
      %v3175 = vunpack.c.l.b16 %v3143
      %v3176 = vunpack.c.l.b16 %v3144
      %v3177 = vunpack.c.l.b16 %v3145
      %v3178 = vunpack.c.l.b16 %v3146
      %v3179 = vunpack.c.l.b16 %v3147
      %v3180 = vpack.c.b16 %v3165, %v3164
      %v3181 = vpack.c.b16 %v3167, %v3166
      %v3182 = vpack.c.b16 %v3169, %v3168
      %v3183 = vpack.c.b16 %v3171, %v3170
      %v3184 = vpack.c.b16 %v3173, %v3172
      %v3185 = vpack.c.b16 %v3175, %v3174
      %v3186 = vpack.c.b16 %v3177, %v3176
      %v3187 = vpack.c.b16 %v3179, %v3178
      %3196 = vmatprep.subr.bf16.mxu0 0
      %3197 = vmatpush1.bf16.msra.mxu0 %v3180
      %3198 = vmatprep.subr.bf16.mxu0 0
      %3199 = vmatpush1.bf16.msra.mxu0 %v3181
      %3200 = vmatprep.subr.bf16.mxu0 0
      %3201 = vmatpush1.bf16.msra.mxu0 %v3182
      %3202 = vmatprep.subr.bf16.mxu0 0
      %3203 = vmatpush1.bf16.msra.mxu0 %v3183
      %3204 = vmatprep.subr.bf16.mxu0 0
      %3205 = vmatpush1.bf16.msra.mxu0 %v3184
      %3206 = vmatprep.subr.bf16.mxu0 0
      %3207 = vmatpush1.bf16.msra.mxu0 %v3185
      %3208 = vmatprep.subr.bf16.mxu0 0
      %3209 = vmatpush1.bf16.msra.mxu0 %v3186
      %3210 = vmatprep.subr.bf16.mxu0 0
      %3211 = vmatpush1.bf16.msra.mxu0 %v3187
      %3212 = vmatprep.subr.bf16.mxu0 0
      %3213 = vmatpush1.bf16.msra.mxu0 0
      %3214 = vmatprep.subr.bf16.mxu0 0
      %3215 = vmatpush1.bf16.msra.mxu0 0
      %3216 = vmatprep.subr.bf16.mxu0 0
      %3217 = vmatpush1.bf16.msra.mxu0 0
      %3218 = vmatprep.subr.bf16.mxu0 0
      %3219 = vmatpush1.bf16.msra.mxu0 0
      %3220 = vmatprep.subr.bf16.mxu0 0
      %3221 = vmatpush1.bf16.msra.mxu0 0
      %3222 = vmatprep.subr.bf16.mxu0 0
      %3223 = vmatpush1.bf16.msra.mxu0 0
      %3224 = vmatprep.subr.bf16.mxu0 0
      %3225 = vmatpush1.bf16.msra.mxu0 0
      %3226 = vmatprep.subr.bf16.mxu0 0
      %3227 = vmatpush1.bf16.msra.mxu0 0
      %3228 = vmatprep.mubr.bf16.mxu0 0
      %3229 = vmatmul.mubr.bf16.gmra.mrb[0].mxu0 %v3108
      %v3230 = vpop.f32.mrb[0].mxu0
      %v3231 = vadd.f32 0.0, %v3230
      %v3232 = vpop.f32.mrb[0].mxu0
      %v3233 = vpop.f32.mrb[0].mxu0
      %v3234 = vadd.f32 0.0, %v3233
      %v3235 = vpop.f32.mrb[0].mxu0
      %3236 = vmatprep.mubr.bf16.mxu0 0
      %3237 = vmatmul.mubr.bf16.gmra.mrb[0].mxu0 %v3109
      %v3238 = vpop.f32.mrb[0].mxu0
      %v3239 = vadd.f32 0.0, %v3238
      %v3240 = vpop.f32.mrb[0].mxu0
      %v3241 = vpop.f32.mrb[0].mxu0
      %v3242 = vadd.f32 0.0, %v3241
      %v3243 = vpop.f32.mrb[0].mxu0
      %3244 = vmatprep.mubr.bf16.mxu0 0
      %3245 = vmatmul.mubr.bf16.gmra.mrb[0].mxu0 %v3110
      %v3246 = vpop.f32.mrb[0].mxu0
      %v3247 = vadd.f32 0.0, %v3246
      %v3248 = vpop.f32.mrb[0].mxu0
      %v3249 = vpop.f32.mrb[0].mxu0
      %v3250 = vadd.f32 0.0, %v3249
      %v3251 = vpop.f32.mrb[0].mxu0
      %3252 = vmatprep.mubr.bf16.mxu0 0
      %3253 = vmatmul.mubr.bf16.gmra.mrb[0].mxu0 %v3111
      %v3254 = vpop.f32.mrb[0].mxu0
      %v3255 = vadd.f32 0.0, %v3254
      %v3256 = vpop.f32.mrb[0].mxu0
      %v3257 = vpop.f32.mrb[0].mxu0
      %v3258 = vadd.f32 0.0, %v3257
      %v3259 = vpop.f32.mrb[0].mxu0
      %3260 = vmatprep.mubr.bf16.mxu0 0
      %3261 = vmatmul.mubr.bf16.gmra.mrb[0].mxu0 %v3112
      %v3262 = vpop.f32.mrb[0].mxu0
      %v3263 = vadd.f32 0.0, %v3262
      %v3264 = vpop.f32.mrb[0].mxu0
      %v3265 = vpop.f32.mrb[0].mxu0
      %v3266 = vadd.f32 0.0, %v3265
      %v3267 = vpop.f32.mrb[0].mxu0
      %3268 = vmatprep.mubr.bf16.mxu0 0
      %3269 = vmatmul.mubr.bf16.gmra.mrb[0].mxu0 %v3113
      %v3270 = vpop.f32.mrb[0].mxu0
      %v3271 = vadd.f32 0.0, %v3270
      %v3272 = vpop.f32.mrb[0].mxu0
      %v3273 = vpop.f32.mrb[0].mxu0
      %v3274 = vadd.f32 0.0, %v3273
      %v3275 = vpop.f32.mrb[0].mxu0
      %3276 = vmatprep.mubr.bf16.mxu0 0
      %3277 = vmatmul.mubr.bf16.gmra.mrb[0].mxu0 %v3114
      %v3278 = vpop.f32.mrb[0].mxu0
      %v3279 = vadd.f32 0.0, %v3278
      %v3280 = vpop.f32.mrb[0].mxu0
      %v3281 = vpop.f32.mrb[0].mxu0
      %v3282 = vadd.f32 0.0, %v3281
      %v3283 = vpop.f32.mrb[0].mxu0
      %3284 = vmatprep.mubr.bf16.mxu0 0
      %3285 = vmatmul.mubr.bf16.gmra.mrb[0].mxu0 %v3115
      %v3286 = vpop.f32.mrb[0].mxu0
      %v3287 = vadd.f32 0.0, %v3286
      %v3288 = vpop.f32.mrb[0].mxu0
      %v3289 = vpop.f32.mrb[0].mxu0
      %v3290 = vpop.f32.mrb[0].mxu0
      %3291 = vdwg.mxu0
      %v3292 = vadd.f32 %v3116, %v3231
      %v3293 = vadd.f32 %v3117, %v3234
      %v3294 = vadd.f32 %v3118, %v3239
      %v3295 = vadd.f32 %v3119, %v3242
      %v3296 = vadd.f32 %v3120, %v3247
      %v3297 = vadd.f32 %v3121, %v3250
      %v3298 = vadd.f32 %v3122, %v3255
      %v3299 = vadd.f32 %v3123, %v3258
      %v3300 = vadd.f32 %v3124, %v3263
      %v3301 = vadd.f32 %v3125, %v3266
      %v3302 = vadd.f32 %v3126, %v3271
      %v3303 = vadd.f32 %v3127, %v3274
      %v3304 = vadd.f32 %v3128, %v3279
      %v3305 = vadd.f32 %v3129, %v3282
      %v3306 = vadd.f32 %v3130, %v3287
      %3307 = vst [vmem:[%s341] sm:$0xff] %v3292
      %3308 = vst [vmem:[%s341 + $0x8] sm:$0xff] %v3293
      %3309 = vst [vmem:[%s341 + $0x10] sm:$0xff] %v3294
      %3310 = vst [vmem:[%s341 + $0x18] sm:$0xff] %v3295
      %3311 = vst [vmem:[%s341 + $0x20] sm:$0xff] %v3296
      %3312 = vst [vmem:[%s341 + $0x28] sm:$0xff] %v3297
      %3313 = vst [vmem:[%s341 + $0x30] sm:$0xff] %v3298
      %3314 = vst [vmem:[%s341 + $0x38] sm:$0xff] %v3299
      %3315 = vst [vmem:[%s341 + $0x40] sm:$0xff] %v3300
      %3316 = vst [vmem:[%s341 + $0x48] sm:$0xff] %v3301
      %3317 = vst [vmem:[%s341 + $0x50] sm:$0xff] %v3302
      %3318 = vst [vmem:[%s341 + $0x58] sm:$0xff] %v3303
      %3319 = vst [vmem:[%s341 + $0x60] sm:$0xff] %v3304
      %3320 = vst [vmem:[%s341 + $0x68] sm:$0xff] %v3305
      %3321 = vst [vmem:[%s341 + $0x70] sm:$0x7f] %v3306
      %v3322 = vld [vmem:[%s335 + $0x22] sm:$0xff]
      %v3323 = vld [vmem:[%s335 + $0x2a] sm:$0xff]
      %v3324 = vld [vmem:[%s335 + $0x32] sm:$0xff]
      %v3325 = vld [vmem:[%s335 + $0x3a] sm:$0xff]
      %v3326 = vld [vmem:[%s335 + $0x42] sm:$0xff]
      %v3327 = vld [vmem:[%s335 + $0x4a] sm:$0xff]
      %v3328 = vld [vmem:[%s335 + $0x52] sm:$0xff]
      %v3329 = vld [vmem:[%s335 + $0x5a] sm:$0xff]
      %v3330 = vld [vmem:[%s335 + $0x62] sm:$0xff]
      %v3331 = vld [vmem:[%s335 + $0x6a] sm:$0xff]
      %v3332 = vld [vmem:[%s335 + $0x72] sm:$0xff]
      %v3333 = vld [vmem:[%s335 + $0x7a] sm:$0xff]
      %v3334 = vld [vmem:[%s335 + $0x82] sm:$0x3f]
      %v3335 = vmul.f32 %v3322, %v395
      %v3336 = vmul.f32 %v3323, %v395
      %v3337 = vmul.f32 %v3324, %v395
      %v3338 = vmul.f32 %v3325, %v395
      %v3339 = vmul.f32 %v3326, %v395
      %v3340 = vmul.f32 %v3327, %v395
      %v3341 = vmul.f32 %v3328, %v395
      %v3342 = vmul.f32 %v3329, %v395
      %v3343 = vmul.f32 %v3330, %v395
      %v3344 = vmul.f32 %v3331, %v395
      %v3345 = vmul.f32 %v3332, %v395
      %v3346 = vmul.f32 %v3333, %v395
      %v3347 = vmul.f32 %v3334, %v395
      %v3348 = vadd.f32 %v3335, %v416
      %v3349 = vadd.f32 %v3336, %v416
      %v3350 = vadd.f32 %v3337, %v416
      %v3351 = vadd.f32 %v3338, %v416
      %v3352 = vadd.f32 %v3339, %v416
      %v3353 = vadd.f32 %v3340, %v416
      %v3354 = vadd.f32 %v3341, %v416
      %v3355 = vadd.f32 %v3342, %v416
      %v3356 = vadd.f32 %v3343, %v416
      %v3357 = vadd.f32 %v3344, %v416
      %v3358 = vadd.f32 %v3345, %v416
      %v3359 = vadd.f32 %v3346, %v416
      %v3360 = vadd.f32 %v3347, %v416
      %v3361 = vmax.f32 %v3348, 0.0
      %v3362 = vmax.f32 %v3349, 0.0
      %v3363 = vmax.f32 %v3350, 0.0
      %v3364 = vmax.f32 %v3351, 0.0
      %v3365 = vmax.f32 %v3352, 0.0
      %v3366 = vmax.f32 %v3353, 0.0
      %v3367 = vmax.f32 %v3354, 0.0
      %v3368 = vmax.f32 %v3355, 0.0
      %v3369 = vmax.f32 %v3356, 0.0
      %v3370 = vmax.f32 %v3357, 0.0
      %v3371 = vmax.f32 %v3358, 0.0
      %v3372 = vmax.f32 %v3359, 0.0
      %v3373 = vmax.f32 %v3360, 0.0
      %v3374 = vsub.f32 %v3361, %v3348
      %v3375 = vsub.f32 %v3362, %v3349
      %v3376 = vsub.f32 %v3363, %v3350
      %v3377 = vsub.f32 %v3364, %v3351
      %v3378 = vsub.f32 %v3365, %v3352
      %v3379 = vsub.f32 %v3366, %v3353
      %v3380 = vsub.f32 %v3367, %v3354
      %v3381 = vsub.f32 %v3368, %v3355
      %v3382 = vsub.f32 %v3369, %v3356
      %v3383 = vsub.f32 %v3370, %v3357
      %v3384 = vsub.f32 %v3371, %v3358
      %v3385 = vsub.f32 %v3372, %v3359
      %v3386 = vsub.f32 %v3373, %v3360
      %v3387 = vmul.f32 %v467, %v3374
      %v3388 = vmul.f32 %v467, %v3375
      %v3389 = vmul.f32 %v467, %v3376
      %v3390 = vmul.f32 %v467, %v3377
      %v3391 = vmul.f32 %v467, %v3378
      %v3392 = vmul.f32 %v467, %v3379
      %v3393 = vmul.f32 %v467, %v3380
      %v3394 = vmul.f32 %v467, %v3381
      %v3395 = vmul.f32 %v467, %v3382
      %v3396 = vmul.f32 %v467, %v3383
      %v3397 = vmul.f32 %v467, %v3384
      %v3398 = vmul.f32 %v467, %v3385
      %v3399 = vmul.f32 %v467, %v3386
      %v3400 = vadd.f32 %v3348, %v3387
      %v3401 = vadd.f32 %v3349, %v3388
      %v3402 = vadd.f32 %v3350, %v3389
      %v3403 = vadd.f32 %v3351, %v3390
      %v3404 = vadd.f32 %v3352, %v3391
      %v3405 = vadd.f32 %v3353, %v3392
      %v3406 = vadd.f32 %v3354, %v3393
      %v3407 = vadd.f32 %v3355, %v3394
      %v3408 = vadd.f32 %v3356, %v3395
      %v3409 = vadd.f32 %v3357, %v3396
      %v3410 = vadd.f32 %v3358, %v3397
      %v3411 = vadd.f32 %v3359, %v3398
      %v3412 = vadd.f32 %v3360, %v3399
      %v3413 = vpack.c.bf16 %v3401, %v3400
      %v3414 = vpack.c.bf16 %v3403, %v3402
      %v3415 = vpack.c.bf16 %v3405, %v3404
      %v3416 = vpack.c.bf16 %v3407, %v3406
      %v3417 = vpack.c.bf16 %v3409, %v3408
      %v3418 = vpack.c.bf16 %v3411, %v3410
      %v3419 = vpack.c.bf16 %v3412, %v3412
      %v3420 = vld [vmem:[%s341] sm:$0xff]
      %v3421 = vld [vmem:[%s341 + $0x8] sm:$0xff]
      %v3422 = vld [vmem:[%s341 + $0x10] sm:$0xff]
      %v3423 = vld [vmem:[%s341 + $0x18] sm:$0xff]
      %v3424 = vld [vmem:[%s341 + $0x20] sm:$0xff]
      %v3425 = vld [vmem:[%s341 + $0x28] sm:$0xff]
      %v3426 = vld [vmem:[%s341 + $0x30] sm:$0xff]
      %v3427 = vld [vmem:[%s341 + $0x38] sm:$0xff]
      %v3428 = vld [vmem:[%s341 + $0x40] sm:$0xff]
      %v3429 = vld [vmem:[%s341 + $0x48] sm:$0xff]
      %v3430 = vld [vmem:[%s341 + $0x50] sm:$0xff]
      %v3431 = vld [vmem:[%s341 + $0x58] sm:$0xff]
      %v3432 = vld [vmem:[%s341 + $0x60] sm:$0x3f]
      %s3433 = scalar_lea.vmem %s6, 576
      %v3434 = vld [vmem:[%s3433] sm:$0xf]
      %v3435 = vld [vmem:[%s3433 + $0x4] sm:$0xf]
      %v3436 = vld [vmem:[%s3433 + $0x8] sm:$0xf]
      %v3437 = vld [vmem:[%s3433 + $0xc] sm:$0xf]
      %v3438 = vld [vmem:[%s3433 + $0x10] sm:$0xf]
      %v3439 = vld [vmem:[%s3433 + $0x14] sm:$0xf]
      %v3440 = vld [vmem:[%s3433 + $0x18] sm:$0xf]
      %v3441 = vld [vmem:[%s3433 + $0x1c] sm:$0xf]
      %v3442 = vld [vmem:[%s3433 + $0x20] sm:$0xf]
      %v3443 = vld [vmem:[%s3433 + $0x24] sm:$0xf]
      %v3444 = vld [vmem:[%s3433 + $0x28] sm:$0xf]
      %v3445 = vld [vmem:[%s3433 + $0x2c] sm:$0xf]
      %v3446 = vld [vmem:[%s3433 + $0x30] sm:$0xf]
      %v3447 = vld [vmem:[%s3433 + $0x34] sm:$0xf]
      %v3448 = vld [vmem:[%s3433 + $0x38] sm:$0xf]
      %v3449 = vld [vmem:[%s3433 + $0x3c] sm:$0xf]
      %v3466 = vunpack.c.l.b16 %v3434
      %v3467 = vunpack.c.l.b16 %v3435
      %v3468 = vunpack.c.l.b16 %v3436
      %v3469 = vunpack.c.l.b16 %v3437
      %v3470 = vunpack.c.l.b16 %v3438
      %v3471 = vunpack.c.l.b16 %v3439
      %v3472 = vunpack.c.l.b16 %v3440
      %v3473 = vunpack.c.l.b16 %v3441
      %v3474 = vunpack.c.l.b16 %v3442
      %v3475 = vunpack.c.l.b16 %v3443
      %v3476 = vunpack.c.l.b16 %v3444
      %v3477 = vunpack.c.l.b16 %v3445
      %v3478 = vunpack.c.l.b16 %v3446
      %v3479 = vunpack.c.l.b16 %v3447
      %v3480 = vunpack.c.l.b16 %v3448
      %v3481 = vunpack.c.l.b16 %v3449
      %v3482 = vpack.c.b16 %v3467, %v3466
      %v3483 = vpack.c.b16 %v3469, %v3468
      %v3484 = vpack.c.b16 %v3471, %v3470
      %v3485 = vpack.c.b16 %v3473, %v3472
      %v3486 = vpack.c.b16 %v3475, %v3474
      %v3487 = vpack.c.b16 %v3477, %v3476
      %v3488 = vpack.c.b16 %v3479, %v3478
      %v3489 = vpack.c.b16 %v3481, %v3480
      %3498 = vmatprep.subr.bf16.mxu0 0
      %3499 = vmatpush1.bf16.msra.mxu0 %v3482
      %3500 = vmatprep.subr.bf16.mxu0 0
      %3501 = vmatpush1.bf16.msra.mxu0 %v3483
      %3502 = vmatprep.subr.bf16.mxu0 0
      %3503 = vmatpush1.bf16.msra.mxu0 %v3484
      %3504 = vmatprep.subr.bf16.mxu0 0
      %3505 = vmatpush1.bf16.msra.mxu0 %v3485
      %3506 = vmatprep.subr.bf16.mxu0 0
      %3507 = vmatpush1.bf16.msra.mxu0 %v3486
      %3508 = vmatprep.subr.bf16.mxu0 0
      %3509 = vmatpush1.bf16.msra.mxu0 %v3487
      %3510 = vmatprep.subr.bf16.mxu0 0
      %3511 = vmatpush1.bf16.msra.mxu0 %v3488
      %3512 = vmatprep.subr.bf16.mxu0 0
      %3513 = vmatpush1.bf16.msra.mxu0 %v3489
      %3514 = vmatprep.subr.bf16.mxu0 0
      %3515 = vmatpush1.bf16.msra.mxu0 0
      %3516 = vmatprep.subr.bf16.mxu0 0
      %3517 = vmatpush1.bf16.msra.mxu0 0
      %3518 = vmatprep.subr.bf16.mxu0 0
      %3519 = vmatpush1.bf16.msra.mxu0 0
      %3520 = vmatprep.subr.bf16.mxu0 0
      %3521 = vmatpush1.bf16.msra.mxu0 0
      %3522 = vmatprep.subr.bf16.mxu0 0
      %3523 = vmatpush1.bf16.msra.mxu0 0
      %3524 = vmatprep.subr.bf16.mxu0 0
      %3525 = vmatpush1.bf16.msra.mxu0 0
      %3526 = vmatprep.subr.bf16.mxu0 0
      %3527 = vmatpush1.bf16.msra.mxu0 0
      %3528 = vmatprep.subr.bf16.mxu0 0
      %3529 = vmatpush1.bf16.msra.mxu0 0
      %3530 = vmatprep.mubr.bf16.mxu0 0
      %3531 = vmatmul.mubr.bf16.gmra.mrb[0].mxu0 %v3413
      %v3532 = vpop.f32.mrb[0].mxu0
      %v3533 = vadd.f32 0.0, %v3532
      %v3534 = vpop.f32.mrb[0].mxu0
      %v3535 = vpop.f32.mrb[0].mxu0
      %v3536 = vadd.f32 0.0, %v3535
      %v3537 = vpop.f32.mrb[0].mxu0
      %3538 = vmatprep.mubr.bf16.mxu0 0
      %3539 = vmatmul.mubr.bf16.gmra.mrb[0].mxu0 %v3414
      %v3540 = vpop.f32.mrb[0].mxu0
      %v3541 = vadd.f32 0.0, %v3540
      %v3542 = vpop.f32.mrb[0].mxu0
      %v3543 = vpop.f32.mrb[0].mxu0
      %v3544 = vadd.f32 0.0, %v3543
      %v3545 = vpop.f32.mrb[0].mxu0
      %3546 = vmatprep.mubr.bf16.mxu0 0
      %3547 = vmatmul.mubr.bf16.gmra.mrb[0].mxu0 %v3415
      %v3548 = vpop.f32.mrb[0].mxu0
      %v3549 = vadd.f32 0.0, %v3548
      %v3550 = vpop.f32.mrb[0].mxu0
      %v3551 = vpop.f32.mrb[0].mxu0
      %v3552 = vadd.f32 0.0, %v3551
      %v3553 = vpop.f32.mrb[0].mxu0
      %3554 = vmatprep.mubr.bf16.mxu0 0
      %3555 = vmatmul.mubr.bf16.gmra.mrb[0].mxu0 %v3416
      %v3556 = vpop.f32.mrb[0].mxu0
      %v3557 = vadd.f32 0.0, %v3556
      %v3558 = vpop.f32.mrb[0].mxu0
      %v3559 = vpop.f32.mrb[0].mxu0
      %v3560 = vadd.f32 0.0, %v3559
      %v3561 = vpop.f32.mrb[0].mxu0
      %3562 = vmatprep.mubr.bf16.mxu0 0
      %3563 = vmatmul.mubr.bf16.gmra.mrb[0].mxu0 %v3417
      %v3564 = vpop.f32.mrb[0].mxu0
      %v3565 = vadd.f32 0.0, %v3564
      %v3566 = vpop.f32.mrb[0].mxu0
      %v3567 = vpop.f32.mrb[0].mxu0
      %v3568 = vadd.f32 0.0, %v3567
      %v3569 = vpop.f32.mrb[0].mxu0
      %3570 = vmatprep.mubr.bf16.mxu0 0
      %3571 = vmatmul.mubr.bf16.gmra.mrb[0].mxu0 %v3418
      %v3572 = vpop.f32.mrb[0].mxu0
      %v3573 = vadd.f32 0.0, %v3572
      %v3574 = vpop.f32.mrb[0].mxu0
      %v3575 = vpop.f32.mrb[0].mxu0
      %v3576 = vadd.f32 0.0, %v3575
      %v3577 = vpop.f32.mrb[0].mxu0
      %3578 = vmatprep.mubr.bf16.mxu0 0
      %3579 = vmatmul.mubr.bf16.gmra.mrb[0].mxu0 %v3419
      %v3580 = vpop.f32.mrb[0].mxu0
      %v3581 = vadd.f32 0.0, %v3580
      %v3582 = vpop.f32.mrb[0].mxu0
      %v3583 = vpop.f32.mrb[0].mxu0
      %v3584 = vpop.f32.mrb[0].mxu0
      %3585 = vdwg.mxu0
      %v3586 = vadd.f32 %v3420, %v3533
      %v3587 = vadd.f32 %v3421, %v3536
      %v3588 = vadd.f32 %v3422, %v3541
      %v3589 = vadd.f32 %v3423, %v3544
      %v3590 = vadd.f32 %v3424, %v3549
      %v3591 = vadd.f32 %v3425, %v3552
      %v3592 = vadd.f32 %v3426, %v3557
      %v3593 = vadd.f32 %v3427, %v3560
      %v3594 = vadd.f32 %v3428, %v3565
      %v3595 = vadd.f32 %v3429, %v3568
      %v3596 = vadd.f32 %v3430, %v3573
      %v3597 = vadd.f32 %v3431, %v3576
      %v3598 = vadd.f32 %v3432, %v3581
      %3599 = vst [vmem:[%s341] sm:$0xff] %v3586
      %3600 = vst [vmem:[%s341 + $0x8] sm:$0xff] %v3587
      %3601 = vst [vmem:[%s341 + $0x10] sm:$0xff] %v3588
      %3602 = vst [vmem:[%s341 + $0x18] sm:$0xff] %v3589
      %3603 = vst [vmem:[%s341 + $0x20] sm:$0xff] %v3590
      %3604 = vst [vmem:[%s341 + $0x28] sm:$0xff] %v3591
      %3605 = vst [vmem:[%s341 + $0x30] sm:$0xff] %v3592
      %3606 = vst [vmem:[%s341 + $0x38] sm:$0xff] %v3593
      %3607 = vst [vmem:[%s341 + $0x40] sm:$0xff] %v3594
      %3608 = vst [vmem:[%s341 + $0x48] sm:$0xff] %v3595
      %3609 = vst [vmem:[%s341 + $0x50] sm:$0xff] %v3596
      %3610 = vst [vmem:[%s341 + $0x58] sm:$0xff] %v3597
      %3611 = vst [vmem:[%s341 + $0x60] sm:$0x3f] %v3598
      %v3612 = vld [vmem:[%s4] sm:$0x1]
      %v3613 = vld [vmem:[%s5] sm:$0x1]
      %v3614 = vld [vmem:[%s335] sm:$0xff]
      %v3615 = vld [vmem:[%s335 + $0x8] sm:$0xff]
      %v3616 = vld [vmem:[%s335 + $0x10] sm:$0xff]
      %v3617 = vld [vmem:[%s335 + $0x18] sm:$0xff]
      %v3618 = vld [vmem:[%s335 + $0x20] sm:$0xff]
      %v3619 = vld [vmem:[%s335 + $0x28] sm:$0xff]
      %v3620 = vld [vmem:[%s335 + $0x30] sm:$0xff]
      %v3621 = vld [vmem:[%s335 + $0x38] sm:$0xff]
      %v3622 = vld [vmem:[%s335 + $0x40] sm:$0xff]
      %v3623 = vld [vmem:[%s335 + $0x48] sm:$0xff]
      %v3624 = vld [vmem:[%s335 + $0x50] sm:$0xff]
      %v3625 = vld [vmem:[%s335 + $0x58] sm:$0xff]
      %v3626 = vld [vmem:[%s335 + $0x60] sm:$0xff]
      %v3627 = vld [vmem:[%s335 + $0x68] sm:$0xff]
      %v3628 = vld [vmem:[%s335 + $0x70] sm:$0xff]
      %v3629 = vld [vmem:[%s335 + $0x78] sm:$0xff]
      %v3630 = vld [vmem:[%s335 + $0x80] sm:$0xff]
      %v3631 = vmul.f32 %v3614, %v395
      %v3632 = vmul.f32 %v3615, %v395
      %v3633 = vmul.f32 %v3616, %v395
      %v3634 = vmul.f32 %v3617, %v395
      %v3635 = vmul.f32 %v3618, %v395
      %v3636 = vmul.f32 %v3619, %v395
      %v3637 = vmul.f32 %v3620, %v395
      %v3638 = vmul.f32 %v3621, %v395
      %v3639 = vmul.f32 %v3622, %v395
      %v3640 = vmul.f32 %v3623, %v395
      %v3641 = vmul.f32 %v3624, %v395
      %v3642 = vmul.f32 %v3625, %v395
      %v3643 = vmul.f32 %v3626, %v395
      %v3644 = vmul.f32 %v3627, %v395
      %v3645 = vmul.f32 %v3628, %v395
      %v3646 = vmul.f32 %v3629, %v395
      %v3647 = vmul.f32 %v3630, %v395
      %v3648 = vadd.f32 %v3631, %v416
      %v3649 = vadd.f32 %v3632, %v416
      %v3650 = vadd.f32 %v3633, %v416
      %v3651 = vadd.f32 %v3634, %v416
      %v3652 = vadd.f32 %v3635, %v416
      %v3653 = vadd.f32 %v3636, %v416
      %v3654 = vadd.f32 %v3637, %v416
      %v3655 = vadd.f32 %v3638, %v416
      %v3656 = vadd.f32 %v3639, %v416
      %v3657 = vadd.f32 %v3640, %v416
      %v3658 = vadd.f32 %v3641, %v416
      %v3659 = vadd.f32 %v3642, %v416
      %v3660 = vadd.f32 %v3643, %v416
      %v3661 = vadd.f32 %v3644, %v416
      %v3662 = vadd.f32 %v3645, %v416
      %v3663 = vadd.f32 %v3646, %v416
      %v3664 = vadd.f32 %v3647, %v416
      %v3665 = vmax.f32 %v3648, 0.0
      %v3666 = vmax.f32 %v3649, 0.0
      %v3667 = vmax.f32 %v3650, 0.0
      %v3668 = vmax.f32 %v3651, 0.0
      %v3669 = vmax.f32 %v3652, 0.0
      %v3670 = vmax.f32 %v3653, 0.0
      %v3671 = vmax.f32 %v3654, 0.0
      %v3672 = vmax.f32 %v3655, 0.0
      %v3673 = vmax.f32 %v3656, 0.0
      %v3674 = vmax.f32 %v3657, 0.0
      %v3675 = vmax.f32 %v3658, 0.0
      %v3676 = vmax.f32 %v3659, 0.0
      %v3677 = vmax.f32 %v3660, 0.0
      %v3678 = vmax.f32 %v3661, 0.0
      %v3679 = vmax.f32 %v3662, 0.0
      %v3680 = vmax.f32 %v3663, 0.0
      %v3681 = vmax.f32 %v3664, 0.0
      %v3682 = vsub.f32 %v3665, %v3648
      %v3683 = vsub.f32 %v3666, %v3649
      %v3684 = vsub.f32 %v3667, %v3650
      %v3685 = vsub.f32 %v3668, %v3651
      %v3686 = vsub.f32 %v3669, %v3652
      %v3687 = vsub.f32 %v3670, %v3653
      %v3688 = vsub.f32 %v3671, %v3654
      %v3689 = vsub.f32 %v3672, %v3655
      %v3690 = vsub.f32 %v3673, %v3656
      %v3691 = vsub.f32 %v3674, %v3657
      %v3692 = vsub.f32 %v3675, %v3658
      %v3693 = vsub.f32 %v3676, %v3659
      %v3694 = vsub.f32 %v3677, %v3660
      %v3695 = vsub.f32 %v3678, %v3661
      %v3696 = vsub.f32 %v3679, %v3662
      %v3697 = vsub.f32 %v3680, %v3663
      %v3698 = vsub.f32 %v3681, %v3664
      %v3699 = vmul.f32 %v467, %v3682
      %v3700 = vmul.f32 %v467, %v3683
      %v3701 = vmul.f32 %v467, %v3684
      %v3702 = vmul.f32 %v467, %v3685
      %v3703 = vmul.f32 %v467, %v3686
      %v3704 = vmul.f32 %v467, %v3687
      %v3705 = vmul.f32 %v467, %v3688
      %v3706 = vmul.f32 %v467, %v3689
      %v3707 = vmul.f32 %v467, %v3690
      %v3708 = vmul.f32 %v467, %v3691
      %v3709 = vmul.f32 %v467, %v3692
      %v3710 = vmul.f32 %v467, %v3693
      %v3711 = vmul.f32 %v467, %v3694
      %v3712 = vmul.f32 %v467, %v3695
      %v3713 = vmul.f32 %v467, %v3696
      %v3714 = vmul.f32 %v467, %v3697
      %v3715 = vmul.f32 %v467, %v3698
      %v3716 = vadd.f32 %v3648, %v3699
      %v3717 = vadd.f32 %v3649, %v3700
      %v3718 = vadd.f32 %v3650, %v3701
      %v3719 = vadd.f32 %v3651, %v3702
      %v3720 = vadd.f32 %v3652, %v3703
      %v3721 = vadd.f32 %v3653, %v3704
      %v3722 = vadd.f32 %v3654, %v3705
      %v3723 = vadd.f32 %v3655, %v3706
      %v3724 = vadd.f32 %v3656, %v3707
      %v3725 = vadd.f32 %v3657, %v3708
      %v3726 = vadd.f32 %v3658, %v3709
      %v3727 = vadd.f32 %v3659, %v3710
      %v3728 = vadd.f32 %v3660, %v3711
      %v3729 = vadd.f32 %v3661, %v3712
      %v3730 = vadd.f32 %v3662, %v3713
      %v3731 = vadd.f32 %v3663, %v3714
      %v3732 = vadd.f32 %v3664, %v3715
      %v3733 = vld [vmem:[%s341] sm:$0xff]
      %v3734 = vld [vmem:[%s341 + $0x8] sm:$0xff]
      %v3735 = vld [vmem:[%s341 + $0x10] sm:$0xff]
      %v3736 = vld [vmem:[%s341 + $0x18] sm:$0xff]
      %v3737 = vld [vmem:[%s341 + $0x20] sm:$0xff]
      %v3738 = vld [vmem:[%s341 + $0x28] sm:$0xff]
      %v3739 = vld [vmem:[%s341 + $0x30] sm:$0xff]
      %v3740 = vld [vmem:[%s341 + $0x38] sm:$0xff]
      %v3741 = vld [vmem:[%s341 + $0x40] sm:$0xff]
      %v3742 = vld [vmem:[%s341 + $0x48] sm:$0xff]
      %v3743 = vld [vmem:[%s341 + $0x50] sm:$0xff]
      %v3744 = vld [vmem:[%s341 + $0x58] sm:$0xff]
      %v3745 = vld [vmem:[%s341 + $0x60] sm:$0xff]
      %v3746 = vld [vmem:[%s341 + $0x68] sm:$0xff]
      %v3747 = vld [vmem:[%s341 + $0x70] sm:$0xff]
      %v3748 = vld [vmem:[%s341 + $0x78] sm:$0xff]
      %v3749 = vld [vmem:[%s341 + $0x80] sm:$0xff]
      %v3750 = vadd.f32 %v3612, %v3613
      %v3752 = vlaneseq
      %v3753 = vshrl.u32 %v3752, 7
      %v3754 = vsub.s32 0, %v3753
      %v3755 = vrot.slane %v3750, %v3754
      %v3757 = vmul.f32 %v3716, %v3755
      %v3758 = vmul.f32 %v3717, %v3755
      %v3759 = vmul.f32 %v3718, %v3755
      %v3760 = vmul.f32 %v3719, %v3755
      %v3761 = vmul.f32 %v3720, %v3755
      %v3762 = vmul.f32 %v3721, %v3755
      %v3763 = vmul.f32 %v3722, %v3755
      %v3764 = vmul.f32 %v3723, %v3755
      %v3765 = vmul.f32 %v3724, %v3755
      %v3766 = vmul.f32 %v3725, %v3755
      %v3767 = vmul.f32 %v3726, %v3755
      %v3768 = vmul.f32 %v3727, %v3755
      %v3769 = vmul.f32 %v3728, %v3755
      %v3770 = vmul.f32 %v3729, %v3755
      %v3771 = vmul.f32 %v3730, %v3755
      %v3772 = vmul.f32 %v3731, %v3755
      %v3773 = vmul.f32 %v3732, %v3755
      %v3774 = vadd.f32 %v3733, %v3757
      %v3775 = vadd.f32 %v3734, %v3758
      %v3776 = vadd.f32 %v3735, %v3759
      %v3777 = vadd.f32 %v3736, %v3760
      %v3778 = vadd.f32 %v3737, %v3761
      %v3779 = vadd.f32 %v3738, %v3762
      %v3780 = vadd.f32 %v3739, %v3763
      %v3781 = vadd.f32 %v3740, %v3764
      %v3782 = vadd.f32 %v3741, %v3765
      %v3783 = vadd.f32 %v3742, %v3766
      %v3784 = vadd.f32 %v3743, %v3767
      %v3785 = vadd.f32 %v3744, %v3768
      %v3786 = vadd.f32 %v3745, %v3769
      %v3787 = vadd.f32 %v3746, %v3770
      %v3788 = vadd.f32 %v3747, %v3771
      %v3789 = vadd.f32 %v3748, %v3772
      %v3790 = vadd.f32 %v3749, %v3773
      %3791 = vst [vmem:[%s341] sm:$0xff] %v3774
      %3792 = vst [vmem:[%s341 + $0x8] sm:$0xff] %v3775
      %3793 = vst [vmem:[%s341 + $0x10] sm:$0xff] %v3776
      %3794 = vst [vmem:[%s341 + $0x18] sm:$0xff] %v3777
      %3795 = vst [vmem:[%s341 + $0x20] sm:$0xff] %v3778
      %3796 = vst [vmem:[%s341 + $0x28] sm:$0xff] %v3779
      %3797 = vst [vmem:[%s341 + $0x30] sm:$0xff] %v3780
      %3798 = vst [vmem:[%s341 + $0x38] sm:$0xff] %v3781
      %3799 = vst [vmem:[%s341 + $0x40] sm:$0xff] %v3782
      %3800 = vst [vmem:[%s341 + $0x48] sm:$0xff] %v3783
      %3801 = vst [vmem:[%s341 + $0x50] sm:$0xff] %v3784
      %3802 = vst [vmem:[%s341 + $0x58] sm:$0xff] %v3785
      %3803 = vst [vmem:[%s341 + $0x60] sm:$0xff] %v3786
      %3804 = vst [vmem:[%s341 + $0x68] sm:$0xff] %v3787
      %3805 = vst [vmem:[%s341 + $0x70] sm:$0xff] %v3788
      %3806 = vst [vmem:[%s341 + $0x78] sm:$0xff] %v3789
      %3807 = vst [vmem:[%s341 + $0x80] sm:$0xff] %v3790
      %v3808 = vld [vmem:[%s335 + $0x88] sm:$0xff]
      %v3809 = vld [vmem:[%s335 + $0x90] sm:$0xff]
      %v3810 = vld [vmem:[%s335 + $0x98] sm:$0xff]
      %v3811 = vld [vmem:[%s335 + $0xa0] sm:$0xff]
      %v3812 = vld [vmem:[%s335 + $0xa8] sm:$0xff]
      %v3813 = vld [vmem:[%s335 + $0xb0] sm:$0xff]
      %v3814 = vld [vmem:[%s335 + $0xb8] sm:$0xff]
      %v3815 = vld [vmem:[%s335 + $0xc0] sm:$0xff]
      %v3816 = vld [vmem:[%s335 + $0xc8] sm:$0xff]
      %v3817 = vld [vmem:[%s335 + $0xd0] sm:$0xff]
      %v3818 = vld [vmem:[%s335 + $0xd8] sm:$0xff]
      %v3819 = vld [vmem:[%s335 + $0xe0] sm:$0xff]
      %v3820 = vld [vmem:[%s335 + $0xe8] sm:$0xff]
      %v3821 = vld [vmem:[%s335 + $0xf0] sm:$0xff]
      %v3822 = vld [vmem:[%s335 + $0xf8] sm:$0x7f]
      %v3823 = vmul.f32 %v3808, %v395
      %v3824 = vmul.f32 %v3809, %v395
      %v3825 = vmul.f32 %v3810, %v395
      %v3826 = vmul.f32 %v3811, %v395
      %v3827 = vmul.f32 %v3812, %v395
      %v3828 = vmul.f32 %v3813, %v395
      %v3829 = vmul.f32 %v3814, %v395
      %v3830 = vmul.f32 %v3815, %v395
      %v3831 = vmul.f32 %v3816, %v395
      %v3832 = vmul.f32 %v3817, %v395
      %v3833 = vmul.f32 %v3818, %v395
      %v3834 = vmul.f32 %v3819, %v395
      %v3835 = vmul.f32 %v3820, %v395
      %v3836 = vmul.f32 %v3821, %v395
      %v3837 = vmul.f32 %v3822, %v395
      %v3838 = vadd.f32 %v3823, %v416
      %v3839 = vadd.f32 %v3824, %v416
      %v3840 = vadd.f32 %v3825, %v416
      %v3841 = vadd.f32 %v3826, %v416
      %v3842 = vadd.f32 %v3827, %v416
      %v3843 = vadd.f32 %v3828, %v416
      %v3844 = vadd.f32 %v3829, %v416
      %v3845 = vadd.f32 %v3830, %v416
      %v3846 = vadd.f32 %v3831, %v416
      %v3847 = vadd.f32 %v3832, %v416
      %v3848 = vadd.f32 %v3833, %v416
      %v3849 = vadd.f32 %v3834, %v416
      %v3850 = vadd.f32 %v3835, %v416
      %v3851 = vadd.f32 %v3836, %v416
      %v3852 = vadd.f32 %v3837, %v416
      %v3853 = vmax.f32 %v3838, 0.0
      %v3854 = vmax.f32 %v3839, 0.0
      %v3855 = vmax.f32 %v3840, 0.0
      %v3856 = vmax.f32 %v3841, 0.0
      %v3857 = vmax.f32 %v3842, 0.0
      %v3858 = vmax.f32 %v3843, 0.0
      %v3859 = vmax.f32 %v3844, 0.0
      %v3860 = vmax.f32 %v3845, 0.0
      %v3861 = vmax.f32 %v3846, 0.0
      %v3862 = vmax.f32 %v3847, 0.0
      %v3863 = vmax.f32 %v3848, 0.0
      %v3864 = vmax.f32 %v3849, 0.0
      %v3865 = vmax.f32 %v3850, 0.0
      %v3866 = vmax.f32 %v3851, 0.0
      %v3867 = vmax.f32 %v3852, 0.0
      %v3868 = vsub.f32 %v3853, %v3838
      %v3869 = vsub.f32 %v3854, %v3839
      %v3870 = vsub.f32 %v3855, %v3840
      %v3871 = vsub.f32 %v3856, %v3841
      %v3872 = vsub.f32 %v3857, %v3842
      %v3873 = vsub.f32 %v3858, %v3843
      %v3874 = vsub.f32 %v3859, %v3844
      %v3875 = vsub.f32 %v3860, %v3845
      %v3876 = vsub.f32 %v3861, %v3846
      %v3877 = vsub.f32 %v3862, %v3847
      %v3878 = vsub.f32 %v3863, %v3848
      %v3879 = vsub.f32 %v3864, %v3849
      %v3880 = vsub.f32 %v3865, %v3850
      %v3881 = vsub.f32 %v3866, %v3851
      %v3882 = vsub.f32 %v3867, %v3852
      %v3883 = vmul.f32 %v467, %v3868
      %v3884 = vmul.f32 %v467, %v3869
      %v3885 = vmul.f32 %v467, %v3870
      %v3886 = vmul.f32 %v467, %v3871
      %v3887 = vmul.f32 %v467, %v3872
      %v3888 = vmul.f32 %v467, %v3873
      %v3889 = vmul.f32 %v467, %v3874
      %v3890 = vmul.f32 %v467, %v3875
      %v3891 = vmul.f32 %v467, %v3876
      %v3892 = vmul.f32 %v467, %v3877
      %v3893 = vmul.f32 %v467, %v3878
      %v3894 = vmul.f32 %v467, %v3879
      %v3895 = vmul.f32 %v467, %v3880
      %v3896 = vmul.f32 %v467, %v3881
      %v3897 = vmul.f32 %v467, %v3882
      %v3898 = vadd.f32 %v3838, %v3883
      %v3899 = vadd.f32 %v3839, %v3884
      %v3900 = vadd.f32 %v3840, %v3885
      %v3901 = vadd.f32 %v3841, %v3886
      %v3902 = vadd.f32 %v3842, %v3887
      %v3903 = vadd.f32 %v3843, %v3888
      %v3904 = vadd.f32 %v3844, %v3889
      %v3905 = vadd.f32 %v3845, %v3890
      %v3906 = vadd.f32 %v3846, %v3891
      %v3907 = vadd.f32 %v3847, %v3892
      %v3908 = vadd.f32 %v3848, %v3893
      %v3909 = vadd.f32 %v3849, %v3894
      %v3910 = vadd.f32 %v3850, %v3895
      %v3911 = vadd.f32 %v3851, %v3896
      %v3912 = vadd.f32 %v3852, %v3897
      %v3913 = vld [vmem:[%s341 + $0x11] sm:$0xff]
      %v3914 = vld [vmem:[%s341 + $0x19] sm:$0xff]
      %v3915 = vld [vmem:[%s341 + $0x21] sm:$0xff]
      %v3916 = vld [vmem:[%s341 + $0x29] sm:$0xff]
      %v3917 = vld [vmem:[%s341 + $0x31] sm:$0xff]
      %v3918 = vld [vmem:[%s341 + $0x39] sm:$0xff]
      %v3919 = vld [vmem:[%s341 + $0x41] sm:$0xff]
      %v3920 = vld [vmem:[%s341 + $0x49] sm:$0xff]
      %v3921 = vld [vmem:[%s341 + $0x51] sm:$0xff]
      %v3922 = vld [vmem:[%s341 + $0x59] sm:$0xff]
      %v3923 = vld [vmem:[%s341 + $0x61] sm:$0xff]
      %v3924 = vld [vmem:[%s341 + $0x69] sm:$0xff]
      %v3925 = vld [vmem:[%s341 + $0x71] sm:$0xff]
      %v3926 = vld [vmem:[%s341 + $0x79] sm:$0xff]
      %v3927 = vld [vmem:[%s341 + $0x81] sm:$0x7f]
      %v3929 = vlaneseq
      %v3930 = vshrl.u32 %v3929, 7
      %v3931 = vsub.s32 0, %v3930
      %v3932 = vrot.slane %v3612, %v3931
      %v3934 = vmul.f32 %v3898, %v3932
      %v3935 = vmul.f32 %v3899, %v3932
      %v3936 = vmul.f32 %v3900, %v3932
      %v3937 = vmul.f32 %v3901, %v3932
      %v3938 = vmul.f32 %v3902, %v3932
      %v3939 = vmul.f32 %v3903, %v3932
      %v3940 = vmul.f32 %v3904, %v3932
      %v3941 = vmul.f32 %v3905, %v3932
      %v3942 = vmul.f32 %v3906, %v3932
      %v3943 = vmul.f32 %v3907, %v3932
      %v3944 = vmul.f32 %v3908, %v3932
      %v3945 = vmul.f32 %v3909, %v3932
      %v3946 = vmul.f32 %v3910, %v3932
      %v3947 = vmul.f32 %v3911, %v3932
      %v3948 = vmul.f32 %v3912, %v3932
      %v3949 = vsub.f32 1.0, %v3612
      %v3951 = vlaneseq
      %v3952 = vshrl.u32 %v3951, 7
      %v3953 = vsub.s32 0, %v3952
      %v3954 = vrot.slane %v3949, %v3953
      %v3956 = vmul.f32 %v3913, %v3954
      %v3957 = vmul.f32 %v3914, %v3954
      %v3958 = vmul.f32 %v3915, %v3954
      %v3959 = vmul.f32 %v3916, %v3954
      %v3960 = vmul.f32 %v3917, %v3954
      %v3961 = vmul.f32 %v3918, %v3954
      %v3962 = vmul.f32 %v3919, %v3954
      %v3963 = vmul.f32 %v3920, %v3954
      %v3964 = vmul.f32 %v3921, %v3954
      %v3965 = vmul.f32 %v3922, %v3954
      %v3966 = vmul.f32 %v3923, %v3954
      %v3967 = vmul.f32 %v3924, %v3954
      %v3968 = vmul.f32 %v3925, %v3954
      %v3969 = vmul.f32 %v3926, %v3954
      %v3970 = vmul.f32 %v3927, %v3954
      %v3971 = vadd.f32 %v3934, %v3956
      %v3972 = vadd.f32 %v3935, %v3957
      %v3973 = vadd.f32 %v3936, %v3958
      %v3974 = vadd.f32 %v3937, %v3959
      %v3975 = vadd.f32 %v3938, %v3960
      %v3976 = vadd.f32 %v3939, %v3961
      %v3977 = vadd.f32 %v3940, %v3962
      %v3978 = vadd.f32 %v3941, %v3963
      %v3979 = vadd.f32 %v3942, %v3964
      %v3980 = vadd.f32 %v3943, %v3965
      %v3981 = vadd.f32 %v3944, %v3966
      %v3982 = vadd.f32 %v3945, %v3967
      %v3983 = vadd.f32 %v3946, %v3968
      %v3984 = vadd.f32 %v3947, %v3969
      %v3985 = vadd.f32 %v3948, %v3970
      %v3986 = vmax.f32 %v3913, %v3971
      %v3987 = vmax.f32 %v3914, %v3972
      %v3988 = vmax.f32 %v3915, %v3973
      %v3989 = vmax.f32 %v3916, %v3974
      %v3990 = vmax.f32 %v3917, %v3975
      %v3991 = vmax.f32 %v3918, %v3976
      %v3992 = vmax.f32 %v3919, %v3977
      %v3993 = vmax.f32 %v3920, %v3978
      %v3994 = vmax.f32 %v3921, %v3979
      %v3995 = vmax.f32 %v3922, %v3980
      %v3996 = vmax.f32 %v3923, %v3981
      %v3997 = vmax.f32 %v3924, %v3982
      %v3998 = vmax.f32 %v3925, %v3983
      %v3999 = vmax.f32 %v3926, %v3984
      %v4000 = vmax.f32 %v3927, %v3985
      %4001 = vst [vmem:[%s341 + $0x11] sm:$0xff] %v3986
      %4002 = vst [vmem:[%s341 + $0x19] sm:$0xff] %v3987
      %4003 = vst [vmem:[%s341 + $0x21] sm:$0xff] %v3988
      %4004 = vst [vmem:[%s341 + $0x29] sm:$0xff] %v3989
      %4005 = vst [vmem:[%s341 + $0x31] sm:$0xff] %v3990
      %4006 = vst [vmem:[%s341 + $0x39] sm:$0xff] %v3991
      %4007 = vst [vmem:[%s341 + $0x41] sm:$0xff] %v3992
      %4008 = vst [vmem:[%s341 + $0x49] sm:$0xff] %v3993
      %4009 = vst [vmem:[%s341 + $0x51] sm:$0xff] %v3994
      %4010 = vst [vmem:[%s341 + $0x59] sm:$0xff] %v3995
      %4011 = vst [vmem:[%s341 + $0x61] sm:$0xff] %v3996
      %4012 = vst [vmem:[%s341 + $0x69] sm:$0xff] %v3997
      %4013 = vst [vmem:[%s341 + $0x71] sm:$0xff] %v3998
      %4014 = vst [vmem:[%s341 + $0x79] sm:$0xff] %v3999
      %4015 = vst [vmem:[%s341 + $0x81] sm:$0x7f] %v4000
      %v4016 = vld [vmem:[%s335 + $0x88] sm:$0xff]
      %v4017 = vld [vmem:[%s335 + $0x90] sm:$0xff]
      %v4018 = vld [vmem:[%s335 + $0x98] sm:$0xff]
      %v4019 = vld [vmem:[%s335 + $0xa0] sm:$0xff]
      %v4020 = vld [vmem:[%s335 + $0xa8] sm:$0xff]
      %v4021 = vld [vmem:[%s335 + $0xb0] sm:$0xff]
      %v4022 = vld [vmem:[%s335 + $0xb8] sm:$0xff]
      %v4023 = vld [vmem:[%s335 + $0xc0] sm:$0xff]
      %v4024 = vld [vmem:[%s335 + $0xc8] sm:$0xff]
      %v4025 = vld [vmem:[%s335 + $0xd0] sm:$0xff]
      %v4026 = vld [vmem:[%s335 + $0xd8] sm:$0xff]
      %v4027 = vld [vmem:[%s335 + $0xe0] sm:$0xff]
      %v4028 = vld [vmem:[%s335 + $0xe8] sm:$0xff]
      %v4029 = vld [vmem:[%s335 + $0xf0] sm:$0xff]
      %v4030 = vld [vmem:[%s335 + $0xf8] sm:$0xff]
      %v4031 = vld [vmem:[%s335 + $0x100] sm:$0xff]
      %v4032 = vld [vmem:[%s335 + $0x108] sm:$0xff]
      %v4033 = vmul.f32 %v4016, %v395
      %v4034 = vmul.f32 %v4017, %v395
      %v4035 = vmul.f32 %v4018, %v395
      %v4036 = vmul.f32 %v4019, %v395
      %v4037 = vmul.f32 %v4020, %v395
      %v4038 = vmul.f32 %v4021, %v395
      %v4039 = vmul.f32 %v4022, %v395
      %v4040 = vmul.f32 %v4023, %v395
      %v4041 = vmul.f32 %v4024, %v395
      %v4042 = vmul.f32 %v4025, %v395
      %v4043 = vmul.f32 %v4026, %v395
      %v4044 = vmul.f32 %v4027, %v395
      %v4045 = vmul.f32 %v4028, %v395
      %v4046 = vmul.f32 %v4029, %v395
      %v4047 = vmul.f32 %v4030, %v395
      %v4048 = vmul.f32 %v4031, %v395
      %v4049 = vmul.f32 %v4032, %v395
      %v4050 = vadd.f32 %v4033, %v416
      %v4051 = vadd.f32 %v4034, %v416
      %v4052 = vadd.f32 %v4035, %v416
      %v4053 = vadd.f32 %v4036, %v416
      %v4054 = vadd.f32 %v4037, %v416
      %v4055 = vadd.f32 %v4038, %v416
      %v4056 = vadd.f32 %v4039, %v416
      %v4057 = vadd.f32 %v4040, %v416
      %v4058 = vadd.f32 %v4041, %v416
      %v4059 = vadd.f32 %v4042, %v416
      %v4060 = vadd.f32 %v4043, %v416
      %v4061 = vadd.f32 %v4044, %v416
      %v4062 = vadd.f32 %v4045, %v416
      %v4063 = vadd.f32 %v4046, %v416
      %v4064 = vadd.f32 %v4047, %v416
      %v4065 = vadd.f32 %v4048, %v416
      %v4066 = vadd.f32 %v4049, %v416
      %v4067 = vmax.f32 %v4050, 0.0
      %v4068 = vmax.f32 %v4051, 0.0
      %v4069 = vmax.f32 %v4052, 0.0
      %v4070 = vmax.f32 %v4053, 0.0
      %v4071 = vmax.f32 %v4054, 0.0
      %v4072 = vmax.f32 %v4055, 0.0
      %v4073 = vmax.f32 %v4056, 0.0
      %v4074 = vmax.f32 %v4057, 0.0
      %v4075 = vmax.f32 %v4058, 0.0
      %v4076 = vmax.f32 %v4059, 0.0
      %v4077 = vmax.f32 %v4060, 0.0
      %v4078 = vmax.f32 %v4061, 0.0
      %v4079 = vmax.f32 %v4062, 0.0
      %v4080 = vmax.f32 %v4063, 0.0
      %v4081 = vmax.f32 %v4064, 0.0
      %v4082 = vmax.f32 %v4065, 0.0
      %v4083 = vmax.f32 %v4066, 0.0
      %v4084 = vsub.f32 %v4067, %v4050
      %v4085 = vsub.f32 %v4068, %v4051
      %v4086 = vsub.f32 %v4069, %v4052
      %v4087 = vsub.f32 %v4070, %v4053
      %v4088 = vsub.f32 %v4071, %v4054
      %v4089 = vsub.f32 %v4072, %v4055
      %v4090 = vsub.f32 %v4073, %v4056
      %v4091 = vsub.f32 %v4074, %v4057
      %v4092 = vsub.f32 %v4075, %v4058
      %v4093 = vsub.f32 %v4076, %v4059
      %v4094 = vsub.f32 %v4077, %v4060
      %v4095 = vsub.f32 %v4078, %v4061
      %v4096 = vsub.f32 %v4079, %v4062
      %v4097 = vsub.f32 %v4080, %v4063
      %v4098 = vsub.f32 %v4081, %v4064
      %v4099 = vsub.f32 %v4082, %v4065
      %v4100 = vsub.f32 %v4083, %v4066
      %v4101 = vmul.f32 %v467, %v4084
      %v4102 = vmul.f32 %v467, %v4085
      %v4103 = vmul.f32 %v467, %v4086
      %v4104 = vmul.f32 %v467, %v4087
      %v4105 = vmul.f32 %v467, %v4088
      %v4106 = vmul.f32 %v467, %v4089
      %v4107 = vmul.f32 %v467, %v4090
      %v4108 = vmul.f32 %v467, %v4091
      %v4109 = vmul.f32 %v467, %v4092
      %v4110 = vmul.f32 %v467, %v4093
      %v4111 = vmul.f32 %v467, %v4094
      %v4112 = vmul.f32 %v467, %v4095
      %v4113 = vmul.f32 %v467, %v4096
      %v4114 = vmul.f32 %v467, %v4097
      %v4115 = vmul.f32 %v467, %v4098
      %v4116 = vmul.f32 %v467, %v4099
      %v4117 = vmul.f32 %v467, %v4100
      %v4118 = vadd.f32 %v4050, %v4101
      %v4119 = vadd.f32 %v4051, %v4102
      %v4120 = vadd.f32 %v4052, %v4103
      %v4121 = vadd.f32 %v4053, %v4104
      %v4122 = vadd.f32 %v4054, %v4105
      %v4123 = vadd.f32 %v4055, %v4106
      %v4124 = vadd.f32 %v4056, %v4107
      %v4125 = vadd.f32 %v4057, %v4108
      %v4126 = vadd.f32 %v4058, %v4109
      %v4127 = vadd.f32 %v4059, %v4110
      %v4128 = vadd.f32 %v4060, %v4111
      %v4129 = vadd.f32 %v4061, %v4112
      %v4130 = vadd.f32 %v4062, %v4113
      %v4131 = vadd.f32 %v4063, %v4114
      %v4132 = vadd.f32 %v4064, %v4115
      %v4133 = vadd.f32 %v4065, %v4116
      %v4134 = vadd.f32 %v4066, %v4117
      %v4135 = vld [vmem:[%s341] sm:$0xff]
      %v4136 = vld [vmem:[%s341 + $0x8] sm:$0xff]
      %v4137 = vld [vmem:[%s341 + $0x10] sm:$0xff]
      %v4138 = vld [vmem:[%s341 + $0x18] sm:$0xff]
      %v4139 = vld [vmem:[%s341 + $0x20] sm:$0xff]
      %v4140 = vld [vmem:[%s341 + $0x28] sm:$0xff]
      %v4141 = vld [vmem:[%s341 + $0x30] sm:$0xff]
      %v4142 = vld [vmem:[%s341 + $0x38] sm:$0xff]
      %v4143 = vld [vmem:[%s341 + $0x40] sm:$0xff]
      %v4144 = vld [vmem:[%s341 + $0x48] sm:$0xff]
      %v4145 = vld [vmem:[%s341 + $0x50] sm:$0xff]
      %v4146 = vld [vmem:[%s341 + $0x58] sm:$0xff]
      %v4147 = vld [vmem:[%s341 + $0x60] sm:$0xff]
      %v4148 = vld [vmem:[%s341 + $0x68] sm:$0xff]
      %v4149 = vld [vmem:[%s341 + $0x70] sm:$0xff]
      %v4150 = vld [vmem:[%s341 + $0x78] sm:$0xff]
      %v4151 = vld [vmem:[%s341 + $0x80] sm:$0xff]
      %v4152 = vmul.f32 %v4118, %v3932
      %v4153 = vmul.f32 %v4119, %v3932
      %v4154 = vmul.f32 %v4120, %v3932
      %v4155 = vmul.f32 %v4121, %v3932
      %v4156 = vmul.f32 %v4122, %v3932
      %v4157 = vmul.f32 %v4123, %v3932
      %v4158 = vmul.f32 %v4124, %v3932
      %v4159 = vmul.f32 %v4125, %v3932
      %v4160 = vmul.f32 %v4126, %v3932
      %v4161 = vmul.f32 %v4127, %v3932
      %v4162 = vmul.f32 %v4128, %v3932
      %v4163 = vmul.f32 %v4129, %v3932
      %v4164 = vmul.f32 %v4130, %v3932
      %v4165 = vmul.f32 %v4131, %v3932
      %v4166 = vmul.f32 %v4132, %v3932
      %v4167 = vmul.f32 %v4133, %v3932
      %v4168 = vmul.f32 %v4134, %v3932
      %v4169 = vmul.f32 %v4135, %v3954
      %v4170 = vmul.f32 %v4136, %v3954
      %v4171 = vmul.f32 %v4137, %v3954
      %v4172 = vmul.f32 %v4138, %v3954
      %v4173 = vmul.f32 %v4139, %v3954
      %v4174 = vmul.f32 %v4140, %v3954
      %v4175 = vmul.f32 %v4141, %v3954
      %v4176 = vmul.f32 %v4142, %v3954
      %v4177 = vmul.f32 %v4143, %v3954
      %v4178 = vmul.f32 %v4144, %v3954
      %v4179 = vmul.f32 %v4145, %v3954
      %v4180 = vmul.f32 %v4146, %v3954
      %v4181 = vmul.f32 %v4147, %v3954
      %v4182 = vmul.f32 %v4148, %v3954
      %v4183 = vmul.f32 %v4149, %v3954
      %v4184 = vmul.f32 %v4150, %v3954
      %v4185 = vmul.f32 %v4151, %v3954
      %v4186 = vadd.f32 %v4152, %v4169
      %v4187 = vadd.f32 %v4153, %v4170
      %v4188 = vadd.f32 %v4154, %v4171
      %v4189 = vadd.f32 %v4155, %v4172
      %v4190 = vadd.f32 %v4156, %v4173
      %v4191 = vadd.f32 %v4157, %v4174
      %v4192 = vadd.f32 %v4158, %v4175
      %v4193 = vadd.f32 %v4159, %v4176
      %v4194 = vadd.f32 %v4160, %v4177
      %v4195 = vadd.f32 %v4161, %v4178
      %v4196 = vadd.f32 %v4162, %v4179
      %v4197 = vadd.f32 %v4163, %v4180
      %v4198 = vadd.f32 %v4164, %v4181
      %v4199 = vadd.f32 %v4165, %v4182
      %v4200 = vadd.f32 %v4166, %v4183
      %v4201 = vadd.f32 %v4167, %v4184
      %v4202 = vadd.f32 %v4168, %v4185
      %v4203 = vmax.f32 %v4135, %v4186
      %v4204 = vmax.f32 %v4136, %v4187
      %v4205 = vmax.f32 %v4137, %v4188
      %v4206 = vmax.f32 %v4138, %v4189
      %v4207 = vmax.f32 %v4139, %v4190
      %v4208 = vmax.f32 %v4140, %v4191
      %v4209 = vmax.f32 %v4141, %v4192
      %v4210 = vmax.f32 %v4142, %v4193
      %v4211 = vmax.f32 %v4143, %v4194
      %v4212 = vmax.f32 %v4144, %v4195
      %v4213 = vmax.f32 %v4145, %v4196
      %v4214 = vmax.f32 %v4146, %v4197
      %v4215 = vmax.f32 %v4147, %v4198
      %v4216 = vmax.f32 %v4148, %v4199
      %v4217 = vmax.f32 %v4149, %v4200
      %v4218 = vmax.f32 %v4150, %v4201
      %v4219 = vmax.f32 %v4151, %v4202
      %4220 = vst [vmem:[%s341] sm:$0xff] %v4203
      %4221 = vst [vmem:[%s341 + $0x8] sm:$0xff] %v4204
      %4222 = vst [vmem:[%s341 + $0x10] sm:$0xff] %v4205
      %4223 = vst [vmem:[%s341 + $0x18] sm:$0xff] %v4206
      %4224 = vst [vmem:[%s341 + $0x20] sm:$0xff] %v4207
      %4225 = vst [vmem:[%s341 + $0x28] sm:$0xff] %v4208
      %4226 = vst [vmem:[%s341 + $0x30] sm:$0xff] %v4209
      %4227 = vst [vmem:[%s341 + $0x38] sm:$0xff] %v4210
      %4228 = vst [vmem:[%s341 + $0x40] sm:$0xff] %v4211
      %4229 = vst [vmem:[%s341 + $0x48] sm:$0xff] %v4212
      %4230 = vst [vmem:[%s341 + $0x50] sm:$0xff] %v4213
      %4231 = vst [vmem:[%s341 + $0x58] sm:$0xff] %v4214
      %4232 = vst [vmem:[%s341 + $0x60] sm:$0xff] %v4215
      %4233 = vst [vmem:[%s341 + $0x68] sm:$0xff] %v4216
      %4234 = vst [vmem:[%s341 + $0x70] sm:$0xff] %v4217
      %4235 = vst [vmem:[%s341 + $0x78] sm:$0xff] %v4218
      %4236 = vst [vmem:[%s341 + $0x80] sm:$0xff] %v4219
      %v4237 = vld [vmem:[%s341] sm:$0xff]
      %v4238 = vld [vmem:[%s341 + $0x8] sm:$0xff]
      %v4239 = vld [vmem:[%s341 + $0x10] sm:$0xff]
      %v4240 = vld [vmem:[%s341 + $0x18] sm:$0xff]
      %v4241 = vld [vmem:[%s341 + $0x20] sm:$0xff]
      %v4242 = vld [vmem:[%s341 + $0x28] sm:$0xff]
      %v4243 = vld [vmem:[%s341 + $0x30] sm:$0xff]
      %v4244 = vld [vmem:[%s341 + $0x38] sm:$0xff]
      %v4245 = vld [vmem:[%s341 + $0x40] sm:$0xff]
      %v4246 = vld [vmem:[%s341 + $0x48] sm:$0xff]
      %v4247 = vld [vmem:[%s341 + $0x50] sm:$0xff]
      %v4248 = vld [vmem:[%s341 + $0x58] sm:$0xff]
      %v4249 = vld [vmem:[%s341 + $0x60] sm:$0xff]
      %v4250 = vld [vmem:[%s341 + $0x68] sm:$0xff]
      %v4251 = vld [vmem:[%s341 + $0x70] sm:$0xff]
      %v4252 = vld [vmem:[%s341 + $0x78] sm:$0xff]
      %v4253 = vld [vmem:[%s341 + $0x80] sm:$0xff]
      %v4254 = vadd.f32 %v4237, %v4238
      %v4255 = vadd.f32 %v4254, %v4239
      %v4256 = vadd.f32 %v4255, %v4240
      %v4257 = vadd.f32 %v4256, %v4241
      %v4258 = vadd.f32 %v4257, %v4242
      %v4259 = vadd.f32 %v4258, %v4243
      %v4260 = vadd.f32 %v4259, %v4244
      %v4261 = vadd.f32 %v4260, %v4245
      %v4262 = vadd.f32 %v4261, %v4246
      %v4263 = vadd.f32 %v4262, %v4247
      %v4264 = vadd.f32 %v4263, %v4248
      %v4265 = vadd.f32 %v4264, %v4249
      %v4266 = vadd.f32 %v4265, %v4250
      %v4267 = vadd.f32 %v4266, %v4251
      %v4268 = vadd.f32 %v4267, %v4252
      %v4269 = vadd.f32 %v4268, %v4253
      %v4270 = vrot.slane %v4269, 4
      %v4271 = vadd.f32 %v4269, %v4270
      %v4272 = vrot.slane %v4271, 2
      %v4273 = vadd.f32 %v4271, %v4272
      %v4274 = vrot.slane %v4273, 1
      %v4275 = vadd.f32 %v4273, %v4274
      %4276 = vst [vmem:[%s346] sm:$0x1] %v4275
      %v4277 = vmul.f32 %v4237, %v4237
      %v4278 = vmul.f32 %v4238, %v4238
      %v4279 = vmul.f32 %v4239, %v4239
      %v4280 = vmul.f32 %v4240, %v4240
      %v4281 = vmul.f32 %v4241, %v4241
      %v4282 = vmul.f32 %v4242, %v4242
      %v4283 = vmul.f32 %v4243, %v4243
      %v4284 = vmul.f32 %v4244, %v4244
      %v4285 = vmul.f32 %v4245, %v4245
      %v4286 = vmul.f32 %v4246, %v4246
      %v4287 = vmul.f32 %v4247, %v4247
      %v4288 = vmul.f32 %v4248, %v4248
      %v4289 = vmul.f32 %v4249, %v4249
      %v4290 = vmul.f32 %v4250, %v4250
      %v4291 = vmul.f32 %v4251, %v4251
      %v4292 = vmul.f32 %v4252, %v4252
      %v4293 = vmul.f32 %v4253, %v4253
      %v4294 = vadd.f32 %v4277, %v4278
      %v4295 = vadd.f32 %v4294, %v4279
      %v4296 = vadd.f32 %v4295, %v4280
      %v4297 = vadd.f32 %v4296, %v4281
      %v4298 = vadd.f32 %v4297, %v4282
      %v4299 = vadd.f32 %v4298, %v4283
      %v4300 = vadd.f32 %v4299, %v4284
      %v4301 = vadd.f32 %v4300, %v4285
      %v4302 = vadd.f32 %v4301, %v4286
      %v4303 = vadd.f32 %v4302, %v4287
      %v4304 = vadd.f32 %v4303, %v4288
      %v4305 = vadd.f32 %v4304, %v4289
      %v4306 = vadd.f32 %v4305, %v4290
      %v4307 = vadd.f32 %v4306, %v4291
      %v4308 = vadd.f32 %v4307, %v4292
      %v4309 = vadd.f32 %v4308, %v4293
      %v4310 = vrot.slane %v4309, 4
      %v4311 = vadd.f32 %v4309, %v4310
      %v4312 = vrot.slane %v4311, 2
      %v4313 = vadd.f32 %v4311, %v4312
      %v4314 = vrot.slane %v4313, 1
      %v4315 = vadd.f32 %v4313, %v4314
      %4316 = vst [vmem:[%s346 + $0x1] sm:$0x1] %v4315
      %s4317 = smul.u32 17, %s21
      %p4318 = scmp.lt.s32.totalorder %s4317, 33
      %s4319 = scalar_select %p4318, %s4317, 33
      %s4320 = smul.addr %s4319, 8
      %s4321 = scalar_lea.vmem %s8, %s4320
      %p4322 = scmp.lt.s32.totalorder %s21, 1
      %s4323 = scalar_select %p4322, %s21, 1
      %s4324 = smul.addr %s4323, 2
      %s4325 = scalar_lea.vmem %s9, %s4324
      // Predicated region
      $region53: #{layer_forward.12} parent=51 // pred_check
        %p4326 = pneg %p212
      $region54: #{layer_forward.12} parent=51 // pred_check_branch
        %4328 = sbr.rel (%p4326) target = $region56
      $region55: #{layer_forward.12} parent=51 // pred_region
        %s4329 = smul.u32 17, %s21
      $region56: #{layer_forward.12} parent=51 // pred_fallthru
        _
      // Predicated region
      $region57: #{layer_forward.12} parent=51 // pred_check
        %p4330 = pneg %p238
      $region58: #{layer_forward.12} parent=51 // pred_check_branch
        %4332 = sbr.rel (%p4330) target = $region60
      $region59: #{layer_forward.12} parent=51 // pred_region
        _
      $region60: #{layer_forward.12} parent=51 // pred_fallthru
        _
    $region52: #{layer_forward.12} parent=5 // pred_fallthru
      _
    %p4333 = scmp.le.s32.totalorder 2, %s16
    // Predicated region
    $region61: #{layer_forward.12} parent=5 // pred_check
      %p4334 = pneg %p4333
    $region62: #{layer_forward.12} parent=5 // pred_check_branch
      %4336 = sbr.rel (%p4334) target = $region64
    $region63: #{layer_forward.12} parent=5 // pred_region
      %s4337 = ssub.s32 %s16, 2
      // Predicated region
      $region65: #{layer_forward.12} parent=63 // pred_check
        %p4338 = pneg %p218
      $region66: #{layer_forward.12} parent=63 // pred_check_branch
        %4340 = sbr.rel (%p4338) target = $region68
      $region67: #{layer_forward.12} parent=63 // pred_region
        %s4341 = smul.u32 17, %s22
        %p4342 = scmp.lt.s32.totalorder %s4341, 33
        %s4343 = scalar_select %p4342, %s4341, 33
        %s4344 = smul.addr %s4343, 8
        %s4345 = scalar_lea.vmem %s8, %s4344
      $region68: #{layer_forward.12} parent=63 // pred_fallthru
        _
      // Predicated region
      $region69: #{layer_forward.12} parent=63 // pred_check
        %p4346 = pneg %p244
      $region70: #{layer_forward.12} parent=63 // pred_check_branch
        %4348 = sbr.rel (%p4346) target = $region72
      $region71: #{layer_forward.12} parent=63 // pred_region
        %p4349 = scmp.lt.s32.totalorder %s22, 1
        %s4350 = scalar_select %p4349, %s22, 1
        %s4351 = smul.addr %s4350, 2
        %s4352 = scalar_lea.vmem %s9, %s4351
      $region72: #{layer_forward.12} parent=63 // pred_fallthru
        _
    $region64: #{layer_forward.12} parent=5 // pred_fallthru
      _
  $region6: #{layer_forward.12} parent=0 // loop_footer
    %s20 = sadd.s32 1, %s16
  $region7: #{layer_forward.12} parent=0 // loop_footer_branch
    %15 = sbr.rel target = $region3
  $region8: #{layer_forward.12} parent=0 // loop_exit
    _

// kernel: layer_forward.8
$region0: #{layer_forward.8}
  #allocation0 [shape = 'u32[]', space=smem, size = 0x4, offset = 0x4, fixed_abs, tag = 'smem constant byte address 0x4 - core index']
  #allocation1 [shape = 'u32[144,128]{1,0:T(1,128)}', space=vmem, size = 0x12000, scoped, tag = 'internal scratch']
  %s0 = inlined_call_operand.vmem [shape: bf16[272,64], index: 0, kind: input, shape index: {}]
  %s1 = inlined_call_operand.vmem [shape: bf16[64,128], index: 1, kind: input, shape index: {}]
  %s2 = inlined_call_operand.vmem [shape: f32[1,128], index: 2, kind: input, shape index: {}]
  %s3 = inlined_call_operand.vmem [shape: f32[272,128], index: 3, kind: output, shape index: {0}]
  %s4 = inlined_call_operand.vmem [shape: f32[1,2,128], index: 4, kind: output, shape index: {1}]
  %5 = xla_tuple %s3, %s4
  %s6 = sld [smem:[#allocation0]]
  $region30: #{layer_forward.8} parent=0
    _
  %s8 = ssub.s32 1, %s6
  %s9 = scalar_select 0, %s8, %s6
  // Predicated region
  $region2: #{layer_forward.8} parent=0 // pred_check
    _
  $region3: #{layer_forward.8} parent=0 // pred_check_branch
    %11 = sbr.rel (0) target = $region5
  $region4: #{layer_forward.8} parent=0 // pred_region
    _
  $region5: #{layer_forward.8} parent=0 // pred_fallthru
    _
  // Predicated region
  $region6: #{layer_forward.8} parent=0 // pred_check
    _
  $region7: #{layer_forward.8} parent=0 // pred_check_branch
    %13 = sbr.rel (0) target = $region9
  $region8: #{layer_forward.8} parent=0 // pred_region
    _
  $region9: #{layer_forward.8} parent=0 // pred_fallthru
    _
  // Predicated region
  $region10: #{layer_forward.8} parent=0 // pred_check
    _
  $region11: #{layer_forward.8} parent=0 // pred_check_branch
    %15 = sbr.rel (0) target = $region13
  $region12: #{layer_forward.8} parent=0 // pred_region
    _
  $region13: #{layer_forward.8} parent=0 // pred_fallthru
    _
  %v17 = vld [vmem:[%s0] sm:$0xf]
  %v18 = vld [vmem:[%s0 + $0x4] sm:$0xf]
  %v19 = vld [vmem:[%s0 + $0x8] sm:$0xf]
  %v20 = vld [vmem:[%s0 + $0xc] sm:$0xf]
  %v21 = vld [vmem:[%s0 + $0x10] sm:$0xf]
  %v22 = vld [vmem:[%s0 + $0x14] sm:$0xf]
  %v23 = vld [vmem:[%s0 + $0x18] sm:$0xf]
  %v24 = vld [vmem:[%s0 + $0x1c] sm:$0xf]
  %v25 = vld [vmem:[%s0 + $0x20] sm:$0xf]
  %v26 = vld [vmem:[%s0 + $0x24] sm:$0xf]
  %v27 = vld [vmem:[%s0 + $0x28] sm:$0xf]
  %v28 = vld [vmem:[%s0 + $0x2c] sm:$0xf]
  %v29 = vld [vmem:[%s0 + $0x30] sm:$0xf]
  %v30 = vld [vmem:[%s0 + $0x34] sm:$0xf]
  %v31 = vld [vmem:[%s0 + $0x38] sm:$0xf]
  %v32 = vld [vmem:[%s0 + $0x3c] sm:$0xf]
  %v33 = vld [vmem:[%s0 + $0x40] sm:$0xf]
  %v34 = vld [vmem:[%s0 + $0x44] sm:$0xf]
  %v35 = vld [vmem:[%s0 + $0x48] sm:$0xf]
  %v36 = vld [vmem:[%s0 + $0x4c] sm:$0xf]
  %v37 = vld [vmem:[%s0 + $0x50] sm:$0xf]
  %v38 = vld [vmem:[%s0 + $0x54] sm:$0xf]
  %v39 = vld [vmem:[%s0 + $0x58] sm:$0xf]
  %v40 = vld [vmem:[%s0 + $0x5c] sm:$0xf]
  %v41 = vld [vmem:[%s0 + $0x60] sm:$0xf]
  %v42 = vld [vmem:[%s0 + $0x64] sm:$0xf]
  %v43 = vld [vmem:[%s0 + $0x68] sm:$0xf]
  %v44 = vld [vmem:[%s0 + $0x6c] sm:$0xf]
  %v45 = vld [vmem:[%s0 + $0x70] sm:$0xf]
  %v46 = vld [vmem:[%s0 + $0x74] sm:$0xf]
  %v47 = vld [vmem:[%s0 + $0x78] sm:$0xf]
  %v48 = vld [vmem:[%s0 + $0x7c] sm:$0xf]
  %v49 = vld [vmem:[%s0 + $0x80] sm:$0xf]
  %v50 = vld [vmem:[%s0 + $0x84] sm:$0xf]
  %v51 = vld [vmem:[%s1] sm:$0xf]
  %v52 = vld [vmem:[%s1 + $0x4] sm:$0xf]
  %v53 = vld [vmem:[%s1 + $0x8] sm:$0xf]
  %v54 = vld [vmem:[%s1 + $0xc] sm:$0xf]
  %v55 = vld [vmem:[%s1 + $0x10] sm:$0xf]
  %v56 = vld [vmem:[%s1 + $0x14] sm:$0xf]
  %v57 = vld [vmem:[%s1 + $0x18] sm:$0xf]
  %v58 = vld [vmem:[%s1 + $0x1c] sm:$0xf]
  %v59 = vld [vmem:[%s2] sm:$0x1]
  %v61 = vlaneseq
  %v62 = vshrl.u32 %v61, 7
  %v63 = vsub.s32 0, %v62
  %v64 = vrot.slane %v59, %v63
  %v100 = vunpack.c.l.b16 %v17
  %v101 = vunpack.c.l.b16 %v18
  %v102 = vunpack.c.l.b16 %v19
  %v103 = vunpack.c.l.b16 %v20
  %v104 = vunpack.c.l.b16 %v21
  %v105 = vunpack.c.l.b16 %v22
  %v106 = vunpack.c.l.b16 %v23
  %v107 = vunpack.c.l.b16 %v24
  %v108 = vunpack.c.l.b16 %v25
  %v109 = vunpack.c.l.b16 %v26
  %v110 = vunpack.c.l.b16 %v27
  %v111 = vunpack.c.l.b16 %v28
  %v112 = vunpack.c.l.b16 %v29
  %v113 = vunpack.c.l.b16 %v30
  %v114 = vunpack.c.l.b16 %v31
  %v115 = vunpack.c.l.b16 %v32
  %v116 = vunpack.c.l.b16 %v33
  %v117 = vunpack.c.l.b16 %v34
  %v118 = vunpack.c.l.b16 %v35
  %v119 = vunpack.c.l.b16 %v36
  %v120 = vunpack.c.l.b16 %v37
  %v121 = vunpack.c.l.b16 %v38
  %v122 = vunpack.c.l.b16 %v39
  %v123 = vunpack.c.l.b16 %v40
  %v124 = vunpack.c.l.b16 %v41
  %v125 = vunpack.c.l.b16 %v42
  %v126 = vunpack.c.l.b16 %v43
  %v127 = vunpack.c.l.b16 %v44
  %v128 = vunpack.c.l.b16 %v45
  %v129 = vunpack.c.l.b16 %v46
  %v130 = vunpack.c.l.b16 %v47
  %v131 = vunpack.c.l.b16 %v48
  %v132 = vunpack.c.l.b16 %v49
  %v133 = vunpack.c.l.b16 %v50
  %v134 = vpack.c.b16 %v101, %v100
  %v135 = vpack.c.b16 %v103, %v102
  %v136 = vpack.c.b16 %v105, %v104
  %v137 = vpack.c.b16 %v107, %v106
  %v138 = vpack.c.b16 %v109, %v108
  %v139 = vpack.c.b16 %v111, %v110
  %v140 = vpack.c.b16 %v113, %v112
  %v141 = vpack.c.b16 %v115, %v114
  %v142 = vpack.c.b16 %v117, %v116
  %v143 = vpack.c.b16 %v119, %v118
  %v144 = vpack.c.b16 %v121, %v120
  %v145 = vpack.c.b16 %v123, %v122
  %v146 = vpack.c.b16 %v125, %v124
  %v147 = vpack.c.b16 %v127, %v126
  %v148 = vpack.c.b16 %v129, %v128
  %v149 = vpack.c.b16 %v131, %v130
  %v150 = vpack.c.b16 %v133, %v132
  %v159 = vunpack.c.l.b16 %v51
  %v160 = vunpack.c.l.b16 %v52
  %v161 = vunpack.c.l.b16 %v53
  %v162 = vunpack.c.l.b16 %v54
  %v163 = vunpack.c.l.b16 %v55
  %v164 = vunpack.c.l.b16 %v56
  %v165 = vunpack.c.l.b16 %v57
  %v166 = vunpack.c.l.b16 %v58
  %v167 = vpack.c.b16 %v160, %v159
  %v168 = vpack.c.b16 %v162, %v161
  %v169 = vpack.c.b16 %v164, %v163
  %v170 = vpack.c.b16 %v166, %v165
  %vm175 = vcmask 523264
  %v177 = vsel %vm175, %v134, 0
  %v180 = vsel %vm175, %v135, 0
  %v183 = vsel %vm175, %v136, 0
  %v186 = vsel %vm175, %v137, 0
  %v189 = vsel %vm175, %v138, 0
  %v192 = vsel %vm175, %v139, 0
  %v195 = vsel %vm175, %v140, 0
  %v198 = vsel %vm175, %v141, 0
  %v201 = vsel %vm175, %v142, 0
  %v204 = vsel %vm175, %v143, 0
  %v207 = vsel %vm175, %v144, 0
  %v210 = vsel %vm175, %v145, 0
  %v213 = vsel %vm175, %v146, 0
  %v216 = vsel %vm175, %v147, 0
  %v219 = vsel %vm175, %v148, 0
  %v222 = vsel %vm175, %v149, 0
  %v225 = vsel %vm175, %v150, 0
  %227 = vmatprep.subr.bf16.mxu0 0
  %228 = vmatpush1.bf16.msra.mxu0 %v167
  %229 = vmatprep.subr.bf16.mxu0 0
  %230 = vmatpush1.bf16.msra.mxu0 %v168
  %231 = vmatprep.subr.bf16.mxu0 0
  %232 = vmatpush1.bf16.msra.mxu0 %v169
  %233 = vmatprep.subr.bf16.mxu0 0
  %234 = vmatpush1.bf16.msra.mxu0 %v170
  %235 = vmatprep.subr.bf16.mxu0 0
  %236 = vmatpush1.bf16.msra.mxu0 0
  %237 = vmatprep.subr.bf16.mxu0 0
  %238 = vmatpush1.bf16.msra.mxu0 0
  %239 = vmatprep.subr.bf16.mxu0 0
  %240 = vmatpush1.bf16.msra.mxu0 0
  %241 = vmatprep.subr.bf16.mxu0 0
  %242 = vmatpush1.bf16.msra.mxu0 0
  %243 = vmatprep.subr.bf16.mxu0 0
  %244 = vmatpush1.bf16.msra.mxu0 0
  %245 = vmatprep.subr.bf16.mxu0 0
  %246 = vmatpush1.bf16.msra.mxu0 0
  %247 = vmatprep.subr.bf16.mxu0 0
  %248 = vmatpush1.bf16.msra.mxu0 0
  %249 = vmatprep.subr.bf16.mxu0 0
  %250 = vmatpush1.bf16.msra.mxu0 0
  %251 = vmatprep.subr.bf16.mxu0 0
  %252 = vmatpush1.bf16.msra.mxu0 0
  %253 = vmatprep.subr.bf16.mxu0 0
  %254 = vmatpush1.bf16.msra.mxu0 0
  %255 = vmatprep.subr.bf16.mxu0 0
  %256 = vmatpush1.bf16.msra.mxu0 0
  %257 = vmatprep.subr.bf16.mxu0 0
  %258 = vmatpush1.bf16.msra.mxu0 0
  %259 = vmatprep.mubr.bf16.mxu0 0
  %260 = vmatmul.mubr.bf16.gmra.mrb[0].mxu0 %v177
  %v261 = vpop.f32.mrb[0].mxu0
  %v262 = vadd.f32 %v64, %v261
  %v263 = vpop.f32.mrb[0].mxu0
  %v264 = vpop.f32.mrb[0].mxu0
  %v265 = vadd.f32 %v64, %v264
  %v266 = vpop.f32.mrb[0].mxu0
  %267 = vmatprep.mubr.bf16.mxu0 0
  %268 = vmatmul.mubr.bf16.gmra.mrb[0].mxu0 %v180
  %v269 = vpop.f32.mrb[0].mxu0
  %v270 = vadd.f32 %v64, %v269
  %v271 = vpop.f32.mrb[0].mxu0
  %v272 = vpop.f32.mrb[0].mxu0
  %v273 = vadd.f32 %v64, %v272
  %v274 = vpop.f32.mrb[0].mxu0
  %275 = vmatprep.mubr.bf16.mxu0 0
  %276 = vmatmul.mubr.bf16.gmra.mrb[0].mxu0 %v183
  %v277 = vpop.f32.mrb[0].mxu0
  %v278 = vadd.f32 %v64, %v277
  %v279 = vpop.f32.mrb[0].mxu0
  %v280 = vpop.f32.mrb[0].mxu0
  %v281 = vadd.f32 %v64, %v280
  %v282 = vpop.f32.mrb[0].mxu0
  %283 = vmatprep.mubr.bf16.mxu0 0
  %284 = vmatmul.mubr.bf16.gmra.mrb[0].mxu0 %v186
  %v285 = vpop.f32.mrb[0].mxu0
  %v286 = vadd.f32 %v64, %v285
  %v287 = vpop.f32.mrb[0].mxu0
  %v288 = vpop.f32.mrb[0].mxu0
  %v289 = vadd.f32 %v64, %v288
  %v290 = vpop.f32.mrb[0].mxu0
  %291 = vmatprep.mubr.bf16.mxu0 0
  %292 = vmatmul.mubr.bf16.gmra.mrb[0].mxu0 %v189
  %v293 = vpop.f32.mrb[0].mxu0
  %v294 = vadd.f32 %v64, %v293
  %v295 = vpop.f32.mrb[0].mxu0
  %v296 = vpop.f32.mrb[0].mxu0
  %v297 = vadd.f32 %v64, %v296
  %v298 = vpop.f32.mrb[0].mxu0
  %299 = vmatprep.mubr.bf16.mxu0 0
  %300 = vmatmul.mubr.bf16.gmra.mrb[0].mxu0 %v192
  %v301 = vpop.f32.mrb[0].mxu0
  %v302 = vadd.f32 %v64, %v301
  %v303 = vpop.f32.mrb[0].mxu0
  %v304 = vpop.f32.mrb[0].mxu0
  %v305 = vadd.f32 %v64, %v304
  %v306 = vpop.f32.mrb[0].mxu0
  %307 = vmatprep.mubr.bf16.mxu0 0
  %308 = vmatmul.mubr.bf16.gmra.mrb[0].mxu0 %v195
  %v309 = vpop.f32.mrb[0].mxu0
  %v310 = vadd.f32 %v64, %v309
  %v311 = vpop.f32.mrb[0].mxu0
  %v312 = vpop.f32.mrb[0].mxu0
  %v313 = vadd.f32 %v64, %v312
  %v314 = vpop.f32.mrb[0].mxu0
  %315 = vmatprep.mubr.bf16.mxu0 0
  %316 = vmatmul.mubr.bf16.gmra.mrb[0].mxu0 %v198
  %v317 = vpop.f32.mrb[0].mxu0
  %v318 = vadd.f32 %v64, %v317
  %v319 = vpop.f32.mrb[0].mxu0
  %v320 = vpop.f32.mrb[0].mxu0
  %v321 = vadd.f32 %v64, %v320
  %v322 = vpop.f32.mrb[0].mxu0
  %323 = vmatprep.mubr.bf16.mxu0 0
  %324 = vmatmul.mubr.bf16.gmra.mrb[0].mxu0 %v201
  %v325 = vpop.f32.mrb[0].mxu0
  %v326 = vadd.f32 %v64, %v325
  %v327 = vpop.f32.mrb[0].mxu0
  %v328 = vpop.f32.mrb[0].mxu0
  %v329 = vadd.f32 %v64, %v328
  %v330 = vpop.f32.mrb[0].mxu0
  %331 = vmatprep.mubr.bf16.mxu0 0
  %332 = vmatmul.mubr.bf16.gmra.mrb[0].mxu0 %v204
  %v333 = vpop.f32.mrb[0].mxu0
  %v334 = vadd.f32 %v64, %v333
  %v335 = vpop.f32.mrb[0].mxu0
  %v336 = vpop.f32.mrb[0].mxu0
  %v337 = vadd.f32 %v64, %v336
  %v338 = vpop.f32.mrb[0].mxu0
  %339 = vmatprep.mubr.bf16.mxu0 0
  %340 = vmatmul.mubr.bf16.gmra.mrb[0].mxu0 %v207
  %v341 = vpop.f32.mrb[0].mxu0
  %v342 = vadd.f32 %v64, %v341
  %v343 = vpop.f32.mrb[0].mxu0
  %v344 = vpop.f32.mrb[0].mxu0
  %v345 = vadd.f32 %v64, %v344
  %v346 = vpop.f32.mrb[0].mxu0
  %347 = vmatprep.mubr.bf16.mxu0 0
  %348 = vmatmul.mubr.bf16.gmra.mrb[0].mxu0 %v210
  %v349 = vpop.f32.mrb[0].mxu0
  %v350 = vadd.f32 %v64, %v349
  %v351 = vpop.f32.mrb[0].mxu0
  %v352 = vpop.f32.mrb[0].mxu0
  %v353 = vadd.f32 %v64, %v352
  %v354 = vpop.f32.mrb[0].mxu0
  %355 = vmatprep.mubr.bf16.mxu0 0
  %356 = vmatmul.mubr.bf16.gmra.mrb[0].mxu0 %v213
  %v357 = vpop.f32.mrb[0].mxu0
  %v358 = vadd.f32 %v64, %v357
  %v359 = vpop.f32.mrb[0].mxu0
  %v360 = vpop.f32.mrb[0].mxu0
  %v361 = vadd.f32 %v64, %v360
  %v362 = vpop.f32.mrb[0].mxu0
  %363 = vmatprep.mubr.bf16.mxu0 0
  %364 = vmatmul.mubr.bf16.gmra.mrb[0].mxu0 %v216
  %v365 = vpop.f32.mrb[0].mxu0
  %v366 = vadd.f32 %v64, %v365
  %v367 = vpop.f32.mrb[0].mxu0
  %v368 = vpop.f32.mrb[0].mxu0
  %v369 = vadd.f32 %v64, %v368
  %v370 = vpop.f32.mrb[0].mxu0
  %371 = vmatprep.mubr.bf16.mxu0 0
  %372 = vmatmul.mubr.bf16.gmra.mrb[0].mxu0 %v219
  %v373 = vpop.f32.mrb[0].mxu0
  %v374 = vadd.f32 %v64, %v373
  %v375 = vpop.f32.mrb[0].mxu0
  %v376 = vpop.f32.mrb[0].mxu0
  %v377 = vadd.f32 %v64, %v376
  %v378 = vpop.f32.mrb[0].mxu0
  %379 = vmatprep.mubr.bf16.mxu0 0
  %380 = vmatmul.mubr.bf16.gmra.mrb[0].mxu0 %v222
  %v381 = vpop.f32.mrb[0].mxu0
  %v382 = vadd.f32 %v64, %v381
  %v383 = vpop.f32.mrb[0].mxu0
  %v384 = vpop.f32.mrb[0].mxu0
  %v385 = vadd.f32 %v64, %v384
  %v386 = vpop.f32.mrb[0].mxu0
  %387 = vmatprep.mubr.bf16.mxu0 0
  %388 = vmatmul.mubr.bf16.gmra.mrb[0].mxu0 %v225
  %v389 = vpop.f32.mrb[0].mxu0
  %v390 = vadd.f32 %v64, %v389
  %v391 = vpop.f32.mrb[0].mxu0
  %v392 = vpop.f32.mrb[0].mxu0
  %v393 = vadd.f32 %v64, %v392
  %v394 = vpop.f32.mrb[0].mxu0
  %395 = vdwg.mxu0
  %396 = vst [vmem:[%s3] sm:$0xff] %v262
  %397 = vst [vmem:[%s3 + $0x8] sm:$0xff] %v265
  %398 = vst [vmem:[%s3 + $0x10] sm:$0xff] %v270
  %399 = vst [vmem:[%s3 + $0x18] sm:$0xff] %v273
  %400 = vst [vmem:[%s3 + $0x20] sm:$0xff] %v278
  %401 = vst [vmem:[%s3 + $0x28] sm:$0xff] %v281
  %402 = vst [vmem:[%s3 + $0x30] sm:$0xff] %v286
  %403 = vst [vmem:[%s3 + $0x38] sm:$0xff] %v289
  %404 = vst [vmem:[%s3 + $0x40] sm:$0xff] %v294
  %405 = vst [vmem:[%s3 + $0x48] sm:$0xff] %v297
  %406 = vst [vmem:[%s3 + $0x50] sm:$0xff] %v302
  %407 = vst [vmem:[%s3 + $0x58] sm:$0xff] %v305
  %408 = vst [vmem:[%s3 + $0x60] sm:$0xff] %v310
  %409 = vst [vmem:[%s3 + $0x68] sm:$0xff] %v313
  %410 = vst [vmem:[%s3 + $0x70] sm:$0xff] %v318
  %411 = vst [vmem:[%s3 + $0x78] sm:$0xff] %v321
  %412 = vst [vmem:[%s3 + $0x80] sm:$0xff] %v326
  %413 = vst [vmem:[%s3 + $0x88] sm:$0xff] %v329
  %414 = vst [vmem:[%s3 + $0x90] sm:$0xff] %v334
  %415 = vst [vmem:[%s3 + $0x98] sm:$0xff] %v337
  %416 = vst [vmem:[%s3 + $0xa0] sm:$0xff] %v342
  %417 = vst [vmem:[%s3 + $0xa8] sm:$0xff] %v345
  %418 = vst [vmem:[%s3 + $0xb0] sm:$0xff] %v350
  %419 = vst [vmem:[%s3 + $0xb8] sm:$0xff] %v353
  %420 = vst [vmem:[%s3 + $0xc0] sm:$0xff] %v358
  %421 = vst [vmem:[%s3 + $0xc8] sm:$0xff] %v361
  %422 = vst [vmem:[%s3 + $0xd0] sm:$0xff] %v366
  %423 = vst [vmem:[%s3 + $0xd8] sm:$0xff] %v369
  %424 = vst [vmem:[%s3 + $0xe0] sm:$0xff] %v374
  %425 = vst [vmem:[%s3 + $0xe8] sm:$0xff] %v377
  %426 = vst [vmem:[%s3 + $0xf0] sm:$0xff] %v382
  %427 = vst [vmem:[%s3 + $0xf8] sm:$0xff] %v385
  %428 = vst [vmem:[%s3 + $0x100] sm:$0xff] %v390
  %429 = vst [vmem:[%s3 + $0x108] sm:$0xff] %v393
  %v430 = vadd.f32 %v262, %v265
  %v431 = vadd.f32 %v430, %v270
  %v432 = vadd.f32 %v431, %v273
  %v433 = vadd.f32 %v432, %v278
  %v434 = vadd.f32 %v433, %v281
  %v435 = vadd.f32 %v434, %v286
  %v436 = vadd.f32 %v435, %v289
  %v437 = vadd.f32 %v436, %v294
  %v438 = vadd.f32 %v437, %v297
  %v439 = vadd.f32 %v438, %v302
  %v440 = vadd.f32 %v439, %v305
  %v441 = vadd.f32 %v440, %v310
  %v442 = vadd.f32 %v441, %v313
  %v443 = vadd.f32 %v442, %v318
  %v444 = vadd.f32 %v443, %v321
  %v445 = vadd.f32 %v444, %v326
  %v446 = vadd.f32 %v445, %v329
  %v447 = vadd.f32 %v446, %v334
  %v448 = vadd.f32 %v447, %v337
  %v449 = vadd.f32 %v448, %v342
  %v450 = vadd.f32 %v449, %v345
  %v451 = vadd.f32 %v450, %v350
  %v452 = vadd.f32 %v451, %v353
  %v453 = vadd.f32 %v452, %v358
  %v454 = vadd.f32 %v453, %v361
  %v455 = vadd.f32 %v454, %v366
  %v456 = vadd.f32 %v455, %v369
  %v457 = vadd.f32 %v456, %v374
  %v458 = vadd.f32 %v457, %v377
  %v459 = vadd.f32 %v458, %v382
  %v460 = vadd.f32 %v459, %v385
  %v461 = vadd.f32 %v460, %v390
  %v462 = vadd.f32 %v461, %v393
  %v463 = vrot.slane %v462, 4
  %v464 = vadd.f32 %v462, %v463
  %v465 = vrot.slane %v464, 2
  %v466 = vadd.f32 %v464, %v465
  %v467 = vrot.slane %v466, 1
  %v468 = vadd.f32 %v466, %v467
  %469 = vst [vmem:[%s4] sm:$0x1] %v468
  %v470 = vmul.f32 %v262, %v262
  %v471 = vmul.f32 %v265, %v265
  %v472 = vmul.f32 %v270, %v270
  %v473 = vmul.f32 %v273, %v273
  %v474 = vmul.f32 %v278, %v278
  %v475 = vmul.f32 %v281, %v281
  %v476 = vmul.f32 %v286, %v286
  %v477 = vmul.f32 %v289, %v289
  %v478 = vmul.f32 %v294, %v294
  %v479 = vmul.f32 %v297, %v297
  %v480 = vmul.f32 %v302, %v302
  %v481 = vmul.f32 %v305, %v305
  %v482 = vmul.f32 %v310, %v310
  %v483 = vmul.f32 %v313, %v313
  %v484 = vmul.f32 %v318, %v318
  %v485 = vmul.f32 %v321, %v321
  %v486 = vmul.f32 %v326, %v326
  %v487 = vmul.f32 %v329, %v329
  %v488 = vmul.f32 %v334, %v334
  %v489 = vmul.f32 %v337, %v337
  %v490 = vmul.f32 %v342, %v342
  %v491 = vmul.f32 %v345, %v345
  %v492 = vmul.f32 %v350, %v350
  %v493 = vmul.f32 %v353, %v353
  %v494 = vmul.f32 %v358, %v358
  %v495 = vmul.f32 %v361, %v361
  %v496 = vmul.f32 %v366, %v366
  %v497 = vmul.f32 %v369, %v369
  %v498 = vmul.f32 %v374, %v374
  %v499 = vmul.f32 %v377, %v377
  %v500 = vmul.f32 %v382, %v382
  %v501 = vmul.f32 %v385, %v385
  %v502 = vmul.f32 %v390, %v390
  %v503 = vmul.f32 %v393, %v393
  %v504 = vadd.f32 %v470, %v471
  %v505 = vadd.f32 %v504, %v472
  %v506 = vadd.f32 %v505, %v473
  %v507 = vadd.f32 %v506, %v474
  %v508 = vadd.f32 %v507, %v475
  %v509 = vadd.f32 %v508, %v476
  %v510 = vadd.f32 %v509, %v477
  %v511 = vadd.f32 %v510, %v478
  %v512 = vadd.f32 %v511, %v479
  %v513 = vadd.f32 %v512, %v480
  %v514 = vadd.f32 %v513, %v481
  %v515 = vadd.f32 %v514, %v482
  %v516 = vadd.f32 %v515, %v483
  %v517 = vadd.f32 %v516, %v484
  %v518 = vadd.f32 %v517, %v485
  %v519 = vadd.f32 %v518, %v486
  %v520 = vadd.f32 %v519, %v487
  %v521 = vadd.f32 %v520, %v488
  %v522 = vadd.f32 %v521, %v489
  %v523 = vadd.f32 %v522, %v490
  %v524 = vadd.f32 %v523, %v491
  %v525 = vadd.f32 %v524, %v492
  %v526 = vadd.f32 %v525, %v493
  %v527 = vadd.f32 %v526, %v494
  %v528 = vadd.f32 %v527, %v495
  %v529 = vadd.f32 %v528, %v496
  %v530 = vadd.f32 %v529, %v497
  %v531 = vadd.f32 %v530, %v498
  %v532 = vadd.f32 %v531, %v499
  %v533 = vadd.f32 %v532, %v500
  %v534 = vadd.f32 %v533, %v501
  %v535 = vadd.f32 %v534, %v502
  %v536 = vadd.f32 %v535, %v503
  %v537 = vrot.slane %v536, 4
  %v538 = vadd.f32 %v536, %v537
  %v539 = vrot.slane %v538, 2
  %v540 = vadd.f32 %v538, %v539
  %v541 = vrot.slane %v540, 1
  %v542 = vadd.f32 %v540, %v541
  %543 = vst [vmem:[%s4 + $0x1] sm:$0x1] %v542
  // Predicated region
  $region14: #{layer_forward.8} parent=0 // pred_check
    _
  $region15: #{layer_forward.8} parent=0 // pred_check_branch
    %545 = sbr.rel (0) target = $region17
  $region16: #{layer_forward.8} parent=0 // pred_region
    _
  $region17: #{layer_forward.8} parent=0 // pred_fallthru
    _
  // Predicated region
  $region18: #{layer_forward.8} parent=0 // pred_check
    _
  $region19: #{layer_forward.8} parent=0 // pred_check_branch
    %547 = sbr.rel (0) target = $region21
  $region20: #{layer_forward.8} parent=0 // pred_region
    _
  $region21: #{layer_forward.8} parent=0 // pred_fallthru
    _
  // Predicated region
  $region22: #{layer_forward.8} parent=0 // pred_check
    _
  $region23: #{layer_forward.8} parent=0 // pred_check_branch
    %549 = sbr.rel (0) target = $region25
  $region24: #{layer_forward.8} parent=0 // pred_region
    _
  $region25: #{layer_forward.8} parent=0 // pred_fallthru
    _
  // Predicated region
  $region26: #{layer_forward.8} parent=0 // pred_check
    _
  $region27: #{layer_forward.8} parent=0 // pred_check_branch
    %551 = sbr.rel (0) target = $region29
  $region28: #{layer_forward.8} parent=0 // pred_region
    _
  $region29: #{layer_forward.8} parent=0 // pred_fallthru
    _

// kernel: layer_forward.13
$region0: #{layer_forward.13}
  #allocation0 [shape = 'u32[]', space=smem, size = 0x4, offset = 0x4, fixed_abs, tag = 'smem constant byte address 0x4 - core index']
  #allocation1 [shape = 'u32[144,128]{1,0:T(1,128)}', space=vmem, size = 0x12000, scoped, tag = 'internal scratch']
  %s0 = inlined_call_operand.vmem [shape: f32[272,128], index: 0, kind: input, shape index: {}]
  %s1 = inlined_call_operand.vmem [shape: f32[272,128], index: 1, kind: input, shape index: {}]
  %s2 = inlined_call_operand.vmem [shape: f32[1,128], index: 2, kind: input, shape index: {}]
  %s3 = inlined_call_operand.vmem [shape: f32[1,128], index: 3, kind: input, shape index: {}]
  %s4 = inlined_call_operand.vmem [shape: f32[1,128], index: 4, kind: input, shape index: {}]
  %s5 = inlined_call_operand.vmem [shape: f32[272,128], index: 5, kind: output, shape index: {}]
  %s6 = sld [smem:[#allocation0]]
  $region30: #{layer_forward.13} parent=0
    _
  %s8 = ssub.s32 1, %s6
  %s9 = scalar_select 0, %s8, %s6
  // Predicated region
  $region2: #{layer_forward.13} parent=0 // pred_check
    _
  $region3: #{layer_forward.13} parent=0 // pred_check_branch
    %11 = sbr.rel (0) target = $region5
  $region4: #{layer_forward.13} parent=0 // pred_region
    _
  $region5: #{layer_forward.13} parent=0 // pred_fallthru
    _
  // Predicated region
  $region6: #{layer_forward.13} parent=0 // pred_check
    _
  $region7: #{layer_forward.13} parent=0 // pred_check_branch
    %13 = sbr.rel (0) target = $region9
  $region8: #{layer_forward.13} parent=0 // pred_region
    _
  $region9: #{layer_forward.13} parent=0 // pred_fallthru
    _
  // Predicated region
  $region10: #{layer_forward.13} parent=0 // pred_check
    _
  $region11: #{layer_forward.13} parent=0 // pred_check_branch
    %15 = sbr.rel (0) target = $region13
  $region12: #{layer_forward.13} parent=0 // pred_region
    _
  $region13: #{layer_forward.13} parent=0 // pred_fallthru
    _
  // Predicated region
  $region14: #{layer_forward.13} parent=0 // pred_check
    _
  $region15: #{layer_forward.13} parent=0 // pred_check_branch
    %17 = sbr.rel (0) target = $region17
  $region16: #{layer_forward.13} parent=0 // pred_region
    _
  $region17: #{layer_forward.13} parent=0 // pred_fallthru
    _
  // Predicated region
  $region18: #{layer_forward.13} parent=0 // pred_check
    _
  $region19: #{layer_forward.13} parent=0 // pred_check_branch
    %19 = sbr.rel (0) target = $region21
  $region20: #{layer_forward.13} parent=0 // pred_region
    _
  $region21: #{layer_forward.13} parent=0 // pred_fallthru
    _
  %v20 = vld [vmem:[%s0] sm:$0xff]
  %v21 = vld [vmem:[%s0 + $0x8] sm:$0xff]
  %v22 = vld [vmem:[%s0 + $0x10] sm:$0xff]
  %v23 = vld [vmem:[%s0 + $0x18] sm:$0xff]
  %v24 = vld [vmem:[%s0 + $0x20] sm:$0xff]
  %v25 = vld [vmem:[%s0 + $0x28] sm:$0xff]
  %v26 = vld [vmem:[%s0 + $0x30] sm:$0xff]
  %v27 = vld [vmem:[%s0 + $0x38] sm:$0xff]
  %v28 = vld [vmem:[%s0 + $0x40] sm:$0xff]
  %v29 = vld [vmem:[%s0 + $0x48] sm:$0xff]
  %v30 = vld [vmem:[%s0 + $0x50] sm:$0xff]
  %v31 = vld [vmem:[%s0 + $0x58] sm:$0xff]
  %v32 = vld [vmem:[%s0 + $0x60] sm:$0xff]
  %v33 = vld [vmem:[%s0 + $0x68] sm:$0xff]
  %v34 = vld [vmem:[%s0 + $0x70] sm:$0xff]
  %v35 = vld [vmem:[%s0 + $0x78] sm:$0xff]
  %v36 = vld [vmem:[%s0 + $0x80] sm:$0xff]
  %v37 = vld [vmem:[%s0 + $0x88] sm:$0xff]
  %v38 = vld [vmem:[%s0 + $0x90] sm:$0xff]
  %v39 = vld [vmem:[%s0 + $0x98] sm:$0xff]
  %v40 = vld [vmem:[%s0 + $0xa0] sm:$0xff]
  %v41 = vld [vmem:[%s0 + $0xa8] sm:$0xff]
  %v42 = vld [vmem:[%s0 + $0xb0] sm:$0xff]
  %v43 = vld [vmem:[%s0 + $0xb8] sm:$0xff]
  %v44 = vld [vmem:[%s0 + $0xc0] sm:$0xff]
  %v45 = vld [vmem:[%s0 + $0xc8] sm:$0xff]
  %v46 = vld [vmem:[%s0 + $0xd0] sm:$0xff]
  %v47 = vld [vmem:[%s0 + $0xd8] sm:$0xff]
  %v48 = vld [vmem:[%s0 + $0xe0] sm:$0xff]
  %v49 = vld [vmem:[%s0 + $0xe8] sm:$0xff]
  %v50 = vld [vmem:[%s0 + $0xf0] sm:$0xff]
  %v51 = vld [vmem:[%s0 + $0xf8] sm:$0xff]
  %v52 = vld [vmem:[%s0 + $0x100] sm:$0xff]
  %v53 = vld [vmem:[%s0 + $0x108] sm:$0xff]
  %v54 = vld [vmem:[%s2] sm:$0x1]
  %v56 = vlaneseq
  %v57 = vshrl.u32 %v56, 7
  %v58 = vsub.s32 0, %v57
  %v59 = vrot.slane %v54, %v58
  %v61 = vmul.f32 %v20, %v59
  %v62 = vmul.f32 %v21, %v59
  %v63 = vmul.f32 %v22, %v59
  %v64 = vmul.f32 %v23, %v59
  %v65 = vmul.f32 %v24, %v59
  %v66 = vmul.f32 %v25, %v59
  %v67 = vmul.f32 %v26, %v59
  %v68 = vmul.f32 %v27, %v59
  %v69 = vmul.f32 %v28, %v59
  %v70 = vmul.f32 %v29, %v59
  %v71 = vmul.f32 %v30, %v59
  %v72 = vmul.f32 %v31, %v59
  %v73 = vmul.f32 %v32, %v59
  %v74 = vmul.f32 %v33, %v59
  %v75 = vmul.f32 %v34, %v59
  %v76 = vmul.f32 %v35, %v59
  %v77 = vmul.f32 %v36, %v59
  %v78 = vmul.f32 %v37, %v59
  %v79 = vmul.f32 %v38, %v59
  %v80 = vmul.f32 %v39, %v59
  %v81 = vmul.f32 %v40, %v59
  %v82 = vmul.f32 %v41, %v59
  %v83 = vmul.f32 %v42, %v59
  %v84 = vmul.f32 %v43, %v59
  %v85 = vmul.f32 %v44, %v59
  %v86 = vmul.f32 %v45, %v59
  %v87 = vmul.f32 %v46, %v59
  %v88 = vmul.f32 %v47, %v59
  %v89 = vmul.f32 %v48, %v59
  %v90 = vmul.f32 %v49, %v59
  %v91 = vmul.f32 %v50, %v59
  %v92 = vmul.f32 %v51, %v59
  %v93 = vmul.f32 %v52, %v59
  %v94 = vmul.f32 %v53, %v59
  %v95 = vld [vmem:[%s1] sm:$0xff]
  %v96 = vld [vmem:[%s1 + $0x8] sm:$0xff]
  %v97 = vld [vmem:[%s1 + $0x10] sm:$0xff]
  %v98 = vld [vmem:[%s1 + $0x18] sm:$0xff]
  %v99 = vld [vmem:[%s1 + $0x20] sm:$0xff]
  %v100 = vld [vmem:[%s1 + $0x28] sm:$0xff]
  %v101 = vld [vmem:[%s1 + $0x30] sm:$0xff]
  %v102 = vld [vmem:[%s1 + $0x38] sm:$0xff]
  %v103 = vld [vmem:[%s1 + $0x40] sm:$0xff]
  %v104 = vld [vmem:[%s1 + $0x48] sm:$0xff]
  %v105 = vld [vmem:[%s1 + $0x50] sm:$0xff]
  %v106 = vld [vmem:[%s1 + $0x58] sm:$0xff]
  %v107 = vld [vmem:[%s1 + $0x60] sm:$0xff]
  %v108 = vld [vmem:[%s1 + $0x68] sm:$0xff]
  %v109 = vld [vmem:[%s1 + $0x70] sm:$0xff]
  %v110 = vld [vmem:[%s1 + $0x78] sm:$0xff]
  %v111 = vld [vmem:[%s1 + $0x80] sm:$0xff]
  %v112 = vld [vmem:[%s1 + $0x88] sm:$0xff]
  %v113 = vld [vmem:[%s1 + $0x90] sm:$0xff]
  %v114 = vld [vmem:[%s1 + $0x98] sm:$0xff]
  %v115 = vld [vmem:[%s1 + $0xa0] sm:$0xff]
  %v116 = vld [vmem:[%s1 + $0xa8] sm:$0xff]
  %v117 = vld [vmem:[%s1 + $0xb0] sm:$0xff]
  %v118 = vld [vmem:[%s1 + $0xb8] sm:$0xff]
  %v119 = vld [vmem:[%s1 + $0xc0] sm:$0xff]
  %v120 = vld [vmem:[%s1 + $0xc8] sm:$0xff]
  %v121 = vld [vmem:[%s1 + $0xd0] sm:$0xff]
  %v122 = vld [vmem:[%s1 + $0xd8] sm:$0xff]
  %v123 = vld [vmem:[%s1 + $0xe0] sm:$0xff]
  %v124 = vld [vmem:[%s1 + $0xe8] sm:$0xff]
  %v125 = vld [vmem:[%s1 + $0xf0] sm:$0xff]
  %v126 = vld [vmem:[%s1 + $0xf8] sm:$0xff]
  %v127 = vld [vmem:[%s1 + $0x100] sm:$0xff]
  %v128 = vld [vmem:[%s1 + $0x108] sm:$0xff]
  %v129 = vld [vmem:[%s3] sm:$0x1]
  %v131 = vlaneseq
  %v132 = vshrl.u32 %v131, 7
  %v133 = vsub.s32 0, %v132
  %v134 = vrot.slane %v129, %v133
  %v136 = vmul.f32 %v95, %v134
  %v137 = vmul.f32 %v96, %v134
  %v138 = vmul.f32 %v97, %v134
  %v139 = vmul.f32 %v98, %v134
  %v140 = vmul.f32 %v99, %v134
  %v141 = vmul.f32 %v100, %v134
  %v142 = vmul.f32 %v101, %v134
  %v143 = vmul.f32 %v102, %v134
  %v144 = vmul.f32 %v103, %v134
  %v145 = vmul.f32 %v104, %v134
  %v146 = vmul.f32 %v105, %v134
  %v147 = vmul.f32 %v106, %v134
  %v148 = vmul.f32 %v107, %v134
  %v149 = vmul.f32 %v108, %v134
  %v150 = vmul.f32 %v109, %v134
  %v151 = vmul.f32 %v110, %v134
  %v152 = vmul.f32 %v111, %v134
  %v153 = vmul.f32 %v112, %v134
  %v154 = vmul.f32 %v113, %v134
  %v155 = vmul.f32 %v114, %v134
  %v156 = vmul.f32 %v115, %v134
  %v157 = vmul.f32 %v116, %v134
  %v158 = vmul.f32 %v117, %v134
  %v159 = vmul.f32 %v118, %v134
  %v160 = vmul.f32 %v119, %v134
  %v161 = vmul.f32 %v120, %v134
  %v162 = vmul.f32 %v121, %v134
  %v163 = vmul.f32 %v122, %v134
  %v164 = vmul.f32 %v123, %v134
  %v165 = vmul.f32 %v124, %v134
  %v166 = vmul.f32 %v125, %v134
  %v167 = vmul.f32 %v126, %v134
  %v168 = vmul.f32 %v127, %v134
  %v169 = vmul.f32 %v128, %v134
  %v170 = vadd.f32 %v61, %v136
  %v171 = vadd.f32 %v62, %v137
  %v172 = vadd.f32 %v63, %v138
  %v173 = vadd.f32 %v64, %v139
  %v174 = vadd.f32 %v65, %v140
  %v175 = vadd.f32 %v66, %v141
  %v176 = vadd.f32 %v67, %v142
  %v177 = vadd.f32 %v68, %v143
  %v178 = vadd.f32 %v69, %v144
  %v179 = vadd.f32 %v70, %v145
  %v180 = vadd.f32 %v71, %v146
  %v181 = vadd.f32 %v72, %v147
  %v182 = vadd.f32 %v73, %v148
  %v183 = vadd.f32 %v74, %v149
  %v184 = vadd.f32 %v75, %v150
  %v185 = vadd.f32 %v76, %v151
  %v186 = vadd.f32 %v77, %v152
  %v187 = vadd.f32 %v78, %v153
  %v188 = vadd.f32 %v79, %v154
  %v189 = vadd.f32 %v80, %v155
  %v190 = vadd.f32 %v81, %v156
  %v191 = vadd.f32 %v82, %v157
  %v192 = vadd.f32 %v83, %v158
  %v193 = vadd.f32 %v84, %v159
  %v194 = vadd.f32 %v85, %v160
  %v195 = vadd.f32 %v86, %v161
  %v196 = vadd.f32 %v87, %v162
  %v197 = vadd.f32 %v88, %v163
  %v198 = vadd.f32 %v89, %v164
  %v199 = vadd.f32 %v90, %v165
  %v200 = vadd.f32 %v91, %v166
  %v201 = vadd.f32 %v92, %v167
  %v202 = vadd.f32 %v93, %v168
  %v203 = vadd.f32 %v94, %v169
  %v204 = vld [vmem:[%s4] sm:$0x1]
  %v206 = vlaneseq
  %v207 = vshrl.u32 %v206, 7
  %v208 = vsub.s32 0, %v207
  %v209 = vrot.slane %v204, %v208
  %v211 = vadd.f32 %v170, %v209
  %v212 = vadd.f32 %v171, %v209
  %v213 = vadd.f32 %v172, %v209
  %v214 = vadd.f32 %v173, %v209
  %v215 = vadd.f32 %v174, %v209
  %v216 = vadd.f32 %v175, %v209
  %v217 = vadd.f32 %v176, %v209
  %v218 = vadd.f32 %v177, %v209
  %v219 = vadd.f32 %v178, %v209
  %v220 = vadd.f32 %v179, %v209
  %v221 = vadd.f32 %v180, %v209
  %v222 = vadd.f32 %v181, %v209
  %v223 = vadd.f32 %v182, %v209
  %v224 = vadd.f32 %v183, %v209
  %v225 = vadd.f32 %v184, %v209
  %v226 = vadd.f32 %v185, %v209
  %v227 = vadd.f32 %v186, %v209
  %v228 = vadd.f32 %v187, %v209
  %v229 = vadd.f32 %v188, %v209
  %v230 = vadd.f32 %v189, %v209
  %v231 = vadd.f32 %v190, %v209
  %v232 = vadd.f32 %v191, %v209
  %v233 = vadd.f32 %v192, %v209
  %v234 = vadd.f32 %v193, %v209
  %v235 = vadd.f32 %v194, %v209
  %v236 = vadd.f32 %v195, %v209
  %v237 = vadd.f32 %v196, %v209
  %v238 = vadd.f32 %v197, %v209
  %v239 = vadd.f32 %v198, %v209
  %v240 = vadd.f32 %v199, %v209
  %v241 = vadd.f32 %v200, %v209
  %v242 = vadd.f32 %v201, %v209
  %v243 = vadd.f32 %v202, %v209
  %v244 = vadd.f32 %v203, %v209
  %v245 = vmax.f32 %v211, 0.0
  %v246 = vmax.f32 %v212, 0.0
  %v247 = vmax.f32 %v213, 0.0
  %v248 = vmax.f32 %v214, 0.0
  %v249 = vmax.f32 %v215, 0.0
  %v250 = vmax.f32 %v216, 0.0
  %v251 = vmax.f32 %v217, 0.0
  %v252 = vmax.f32 %v218, 0.0
  %v253 = vmax.f32 %v219, 0.0
  %v254 = vmax.f32 %v220, 0.0
  %v255 = vmax.f32 %v221, 0.0
  %v256 = vmax.f32 %v222, 0.0
  %v257 = vmax.f32 %v223, 0.0
  %v258 = vmax.f32 %v224, 0.0
  %v259 = vmax.f32 %v225, 0.0
  %v260 = vmax.f32 %v226, 0.0
  %v261 = vmax.f32 %v227, 0.0
  %v262 = vmax.f32 %v228, 0.0
  %v263 = vmax.f32 %v229, 0.0
  %v264 = vmax.f32 %v230, 0.0
  %v265 = vmax.f32 %v231, 0.0
  %v266 = vmax.f32 %v232, 0.0
  %v267 = vmax.f32 %v233, 0.0
  %v268 = vmax.f32 %v234, 0.0
  %v269 = vmax.f32 %v235, 0.0
  %v270 = vmax.f32 %v236, 0.0
  %v271 = vmax.f32 %v237, 0.0
  %v272 = vmax.f32 %v238, 0.0
  %v273 = vmax.f32 %v239, 0.0
  %v274 = vmax.f32 %v240, 0.0
  %v275 = vmax.f32 %v241, 0.0
  %v276 = vmax.f32 %v242, 0.0
  %v277 = vmax.f32 %v243, 0.0
  %v278 = vmax.f32 %v244, 0.0
  %279 = vst [vmem:[%s5] sm:$0xff] %v245
  %280 = vst [vmem:[%s5 + $0x8] sm:$0xff] %v246
  %281 = vst [vmem:[%s5 + $0x10] sm:$0xff] %v247
  %282 = vst [vmem:[%s5 + $0x18] sm:$0xff] %v248
  %283 = vst [vmem:[%s5 + $0x20] sm:$0xff] %v249
  %284 = vst [vmem:[%s5 + $0x28] sm:$0xff] %v250
  %285 = vst [vmem:[%s5 + $0x30] sm:$0xff] %v251
  %286 = vst [vmem:[%s5 + $0x38] sm:$0xff] %v252
  %287 = vst [vmem:[%s5 + $0x40] sm:$0xff] %v253
  %288 = vst [vmem:[%s5 + $0x48] sm:$0xff] %v254
  %289 = vst [vmem:[%s5 + $0x50] sm:$0xff] %v255
  %290 = vst [vmem:[%s5 + $0x58] sm:$0xff] %v256
  %291 = vst [vmem:[%s5 + $0x60] sm:$0xff] %v257
  %292 = vst [vmem:[%s5 + $0x68] sm:$0xff] %v258
  %293 = vst [vmem:[%s5 + $0x70] sm:$0xff] %v259
  %294 = vst [vmem:[%s5 + $0x78] sm:$0xff] %v260
  %295 = vst [vmem:[%s5 + $0x80] sm:$0xff] %v261
  %296 = vst [vmem:[%s5 + $0x88] sm:$0xff] %v262
  %297 = vst [vmem:[%s5 + $0x90] sm:$0xff] %v263
  %298 = vst [vmem:[%s5 + $0x98] sm:$0xff] %v264
  %299 = vst [vmem:[%s5 + $0xa0] sm:$0xff] %v265
  %300 = vst [vmem:[%s5 + $0xa8] sm:$0xff] %v266
  %301 = vst [vmem:[%s5 + $0xb0] sm:$0xff] %v267
  %302 = vst [vmem:[%s5 + $0xb8] sm:$0xff] %v268
  %303 = vst [vmem:[%s5 + $0xc0] sm:$0xff] %v269
  %304 = vst [vmem:[%s5 + $0xc8] sm:$0xff] %v270
  %305 = vst [vmem:[%s5 + $0xd0] sm:$0xff] %v271
  %306 = vst [vmem:[%s5 + $0xd8] sm:$0xff] %v272
  %307 = vst [vmem:[%s5 + $0xe0] sm:$0xff] %v273
  %308 = vst [vmem:[%s5 + $0xe8] sm:$0xff] %v274
  %309 = vst [vmem:[%s5 + $0xf0] sm:$0xff] %v275
  %310 = vst [vmem:[%s5 + $0xf8] sm:$0xff] %v276
  %311 = vst [vmem:[%s5 + $0x100] sm:$0xff] %v277
  %312 = vst [vmem:[%s5 + $0x108] sm:$0xff] %v278
  // Predicated region
  $region22: #{layer_forward.13} parent=0 // pred_check
    _
  $region23: #{layer_forward.13} parent=0 // pred_check_branch
    %314 = sbr.rel (0) target = $region25
  $region24: #{layer_forward.13} parent=0 // pred_region
    _
  $region25: #{layer_forward.13} parent=0 // pred_fallthru
    _
  // Predicated region
  $region26: #{layer_forward.13} parent=0 // pred_check
    _
  $region27: #{layer_forward.13} parent=0 // pred_check_branch
    %316 = sbr.rel (0) target = $region29
  $region28: #{layer_forward.13} parent=0 // pred_region
    _
  $region29: #{layer_forward.13} parent=0 // pred_fallthru
    _

</llo_original>
